<compile_context>
chip_gen: v6e
topology: v6e:2x2x1
jax: 0.10.0
libtpu: 0.0.40
codegen_flags: <defaults>
</compile_context>

<pallas_src>
import jax
import jax.numpy as jnp
from jax import lax
from jax.experimental import pallas as pl
from jax.experimental.pallas import tpu as pltpu

# Unified spatial addressing: activation row (per image) = h * W_STRIDE + w.
W_STRIDE = 24              # >= padded input width (23), multiple of 8
S = W_STRIDE * W_STRIDE    # rows per image (576)
TAIL = 64                  # zero tail: max tap shift is 2*W_STRIDE + 2 = 50 rows
H_IN = 21                  # input spatial size implied by fc1 = 4*17*17


# ----------------------------------------------------------------------------
# Fused kernel
# ----------------------------------------------------------------------------
def _conv3x3_relu(load_merged, w_ref, b_ref):
    """One 3x3 conv + bias + ReLU on stride-24 addressed rows.

    load_merged(kh) -> (S, 3*C_in) bf16: rows [kh*W_STRIDE, kh*W_STRIDE + S) of
    the kw-merged source (lane layout [kw*C_in + ic]).
    w_ref: (3, 3*C_in, C_out) bf16 with layout [kh, kw*C_in + ic, oc].
    b_ref: (1, C_out) f32.
    """
    acc = None
    for kh in range(3):
        part = jnp.dot(load_merged(kh), w_ref[kh],
                       preferred_element_type=jnp.float32)
        acc = part if acc is None else acc + part
    return jnp.maximum(acc + b_ref[...], 0.0)            # (S, C_out) f32


def _dqn_kernel(x_ref, w1, b1, w2, b2, w3, b3, w4, b4, w5, b5, w6, b6,
                o_ref, a1_ref, a2_ref):
    # Re-zero the scratch tails every step (64 rows, cheap).  Done
    # unconditionally so a megacore split of the "parallel" batch axis stays
    # correct (a program_id==0 gate would only run on one core).
    a1_ref[pl.ds(S, TAIL), :] = jnp.zeros((TAIL, a1_ref.shape[1]), a1_ref.dtype)
    a2_ref[pl.ds(S, TAIL), :] = jnp.zeros((TAIL, a2_ref.shape[1]), a2_ref.dtype)

    def merged_taps(src_ref, kh):
        # (S, 3*C_in) bf16: lane-concat of the kw = 0,1,2 shifted row windows.
        off = kh * W_STRIDE
        return jnp.concatenate(
            [src_ref[pl.ds(off + kw, S), :] for kw in range(3)],
            axis=-1).astype(jnp.bfloat16)

    # conv1 (the wrapper already lane-concatenated the input's kw taps -> 12 ch)
    a1_ref[pl.ds(0, S), :] = _conv3x3_relu(
        lambda kh: x_ref[pl.ds(kh * W_STRIDE, S), :], w1, b1)          # (S, 32)
    # conv2 / conv3, activations VMEM-resident in scratch
    a2_ref[pl.ds(0, S), :] = _conv3x3_relu(
        lambda kh: merged_taps(a1_ref, kh), w2, b2)                    # (S, 64)
    a3 = _conv3x3_relu(lambda kh: merged_taps(a2_ref, kh), w3, b3)     # (S,128) f32

    # conv4 (1x1) + ReLU -> (S, 4); rows with oh/ow >= 17 are don't-care (finite).
    a4 = jnp.dot(a3.astype(jnp.bfloat16), w4[...],
                 preferred_element_type=jnp.float32) + b4[...]
    a4 = jnp.maximum(a4, 0.0).astype(jnp.bfloat16)                      # (S, 4)

    # fc1: contract the strided (S, 4) activation channel by channel; w5[c] is
    # zero outside the valid 17x17 rows, so the don't-care rows contribute 0.
    h = None
    for c in range(4):
        part = jnp.dot(w5[c], a4[:, c:c + 1],
                       preferred_element_type=jnp.float32)             # (128, 1)
        h = part if h is None else h + part
    h = jnp.maximum(h + b5[...], 0.0).astype(jnp.bfloat16)              # (128, 1)

    # fc2 -> (4, 1) Q-values for this image.
    o_ref[...] = jnp.dot(w6[...], h, preferred_element_type=jnp.float32) + b6[...]


# ----------------------------------------------------------------------------
# pallas_call wrapper
# ----------------------------------------------------------------------------
def _const_spec(a):
    zeros = (0,) * a.ndim
    return pl.BlockSpec(a.shape, lambda i, _z=zeros: _z)


def dqn_forward(params, x):
    """x: (B, 4, 21, 21) NCHW float32 -> (B, 4) Q-values."""
    B, C, H, W = x.shape
    assert (C, H, W) == (4, H_IN, H_IN), (C, H, W)

    # NCHW -> NHWC; conv1's padding=1 becomes a leading pad of 1, the trailing
    # pad rounds the 23-wide padded image up to the row stride (24).
    xp = jnp.transpose(x.astype(jnp.float32), (0, 2, 3, 1))
    xp = jnp.pad(xp, ((0, 0), (1, W_STRIDE - H - 1), (1, W_STRIDE - W - 1), (0, 0)))
    xp = xp.reshape(B, S, C)
    xp = jnp.pad(xp, ((0, 0), (0, TAIL + 2), (0, 0)))        # zero tail rows
    # Pre-merge conv1's kw taps along channels (free in XLA): (B, S+TAIL, 12).
    xcat = jnp.concatenate([xp[:, kw:kw + S + TAIL, :] for kw in range(3)],
                           axis=-1).astype(jnp.bfloat16)

    weights = (params["c1_w"], params["c1_b"], params["c2_w"], params["c2_b"],
               params["c3_w"], params["c3_b"], params["c4_w"], params["c4_b"],
               params["f1_w"], params["f1_b"], params["f2_w"], params["f2_b"])

    flops = 2 * B * (S * (9 * 4 * 32 + 9 * 32 * 64 + 9 * 64 * 128 + 128 * 4)
                     + S * 4 * 128 + 128 * 4)
    bytes_accessed = (int(xcat.size) * 2
                      + sum(int(w.size) * w.dtype.itemsize for w in weights)
                      + B * 4 * 4)

    out = pl.pallas_call(
        _dqn_kernel,
        out_shape=jax.ShapeDtypeStruct((B, 4, 1), jnp.float32),
        grid_spec=pltpu.PrefetchScalarGridSpec(
            num_scalar_prefetch=0,
            grid=(B,),
            in_specs=[pl.BlockSpec((None, S + TAIL, 3 * C), lambda i: (i, 0, 0))]
                     + [_const_spec(w) for w in weights],
            out_specs=pl.BlockSpec((None, 4, 1), lambda i: (i, 0, 0)),
            scratch_shapes=[pltpu.VMEM((S + TAIL, 32), jnp.float32),
                            pltpu.VMEM((S + TAIL, 64), jnp.float32)],
        ),
        compiler_params=pltpu.CompilerParams(
            dimension_semantics=("parallel",)),
        cost_estimate=pl.CostEstimate(flops=flops, transcendentals=0,
                                      bytes_accessed=bytes_accessed),
    )(xcat, *weights)
    return out[:, :, 0]


# ----------------------------------------------------------------------------
# Parameters: PyTorch-layout synthetic init + one-time repacking for the kernel
# ----------------------------------------------------------------------------
def init_params(key):
    """Deterministic synthetic weights in PyTorch layouts (Conv2d OIHW, Linear (out,in))."""
    ks = jax.random.split(key, 12)

    def u(k, shape, fan_in):
        bound = float(fan_in) ** -0.5
        return jax.random.uniform(k, shape, jnp.float32, -bound, bound)

    p = {}
    p["c1_w"] = u(ks[0], (32, 4, 3, 3), 4 * 9);    p["c1_b"] = u(ks[1], (32,), 4 * 9)
    p["c2_w"] = u(ks[2], (64, 32, 3, 3), 32 * 9);  p["c2_b"] = u(ks[3], (64,), 32 * 9)
    p["c3_w"] = u(ks[4], (128, 64, 3, 3), 64 * 9); p["c3_b"] = u(ks[5], (128,), 64 * 9)
    p["c4_w"] = u(ks[6], (4, 128, 1, 1), 128);     p["c4_b"] = u(ks[7], (4,), 128)
    p["f1_w"] = u(ks[8], (128, 4 * 17 * 17), 4 * 17 * 17)
    p["f1_b"] = u(ks[9], (128,), 4 * 17 * 17)
    p["f2_w"] = u(ks[10], (4, 128), 128)
    p["f2_b"] = u(ks[11], (4,), 128)
    return p


def prepare_params(raw):
    """One-time repacking of PyTorch-layout weights into kernel-ready (bf16) layouts."""
    def conv_taps(w):                       # (OC, IC, 3, 3) -> (3, 3*IC, OC), [kh, kw*IC+ic, oc]
        oc, ic, kh, kw = w.shape
        return (jnp.transpose(w, (2, 3, 1, 0))
                .reshape(kh, kw * ic, oc).astype(jnp.bfloat16))

    p = {}
    p["c1_w"] = conv_taps(raw["c1_w"]); p["c1_b"] = raw["c1_b"].reshape(1, -1)
    p["c2_w"] = conv_taps(raw["c2_w"]); p["c2_b"] = raw["c2_b"].reshape(1, -1)
    p["c3_w"] = conv_taps(raw["c3_w"]); p["c3_b"] = raw["c3_b"].reshape(1, -1)
    p["c4_w"] = raw["c4_w"].reshape(4, 128).T.astype(jnp.bfloat16)   # (128, 4)
    p["c4_b"] = raw["c4_b"].reshape(1, -1)

    # fc1 -> per-channel strided slabs: w5[c, j, oh*24 + ow] = f1_w[j, c*289 + oh*17 + ow];
    # all other (invalid) row columns are zero, masking the conv4 don't-care rows.
    f1 = raw["f1_w"].reshape(128, 4, 17, 17)
    w5 = jnp.zeros((4, 128, W_STRIDE, W_STRIDE), jnp.float32)
    w5 = w5.at[:, :, :17, :17].set(jnp.transpose(f1, (1, 0, 2, 3)))
    p["f1_w"] = w5.reshape(4, 128, S).astype(jnp.bfloat16)
    p["f1_b"] = raw["f1_b"].reshape(128, 1)
    p["f2_w"] = raw["f2_w"].astype(jnp.bfloat16)                      # (4, 128)
    p["f2_b"] = raw["f2_b"].reshape(4, 1)
    return p


# ----------------------------------------------------------------------------
# Plain-XLA reference (mirrors the PyTorch module) for a correctness check
# ----------------------------------------------------------------------------
def reference_forward(raw, x):
    def conv(y, w, b, pad):
        y = lax.conv_general_dilated(y, w, (1, 1), [(pad, pad), (pad, pad)],
                                     dimension_numbers=("NCHW", "OIHW", "NCHW"),
                                     precision=lax.Precision.HIGHEST)
        return jax.nn.relu(y + b.reshape(1, -1, 1, 1))

    y = conv(x, raw["c1_w"], raw["c1_b"], 1)
    y = conv(y, raw["c2_w"], raw["c2_b"], 0)
    y = conv(y, raw["c3_w"], raw["c3_b"], 0)
    y = conv(y, raw["c4_w"], raw["c4_b"], 0)
    y = y.reshape(y.shape[0], -1)
    y = jax.nn.relu(jnp.dot(y, raw["f1_w"].T, precision=lax.Precision.HIGHEST)
                    + raw["f1_b"])
    return jnp.dot(y, raw["f2_w"].T, precision=lax.Precision.HIGHEST) + raw["f2_b"]


if __name__ == "__main__":
    key = jax.random.PRNGKey(0)
    pkey, xkey = jax.random.split(key)
    raw = init_params(pkey)
    params = prepare_params(raw)

    # Input spatial size must be 21x21 so conv4's output is 4*17*17 = fc1's
    # input, as implied by the PyTorch module.
    batch = 2
    x = jax.random.normal(xkey, (batch, 4, H_IN, H_IN), jnp.float32)

    out = jax.jit(dqn_forward)(params, x)
    out = jax.block_until_ready(out)
    assert out.shape == (batch, 4), out.shape
    assert bool(jnp.all(jnp.isfinite(out)))

    ref = reference_forward(raw, x)
    err = float(jnp.max(jnp.abs(out - ref)))
    assert err < 2e-2, f"mismatch vs reference (bf16 matmuls): {err}"
    print("KERNEL_OK")
</pallas_src>

<mosaic_0001>
module attributes {stable_mosaic.version = 11 : i64} {
  func.func @_dqn_kernel(%arg0: i32, %arg1: memref<1x640x12xbf16, #tpu.memory_space<vmem>>, %arg2: memref<3x12x32xbf16, #tpu.memory_space<vmem>>, %arg3: memref<1x32xf32, #tpu.memory_space<vmem>>, %arg4: memref<3x96x64xbf16, #tpu.memory_space<vmem>>, %arg5: memref<1x64xf32, #tpu.memory_space<vmem>>, %arg6: memref<3x192x128xbf16, #tpu.memory_space<vmem>>, %arg7: memref<1x128xf32, #tpu.memory_space<vmem>>, %arg8: memref<128x4xbf16, #tpu.memory_space<vmem>>, %arg9: memref<1x4xf32, #tpu.memory_space<vmem>>, %arg10: memref<4x128x576xbf16, #tpu.memory_space<vmem>>, %arg11: memref<128x1xf32, #tpu.memory_space<vmem>>, %arg12: memref<4x128xbf16, #tpu.memory_space<vmem>>, %arg13: memref<4x1xf32, #tpu.memory_space<vmem>>, %arg14: memref<1x4x1xf32, #tpu.memory_space<vmem>>, %arg15: memref<640x32xf32, #tpu.memory_space<vmem>>, %arg16: memref<640x64xf32, #tpu.memory_space<vmem>>) attributes {dimension_semantics = [#tpu.dimension_semantics<parallel>], iteration_bounds = array<i64: 2>, scalar_prefetch = 0 : i64, scratch_operands = 2 : i64, tpu.core_type = #tpu.core_type<tc>, window_params = [{transform_indices = @transform_0, window_bounds = array<i64: 1, 640, 12>}, {pipeline_mode = #tpu.pipeline_mode<synchronous>, transform_indices = @transform_1, window_bounds = array<i64: 3, 12, 32>}, {pipeline_mode = #tpu.pipeline_mode<synchronous>, transform_indices = @transform_2, window_bounds = array<i64: 1, 32>}, {pipeline_mode = #tpu.pipeline_mode<synchronous>, transform_indices = @transform_3, window_bounds = array<i64: 3, 96, 64>}, {pipeline_mode = #tpu.pipeline_mode<synchronous>, transform_indices = @transform_4, window_bounds = array<i64: 1, 64>}, {pipeline_mode = #tpu.pipeline_mode<synchronous>, transform_indices = @transform_5, window_bounds = array<i64: 3, 192, 128>}, {pipeline_mode = #tpu.pipeline_mode<synchronous>, transform_indices = @transform_6, window_bounds = array<i64: 1, 128>}, {pipeline_mode = #tpu.pipeline_mode<synchronous>, transform_indices = @transform_7, window_bounds = array<i64: 128, 4>}, {pipeline_mode = #tpu.pipeline_mode<synchronous>, transform_indices = @transform_8, window_bounds = array<i64: 1, 4>}, {pipeline_mode = #tpu.pipeline_mode<synchronous>, transform_indices = @transform_9, window_bounds = array<i64: 4, 128, 576>}, {pipeline_mode = #tpu.pipeline_mode<synchronous>, transform_indices = @transform_10, window_bounds = array<i64: 128, 1>}, {pipeline_mode = #tpu.pipeline_mode<synchronous>, transform_indices = @transform_11, window_bounds = array<i64: 4, 128>}, {pipeline_mode = #tpu.pipeline_mode<synchronous>, transform_indices = @transform_12, window_bounds = array<i64: 4, 1>}, {transform_indices = @transform_13, window_bounds = array<i64: 1, 4, 1>}]} {
    %cst = arith.constant 0.000000e+00 : f32
    %0 = vector.broadcast %cst : f32 to vector<64x32xf32>
    %c576 = arith.constant 576 : index
    %c0 = arith.constant 0 : index
    %1 = vector.load %arg15[%c576, %c0] : memref<640x32xf32, #tpu.memory_space<vmem>>, vector<64x32xf32>
    tpu.vector_store %arg15[%c576, %c0], %0 {strides = array<i32>} : memref<640x32xf32, #tpu.memory_space<vmem>>, vector<64x32xf32>,
    %cst_0 = arith.constant 0.000000e+00 : f32
    %2 = vector.broadcast %cst_0 : f32 to vector<64x64xf32>
    %c576_1 = arith.constant 576 : index
    %c0_2 = arith.constant 0 : index
    %3 = vector.load %arg16[%c576_1, %c0_2] : memref<640x64xf32, #tpu.memory_space<vmem>>, vector<64x64xf32>
    tpu.vector_store %arg16[%c576_1, %c0_2], %2 {strides = array<i32>} : memref<640x64xf32, #tpu.memory_space<vmem>>, vector<64x64xf32>,
    %c0_3 = arith.constant 0 : index
    %c0_4 = arith.constant 0 : index
    %c0_5 = arith.constant 0 : index
    %4 = vector.load %arg1[%c0_3, %c0_4, %c0_5] : memref<1x640x12xbf16, #tpu.memory_space<vmem>>, vector<1x576x12xbf16>
    %5 = vector.shape_cast %4 : vector<1x576x12xbf16> to vector<576x12xbf16>
    %c0_6 = arith.constant 0 : index
    %c0_7 = arith.constant 0 : index
    %c0_8 = arith.constant 0 : index
    %6 = vector.load %arg2[%c0_6, %c0_7, %c0_8] : memref<3x12x32xbf16, #tpu.memory_space<vmem>>, vector<1x12x32xbf16>
    %7 = vector.shape_cast %6 : vector<1x12x32xbf16> to vector<12x32xbf16>
    %cst_9 = arith.constant dense<0.000000e+00> : vector<576x32xf32>
    %8 = tpu.matmul %5, %7, %cst_9 {dimension_numbers = #tpu.dot_dimension_numbers<[1], [0], [0], [1], [0, 0, 1, 1], [], []>} : vector<576x12xbf16>, vector<12x32xbf16>, vector<576x32xf32> -> vector<576x32xf32>
    %c0_10 = arith.constant 0 : index
    %c24 = arith.constant 24 : index
    %c0_11 = arith.constant 0 : index
    %9 = vector.load %arg1[%c0_10, %c24, %c0_11] : memref<1x640x12xbf16, #tpu.memory_space<vmem>>, vector<1x576x12xbf16>
    %10 = vector.shape_cast %9 : vector<1x576x12xbf16> to vector<576x12xbf16>
    %c1 = arith.constant 1 : index
    %c0_12 = arith.constant 0 : index
    %c0_13 = arith.constant 0 : index
    %11 = vector.load %arg2[%c1, %c0_12, %c0_13] : memref<3x12x32xbf16, #tpu.memory_space<vmem>>, vector<1x12x32xbf16>
    %12 = vector.shape_cast %11 : vector<1x12x32xbf16> to vector<12x32xbf16>
    %cst_14 = arith.constant dense<0.000000e+00> : vector<576x32xf32>
    %13 = tpu.matmul %10, %12, %cst_14 {dimension_numbers = #tpu.dot_dimension_numbers<[1], [0], [0], [1], [0, 0, 1, 1], [], []>} : vector<576x12xbf16>, vector<12x32xbf16>, vector<576x32xf32> -> vector<576x32xf32>
    %14 = arith.addf %8, %13 : vector<576x32xf32>
    %c0_15 = arith.constant 0 : index
    %c48 = arith.constant 48 : index
    %c0_16 = arith.constant 0 : index
    %15 = vector.load %arg1[%c0_15, %c48, %c0_16] : memref<1x640x12xbf16, #tpu.memory_space<vmem>>, vector<1x576x12xbf16>
    %16 = vector.shape_cast %15 : vector<1x576x12xbf16> to vector<576x12xbf16>
    %c2 = arith.constant 2 : index
    %c0_17 = arith.constant 0 : index
    %c0_18 = arith.constant 0 : index
    %17 = vector.load %arg2[%c2, %c0_17, %c0_18] : memref<3x12x32xbf16, #tpu.memory_space<vmem>>, vector<1x12x32xbf16>
    %18 = vector.shape_cast %17 : vector<1x12x32xbf16> to vector<12x32xbf16>
    %cst_19 = arith.constant dense<0.000000e+00> : vector<576x32xf32>
    %19 = tpu.matmul %16, %18, %cst_19 {dimension_numbers = #tpu.dot_dimension_numbers<[1], [0], [0], [1], [0, 0, 1, 1], [], []>} : vector<576x12xbf16>, vector<12x32xbf16>, vector<576x32xf32> -> vector<576x32xf32>
    %20 = arith.addf %14, %19 : vector<576x32xf32>
    %c0_20 = arith.constant 0 : index
    %c0_21 = arith.constant 0 : index
    %21 = vector.load %arg3[%c0_20, %c0_21] : memref<1x32xf32, #tpu.memory_space<vmem>>, vector<1x32xf32>
    %22 = vector.broadcast %21 : vector<1x32xf32> to vector<576x32xf32>
    %23 = arith.addf %20, %22 : vector<576x32xf32>
    %cst_22 = arith.constant 0.000000e+00 : f32
    %24 = vector.broadcast %cst_22 : f32 to vector<576x32xf32>
    %25 = arith.maximumf %23, %24 : vector<576x32xf32>
    %c0_23 = arith.constant 0 : index
    %c0_24 = arith.constant 0 : index
    %26 = vector.load %arg15[%c0_23, %c0_24] : memref<640x32xf32, #tpu.memory_space<vmem>>, vector<576x32xf32>
    tpu.vector_store %arg15[%c0_23, %c0_24], %25 {strides = array<i32>} : memref<640x32xf32, #tpu.memory_space<vmem>>, vector<576x32xf32>,
    %c0_25 = arith.constant 0 : index
    %c0_26 = arith.constant 0 : index
    %27 = vector.load %arg15[%c0_25, %c0_26] : memref<640x32xf32, #tpu.memory_space<vmem>>, vector<576x32xf32>
    %c1_27 = arith.constant 1 : index
    %c0_28 = arith.constant 0 : index
    %28 = vector.load %arg15[%c1_27, %c0_28] : memref<640x32xf32, #tpu.memory_space<vmem>>, vector<576x32xf32>
    %c2_29 = arith.constant 2 : index
    %c0_30 = arith.constant 0 : index
    %29 = vector.load %arg15[%c2_29, %c0_30] : memref<640x32xf32, #tpu.memory_space<vmem>>, vector<576x32xf32>
    %30 = tpu.concatenate %27, %28, %29 in 1 : vector<576x32xf32>, vector<576x32xf32>, vector<576x32xf32> -> vector<576x96xf32>
    %31 = arith.truncf %30 : vector<576x96xf32> to vector<576x96xbf16>
    %c0_31 = arith.constant 0 : index
    %c0_32 = arith.constant 0 : index
    %c0_33 = arith.constant 0 : index
    %32 = vector.load %arg4[%c0_31, %c0_32, %c0_33] : memref<3x96x64xbf16, #tpu.memory_space<vmem>>, vector<1x96x64xbf16>
    %33 = vector.shape_cast %32 : vector<1x96x64xbf16> to vector<96x64xbf16>
    %cst_34 = arith.constant dense<0.000000e+00> : vector<576x64xf32>
    %34 = tpu.matmul %31, %33, %cst_34 {dimension_numbers = #tpu.dot_dimension_numbers<[1], [0], [0], [1], [0, 0, 1, 1], [], []>} : vector<576x96xbf16>, vector<96x64xbf16>, vector<576x64xf32> -> vector<576x64xf32>
    %c24_35 = arith.constant 24 : index
    %c0_36 = arith.constant 0 : index
    %35 = vector.load %arg15[%c24_35, %c0_36] : memref<640x32xf32, #tpu.memory_space<vmem>>, vector<576x32xf32>
    %c25 = arith.constant 25 : index
    %c0_37 = arith.constant 0 : index
    %36 = vector.load %arg15[%c25, %c0_37] : memref<640x32xf32, #tpu.memory_space<vmem>>, vector<576x32xf32>
    %c26 = arith.constant 26 : index
    %c0_38 = arith.constant 0 : index
    %37 = vector.load %arg15[%c26, %c0_38] : memref<640x32xf32, #tpu.memory_space<vmem>>, vector<576x32xf32>
    %38 = tpu.concatenate %35, %36, %37 in 1 : vector<576x32xf32>, vector<576x32xf32>, vector<576x32xf32> -> vector<576x96xf32>
    %39 = arith.truncf %38 : vector<576x96xf32> to vector<576x96xbf16>
    %c1_39 = arith.constant 1 : index
    %c0_40 = arith.constant 0 : index
    %c0_41 = arith.constant 0 : index
    %40 = vector.load %arg4[%c1_39, %c0_40, %c0_41] : memref<3x96x64xbf16, #tpu.memory_space<vmem>>, vector<1x96x64xbf16>
    %41 = vector.shape_cast %40 : vector<1x96x64xbf16> to vector<96x64xbf16>
    %cst_42 = arith.constant dense<0.000000e+00> : vector<576x64xf32>
    %42 = tpu.matmul %39, %41, %cst_42 {dimension_numbers = #tpu.dot_dimension_numbers<[1], [0], [0], [1], [0, 0, 1, 1], [], []>} : vector<576x96xbf16>, vector<96x64xbf16>, vector<576x64xf32> -> vector<576x64xf32>
    %43 = arith.addf %34, %42 : vector<576x64xf32>
    %c48_43 = arith.constant 48 : index
    %c0_44 = arith.constant 0 : index
    %44 = vector.load %arg15[%c48_43, %c0_44] : memref<640x32xf32, #tpu.memory_space<vmem>>, vector<576x32xf32>
    %c49 = arith.constant 49 : index
    %c0_45 = arith.constant 0 : index
    %45 = vector.load %arg15[%c49, %c0_45] : memref<640x32xf32, #tpu.memory_space<vmem>>, vector<576x32xf32>
    %c50 = arith.constant 50 : index
    %c0_46 = arith.constant 0 : index
    %46 = vector.load %arg15[%c50, %c0_46] : memref<640x32xf32, #tpu.memory_space<vmem>>, vector<576x32xf32>
    %47 = tpu.concatenate %44, %45, %46 in 1 : vector<576x32xf32>, vector<576x32xf32>, vector<576x32xf32> -> vector<576x96xf32>
    %48 = arith.truncf %47 : vector<576x96xf32> to vector<576x96xbf16>
    %c2_47 = arith.constant 2 : index
    %c0_48 = arith.constant 0 : index
    %c0_49 = arith.constant 0 : index
    %49 = vector.load %arg4[%c2_47, %c0_48, %c0_49] : memref<3x96x64xbf16, #tpu.memory_space<vmem>>, vector<1x96x64xbf16>
    %50 = vector.shape_cast %49 : vector<1x96x64xbf16> to vector<96x64xbf16>
    %cst_50 = arith.constant dense<0.000000e+00> : vector<576x64xf32>
    %51 = tpu.matmul %48, %50, %cst_50 {dimension_numbers = #tpu.dot_dimension_numbers<[1], [0], [0], [1], [0, 0, 1, 1], [], []>} : vector<576x96xbf16>, vector<96x64xbf16>, vector<576x64xf32> -> vector<576x64xf32>
    %52 = arith.addf %43, %51 : vector<576x64xf32>
    %c0_51 = arith.constant 0 : index
    %c0_52 = arith.constant 0 : index
    %53 = vector.load %arg5[%c0_51, %c0_52] : memref<1x64xf32, #tpu.memory_space<vmem>>, vector<1x64xf32>
    %54 = vector.broadcast %53 : vector<1x64xf32> to vector<576x64xf32>
    %55 = arith.addf %52, %54 : vector<576x64xf32>
    %cst_53 = arith.constant 0.000000e+00 : f32
    %56 = vector.broadcast %cst_53 : f32 to vector<576x64xf32>
    %57 = arith.maximumf %55, %56 : vector<576x64xf32>
    %c0_54 = arith.constant 0 : index
    %c0_55 = arith.constant 0 : index
    %58 = vector.load %arg16[%c0_54, %c0_55] : memref<640x64xf32, #tpu.memory_space<vmem>>, vector<576x64xf32>
    tpu.vector_store %arg16[%c0_54, %c0_55], %57 {strides = array<i32>} : memref<640x64xf32, #tpu.memory_space<vmem>>, vector<576x64xf32>,
    %c0_56 = arith.constant 0 : index
    %c0_57 = arith.constant 0 : index
    %59 = vector.load %arg16[%c0_56, %c0_57] : memref<640x64xf32, #tpu.memory_space<vmem>>, vector<576x64xf32>
    %c1_58 = arith.constant 1 : index
    %c0_59 = arith.constant 0 : index
    %60 = vector.load %arg16[%c1_58, %c0_59] : memref<640x64xf32, #tpu.memory_space<vmem>>, vector<576x64xf32>
    %c2_60 = arith.constant 2 : index
    %c0_61 = arith.constant 0 : index
    %61 = vector.load %arg16[%c2_60, %c0_61] : memref<640x64xf32, #tpu.memory_space<vmem>>, vector<576x64xf32>
    %62 = tpu.concatenate %59, %60, %61 in 1 : vector<576x64xf32>, vector<576x64xf32>, vector<576x64xf32> -> vector<576x192xf32>
    %63 = arith.truncf %62 : vector<576x192xf32> to vector<576x192xbf16>
    %c0_62 = arith.constant 0 : index
    %c0_63 = arith.constant 0 : index
    %c0_64 = arith.constant 0 : index
    %64 = vector.load %arg6[%c0_62, %c0_63, %c0_64] : memref<3x192x128xbf16, #tpu.memory_space<vmem>>, vector<1x192x128xbf16>
    %65 = vector.shape_cast %64 : vector<1x192x128xbf16> to vector<192x128xbf16>
    %cst_65 = arith.constant dense<0.000000e+00> : vector<576x128xf32>
    %66 = tpu.matmul %63, %65, %cst_65 {dimension_numbers = #tpu.dot_dimension_numbers<[1], [0], [0], [1], [0, 0, 1, 1], [], []>} : vector<576x192xbf16>, vector<192x128xbf16>, vector<576x128xf32> -> vector<576x128xf32>
    %c24_66 = arith.constant 24 : index
    %c0_67 = arith.constant 0 : index
    %67 = vector.load %arg16[%c24_66, %c0_67] : memref<640x64xf32, #tpu.memory_space<vmem>>, vector<576x64xf32>
    %c25_68 = arith.constant 25 : index
    %c0_69 = arith.constant 0 : index
    %68 = vector.load %arg16[%c25_68, %c0_69] : memref<640x64xf32, #tpu.memory_space<vmem>>, vector<576x64xf32>
    %c26_70 = arith.constant 26 : index
    %c0_71 = arith.constant 0 : index
    %69 = vector.load %arg16[%c26_70, %c0_71] : memref<640x64xf32, #tpu.memory_space<vmem>>, vector<576x64xf32>
    %70 = tpu.concatenate %67, %68, %69 in 1 : vector<576x64xf32>, vector<576x64xf32>, vector<576x64xf32> -> vector<576x192xf32>
    %71 = arith.truncf %70 : vector<576x192xf32> to vector<576x192xbf16>
    %c1_72 = arith.constant 1 : index
    %c0_73 = arith.constant 0 : index
    %c0_74 = arith.constant 0 : index
    %72 = vector.load %arg6[%c1_72, %c0_73, %c0_74] : memref<3x192x128xbf16, #tpu.memory_space<vmem>>, vector<1x192x128xbf16>
    %73 = vector.shape_cast %72 : vector<1x192x128xbf16> to vector<192x128xbf16>
    %cst_75 = arith.constant dense<0.000000e+00> : vector<576x128xf32>
    %74 = tpu.matmul %71, %73, %cst_75 {dimension_numbers = #tpu.dot_dimension_numbers<[1], [0], [0], [1], [0, 0, 1, 1], [], []>} : vector<576x192xbf16>, vector<192x128xbf16>, vector<576x128xf32> -> vector<576x128xf32>
    %75 = arith.addf %66, %74 : vector<576x128xf32>
    %c48_76 = arith.constant 48 : index
    %c0_77 = arith.constant 0 : index
    %76 = vector.load %arg16[%c48_76, %c0_77] : memref<640x64xf32, #tpu.memory_space<vmem>>, vector<576x64xf32>
    %c49_78 = arith.constant 49 : index
    %c0_79 = arith.constant 0 : index
    %77 = vector.load %arg16[%c49_78, %c0_79] : memref<640x64xf32, #tpu.memory_space<vmem>>, vector<576x64xf32>
    %c50_80 = arith.constant 50 : index
    %c0_81 = arith.constant 0 : index
    %78 = vector.load %arg16[%c50_80, %c0_81] : memref<640x64xf32, #tpu.memory_space<vmem>>, vector<576x64xf32>
    %79 = tpu.concatenate %76, %77, %78 in 1 : vector<576x64xf32>, vector<576x64xf32>, vector<576x64xf32> -> vector<576x192xf32>
    %80 = arith.truncf %79 : vector<576x192xf32> to vector<576x192xbf16>
    %c2_82 = arith.constant 2 : index
    %c0_83 = arith.constant 0 : index
    %c0_84 = arith.constant 0 : index
    %81 = vector.load %arg6[%c2_82, %c0_83, %c0_84] : memref<3x192x128xbf16, #tpu.memory_space<vmem>>, vector<1x192x128xbf16>
    %82 = vector.shape_cast %81 : vector<1x192x128xbf16> to vector<192x128xbf16>
    %cst_85 = arith.constant dense<0.000000e+00> : vector<576x128xf32>
    %83 = tpu.matmul %80, %82, %cst_85 {dimension_numbers = #tpu.dot_dimension_numbers<[1], [0], [0], [1], [0, 0, 1, 1], [], []>} : vector<576x192xbf16>, vector<192x128xbf16>, vector<576x128xf32> -> vector<576x128xf32>
    %84 = arith.addf %75, %83 : vector<576x128xf32>
    %c0_86 = arith.constant 0 : index
    %c0_87 = arith.constant 0 : index
    %85 = vector.load %arg7[%c0_86, %c0_87] : memref<1x128xf32, #tpu.memory_space<vmem>>, vector<1x128xf32>
    %86 = vector.broadcast %85 : vector<1x128xf32> to vector<576x128xf32>
    %87 = arith.addf %84, %86 : vector<576x128xf32>
    %cst_88 = arith.constant 0.000000e+00 : f32
    %88 = vector.broadcast %cst_88 : f32 to vector<576x128xf32>
    %89 = arith.maximumf %87, %88 : vector<576x128xf32>
    %90 = arith.truncf %89 : vector<576x128xf32> to vector<576x128xbf16>
    %c0_89 = arith.constant 0 : index
    %c0_90 = arith.constant 0 : index
    %91 = vector.load %arg8[%c0_89, %c0_90] : memref<128x4xbf16, #tpu.memory_space<vmem>>, vector<128x4xbf16>
    %cst_91 = arith.constant dense<0.000000e+00> : vector<576x4xf32>
    %92 = tpu.matmul %90, %91, %cst_91 {dimension_numbers = #tpu.dot_dimension_numbers<[1], [0], [0], [1], [0, 0, 1, 1], [], []>} : vector<576x128xbf16>, vector<128x4xbf16>, vector<576x4xf32> -> vector<576x4xf32>
    %c0_92 = arith.constant 0 : index
    %c0_93 = arith.constant 0 : index
    %93 = vector.load %arg9[%c0_92, %c0_93] : memref<1x4xf32, #tpu.memory_space<vmem>>, vector<1x4xf32>
    %94 = vector.broadcast %93 : vector<1x4xf32> to vector<576x4xf32>
    %95 = arith.addf %92, %94 : vector<576x4xf32>
    %cst_94 = arith.constant 0.000000e+00 : f32
    %96 = vector.broadcast %cst_94 : f32 to vector<576x4xf32>
    %97 = arith.maximumf %95, %96 : vector<576x4xf32>
    %98 = arith.truncf %97 : vector<576x4xf32> to vector<576x4xbf16>
    %c0_95 = arith.constant 0 : index
    %c0_96 = arith.constant 0 : index
    %c0_97 = arith.constant 0 : index
    %99 = vector.load %arg10[%c0_95, %c0_96, %c0_97] : memref<4x128x576xbf16, #tpu.memory_space<vmem>>, vector<1x128x576xbf16>
    %100 = vector.shape_cast %99 : vector<1x128x576xbf16> to vector<128x576xbf16>
    %101 = vector.extract_strided_slice %98 {offsets = [0, 0], sizes = [576, 1], strides = [1, 1]} : vector<576x4xbf16> to vector<576x1xbf16>
    %cst_98 = arith.constant dense<0.000000e+00> : vector<128x1xf32>
    %102 = tpu.matmul %100, %101, %cst_98 {dimension_numbers = #tpu.dot_dimension_numbers<[1], [0], [0], [1], [0, 0, 1, 1], [], []>} : vector<128x576xbf16>, vector<576x1xbf16>, vector<128x1xf32> -> vector<128x1xf32>
    %c1_99 = arith.constant 1 : index
    %c0_100 = arith.constant 0 : index
    %c0_101 = arith.constant 0 : index
    %103 = vector.load %arg10[%c1_99, %c0_100, %c0_101] : memref<4x128x576xbf16, #tpu.memory_space<vmem>>, vector<1x128x576xbf16>
    %104 = vector.shape_cast %103 : vector<1x128x576xbf16> to vector<128x576xbf16>
    %105 = vector.extract_strided_slice %98 {offsets = [0, 1], sizes = [576, 1], strides = [1, 1]} : vector<576x4xbf16> to vector<576x1xbf16>
    %cst_102 = arith.constant dense<0.000000e+00> : vector<128x1xf32>
    %106 = tpu.matmul %104, %105, %cst_102 {dimension_numbers = #tpu.dot_dimension_numbers<[1], [0], [0], [1], [0, 0, 1, 1], [], []>} : vector<128x576xbf16>, vector<576x1xbf16>, vector<128x1xf32> -> vector<128x1xf32>
    %107 = arith.addf %102, %106 : vector<128x1xf32>
    %c2_103 = arith.constant 2 : index
    %c0_104 = arith.constant 0 : index
    %c0_105 = arith.constant 0 : index
    %108 = vector.load %arg10[%c2_103, %c0_104, %c0_105] : memref<4x128x576xbf16, #tpu.memory_space<vmem>>, vector<1x128x576xbf16>
    %109 = vector.shape_cast %108 : vector<1x128x576xbf16> to vector<128x576xbf16>
    %110 = vector.extract_strided_slice %98 {offsets = [0, 2], sizes = [576, 1], strides = [1, 1]} : vector<576x4xbf16> to vector<576x1xbf16>
    %cst_106 = arith.constant dense<0.000000e+00> : vector<128x1xf32>
    %111 = tpu.matmul %109, %110, %cst_106 {dimension_numbers = #tpu.dot_dimension_numbers<[1], [0], [0], [1], [0, 0, 1, 1], [], []>} : vector<128x576xbf16>, vector<576x1xbf16>, vector<128x1xf32> -> vector<128x1xf32>
    %112 = arith.addf %107, %111 : vector<128x1xf32>
    %c3 = arith.constant 3 : index
    %c0_107 = arith.constant 0 : index
    %c0_108 = arith.constant 0 : index
    %113 = vector.load %arg10[%c3, %c0_107, %c0_108] : memref<4x128x576xbf16, #tpu.memory_space<vmem>>, vector<1x128x576xbf16>
    %114 = vector.shape_cast %113 : vector<1x128x576xbf16> to vector<128x576xbf16>
    %115 = vector.extract_strided_slice %98 {offsets = [0, 3], sizes = [576, 1], strides = [1, 1]} : vector<576x4xbf16> to vector<576x1xbf16>
    %cst_109 = arith.constant dense<0.000000e+00> : vector<128x1xf32>
    %116 = tpu.matmul %114, %115, %cst_109 {dimension_numbers = #tpu.dot_dimension_numbers<[1], [0], [0], [1], [0, 0, 1, 1], [], []>} : vector<128x576xbf16>, vector<576x1xbf16>, vector<128x1xf32> -> vector<128x1xf32>
    %117 = arith.addf %112, %116 : vector<128x1xf32>
    %c0_110 = arith.constant 0 : index
    %c0_111 = arith.constant 0 : index
    %118 = vector.load %arg11[%c0_110, %c0_111] : memref<128x1xf32, #tpu.memory_space<vmem>>, vector<128x1xf32>
    %119 = arith.addf %117, %118 : vector<128x1xf32>
    %cst_112 = arith.constant 0.000000e+00 : f32
    %120 = vector.broadcast %cst_112 : f32 to vector<128x1xf32>
    %121 = arith.maximumf %119, %120 : vector<128x1xf32>
    %122 = arith.truncf %121 : vector<128x1xf32> to vector<128x1xbf16>
    %c0_113 = arith.constant 0 : index
    %c0_114 = arith.constant 0 : index
    %123 = vector.load %arg12[%c0_113, %c0_114] : memref<4x128xbf16, #tpu.memory_space<vmem>>, vector<4x128xbf16>
    %cst_115 = arith.constant dense<0.000000e+00> : vector<4x1xf32>
    %124 = tpu.matmul %123, %122, %cst_115 {dimension_numbers = #tpu.dot_dimension_numbers<[1], [0], [0], [1], [0, 0, 1, 1], [], []>} : vector<4x128xbf16>, vector<128x1xbf16>, vector<4x1xf32> -> vector<4x1xf32>
    %c0_116 = arith.constant 0 : index
    %c0_117 = arith.constant 0 : index
    %125 = vector.load %arg13[%c0_116, %c0_117] : memref<4x1xf32, #tpu.memory_space<vmem>>, vector<4x1xf32>
    %126 = arith.addf %124, %125 : vector<4x1xf32>
    %c0_118 = arith.constant 0 : index
    %c0_119 = arith.constant 0 : index
    %c0_120 = arith.constant 0 : index
    %127 = vector.load %arg14[%c0_118, %c0_119, %c0_120] : memref<1x4x1xf32, #tpu.memory_space<vmem>>, vector<1x4x1xf32>
    %128 = vector.shape_cast %127 : vector<1x4x1xf32> to vector<4x1xf32>
    %129 = vector.shape_cast %126 : vector<4x1xf32> to vector<1x4x1xf32>
    tpu.vector_store %arg14[%c0_118, %c0_119, %c0_120], %129 {strides = array<i32>} : memref<1x4x1xf32, #tpu.memory_space<vmem>>, vector<1x4x1xf32>,
    return
  }
  func.func @transform_0(%arg0: i32) -> (i32, i32, i32) {
    %c0_i32 = arith.constant 0 : i32
    %c0_i32_0 = arith.constant 0 : i32
    %c0_i32_1 = arith.constant 0 : i32
    return %arg0, %c0_i32, %c0_i32_0 : i32, i32, i32
  }
  func.func @transform_1(%arg0: i32) -> (i32, i32, i32) {
    %c0_i32 = arith.constant 0 : i32
    %c0_i32_0 = arith.constant 0 : i32
    %c0_i32_1 = arith.constant 0 : i32
    %c0_i32_2 = arith.constant 0 : i32
    return %c0_i32, %c0_i32_0, %c0_i32_1 : i32, i32, i32
  }
  func.func @transform_2(%arg0: i32) -> (i32, i32) {
    %c0_i32 = arith.constant 0 : i32
    %c0_i32_0 = arith.constant 0 : i32
    %c0_i32_1 = arith.constant 0 : i32
    return %c0_i32, %c0_i32_0 : i32, i32
  }
  func.func @transform_3(%arg0: i32) -> (i32, i32, i32) {
    %c0_i32 = arith.constant 0 : i32
    %c0_i32_0 = arith.constant 0 : i32
    %c0_i32_1 = arith.constant 0 : i32
    %c0_i32_2 = arith.constant 0 : i32
    return %c0_i32, %c0_i32_0, %c0_i32_1 : i32, i32, i32
  }
  func.func @transform_4(%arg0: i32) -> (i32, i32) {
    %c0_i32 = arith.constant 0 : i32
    %c0_i32_0 = arith.constant 0 : i32
    %c0_i32_1 = arith.constant 0 : i32
    return %c0_i32, %c0_i32_0 : i32, i32
  }
  func.func @transform_5(%arg0: i32) -> (i32, i32, i32) {
    %c0_i32 = arith.constant 0 : i32
    %c0_i32_0 = arith.constant 0 : i32
    %c0_i32_1 = arith.constant 0 : i32
    %c0_i32_2 = arith.constant 0 : i32
    return %c0_i32, %c0_i32_0, %c0_i32_1 : i32, i32, i32
  }
  func.func @transform_6(%arg0: i32) -> (i32, i32) {
    %c0_i32 = arith.constant 0 : i32
    %c0_i32_0 = arith.constant 0 : i32
    %c0_i32_1 = arith.constant 0 : i32
    return %c0_i32, %c0_i32_0 : i32, i32
  }
  func.func @transform_7(%arg0: i32) -> (i32, i32) {
    %c0_i32 = arith.constant 0 : i32
    %c0_i32_0 = arith.constant 0 : i32
    %c0_i32_1 = arith.constant 0 : i32
    return %c0_i32, %c0_i32_0 : i32, i32
  }
  func.func @transform_8(%arg0: i32) -> (i32, i32) {
    %c0_i32 = arith.constant 0 : i32
    %c0_i32_0 = arith.constant 0 : i32
    %c0_i32_1 = arith.constant 0 : i32
    return %c0_i32, %c0_i32_0 : i32, i32
  }
  func.func @transform_9(%arg0: i32) -> (i32, i32, i32) {
    %c0_i32 = arith.constant 0 : i32
    %c0_i32_0 = arith.constant 0 : i32
    %c0_i32_1 = arith.constant 0 : i32
    %c0_i32_2 = arith.constant 0 : i32
    return %c0_i32, %c0_i32_0, %c0_i32_1 : i32, i32, i32
  }
  func.func @transform_10(%arg0: i32) -> (i32, i32) {
    %c0_i32 = arith.constant 0 : i32
    %c0_i32_0 = arith.constant 0 : i32
    %c0_i32_1 = arith.constant 0 : i32
    return %c0_i32, %c0_i32_0 : i32, i32
  }
  func.func @transform_11(%arg0: i32) -> (i32, i32) {
    %c0_i32 = arith.constant 0 : i32
    %c0_i32_0 = arith.constant 0 : i32
    %c0_i32_1 = arith.constant 0 : i32
    return %c0_i32, %c0_i32_0 : i32, i32
  }
  func.func @transform_12(%arg0: i32) -> (i32, i32) {
    %c0_i32 = arith.constant 0 : i32
    %c0_i32_0 = arith.constant 0 : i32
    %c0_i32_1 = arith.constant 0 : i32
    return %c0_i32, %c0_i32_0 : i32, i32
  }
  func.func @transform_13(%arg0: i32) -> (i32, i32, i32) {
    %c0_i32 = arith.constant 0 : i32
    %c0_i32_0 = arith.constant 0 : i32
    %c0_i32_1 = arith.constant 0 : i32
    return %arg0, %c0_i32, %c0_i32_0 : i32, i32, i32
  }
}

</mosaic_0001>

<llo_original>
// kernel: dqn_forward.1
$region0: #{dqn_forward.1}
  #allocation0 [shape = 'u32[]', space=smem, size = 0x4, offset = 0x4, fixed_abs, tag = 'smem constant byte address 0x4 - core index']
  #allocation1 [shape = 'u32[144,128]{1,0:T(1,128)}', space=vmem, size = 0x12000, scoped, tag = 'internal scratch']
  #allocation2 [shape = 'f32[640,32]{1,0:T(8,128)}', space=vmem, size = 0x50000, scoped, tag = 'scratch operand']
  #allocation3 [shape = 'f32[640,64]{1,0:T(8,128)}', space=vmem, size = 0x50000, scoped, tag = 'scratch operand']
  %s0 = inlined_call_operand.vmem [shape: bf16[2,640,12], index: 0, kind: input, shape index: {}]
  %s1 = inlined_call_operand.vmem [shape: bf16[3,12,32], index: 1, kind: input, shape index: {}]
  %s2 = inlined_call_operand.vmem [shape: f32[1,32], index: 2, kind: input, shape index: {}]
  %s3 = inlined_call_operand.vmem [shape: bf16[3,96,64], index: 3, kind: input, shape index: {}]
  %s4 = inlined_call_operand.vmem [shape: f32[1,64], index: 4, kind: input, shape index: {}]
  %s5 = inlined_call_operand.vmem [shape: bf16[3,192,128], index: 5, kind: input, shape index: {}]
  %s6 = inlined_call_operand.vmem [shape: f32[1,128], index: 6, kind: input, shape index: {}]
  %s7 = inlined_call_operand.vmem [shape: bf16[128,4], index: 7, kind: input, shape index: {}]
  %s8 = inlined_call_operand.vmem [shape: f32[1,4], index: 8, kind: input, shape index: {}]
  %s9 = inlined_call_operand.vmem [shape: bf16[4,128,576], index: 9, kind: input, shape index: {}]
  %s10 = inlined_call_operand.vmem [shape: f32[128,1], index: 10, kind: input, shape index: {}]
  %s11 = inlined_call_operand.vmem [shape: bf16[4,128], index: 11, kind: input, shape index: {}]
  %s12 = inlined_call_operand.vmem [shape: f32[4,1], index: 12, kind: input, shape index: {}]
  %s13 = inlined_call_operand.vmem [shape: f32[2,4,1], index: 13, kind: output, shape index: {}]
  %s14 = sld [smem:[#allocation0]]
  $region85: #{dqn_forward.1} parent=0
    _
  %s16 = ssub.s32 1, %s14
  %s17 = scalar_select 0, %s16, %s14
  loop: start=0, step=1, limit=4
  $region2: #{dqn_forward.1} parent=0 // loop_pre_header
    _
  $region3: #{dqn_forward.1} parent=0 // loop_header
    %s19 = sphi 0, %s23
    %p20 = scmp.ge.s32.totalorder %s19, 4
    %s29 = sphi 0, %s31
    %s32 = sphi 0, %s29
    %s33 = sphi 0, %s32
    %s49 = sphi 0, %s33
    %s53 = sphi 0, %s53
    %s55 = sphi 0, %s53
    %s56 = sphi 0, %s55
    %s70 = sphi 0, %s56
    %s74 = sphi 0, %s74
    %s76 = sphi 0, %s74
    %s77 = sphi 0, %s76
    %s91 = sphi 0, %s77
    %s95 = sphi 0, %s95
    %s97 = sphi 0, %s95
    %s98 = sphi 0, %s97
    %s112 = sphi 0, %s98
    %s116 = sphi 0, %s116
    %s118 = sphi 0, %s116
    %s119 = sphi 0, %s118
    %s133 = sphi 0, %s119
    %s137 = sphi 0, %s137
    %s139 = sphi 0, %s137
    %s140 = sphi 0, %s139
    %s154 = sphi 0, %s140
    %s158 = sphi 0, %s158
    %s160 = sphi 0, %s158
    %s161 = sphi 0, %s160
    %s175 = sphi 0, %s161
    %s179 = sphi 0, %s179
    %s181 = sphi 0, %s179
    %s182 = sphi 0, %s181
    %s196 = sphi 0, %s182
    %s200 = sphi 0, %s200
    %s202 = sphi 0, %s200
    %s203 = sphi 0, %s202
    %s217 = sphi 0, %s203
    %s221 = sphi 0, %s221
    %s223 = sphi 0, %s221
    %s224 = sphi 0, %s223
    %s238 = sphi 0, %s224
    %s242 = sphi 0, %s242
    %s244 = sphi 0, %s242
    %s245 = sphi 0, %s244
    %s259 = sphi 0, %s245
    %s263 = sphi 0, %s263
    %s265 = sphi 0, %s263
    %s266 = sphi 0, %s265
    %s280 = sphi 0, %s266
    %s284 = sphi 0, %s284
    %s286 = sphi 0, %s284
    %s287 = sphi 0, %s286
    %s301 = sphi 0, %s287
    %s307 = sphi 0, %s309
    %s310 = sphi 0, %s307
    %s311 = sphi 0, %s310
    %s327 = sphi 0, %s311
  $region4: #{dqn_forward.1} parent=0 // loop_header_branch
    %22 = sbr.rel (%p20) target = $region8
  $region5: #{dqn_forward.1} parent=0 // loop_body
    %s24 = ssub.s32 %s19, 1
    %s25 = ssub.s32 %s19, 2
    %s26 = sadd.s32 %s19, 1
    %s27 = ssub.s32 %s19, %s26
    %p28 = scmp.eq.s32.totalorder %s27, 0
    %s30 = sadd.s32 %s29, 1
    %s31 = scalar_select %p28, %s29, %s30
    %p34 = pneg %p28
    %p35 = scmp.eq.s32.totalorder %s19, 1
    %p36 = por %p34, %p35
    %p37 = scmp.ne.s32.totalorder %s29, %s32
    %p38 = scmp.eq.s32.totalorder %s19, 0
    %p39 = por %p37, %p38
    %p40 = scmp.ne.s32.totalorder %s29, %s32
    %p41 = scmp.eq.s32.totalorder %s24, 1
    %p42 = por %p40, %p41
    %p43 = scmp.ne.s32.totalorder %s32, %s33
    %p44 = scmp.eq.s32.totalorder %s24, 0
    %p45 = por %p43, %p44
    %p46 = scmp.ne.s32.totalorder %s32, %s33
    %p47 = scmp.eq.s32.totalorder %s25, 1
    %p48 = por %p46, %p47
    %p50 = scmp.ne.s32.totalorder %s33, %s49
    %p51 = scmp.eq.s32.totalorder %s25, 0
    %p52 = por %p50, %p51
    %s54 = sadd.s32 %s53, 1
    %p57 = scmp.eq.s32.totalorder %s19, 1
    %p58 = scmp.ne.s32.totalorder %s53, %s55
    %p59 = scmp.eq.s32.totalorder %s19, 0
    %p60 = por %p58, %p59
    %p61 = scmp.ne.s32.totalorder %s53, %s55
    %p62 = scmp.eq.s32.totalorder %s24, 1
    %p63 = por %p61, %p62
    %p64 = scmp.ne.s32.totalorder %s55, %s56
    %p65 = scmp.eq.s32.totalorder %s24, 0
    %p66 = por %p64, %p65
    %p67 = scmp.ne.s32.totalorder %s55, %s56
    %p68 = scmp.eq.s32.totalorder %s25, 1
    %p69 = por %p67, %p68
    %p71 = scmp.ne.s32.totalorder %s56, %s70
    %p72 = scmp.eq.s32.totalorder %s25, 0
    %p73 = por %p71, %p72
    %s75 = sadd.s32 %s74, 1
    %p78 = scmp.eq.s32.totalorder %s19, 1
    %p79 = scmp.ne.s32.totalorder %s74, %s76
    %p80 = scmp.eq.s32.totalorder %s19, 0
    %p81 = por %p79, %p80
    %p82 = scmp.ne.s32.totalorder %s74, %s76
    %p83 = scmp.eq.s32.totalorder %s24, 1
    %p84 = por %p82, %p83
    %p85 = scmp.ne.s32.totalorder %s76, %s77
    %p86 = scmp.eq.s32.totalorder %s24, 0
    %p87 = por %p85, %p86
    %p88 = scmp.ne.s32.totalorder %s76, %s77
    %p89 = scmp.eq.s32.totalorder %s25, 1
    %p90 = por %p88, %p89
    %p92 = scmp.ne.s32.totalorder %s77, %s91
    %p93 = scmp.eq.s32.totalorder %s25, 0
    %p94 = por %p92, %p93
    %s96 = sadd.s32 %s95, 1
    %p99 = scmp.eq.s32.totalorder %s19, 1
    %p100 = scmp.ne.s32.totalorder %s95, %s97
    %p101 = scmp.eq.s32.totalorder %s19, 0
    %p102 = por %p100, %p101
    %p103 = scmp.ne.s32.totalorder %s95, %s97
    %p104 = scmp.eq.s32.totalorder %s24, 1
    %p105 = por %p103, %p104
    %p106 = scmp.ne.s32.totalorder %s97, %s98
    %p107 = scmp.eq.s32.totalorder %s24, 0
    %p108 = por %p106, %p107
    %p109 = scmp.ne.s32.totalorder %s97, %s98
    %p110 = scmp.eq.s32.totalorder %s25, 1
    %p111 = por %p109, %p110
    %p113 = scmp.ne.s32.totalorder %s98, %s112
    %p114 = scmp.eq.s32.totalorder %s25, 0
    %p115 = por %p113, %p114
    %s117 = sadd.s32 %s116, 1
    %p120 = scmp.eq.s32.totalorder %s19, 1
    %p121 = scmp.ne.s32.totalorder %s116, %s118
    %p122 = scmp.eq.s32.totalorder %s19, 0
    %p123 = por %p121, %p122
    %p124 = scmp.ne.s32.totalorder %s116, %s118
    %p125 = scmp.eq.s32.totalorder %s24, 1
    %p126 = por %p124, %p125
    %p127 = scmp.ne.s32.totalorder %s118, %s119
    %p128 = scmp.eq.s32.totalorder %s24, 0
    %p129 = por %p127, %p128
    %p130 = scmp.ne.s32.totalorder %s118, %s119
    %p131 = scmp.eq.s32.totalorder %s25, 1
    %p132 = por %p130, %p131
    %p134 = scmp.ne.s32.totalorder %s119, %s133
    %p135 = scmp.eq.s32.totalorder %s25, 0
    %p136 = por %p134, %p135
    %s138 = sadd.s32 %s137, 1
    %p141 = scmp.eq.s32.totalorder %s19, 1
    %p142 = scmp.ne.s32.totalorder %s137, %s139
    %p143 = scmp.eq.s32.totalorder %s19, 0
    %p144 = por %p142, %p143
    %p145 = scmp.ne.s32.totalorder %s137, %s139
    %p146 = scmp.eq.s32.totalorder %s24, 1
    %p147 = por %p145, %p146
    %p148 = scmp.ne.s32.totalorder %s139, %s140
    %p149 = scmp.eq.s32.totalorder %s24, 0
    %p150 = por %p148, %p149
    %p151 = scmp.ne.s32.totalorder %s139, %s140
    %p152 = scmp.eq.s32.totalorder %s25, 1
    %p153 = por %p151, %p152
    %p155 = scmp.ne.s32.totalorder %s140, %s154
    %p156 = scmp.eq.s32.totalorder %s25, 0
    %p157 = por %p155, %p156
    %s159 = sadd.s32 %s158, 1
    %p162 = scmp.eq.s32.totalorder %s19, 1
    %p163 = scmp.ne.s32.totalorder %s158, %s160
    %p164 = scmp.eq.s32.totalorder %s19, 0
    %p165 = por %p163, %p164
    %p166 = scmp.ne.s32.totalorder %s158, %s160
    %p167 = scmp.eq.s32.totalorder %s24, 1
    %p168 = por %p166, %p167
    %p169 = scmp.ne.s32.totalorder %s160, %s161
    %p170 = scmp.eq.s32.totalorder %s24, 0
    %p171 = por %p169, %p170
    %p172 = scmp.ne.s32.totalorder %s160, %s161
    %p173 = scmp.eq.s32.totalorder %s25, 1
    %p174 = por %p172, %p173
    %p176 = scmp.ne.s32.totalorder %s161, %s175
    %p177 = scmp.eq.s32.totalorder %s25, 0
    %p178 = por %p176, %p177
    %s180 = sadd.s32 %s179, 1
    %p183 = scmp.eq.s32.totalorder %s19, 1
    %p184 = scmp.ne.s32.totalorder %s179, %s181
    %p185 = scmp.eq.s32.totalorder %s19, 0
    %p186 = por %p184, %p185
    %p187 = scmp.ne.s32.totalorder %s179, %s181
    %p188 = scmp.eq.s32.totalorder %s24, 1
    %p189 = por %p187, %p188
    %p190 = scmp.ne.s32.totalorder %s181, %s182
    %p191 = scmp.eq.s32.totalorder %s24, 0
    %p192 = por %p190, %p191
    %p193 = scmp.ne.s32.totalorder %s181, %s182
    %p194 = scmp.eq.s32.totalorder %s25, 1
    %p195 = por %p193, %p194
    %p197 = scmp.ne.s32.totalorder %s182, %s196
    %p198 = scmp.eq.s32.totalorder %s25, 0
    %p199 = por %p197, %p198
    %s201 = sadd.s32 %s200, 1
    %p204 = scmp.eq.s32.totalorder %s19, 1
    %p205 = scmp.ne.s32.totalorder %s200, %s202
    %p206 = scmp.eq.s32.totalorder %s19, 0
    %p207 = por %p205, %p206
    %p208 = scmp.ne.s32.totalorder %s200, %s202
    %p209 = scmp.eq.s32.totalorder %s24, 1
    %p210 = por %p208, %p209
    %p211 = scmp.ne.s32.totalorder %s202, %s203
    %p212 = scmp.eq.s32.totalorder %s24, 0
    %p213 = por %p211, %p212
    %p214 = scmp.ne.s32.totalorder %s202, %s203
    %p215 = scmp.eq.s32.totalorder %s25, 1
    %p216 = por %p214, %p215
    %p218 = scmp.ne.s32.totalorder %s203, %s217
    %p219 = scmp.eq.s32.totalorder %s25, 0
    %p220 = por %p218, %p219
    %s222 = sadd.s32 %s221, 1
    %p225 = scmp.eq.s32.totalorder %s19, 1
    %p226 = scmp.ne.s32.totalorder %s221, %s223
    %p227 = scmp.eq.s32.totalorder %s19, 0
    %p228 = por %p226, %p227
    %p229 = scmp.ne.s32.totalorder %s221, %s223
    %p230 = scmp.eq.s32.totalorder %s24, 1
    %p231 = por %p229, %p230
    %p232 = scmp.ne.s32.totalorder %s223, %s224
    %p233 = scmp.eq.s32.totalorder %s24, 0
    %p234 = por %p232, %p233
    %p235 = scmp.ne.s32.totalorder %s223, %s224
    %p236 = scmp.eq.s32.totalorder %s25, 1
    %p237 = por %p235, %p236
    %p239 = scmp.ne.s32.totalorder %s224, %s238
    %p240 = scmp.eq.s32.totalorder %s25, 0
    %p241 = por %p239, %p240
    %s243 = sadd.s32 %s242, 1
    %p246 = scmp.eq.s32.totalorder %s19, 1
    %p247 = scmp.ne.s32.totalorder %s242, %s244
    %p248 = scmp.eq.s32.totalorder %s19, 0
    %p249 = por %p247, %p248
    %p250 = scmp.ne.s32.totalorder %s242, %s244
    %p251 = scmp.eq.s32.totalorder %s24, 1
    %p252 = por %p250, %p251
    %p253 = scmp.ne.s32.totalorder %s244, %s245
    %p254 = scmp.eq.s32.totalorder %s24, 0
    %p255 = por %p253, %p254
    %p256 = scmp.ne.s32.totalorder %s244, %s245
    %p257 = scmp.eq.s32.totalorder %s25, 1
    %p258 = por %p256, %p257
    %p260 = scmp.ne.s32.totalorder %s245, %s259
    %p261 = scmp.eq.s32.totalorder %s25, 0
    %p262 = por %p260, %p261
    %s264 = sadd.s32 %s263, 1
    %p267 = scmp.eq.s32.totalorder %s19, 1
    %p268 = scmp.ne.s32.totalorder %s263, %s265
    %p269 = scmp.eq.s32.totalorder %s19, 0
    %p270 = por %p268, %p269
    %p271 = scmp.ne.s32.totalorder %s263, %s265
    %p272 = scmp.eq.s32.totalorder %s24, 1
    %p273 = por %p271, %p272
    %p274 = scmp.ne.s32.totalorder %s265, %s266
    %p275 = scmp.eq.s32.totalorder %s24, 0
    %p276 = por %p274, %p275
    %p277 = scmp.ne.s32.totalorder %s265, %s266
    %p278 = scmp.eq.s32.totalorder %s25, 1
    %p279 = por %p277, %p278
    %p281 = scmp.ne.s32.totalorder %s266, %s280
    %p282 = scmp.eq.s32.totalorder %s25, 0
    %p283 = por %p281, %p282
    %s285 = sadd.s32 %s284, 1
    %p288 = scmp.eq.s32.totalorder %s19, 1
    %p289 = scmp.ne.s32.totalorder %s284, %s286
    %p290 = scmp.eq.s32.totalorder %s19, 0
    %p291 = por %p289, %p290
    %p292 = scmp.ne.s32.totalorder %s284, %s286
    %p293 = scmp.eq.s32.totalorder %s24, 1
    %p294 = por %p292, %p293
    %p295 = scmp.ne.s32.totalorder %s286, %s287
    %p296 = scmp.eq.s32.totalorder %s24, 0
    %p297 = por %p295, %p296
    %p298 = scmp.ne.s32.totalorder %s286, %s287
    %p299 = scmp.eq.s32.totalorder %s25, 1
    %p300 = por %p298, %p299
    %p302 = scmp.ne.s32.totalorder %s287, %s301
    %p303 = scmp.eq.s32.totalorder %s25, 0
    %p304 = por %p302, %p303
    %s305 = ssub.s32 %s19, %s26
    %p306 = scmp.eq.s32.totalorder %s305, 0
    %s308 = sadd.s32 %s307, 1
    %s309 = scalar_select %p306, %s307, %s308
    %p312 = pneg %p306
    %p313 = scmp.eq.s32.totalorder %s19, 1
    %p314 = por %p312, %p313
    %p315 = scmp.ne.s32.totalorder %s307, %s310
    %p316 = scmp.eq.s32.totalorder %s19, 0
    %p317 = por %p315, %p316
    %p318 = scmp.ne.s32.totalorder %s307, %s310
    %p319 = scmp.eq.s32.totalorder %s24, 1
    %p320 = por %p318, %p319
    %p321 = scmp.ne.s32.totalorder %s310, %s311
    %p322 = scmp.eq.s32.totalorder %s24, 0
    %p323 = por %p321, %p322
    %p324 = scmp.ne.s32.totalorder %s310, %s311
    %p325 = scmp.eq.s32.totalorder %s25, 1
    %p326 = por %p324, %p325
    %p328 = scmp.ne.s32.totalorder %s311, %s327
    %p329 = scmp.eq.s32.totalorder %s25, 0
    %p330 = por %p328, %p329
    %p331 = scmp.le.s32.totalorder 1, %s19
    %p332 = scmp.lt.s32.totalorder %s19, 3
    %p333 = pnand %p331, %p332
    %p334 = pneg %p333
    // Predicated region
    $region9: #{dqn_forward.1} parent=5 // pred_check
      _
    $region10: #{dqn_forward.1} parent=5 // pred_check_branch
      %336 = sbr.rel (%p333) target = $region12
    $region11: #{dqn_forward.1} parent=5 // pred_region
      %s337 = ssub.s32 %s19, 1
      // Predicated region
      $region13: #{dqn_forward.1} parent=11 // pred_check
        %p338 = pneg %p66
      $region14: #{dqn_forward.1} parent=11 // pred_check_branch
        %340 = sbr.rel (%p338) target = $region16
      $region15: #{dqn_forward.1} parent=11 // pred_region
        _
      $region16: #{dqn_forward.1} parent=11 // pred_fallthru
        _
      // Predicated region
      $region17: #{dqn_forward.1} parent=11 // pred_check
        %p341 = pneg %p87
      $region18: #{dqn_forward.1} parent=11 // pred_check_branch
        %343 = sbr.rel (%p341) target = $region20
      $region19: #{dqn_forward.1} parent=11 // pred_region
        _
      $region20: #{dqn_forward.1} parent=11 // pred_fallthru
        _
      // Predicated region
      $region21: #{dqn_forward.1} parent=11 // pred_check
        %p344 = pneg %p108
      $region22: #{dqn_forward.1} parent=11 // pred_check_branch
        %346 = sbr.rel (%p344) target = $region24
      $region23: #{dqn_forward.1} parent=11 // pred_region
        _
      $region24: #{dqn_forward.1} parent=11 // pred_fallthru
        _
      // Predicated region
      $region25: #{dqn_forward.1} parent=11 // pred_check
        %p347 = pneg %p129
      $region26: #{dqn_forward.1} parent=11 // pred_check_branch
        %349 = sbr.rel (%p347) target = $region28
      $region27: #{dqn_forward.1} parent=11 // pred_region
        _
      $region28: #{dqn_forward.1} parent=11 // pred_fallthru
        _
      // Predicated region
      $region29: #{dqn_forward.1} parent=11 // pred_check
        %p350 = pneg %p150
      $region30: #{dqn_forward.1} parent=11 // pred_check_branch
        %352 = sbr.rel (%p350) target = $region32
      $region31: #{dqn_forward.1} parent=11 // pred_region
        _
      $region32: #{dqn_forward.1} parent=11 // pred_fallthru
        _
      // Predicated region
      $region33: #{dqn_forward.1} parent=11 // pred_check
        %p353 = pneg %p171
      $region34: #{dqn_forward.1} parent=11 // pred_check_branch
        %355 = sbr.rel (%p353) target = $region36
      $region35: #{dqn_forward.1} parent=11 // pred_region
        _
      $region36: #{dqn_forward.1} parent=11 // pred_fallthru
        _
      // Predicated region
      $region37: #{dqn_forward.1} parent=11 // pred_check
        %p356 = pneg %p192
      $region38: #{dqn_forward.1} parent=11 // pred_check_branch
        %358 = sbr.rel (%p356) target = $region40
      $region39: #{dqn_forward.1} parent=11 // pred_region
        _
      $region40: #{dqn_forward.1} parent=11 // pred_fallthru
        _
      // Predicated region
      $region41: #{dqn_forward.1} parent=11 // pred_check
        %p359 = pneg %p213
      $region42: #{dqn_forward.1} parent=11 // pred_check_branch
        %361 = sbr.rel (%p359) target = $region44
      $region43: #{dqn_forward.1} parent=11 // pred_region
        _
      $region44: #{dqn_forward.1} parent=11 // pred_fallthru
        _
      // Predicated region
      $region45: #{dqn_forward.1} parent=11 // pred_check
        %p362 = pneg %p234
      $region46: #{dqn_forward.1} parent=11 // pred_check_branch
        %364 = sbr.rel (%p362) target = $region48
      $region47: #{dqn_forward.1} parent=11 // pred_region
        _
      $region48: #{dqn_forward.1} parent=11 // pred_fallthru
        _
      // Predicated region
      $region49: #{dqn_forward.1} parent=11 // pred_check
        %p365 = pneg %p255
      $region50: #{dqn_forward.1} parent=11 // pred_check_branch
        %367 = sbr.rel (%p365) target = $region52
      $region51: #{dqn_forward.1} parent=11 // pred_region
        _
      $region52: #{dqn_forward.1} parent=11 // pred_fallthru
        _
      // Predicated region
      $region53: #{dqn_forward.1} parent=11 // pred_check
        %p368 = pneg %p276
      $region54: #{dqn_forward.1} parent=11 // pred_check_branch
        %370 = sbr.rel (%p368) target = $region56
      $region55: #{dqn_forward.1} parent=11 // pred_region
        _
      $region56: #{dqn_forward.1} parent=11 // pred_fallthru
        _
      // Predicated region
      $region57: #{dqn_forward.1} parent=11 // pred_check
        %p371 = pneg %p297
      $region58: #{dqn_forward.1} parent=11 // pred_check_branch
        %373 = sbr.rel (%p371) target = $region60
      $region59: #{dqn_forward.1} parent=11 // pred_region
        _
      $region60: #{dqn_forward.1} parent=11 // pred_fallthru
        _
    $region12: #{dqn_forward.1} parent=5 // pred_fallthru
      _
    %p374 = scmp.lt.s32.totalorder %s19, 2
    // Predicated region
    $region61: #{dqn_forward.1} parent=5 // pred_check
      %p375 = pneg %p374
    $region62: #{dqn_forward.1} parent=5 // pred_check_branch
      %377 = sbr.rel (%p375) target = $region64
    $region63: #{dqn_forward.1} parent=5 // pred_region
      // Predicated region
      $region65: #{dqn_forward.1} parent=63 // pred_check
        %p378 = pneg %p39
      $region66: #{dqn_forward.1} parent=63 // pred_check_branch
        %380 = sbr.rel (%p378) target = $region68
      $region67: #{dqn_forward.1} parent=63 // pred_region
        %p381 = scmp.lt.s32.totalorder %s19, 1
        %s382 = scalar_select %p381, %s19, 1
        %s383 = smul.addr %s382, 80
        %s384 = smul.addr %s383, 4
        %s385 = scalar_lea.vmem %s0, %s384
      $region68: #{dqn_forward.1} parent=63 // pred_fallthru
        _
    $region64: #{dqn_forward.1} parent=5 // pred_fallthru
      _
    %p386 = scmp.le.s32.totalorder 1, %s19
    %p387 = scmp.lt.s32.totalorder %s19, 3
    %p388 = pnand %p386, %p387
    %p389 = pneg %p388
    // Predicated region
    $region69: #{dqn_forward.1} parent=5 // pred_check
      _
    $region70: #{dqn_forward.1} parent=5 // pred_check_branch
      %391 = sbr.rel (%p388) target = $region72
    $region71: #{dqn_forward.1} parent=5 // pred_region
      %s392 = ssub.s32 %s19, 1
      %p393 = scmp.lt.s32.totalorder %s24, 1
      %s394 = scalar_select %p393, %s24, 1
      %s395 = smul.addr %s394, 80
      %s396 = smul.addr %s395, 4
      %s397 = scalar_lea.vmem %s0, %s396
      %p398 = pneg %p45
      %p399 = pneg %p42
      %p400 = pneg %p66
      %p401 = pneg %p63
      %p402 = pneg %p87
      %p403 = pneg %p84
      %p404 = pneg %p108
      %p405 = pneg %p105
      %p406 = pneg %p129
      %p407 = pneg %p126
      %p408 = pneg %p150
      %p409 = pneg %p147
      %p410 = pneg %p171
      %p411 = pneg %p168
      %p412 = pneg %p192
      %p413 = pneg %p189
      %p414 = pneg %p213
      %p415 = pneg %p210
      %p416 = pneg %p234
      %p417 = pneg %p231
      %p418 = pneg %p255
      %p419 = pneg %p252
      %p420 = pneg %p276
      %p421 = pneg %p273
      %p422 = pneg %p297
      %p423 = pneg %p294
      %p424 = pneg %p323
      %p425 = pneg %p320
      %p426 = scmp.lt.s32.totalorder %s24, 1
      %s427 = scalar_select %p426, %s24, 1
      %s428 = smul.addr %s427, 4
      %s429 = scalar_lea.vmem %s13, %s428
      %p430 = scmp.lt.s32.totalorder %s24, 1
      %s431 = scalar_select %p430, %s24, 1
      %s432 = smul.addr %s431, 80
      %s433 = smul.addr %s432, 4
      %s434 = scalar_lea.vmem %s0, %s433
      %p435 = scmp.lt.s32.totalorder %s24, 1
      %s436 = scalar_select %p435, %s24, 1
      %s437 = smul.addr %s436, 4
      %s438 = scalar_lea.vmem %s13, %s437
      %vm440 = vcmask 261120
      %441 = vst.msk [vmem:[#allocation2 + $0x240] sm:$0xff] %vm440, 0.0
      %442 = vst.msk [vmem:[#allocation2 + $0x248] sm:$0xff] %vm440, 0.0
      %443 = vst.msk [vmem:[#allocation2 + $0x250] sm:$0xff] %vm440, 0.0
      %444 = vst.msk [vmem:[#allocation2 + $0x258] sm:$0xff] %vm440, 0.0
      %445 = vst.msk [vmem:[#allocation2 + $0x260] sm:$0xff] %vm440, 0.0
      %446 = vst.msk [vmem:[#allocation2 + $0x268] sm:$0xff] %vm440, 0.0
      %447 = vst.msk [vmem:[#allocation2 + $0x270] sm:$0xff] %vm440, 0.0
      %448 = vst.msk [vmem:[#allocation2 + $0x278] sm:$0xff] %vm440, 0.0
      %vm449 = vcmask 523264
      %450 = vst.msk [vmem:[#allocation3 + $0x240] sm:$0xff] %vm449, 0.0
      %451 = vst.msk [vmem:[#allocation3 + $0x248] sm:$0xff] %vm449, 0.0
      %452 = vst.msk [vmem:[#allocation3 + $0x250] sm:$0xff] %vm449, 0.0
      %453 = vst.msk [vmem:[#allocation3 + $0x258] sm:$0xff] %vm449, 0.0
      %454 = vst.msk [vmem:[#allocation3 + $0x260] sm:$0xff] %vm449, 0.0
      %455 = vst.msk [vmem:[#allocation3 + $0x268] sm:$0xff] %vm449, 0.0
      %456 = vst.msk [vmem:[#allocation3 + $0x270] sm:$0xff] %vm449, 0.0
      %457 = vst.msk [vmem:[#allocation3 + $0x278] sm:$0xff] %vm449, 0.0
      %v458 = vld [vmem:[%s434] sm:$0xf]
      %v459 = vld [vmem:[%s434 + $0x4] sm:$0xf]
      %v460 = vld [vmem:[%s434 + $0x8] sm:$0xf]
      %v461 = vld [vmem:[%s434 + $0xc] sm:$0xf]
      %v462 = vld [vmem:[%s434 + $0x10] sm:$0xf]
      %v463 = vld [vmem:[%s434 + $0x14] sm:$0xf]
      %v464 = vld [vmem:[%s434 + $0x18] sm:$0xf]
      %v465 = vld [vmem:[%s434 + $0x1c] sm:$0xf]
      %v466 = vld [vmem:[%s434 + $0x20] sm:$0xf]
      %v467 = vld [vmem:[%s434 + $0x24] sm:$0xf]
      %v468 = vld [vmem:[%s434 + $0x28] sm:$0xf]
      %v469 = vld [vmem:[%s434 + $0x2c] sm:$0xf]
      %v470 = vld [vmem:[%s434 + $0x30] sm:$0xf]
      %v471 = vld [vmem:[%s434 + $0x34] sm:$0xf]
      %v472 = vld [vmem:[%s434 + $0x38] sm:$0xf]
      %v473 = vld [vmem:[%s434 + $0x3c] sm:$0xf]
      %v474 = vld [vmem:[%s434 + $0x40] sm:$0xf]
      %v475 = vld [vmem:[%s434 + $0x44] sm:$0xf]
      %v476 = vld [vmem:[%s434 + $0x48] sm:$0xf]
      %v477 = vld [vmem:[%s434 + $0x4c] sm:$0xf]
      %v478 = vld [vmem:[%s434 + $0x50] sm:$0xf]
      %v479 = vld [vmem:[%s434 + $0x54] sm:$0xf]
      %v480 = vld [vmem:[%s434 + $0x58] sm:$0xf]
      %v481 = vld [vmem:[%s434 + $0x5c] sm:$0xf]
      %v482 = vld [vmem:[%s434 + $0x60] sm:$0xf]
      %v483 = vld [vmem:[%s434 + $0x64] sm:$0xf]
      %v484 = vld [vmem:[%s434 + $0x68] sm:$0xf]
      %v485 = vld [vmem:[%s434 + $0x6c] sm:$0xf]
      %v486 = vld [vmem:[%s434 + $0x70] sm:$0xf]
      %v487 = vld [vmem:[%s434 + $0x74] sm:$0xf]
      %v488 = vld [vmem:[%s434 + $0x78] sm:$0xf]
      %v489 = vld [vmem:[%s434 + $0x7c] sm:$0xf]
      %v490 = vld [vmem:[%s434 + $0x80] sm:$0xf]
      %v491 = vld [vmem:[%s434 + $0x84] sm:$0xf]
      %v492 = vld [vmem:[%s434 + $0x88] sm:$0xf]
      %v493 = vld [vmem:[%s434 + $0x8c] sm:$0xf]
      %v494 = vld [vmem:[%s434 + $0x90] sm:$0xf]
      %v495 = vld [vmem:[%s434 + $0x94] sm:$0xf]
      %v496 = vld [vmem:[%s434 + $0x98] sm:$0xf]
      %v497 = vld [vmem:[%s434 + $0x9c] sm:$0xf]
      %v498 = vld [vmem:[%s434 + $0xa0] sm:$0xf]
      %v499 = vld [vmem:[%s434 + $0xa4] sm:$0xf]
      %v500 = vld [vmem:[%s434 + $0xa8] sm:$0xf]
      %v501 = vld [vmem:[%s434 + $0xac] sm:$0xf]
      %v502 = vld [vmem:[%s434 + $0xb0] sm:$0xf]
      %v503 = vld [vmem:[%s434 + $0xb4] sm:$0xf]
      %v504 = vld [vmem:[%s434 + $0xb8] sm:$0xf]
      %v505 = vld [vmem:[%s434 + $0xbc] sm:$0xf]
      %v506 = vld [vmem:[%s434 + $0xc0] sm:$0xf]
      %v507 = vld [vmem:[%s434 + $0xc4] sm:$0xf]
      %v508 = vld [vmem:[%s434 + $0xc8] sm:$0xf]
      %v509 = vld [vmem:[%s434 + $0xcc] sm:$0xf]
      %v510 = vld [vmem:[%s434 + $0xd0] sm:$0xf]
      %v511 = vld [vmem:[%s434 + $0xd4] sm:$0xf]
      %v512 = vld [vmem:[%s434 + $0xd8] sm:$0xf]
      %v513 = vld [vmem:[%s434 + $0xdc] sm:$0xf]
      %v514 = vld [vmem:[%s434 + $0xe0] sm:$0xf]
      %v515 = vld [vmem:[%s434 + $0xe4] sm:$0xf]
      %v516 = vld [vmem:[%s434 + $0xe8] sm:$0xf]
      %v517 = vld [vmem:[%s434 + $0xec] sm:$0xf]
      %v518 = vld [vmem:[%s434 + $0xf0] sm:$0xf]
      %v519 = vld [vmem:[%s434 + $0xf4] sm:$0xf]
      %v520 = vld [vmem:[%s434 + $0xf8] sm:$0xf]
      %v521 = vld [vmem:[%s434 + $0xfc] sm:$0xf]
      %v522 = vld [vmem:[%s434 + $0x100] sm:$0xf]
      %v523 = vld [vmem:[%s434 + $0x104] sm:$0xf]
      %v524 = vld [vmem:[%s434 + $0x108] sm:$0xf]
      %v525 = vld [vmem:[%s434 + $0x10c] sm:$0xf]
      %v526 = vld [vmem:[%s434 + $0x110] sm:$0xf]
      %v527 = vld [vmem:[%s434 + $0x114] sm:$0xf]
      %v528 = vld [vmem:[%s434 + $0x118] sm:$0xf]
      %v529 = vld [vmem:[%s434 + $0x11c] sm:$0xf]
      %v530 = vld [vmem:[%s1] sm:$0xf]
      %v531 = vld [vmem:[%s1 + $0x4] sm:$0x3]
      %v532 = vld [vmem:[%s434 + $0x120] sm:$0xf]
      %v533 = vld [vmem:[%s434 + $0x124] sm:$0xf]
      %v534 = vld [vmem:[%s434 + $0x128] sm:$0xf]
      %s535 = scalar_lea.vmem %s1, 8
      %v536 = vld [vmem:[%s535] sm:$0xf]
      %v537 = vld [vmem:[%s535 + $0x4] sm:$0x3]
      %v610 = vunpack.c.l.b16 %v461
      %v611 = vunpack.c.l.b16 %v462
      %v612 = vunpack.c.l.b16 %v463
      %v613 = vunpack.c.l.b16 %v464
      %v614 = vunpack.c.l.b16 %v465
      %v615 = vunpack.c.l.b16 %v466
      %v616 = vunpack.c.l.b16 %v467
      %v617 = vunpack.c.l.b16 %v468
      %v618 = vunpack.c.l.b16 %v469
      %v619 = vunpack.c.l.b16 %v470
      %v620 = vunpack.c.l.b16 %v471
      %v621 = vunpack.c.l.b16 %v472
      %v622 = vunpack.c.l.b16 %v473
      %v623 = vunpack.c.l.b16 %v474
      %v624 = vunpack.c.l.b16 %v475
      %v625 = vunpack.c.l.b16 %v476
      %v626 = vunpack.c.l.b16 %v477
      %v627 = vunpack.c.l.b16 %v478
      %v628 = vunpack.c.l.b16 %v479
      %v629 = vunpack.c.l.b16 %v480
      %v630 = vunpack.c.l.b16 %v481
      %v631 = vunpack.c.l.b16 %v482
      %v632 = vunpack.c.l.b16 %v483
      %v633 = vunpack.c.l.b16 %v484
      %v634 = vunpack.c.l.b16 %v485
      %v635 = vunpack.c.l.b16 %v486
      %v636 = vunpack.c.l.b16 %v487
      %v637 = vunpack.c.l.b16 %v488
      %v638 = vunpack.c.l.b16 %v489
      %v639 = vunpack.c.l.b16 %v490
      %v640 = vunpack.c.l.b16 %v491
      %v641 = vunpack.c.l.b16 %v492
      %v642 = vunpack.c.l.b16 %v493
      %v643 = vunpack.c.l.b16 %v494
      %v644 = vunpack.c.l.b16 %v495
      %v645 = vunpack.c.l.b16 %v496
      %v646 = vunpack.c.l.b16 %v497
      %v647 = vunpack.c.l.b16 %v498
      %v648 = vunpack.c.l.b16 %v499
      %v649 = vunpack.c.l.b16 %v500
      %v650 = vunpack.c.l.b16 %v501
      %v651 = vunpack.c.l.b16 %v502
      %v652 = vunpack.c.l.b16 %v503
      %v653 = vunpack.c.l.b16 %v504
      %v654 = vunpack.c.l.b16 %v505
      %v655 = vunpack.c.l.b16 %v506
      %v656 = vunpack.c.l.b16 %v507
      %v657 = vunpack.c.l.b16 %v508
      %v658 = vunpack.c.l.b16 %v509
      %v659 = vunpack.c.l.b16 %v510
      %v660 = vunpack.c.l.b16 %v511
      %v661 = vunpack.c.l.b16 %v512
      %v662 = vunpack.c.l.b16 %v513
      %v663 = vunpack.c.l.b16 %v514
      %v664 = vunpack.c.l.b16 %v515
      %v665 = vunpack.c.l.b16 %v516
      %v666 = vunpack.c.l.b16 %v517
      %v667 = vunpack.c.l.b16 %v518
      %v668 = vunpack.c.l.b16 %v519
      %v669 = vunpack.c.l.b16 %v520
      %v670 = vunpack.c.l.b16 %v521
      %v671 = vunpack.c.l.b16 %v522
      %v672 = vunpack.c.l.b16 %v523
      %v673 = vunpack.c.l.b16 %v524
      %v674 = vunpack.c.l.b16 %v525
      %v675 = vunpack.c.l.b16 %v526
      %v676 = vunpack.c.l.b16 %v527
      %v677 = vunpack.c.l.b16 %v528
      %v678 = vunpack.c.l.b16 %v529
      %v679 = vunpack.c.l.b16 %v532
      %v680 = vunpack.c.l.b16 %v533
      %v681 = vunpack.c.l.b16 %v534
      %v682 = vpack.c.b16 %v611, %v610
      %v683 = vpack.c.b16 %v613, %v612
      %v684 = vpack.c.b16 %v615, %v614
      %v685 = vpack.c.b16 %v617, %v616
      %v686 = vpack.c.b16 %v619, %v618
      %v687 = vpack.c.b16 %v621, %v620
      %v688 = vpack.c.b16 %v623, %v622
      %v689 = vpack.c.b16 %v625, %v624
      %v690 = vpack.c.b16 %v627, %v626
      %v691 = vpack.c.b16 %v629, %v628
      %v692 = vpack.c.b16 %v631, %v630
      %v693 = vpack.c.b16 %v633, %v632
      %v694 = vpack.c.b16 %v635, %v634
      %v695 = vpack.c.b16 %v637, %v636
      %v696 = vpack.c.b16 %v639, %v638
      %v697 = vpack.c.b16 %v641, %v640
      %v698 = vpack.c.b16 %v643, %v642
      %v699 = vpack.c.b16 %v645, %v644
      %v700 = vpack.c.b16 %v647, %v646
      %v701 = vpack.c.b16 %v649, %v648
      %v702 = vpack.c.b16 %v651, %v650
      %v703 = vpack.c.b16 %v653, %v652
      %v704 = vpack.c.b16 %v655, %v654
      %v705 = vpack.c.b16 %v657, %v656
      %v706 = vpack.c.b16 %v659, %v658
      %v707 = vpack.c.b16 %v661, %v660
      %v708 = vpack.c.b16 %v663, %v662
      %v709 = vpack.c.b16 %v665, %v664
      %v710 = vpack.c.b16 %v667, %v666
      %v711 = vpack.c.b16 %v669, %v668
      %v712 = vpack.c.b16 %v671, %v670
      %v713 = vpack.c.b16 %v673, %v672
      %v714 = vpack.c.b16 %v675, %v674
      %v715 = vpack.c.b16 %v677, %v676
      %v716 = vpack.c.b16 %v679, %v678
      %v717 = vpack.c.b16 %v681, %v680
      %v720 = vunpack.c.l.b16 %v536
      %v721 = vunpack.c.l.b16 %v537
      %v722 = vpack.c.b16 %v721, %v720
      %vm723 = vcmask 97280
      %v725 = vsel %vm723, %v682, 0
      %v728 = vsel %vm723, %v683, 0
      %v731 = vsel %vm723, %v684, 0
      %v734 = vsel %vm723, %v685, 0
      %v737 = vsel %vm723, %v686, 0
      %v740 = vsel %vm723, %v687, 0
      %v743 = vsel %vm723, %v688, 0
      %v746 = vsel %vm723, %v689, 0
      %v749 = vsel %vm723, %v690, 0
      %v752 = vsel %vm723, %v691, 0
      %v755 = vsel %vm723, %v692, 0
      %v758 = vsel %vm723, %v693, 0
      %v761 = vsel %vm723, %v694, 0
      %v764 = vsel %vm723, %v695, 0
      %v767 = vsel %vm723, %v696, 0
      %v770 = vsel %vm723, %v697, 0
      %v773 = vsel %vm723, %v698, 0
      %v776 = vsel %vm723, %v699, 0
      %v779 = vsel %vm723, %v700, 0
      %v782 = vsel %vm723, %v701, 0
      %v785 = vsel %vm723, %v702, 0
      %v788 = vsel %vm723, %v703, 0
      %v791 = vsel %vm723, %v704, 0
      %v794 = vsel %vm723, %v705, 0
      %v797 = vsel %vm723, %v706, 0
      %v800 = vsel %vm723, %v707, 0
      %v803 = vsel %vm723, %v708, 0
      %v806 = vsel %vm723, %v709, 0
      %v809 = vsel %vm723, %v710, 0
      %v812 = vsel %vm723, %v711, 0
      %v815 = vsel %vm723, %v712, 0
      %v818 = vsel %vm723, %v713, 0
      %v821 = vsel %vm723, %v714, 0
      %v824 = vsel %vm723, %v715, 0
      %v827 = vsel %vm723, %v716, 0
      %v830 = vsel %vm723, %v717, 0
      %vm832 = vcmask 1045504
      %v834 = vsel %vm832, %v722, 0
      %836 = vmatprep.subr.bf16.mxu0 0
      %837 = vmatpush1.bf16.msra.mxu0 0
      %838 = vmatprep.subr.bf16.mxu0 0
      %839 = vmatpush1.bf16.msra.mxu0 0
      %840 = vmatprep.subr.bf16.mxu0 0
      %841 = vmatpush1.bf16.msra.mxu0 0
      %842 = vmatprep.subr.bf16.mxu0 0
      %843 = vmatpush1.bf16.msra.mxu0 0
      %844 = vmatprep.subr.bf16.mxu0 0
      %845 = vmatpush1.bf16.msra.mxu0 0
      %846 = vmatprep.subr.bf16.mxu0 0
      %847 = vmatpush1.bf16.msra.mxu0 0
      %848 = vmatprep.subr.bf16.mxu0 0
      %849 = vmatpush1.bf16.msra.mxu0 0
      %850 = vmatprep.subr.bf16.mxu0 0
      %851 = vmatpush1.bf16.msra.mxu0 %v834
      %852 = vmatprep.subr.bf16.mxu0 0
      %853 = vmatpush2.bf16.msra.mxu0 0
      %854 = vmatprep.subr.bf16.mxu0 0
      %855 = vmatpush2.bf16.msra.mxu0 0
      %856 = vmatprep.subr.bf16.mxu0 0
      %857 = vmatpush2.bf16.msra.mxu0 0
      %858 = vmatprep.subr.bf16.mxu0 0
      %859 = vmatpush2.bf16.msra.mxu0 0
      %860 = vmatprep.subr.bf16.mxu0 0
      %861 = vmatpush2.bf16.msra.mxu0 0
      %862 = vmatprep.subr.bf16.mxu0 0
      %863 = vmatpush2.bf16.msra.mxu0 0
      %864 = vmatprep.subr.bf16.mxu0 0
      %865 = vmatpush2.bf16.msra.mxu0 0
      %866 = vmatprep.subr.bf16.mxu0 0
      %867 = vmatpush2.bf16.msra.mxu0 0
      %868 = vmatprep.mubr.bf16.mxu0 0
      %869 = vmatmul.mubr.bf16.gmra.mxu0 %v725
      %v870 = vpop.f32.mrf.mxu0
      %v871 = vadd.f32 0.0, %v870
      %v872 = vpop.f32.mrf.mxu0
      %v873 = vpop.f32.mrf.mxu0
      %v874 = vadd.f32 0.0, %v873
      %v875 = vpop.f32.mrf.mxu0
      %876 = vmatprep.mubr.bf16.mxu0 0
      %877 = vmatmul.mubr.bf16.gmra.mxu0 %v728
      %v878 = vpop.f32.mrf.mxu0
      %v879 = vadd.f32 0.0, %v878
      %v880 = vpop.f32.mrf.mxu0
      %v881 = vpop.f32.mrf.mxu0
      %v882 = vadd.f32 0.0, %v881
      %v883 = vpop.f32.mrf.mxu0
      %884 = vmatprep.mubr.bf16.mxu0 0
      %885 = vmatmul.mubr.bf16.gmra.mxu0 %v731
      %v886 = vpop.f32.mrf.mxu0
      %v887 = vadd.f32 0.0, %v886
      %v888 = vpop.f32.mrf.mxu0
      %v889 = vpop.f32.mrf.mxu0
      %v890 = vadd.f32 0.0, %v889
      %v891 = vpop.f32.mrf.mxu0
      %892 = vmatprep.mubr.bf16.mxu0 0
      %893 = vmatmul.mubr.bf16.gmra.mxu0 %v734
      %v894 = vpop.f32.mrf.mxu0
      %v895 = vadd.f32 0.0, %v894
      %v896 = vpop.f32.mrf.mxu0
      %v897 = vpop.f32.mrf.mxu0
      %v898 = vadd.f32 0.0, %v897
      %v899 = vpop.f32.mrf.mxu0
      %900 = vmatprep.mubr.bf16.mxu0 0
      %901 = vmatmul.mubr.bf16.gmra.mxu0 %v737
      %v902 = vpop.f32.mrf.mxu0
      %v903 = vadd.f32 0.0, %v902
      %v904 = vpop.f32.mrf.mxu0
      %v905 = vpop.f32.mrf.mxu0
      %v906 = vadd.f32 0.0, %v905
      %v907 = vpop.f32.mrf.mxu0
      %908 = vmatprep.mubr.bf16.mxu0 0
      %909 = vmatmul.mubr.bf16.gmra.mxu0 %v740
      %v910 = vpop.f32.mrf.mxu0
      %v911 = vadd.f32 0.0, %v910
      %v912 = vpop.f32.mrf.mxu0
      %v913 = vpop.f32.mrf.mxu0
      %v914 = vadd.f32 0.0, %v913
      %v915 = vpop.f32.mrf.mxu0
      %916 = vmatprep.mubr.bf16.mxu0 0
      %917 = vmatmul.mubr.bf16.gmra.mxu0 %v743
      %v918 = vpop.f32.mrf.mxu0
      %v919 = vadd.f32 0.0, %v918
      %v920 = vpop.f32.mrf.mxu0
      %v921 = vpop.f32.mrf.mxu0
      %v922 = vadd.f32 0.0, %v921
      %v923 = vpop.f32.mrf.mxu0
      %924 = vmatprep.mubr.bf16.mxu0 0
      %925 = vmatmul.mubr.bf16.gmra.mxu0 %v746
      %v926 = vpop.f32.mrf.mxu0
      %v927 = vadd.f32 0.0, %v926
      %v928 = vpop.f32.mrf.mxu0
      %v929 = vpop.f32.mrf.mxu0
      %v930 = vadd.f32 0.0, %v929
      %v931 = vpop.f32.mrf.mxu0
      %932 = vmatprep.mubr.bf16.mxu0 0
      %933 = vmatmul.mubr.bf16.gmra.mxu0 %v749
      %v934 = vpop.f32.mrf.mxu0
      %v935 = vadd.f32 0.0, %v934
      %v936 = vpop.f32.mrf.mxu0
      %v937 = vpop.f32.mrf.mxu0
      %v938 = vadd.f32 0.0, %v937
      %v939 = vpop.f32.mrf.mxu0
      %940 = vmatprep.mubr.bf16.mxu0 0
      %941 = vmatmul.mubr.bf16.gmra.mxu0 %v752
      %v942 = vpop.f32.mrf.mxu0
      %v943 = vadd.f32 0.0, %v942
      %v944 = vpop.f32.mrf.mxu0
      %v945 = vpop.f32.mrf.mxu0
      %v946 = vadd.f32 0.0, %v945
      %v947 = vpop.f32.mrf.mxu0
      %948 = vmatprep.mubr.bf16.mxu0 0
      %949 = vmatmul.mubr.bf16.gmra.mxu0 %v755
      %v950 = vpop.f32.mrf.mxu0
      %v951 = vadd.f32 0.0, %v950
      %v952 = vpop.f32.mrf.mxu0
      %v953 = vpop.f32.mrf.mxu0
      %v954 = vadd.f32 0.0, %v953
      %v955 = vpop.f32.mrf.mxu0
      %956 = vmatprep.mubr.bf16.mxu0 0
      %957 = vmatmul.mubr.bf16.gmra.mxu0 %v758
      %v958 = vpop.f32.mrf.mxu0
      %v959 = vadd.f32 0.0, %v958
      %v960 = vpop.f32.mrf.mxu0
      %v961 = vpop.f32.mrf.mxu0
      %v962 = vadd.f32 0.0, %v961
      %v963 = vpop.f32.mrf.mxu0
      %964 = vmatprep.mubr.bf16.mxu0 0
      %965 = vmatmul.mubr.bf16.gmra.mxu0 %v761
      %v966 = vpop.f32.mrf.mxu0
      %v967 = vadd.f32 0.0, %v966
      %v968 = vpop.f32.mrf.mxu0
      %v969 = vpop.f32.mrf.mxu0
      %v970 = vadd.f32 0.0, %v969
      %v971 = vpop.f32.mrf.mxu0
      %972 = vmatprep.mubr.bf16.mxu0 0
      %973 = vmatmul.mubr.bf16.gmra.mxu0 %v764
      %v974 = vpop.f32.mrf.mxu0
      %v975 = vadd.f32 0.0, %v974
      %v976 = vpop.f32.mrf.mxu0
      %v977 = vpop.f32.mrf.mxu0
      %v978 = vadd.f32 0.0, %v977
      %v979 = vpop.f32.mrf.mxu0
      %980 = vmatprep.mubr.bf16.mxu0 0
      %981 = vmatmul.mubr.bf16.gmra.mxu0 %v767
      %v982 = vpop.f32.mrf.mxu0
      %v983 = vadd.f32 0.0, %v982
      %v984 = vpop.f32.mrf.mxu0
      %v985 = vpop.f32.mrf.mxu0
      %v986 = vadd.f32 0.0, %v985
      %v987 = vpop.f32.mrf.mxu0
      %988 = vmatprep.mubr.bf16.mxu0 0
      %989 = vmatmul.mubr.bf16.gmra.mxu0 %v770
      %v990 = vpop.f32.mrf.mxu0
      %v991 = vadd.f32 0.0, %v990
      %v992 = vpop.f32.mrf.mxu0
      %v993 = vpop.f32.mrf.mxu0
      %v994 = vadd.f32 0.0, %v993
      %v995 = vpop.f32.mrf.mxu0
      %996 = vmatprep.mubr.bf16.mxu0 0
      %997 = vmatmul.mubr.bf16.gmra.mxu0 %v773
      %v998 = vpop.f32.mrf.mxu0
      %v999 = vadd.f32 0.0, %v998
      %v1000 = vpop.f32.mrf.mxu0
      %v1001 = vpop.f32.mrf.mxu0
      %v1002 = vadd.f32 0.0, %v1001
      %v1003 = vpop.f32.mrf.mxu0
      %1004 = vmatprep.mubr.bf16.mxu0 0
      %1005 = vmatmul.mubr.bf16.gmra.mxu0 %v776
      %v1006 = vpop.f32.mrf.mxu0
      %v1007 = vadd.f32 0.0, %v1006
      %v1008 = vpop.f32.mrf.mxu0
      %v1009 = vpop.f32.mrf.mxu0
      %v1010 = vadd.f32 0.0, %v1009
      %v1011 = vpop.f32.mrf.mxu0
      %1012 = vmatprep.mubr.bf16.mxu0 0
      %1013 = vmatmul.mubr.bf16.gmra.mxu0 %v779
      %v1014 = vpop.f32.mrf.mxu0
      %v1015 = vadd.f32 0.0, %v1014
      %v1016 = vpop.f32.mrf.mxu0
      %v1017 = vpop.f32.mrf.mxu0
      %v1018 = vadd.f32 0.0, %v1017
      %v1019 = vpop.f32.mrf.mxu0
      %1020 = vmatprep.mubr.bf16.mxu0 0
      %1021 = vmatmul.mubr.bf16.gmra.mxu0 %v782
      %v1022 = vpop.f32.mrf.mxu0
      %v1023 = vadd.f32 0.0, %v1022
      %v1024 = vpop.f32.mrf.mxu0
      %v1025 = vpop.f32.mrf.mxu0
      %v1026 = vadd.f32 0.0, %v1025
      %v1027 = vpop.f32.mrf.mxu0
      %1028 = vmatprep.mubr.bf16.mxu0 0
      %1029 = vmatmul.mubr.bf16.gmra.mxu0 %v785
      %v1030 = vpop.f32.mrf.mxu0
      %v1031 = vadd.f32 0.0, %v1030
      %v1032 = vpop.f32.mrf.mxu0
      %v1033 = vpop.f32.mrf.mxu0
      %v1034 = vadd.f32 0.0, %v1033
      %v1035 = vpop.f32.mrf.mxu0
      %1036 = vmatprep.mubr.bf16.mxu0 0
      %1037 = vmatmul.mubr.bf16.gmra.mxu0 %v788
      %v1038 = vpop.f32.mrf.mxu0
      %v1039 = vadd.f32 0.0, %v1038
      %v1040 = vpop.f32.mrf.mxu0
      %v1041 = vpop.f32.mrf.mxu0
      %v1042 = vadd.f32 0.0, %v1041
      %v1043 = vpop.f32.mrf.mxu0
      %1044 = vmatprep.mubr.bf16.mxu0 0
      %1045 = vmatmul.mubr.bf16.gmra.mxu0 %v791
      %v1046 = vpop.f32.mrf.mxu0
      %v1047 = vadd.f32 0.0, %v1046
      %v1048 = vpop.f32.mrf.mxu0
      %v1049 = vpop.f32.mrf.mxu0
      %v1050 = vadd.f32 0.0, %v1049
      %v1051 = vpop.f32.mrf.mxu0
      %1052 = vmatprep.mubr.bf16.mxu0 0
      %1053 = vmatmul.mubr.bf16.gmra.mxu0 %v794
      %v1054 = vpop.f32.mrf.mxu0
      %v1055 = vadd.f32 0.0, %v1054
      %v1056 = vpop.f32.mrf.mxu0
      %v1057 = vpop.f32.mrf.mxu0
      %v1058 = vadd.f32 0.0, %v1057
      %v1059 = vpop.f32.mrf.mxu0
      %1060 = vmatprep.mubr.bf16.mxu0 0
      %1061 = vmatmul.mubr.bf16.gmra.mxu0 %v797
      %v1062 = vpop.f32.mrf.mxu0
      %v1063 = vadd.f32 0.0, %v1062
      %v1064 = vpop.f32.mrf.mxu0
      %v1065 = vpop.f32.mrf.mxu0
      %v1066 = vadd.f32 0.0, %v1065
      %v1067 = vpop.f32.mrf.mxu0
      %1068 = vmatprep.mubr.bf16.mxu0 0
      %1069 = vmatmul.mubr.bf16.gmra.mxu0 %v800
      %v1070 = vpop.f32.mrf.mxu0
      %v1071 = vadd.f32 0.0, %v1070
      %v1072 = vpop.f32.mrf.mxu0
      %v1073 = vpop.f32.mrf.mxu0
      %v1074 = vadd.f32 0.0, %v1073
      %v1075 = vpop.f32.mrf.mxu0
      %1076 = vmatprep.mubr.bf16.mxu0 0
      %1077 = vmatmul.mubr.bf16.gmra.mxu0 %v803
      %v1078 = vpop.f32.mrf.mxu0
      %v1079 = vadd.f32 0.0, %v1078
      %v1080 = vpop.f32.mrf.mxu0
      %v1081 = vpop.f32.mrf.mxu0
      %v1082 = vadd.f32 0.0, %v1081
      %v1083 = vpop.f32.mrf.mxu0
      %1084 = vmatprep.mubr.bf16.mxu0 0
      %1085 = vmatmul.mubr.bf16.gmra.mxu0 %v806
      %v1086 = vpop.f32.mrf.mxu0
      %v1087 = vadd.f32 0.0, %v1086
      %v1088 = vpop.f32.mrf.mxu0
      %v1089 = vpop.f32.mrf.mxu0
      %v1090 = vadd.f32 0.0, %v1089
      %v1091 = vpop.f32.mrf.mxu0
      %1092 = vmatprep.mubr.bf16.mxu0 0
      %1093 = vmatmul.mubr.bf16.gmra.mxu0 %v809
      %v1094 = vpop.f32.mrf.mxu0
      %v1095 = vadd.f32 0.0, %v1094
      %v1096 = vpop.f32.mrf.mxu0
      %v1097 = vpop.f32.mrf.mxu0
      %v1098 = vadd.f32 0.0, %v1097
      %v1099 = vpop.f32.mrf.mxu0
      %1100 = vmatprep.mubr.bf16.mxu0 0
      %1101 = vmatmul.mubr.bf16.gmra.mxu0 %v812
      %v1102 = vpop.f32.mrf.mxu0
      %v1103 = vadd.f32 0.0, %v1102
      %v1104 = vpop.f32.mrf.mxu0
      %v1105 = vpop.f32.mrf.mxu0
      %v1106 = vadd.f32 0.0, %v1105
      %v1107 = vpop.f32.mrf.mxu0
      %1108 = vmatprep.mubr.bf16.mxu0 0
      %1109 = vmatmul.mubr.bf16.gmra.mxu0 %v815
      %v1110 = vpop.f32.mrf.mxu0
      %v1111 = vadd.f32 0.0, %v1110
      %v1112 = vpop.f32.mrf.mxu0
      %v1113 = vpop.f32.mrf.mxu0
      %v1114 = vadd.f32 0.0, %v1113
      %v1115 = vpop.f32.mrf.mxu0
      %1116 = vmatprep.mubr.bf16.mxu0 0
      %1117 = vmatmul.mubr.bf16.gmra.mxu0 %v818
      %v1118 = vpop.f32.mrf.mxu0
      %v1119 = vadd.f32 0.0, %v1118
      %v1120 = vpop.f32.mrf.mxu0
      %v1121 = vpop.f32.mrf.mxu0
      %v1122 = vadd.f32 0.0, %v1121
      %v1123 = vpop.f32.mrf.mxu0
      %1124 = vmatprep.mubr.bf16.mxu0 0
      %1125 = vmatmul.mubr.bf16.gmra.mxu0 %v821
      %v1126 = vpop.f32.mrf.mxu0
      %v1127 = vadd.f32 0.0, %v1126
      %v1128 = vpop.f32.mrf.mxu0
      %v1129 = vpop.f32.mrf.mxu0
      %v1130 = vadd.f32 0.0, %v1129
      %v1131 = vpop.f32.mrf.mxu0
      %1132 = vmatprep.mubr.bf16.mxu0 0
      %1133 = vmatmul.mubr.bf16.gmra.mxu0 %v824
      %v1134 = vpop.f32.mrf.mxu0
      %v1135 = vadd.f32 0.0, %v1134
      %v1136 = vpop.f32.mrf.mxu0
      %v1137 = vpop.f32.mrf.mxu0
      %v1138 = vadd.f32 0.0, %v1137
      %v1139 = vpop.f32.mrf.mxu0
      %1140 = vmatprep.mubr.bf16.mxu0 0
      %1141 = vmatmul.mubr.bf16.gmra.mxu0 %v827
      %v1142 = vpop.f32.mrf.mxu0
      %v1143 = vadd.f32 0.0, %v1142
      %v1144 = vpop.f32.mrf.mxu0
      %v1145 = vpop.f32.mrf.mxu0
      %v1146 = vadd.f32 0.0, %v1145
      %v1147 = vpop.f32.mrf.mxu0
      %1148 = vmatprep.mubr.bf16.mxu0 0
      %1149 = vmatmul.mubr.bf16.gmra.mxu0 %v830
      %v1150 = vpop.f32.mrf.mxu0
      %v1151 = vadd.f32 0.0, %v1150
      %v1152 = vpop.f32.mrf.mxu0
      %v1153 = vpop.f32.mrf.mxu0
      %v1154 = vadd.f32 0.0, %v1153
      %v1155 = vpop.f32.mrf.mxu0
      %1156 = vdwg.mxu0
      %v1160 = vunpack.c.l.b16 %v458
      %v1161 = vunpack.c.l.b16 %v459
      %v1162 = vunpack.c.l.b16 %v460
      %v1163 = vpack.c.b16 %v1161, %v1160
      %v1164 = vpack.c.b16 %v610, %v1162
      %v1165 = vpack.c.b16 %v612, %v611
      %v1166 = vpack.c.b16 %v614, %v613
      %v1167 = vpack.c.b16 %v616, %v615
      %v1168 = vpack.c.b16 %v618, %v617
      %v1169 = vpack.c.b16 %v620, %v619
      %v1170 = vpack.c.b16 %v622, %v621
      %v1171 = vpack.c.b16 %v624, %v623
      %v1172 = vpack.c.b16 %v626, %v625
      %v1173 = vpack.c.b16 %v628, %v627
      %v1174 = vpack.c.b16 %v630, %v629
      %v1175 = vpack.c.b16 %v632, %v631
      %v1176 = vpack.c.b16 %v634, %v633
      %v1177 = vpack.c.b16 %v636, %v635
      %v1178 = vpack.c.b16 %v638, %v637
      %v1179 = vpack.c.b16 %v640, %v639
      %v1180 = vpack.c.b16 %v642, %v641
      %v1181 = vpack.c.b16 %v644, %v643
      %v1182 = vpack.c.b16 %v646, %v645
      %v1183 = vpack.c.b16 %v648, %v647
      %v1184 = vpack.c.b16 %v650, %v649
      %v1185 = vpack.c.b16 %v652, %v651
      %v1186 = vpack.c.b16 %v654, %v653
      %v1187 = vpack.c.b16 %v656, %v655
      %v1188 = vpack.c.b16 %v658, %v657
      %v1189 = vpack.c.b16 %v660, %v659
      %v1190 = vpack.c.b16 %v662, %v661
      %v1191 = vpack.c.b16 %v664, %v663
      %v1192 = vpack.c.b16 %v666, %v665
      %v1193 = vpack.c.b16 %v668, %v667
      %v1194 = vpack.c.b16 %v670, %v669
      %v1195 = vpack.c.b16 %v672, %v671
      %v1196 = vpack.c.b16 %v674, %v673
      %v1197 = vpack.c.b16 %v676, %v675
      %v1198 = vpack.c.b16 %v678, %v677
      %v1201 = vunpack.c.l.b16 %v530
      %v1202 = vunpack.c.l.b16 %v531
      %v1203 = vpack.c.b16 %v1202, %v1201
      %v1205 = vsel %vm723, %v1163, 0
      %v1208 = vsel %vm723, %v1164, 0
      %v1211 = vsel %vm723, %v1165, 0
      %v1214 = vsel %vm723, %v1166, 0
      %v1217 = vsel %vm723, %v1167, 0
      %v1220 = vsel %vm723, %v1168, 0
      %v1223 = vsel %vm723, %v1169, 0
      %v1226 = vsel %vm723, %v1170, 0
      %v1229 = vsel %vm723, %v1171, 0
      %v1232 = vsel %vm723, %v1172, 0
      %v1235 = vsel %vm723, %v1173, 0
      %v1238 = vsel %vm723, %v1174, 0
      %v1241 = vsel %vm723, %v1175, 0
      %v1244 = vsel %vm723, %v1176, 0
      %v1247 = vsel %vm723, %v1177, 0
      %v1250 = vsel %vm723, %v1178, 0
      %v1253 = vsel %vm723, %v1179, 0
      %v1256 = vsel %vm723, %v1180, 0
      %v1259 = vsel %vm723, %v1181, 0
      %v1262 = vsel %vm723, %v1182, 0
      %v1265 = vsel %vm723, %v1183, 0
      %v1268 = vsel %vm723, %v1184, 0
      %v1271 = vsel %vm723, %v1185, 0
      %v1274 = vsel %vm723, %v1186, 0
      %v1277 = vsel %vm723, %v1187, 0
      %v1280 = vsel %vm723, %v1188, 0
      %v1283 = vsel %vm723, %v1189, 0
      %v1286 = vsel %vm723, %v1190, 0
      %v1289 = vsel %vm723, %v1191, 0
      %v1292 = vsel %vm723, %v1192, 0
      %v1295 = vsel %vm723, %v1193, 0
      %v1298 = vsel %vm723, %v1194, 0
      %v1301 = vsel %vm723, %v1195, 0
      %v1304 = vsel %vm723, %v1196, 0
      %v1307 = vsel %vm723, %v1197, 0
      %v1310 = vsel %vm723, %v1198, 0
      %v1313 = vsel %vm832, %v1203, 0
      %1315 = vmatprep.subr.bf16.mxu0 0
      %1316 = vmatpush1.bf16.msra.mxu0 0
      %1317 = vmatprep.subr.bf16.mxu0 0
      %1318 = vmatpush1.bf16.msra.mxu0 0
      %1319 = vmatprep.subr.bf16.mxu0 0
      %1320 = vmatpush1.bf16.msra.mxu0 0
      %1321 = vmatprep.subr.bf16.mxu0 0
      %1322 = vmatpush1.bf16.msra.mxu0 0
      %1323 = vmatprep.subr.bf16.mxu0 0
      %1324 = vmatpush1.bf16.msra.mxu0 0
      %1325 = vmatprep.subr.bf16.mxu0 0
      %1326 = vmatpush1.bf16.msra.mxu0 0
      %1327 = vmatprep.subr.bf16.mxu0 0
      %1328 = vmatpush1.bf16.msra.mxu0 0
      %1329 = vmatprep.subr.bf16.mxu0 0
      %1330 = vmatpush1.bf16.msra.mxu0 %v1313
      %1331 = vmatprep.subr.bf16.mxu0 0
      %1332 = vmatpush2.bf16.msra.mxu0 0
      %1333 = vmatprep.subr.bf16.mxu0 0
      %1334 = vmatpush2.bf16.msra.mxu0 0
      %1335 = vmatprep.subr.bf16.mxu0 0
      %1336 = vmatpush2.bf16.msra.mxu0 0
      %1337 = vmatprep.subr.bf16.mxu0 0
      %1338 = vmatpush2.bf16.msra.mxu0 0
      %1339 = vmatprep.subr.bf16.mxu0 0
      %1340 = vmatpush2.bf16.msra.mxu0 0
      %1341 = vmatprep.subr.bf16.mxu0 0
      %1342 = vmatpush2.bf16.msra.mxu0 0
      %1343 = vmatprep.subr.bf16.mxu0 0
      %1344 = vmatpush2.bf16.msra.mxu0 0
      %1345 = vmatprep.subr.bf16.mxu0 0
      %1346 = vmatpush2.bf16.msra.mxu0 0
      %1347 = vmatprep.mubr.bf16.mxu0 0
      %1348 = vmatmul.mubr.bf16.gmra.mxu0 %v1205
      %v1349 = vpop.f32.mrf.mxu0
      %v1350 = vadd.f32 %v871, %v1349
      %v1351 = vpop.f32.mrf.mxu0
      %v1352 = vpop.f32.mrf.mxu0
      %v1353 = vadd.f32 %v874, %v1352
      %v1354 = vpop.f32.mrf.mxu0
      %1355 = vmatprep.mubr.bf16.mxu0 0
      %1356 = vmatmul.mubr.bf16.gmra.mxu0 %v1208
      %v1357 = vpop.f32.mrf.mxu0
      %v1358 = vadd.f32 %v879, %v1357
      %v1359 = vpop.f32.mrf.mxu0
      %v1360 = vpop.f32.mrf.mxu0
      %v1361 = vadd.f32 %v882, %v1360
      %v1362 = vpop.f32.mrf.mxu0
      %1363 = vmatprep.mubr.bf16.mxu0 0
      %1364 = vmatmul.mubr.bf16.gmra.mxu0 %v1211
      %v1365 = vpop.f32.mrf.mxu0
      %v1366 = vadd.f32 %v887, %v1365
      %v1367 = vpop.f32.mrf.mxu0
      %v1368 = vpop.f32.mrf.mxu0
      %v1369 = vadd.f32 %v890, %v1368
      %v1370 = vpop.f32.mrf.mxu0
      %1371 = vmatprep.mubr.bf16.mxu0 0
      %1372 = vmatmul.mubr.bf16.gmra.mxu0 %v1214
      %v1373 = vpop.f32.mrf.mxu0
      %v1374 = vadd.f32 %v895, %v1373
      %v1375 = vpop.f32.mrf.mxu0
      %v1376 = vpop.f32.mrf.mxu0
      %v1377 = vadd.f32 %v898, %v1376
      %v1378 = vpop.f32.mrf.mxu0
      %1379 = vmatprep.mubr.bf16.mxu0 0
      %1380 = vmatmul.mubr.bf16.gmra.mxu0 %v1217
      %v1381 = vpop.f32.mrf.mxu0
      %v1382 = vadd.f32 %v903, %v1381
      %v1383 = vpop.f32.mrf.mxu0
      %v1384 = vpop.f32.mrf.mxu0
      %v1385 = vadd.f32 %v906, %v1384
      %v1386 = vpop.f32.mrf.mxu0
      %1387 = vmatprep.mubr.bf16.mxu0 0
      %1388 = vmatmul.mubr.bf16.gmra.mxu0 %v1220
      %v1389 = vpop.f32.mrf.mxu0
      %v1390 = vadd.f32 %v911, %v1389
      %v1391 = vpop.f32.mrf.mxu0
      %v1392 = vpop.f32.mrf.mxu0
      %v1393 = vadd.f32 %v914, %v1392
      %v1394 = vpop.f32.mrf.mxu0
      %1395 = vmatprep.mubr.bf16.mxu0 0
      %1396 = vmatmul.mubr.bf16.gmra.mxu0 %v1223
      %v1397 = vpop.f32.mrf.mxu0
      %v1398 = vadd.f32 %v919, %v1397
      %v1399 = vpop.f32.mrf.mxu0
      %v1400 = vpop.f32.mrf.mxu0
      %v1401 = vadd.f32 %v922, %v1400
      %v1402 = vpop.f32.mrf.mxu0
      %1403 = vmatprep.mubr.bf16.mxu0 0
      %1404 = vmatmul.mubr.bf16.gmra.mxu0 %v1226
      %v1405 = vpop.f32.mrf.mxu0
      %v1406 = vadd.f32 %v927, %v1405
      %v1407 = vpop.f32.mrf.mxu0
      %v1408 = vpop.f32.mrf.mxu0
      %v1409 = vadd.f32 %v930, %v1408
      %v1410 = vpop.f32.mrf.mxu0
      %1411 = vmatprep.mubr.bf16.mxu0 0
      %1412 = vmatmul.mubr.bf16.gmra.mxu0 %v1229
      %v1413 = vpop.f32.mrf.mxu0
      %v1414 = vadd.f32 %v935, %v1413
      %v1415 = vpop.f32.mrf.mxu0
      %v1416 = vpop.f32.mrf.mxu0
      %v1417 = vadd.f32 %v938, %v1416
      %v1418 = vpop.f32.mrf.mxu0
      %1419 = vmatprep.mubr.bf16.mxu0 0
      %1420 = vmatmul.mubr.bf16.gmra.mxu0 %v1232
      %v1421 = vpop.f32.mrf.mxu0
      %v1422 = vadd.f32 %v943, %v1421
      %v1423 = vpop.f32.mrf.mxu0
      %v1424 = vpop.f32.mrf.mxu0
      %v1425 = vadd.f32 %v946, %v1424
      %v1426 = vpop.f32.mrf.mxu0
      %1427 = vmatprep.mubr.bf16.mxu0 0
      %1428 = vmatmul.mubr.bf16.gmra.mxu0 %v1235
      %v1429 = vpop.f32.mrf.mxu0
      %v1430 = vadd.f32 %v951, %v1429
      %v1431 = vpop.f32.mrf.mxu0
      %v1432 = vpop.f32.mrf.mxu0
      %v1433 = vadd.f32 %v954, %v1432
      %v1434 = vpop.f32.mrf.mxu0
      %1435 = vmatprep.mubr.bf16.mxu0 0
      %1436 = vmatmul.mubr.bf16.gmra.mxu0 %v1238
      %v1437 = vpop.f32.mrf.mxu0
      %v1438 = vadd.f32 %v959, %v1437
      %v1439 = vpop.f32.mrf.mxu0
      %v1440 = vpop.f32.mrf.mxu0
      %v1441 = vadd.f32 %v962, %v1440
      %v1442 = vpop.f32.mrf.mxu0
      %1443 = vmatprep.mubr.bf16.mxu0 0
      %1444 = vmatmul.mubr.bf16.gmra.mxu0 %v1241
      %v1445 = vpop.f32.mrf.mxu0
      %v1446 = vadd.f32 %v967, %v1445
      %v1447 = vpop.f32.mrf.mxu0
      %v1448 = vpop.f32.mrf.mxu0
      %v1449 = vadd.f32 %v970, %v1448
      %v1450 = vpop.f32.mrf.mxu0
      %1451 = vmatprep.mubr.bf16.mxu0 0
      %1452 = vmatmul.mubr.bf16.gmra.mxu0 %v1244
      %v1453 = vpop.f32.mrf.mxu0
      %v1454 = vadd.f32 %v975, %v1453
      %v1455 = vpop.f32.mrf.mxu0
      %v1456 = vpop.f32.mrf.mxu0
      %v1457 = vadd.f32 %v978, %v1456
      %v1458 = vpop.f32.mrf.mxu0
      %1459 = vmatprep.mubr.bf16.mxu0 0
      %1460 = vmatmul.mubr.bf16.gmra.mxu0 %v1247
      %v1461 = vpop.f32.mrf.mxu0
      %v1462 = vadd.f32 %v983, %v1461
      %v1463 = vpop.f32.mrf.mxu0
      %v1464 = vpop.f32.mrf.mxu0
      %v1465 = vadd.f32 %v986, %v1464
      %v1466 = vpop.f32.mrf.mxu0
      %1467 = vmatprep.mubr.bf16.mxu0 0
      %1468 = vmatmul.mubr.bf16.gmra.mxu0 %v1250
      %v1469 = vpop.f32.mrf.mxu0
      %v1470 = vadd.f32 %v991, %v1469
      %v1471 = vpop.f32.mrf.mxu0
      %v1472 = vpop.f32.mrf.mxu0
      %v1473 = vadd.f32 %v994, %v1472
      %v1474 = vpop.f32.mrf.mxu0
      %1475 = vmatprep.mubr.bf16.mxu0 0
      %1476 = vmatmul.mubr.bf16.gmra.mxu0 %v1253
      %v1477 = vpop.f32.mrf.mxu0
      %v1478 = vadd.f32 %v999, %v1477
      %v1479 = vpop.f32.mrf.mxu0
      %v1480 = vpop.f32.mrf.mxu0
      %v1481 = vadd.f32 %v1002, %v1480
      %v1482 = vpop.f32.mrf.mxu0
      %1483 = vmatprep.mubr.bf16.mxu0 0
      %1484 = vmatmul.mubr.bf16.gmra.mxu0 %v1256
      %v1485 = vpop.f32.mrf.mxu0
      %v1486 = vadd.f32 %v1007, %v1485
      %v1487 = vpop.f32.mrf.mxu0
      %v1488 = vpop.f32.mrf.mxu0
      %v1489 = vadd.f32 %v1010, %v1488
      %v1490 = vpop.f32.mrf.mxu0
      %1491 = vmatprep.mubr.bf16.mxu0 0
      %1492 = vmatmul.mubr.bf16.gmra.mxu0 %v1259
      %v1493 = vpop.f32.mrf.mxu0
      %v1494 = vadd.f32 %v1015, %v1493
      %v1495 = vpop.f32.mrf.mxu0
      %v1496 = vpop.f32.mrf.mxu0
      %v1497 = vadd.f32 %v1018, %v1496
      %v1498 = vpop.f32.mrf.mxu0
      %1499 = vmatprep.mubr.bf16.mxu0 0
      %1500 = vmatmul.mubr.bf16.gmra.mxu0 %v1262
      %v1501 = vpop.f32.mrf.mxu0
      %v1502 = vadd.f32 %v1023, %v1501
      %v1503 = vpop.f32.mrf.mxu0
      %v1504 = vpop.f32.mrf.mxu0
      %v1505 = vadd.f32 %v1026, %v1504
      %v1506 = vpop.f32.mrf.mxu0
      %1507 = vmatprep.mubr.bf16.mxu0 0
      %1508 = vmatmul.mubr.bf16.gmra.mxu0 %v1265
      %v1509 = vpop.f32.mrf.mxu0
      %v1510 = vadd.f32 %v1031, %v1509
      %v1511 = vpop.f32.mrf.mxu0
      %v1512 = vpop.f32.mrf.mxu0
      %v1513 = vadd.f32 %v1034, %v1512
      %v1514 = vpop.f32.mrf.mxu0
      %1515 = vmatprep.mubr.bf16.mxu0 0
      %1516 = vmatmul.mubr.bf16.gmra.mxu0 %v1268
      %v1517 = vpop.f32.mrf.mxu0
      %v1518 = vadd.f32 %v1039, %v1517
      %v1519 = vpop.f32.mrf.mxu0
      %v1520 = vpop.f32.mrf.mxu0
      %v1521 = vadd.f32 %v1042, %v1520
      %v1522 = vpop.f32.mrf.mxu0
      %1523 = vmatprep.mubr.bf16.mxu0 0
      %1524 = vmatmul.mubr.bf16.gmra.mxu0 %v1271
      %v1525 = vpop.f32.mrf.mxu0
      %v1526 = vadd.f32 %v1047, %v1525
      %v1527 = vpop.f32.mrf.mxu0
      %v1528 = vpop.f32.mrf.mxu0
      %v1529 = vadd.f32 %v1050, %v1528
      %v1530 = vpop.f32.mrf.mxu0
      %1531 = vmatprep.mubr.bf16.mxu0 0
      %1532 = vmatmul.mubr.bf16.gmra.mxu0 %v1274
      %v1533 = vpop.f32.mrf.mxu0
      %v1534 = vadd.f32 %v1055, %v1533
      %v1535 = vpop.f32.mrf.mxu0
      %v1536 = vpop.f32.mrf.mxu0
      %v1537 = vadd.f32 %v1058, %v1536
      %v1538 = vpop.f32.mrf.mxu0
      %1539 = vmatprep.mubr.bf16.mxu0 0
      %1540 = vmatmul.mubr.bf16.gmra.mxu0 %v1277
      %v1541 = vpop.f32.mrf.mxu0
      %v1542 = vadd.f32 %v1063, %v1541
      %v1543 = vpop.f32.mrf.mxu0
      %v1544 = vpop.f32.mrf.mxu0
      %v1545 = vadd.f32 %v1066, %v1544
      %v1546 = vpop.f32.mrf.mxu0
      %1547 = vmatprep.mubr.bf16.mxu0 0
      %1548 = vmatmul.mubr.bf16.gmra.mxu0 %v1280
      %v1549 = vpop.f32.mrf.mxu0
      %v1550 = vadd.f32 %v1071, %v1549
      %v1551 = vpop.f32.mrf.mxu0
      %v1552 = vpop.f32.mrf.mxu0
      %v1553 = vadd.f32 %v1074, %v1552
      %v1554 = vpop.f32.mrf.mxu0
      %1555 = vmatprep.mubr.bf16.mxu0 0
      %1556 = vmatmul.mubr.bf16.gmra.mxu0 %v1283
      %v1557 = vpop.f32.mrf.mxu0
      %v1558 = vadd.f32 %v1079, %v1557
      %v1559 = vpop.f32.mrf.mxu0
      %v1560 = vpop.f32.mrf.mxu0
      %v1561 = vadd.f32 %v1082, %v1560
      %v1562 = vpop.f32.mrf.mxu0
      %1563 = vmatprep.mubr.bf16.mxu0 0
      %1564 = vmatmul.mubr.bf16.gmra.mxu0 %v1286
      %v1565 = vpop.f32.mrf.mxu0
      %v1566 = vadd.f32 %v1087, %v1565
      %v1567 = vpop.f32.mrf.mxu0
      %v1568 = vpop.f32.mrf.mxu0
      %v1569 = vadd.f32 %v1090, %v1568
      %v1570 = vpop.f32.mrf.mxu0
      %1571 = vmatprep.mubr.bf16.mxu0 0
      %1572 = vmatmul.mubr.bf16.gmra.mxu0 %v1289
      %v1573 = vpop.f32.mrf.mxu0
      %v1574 = vadd.f32 %v1095, %v1573
      %v1575 = vpop.f32.mrf.mxu0
      %v1576 = vpop.f32.mrf.mxu0
      %v1577 = vadd.f32 %v1098, %v1576
      %v1578 = vpop.f32.mrf.mxu0
      %1579 = vmatprep.mubr.bf16.mxu0 0
      %1580 = vmatmul.mubr.bf16.gmra.mxu0 %v1292
      %v1581 = vpop.f32.mrf.mxu0
      %v1582 = vadd.f32 %v1103, %v1581
      %v1583 = vpop.f32.mrf.mxu0
      %v1584 = vpop.f32.mrf.mxu0
      %v1585 = vadd.f32 %v1106, %v1584
      %v1586 = vpop.f32.mrf.mxu0
      %1587 = vmatprep.mubr.bf16.mxu0 0
      %1588 = vmatmul.mubr.bf16.gmra.mxu0 %v1295
      %v1589 = vpop.f32.mrf.mxu0
      %v1590 = vadd.f32 %v1111, %v1589
      %v1591 = vpop.f32.mrf.mxu0
      %v1592 = vpop.f32.mrf.mxu0
      %v1593 = vadd.f32 %v1114, %v1592
      %v1594 = vpop.f32.mrf.mxu0
      %1595 = vmatprep.mubr.bf16.mxu0 0
      %1596 = vmatmul.mubr.bf16.gmra.mxu0 %v1298
      %v1597 = vpop.f32.mrf.mxu0
      %v1598 = vadd.f32 %v1119, %v1597
      %v1599 = vpop.f32.mrf.mxu0
      %v1600 = vpop.f32.mrf.mxu0
      %v1601 = vadd.f32 %v1122, %v1600
      %v1602 = vpop.f32.mrf.mxu0
      %1603 = vmatprep.mubr.bf16.mxu0 0
      %1604 = vmatmul.mubr.bf16.gmra.mxu0 %v1301
      %v1605 = vpop.f32.mrf.mxu0
      %v1606 = vadd.f32 %v1127, %v1605
      %v1607 = vpop.f32.mrf.mxu0
      %v1608 = vpop.f32.mrf.mxu0
      %v1609 = vadd.f32 %v1130, %v1608
      %v1610 = vpop.f32.mrf.mxu0
      %1611 = vmatprep.mubr.bf16.mxu0 0
      %1612 = vmatmul.mubr.bf16.gmra.mxu0 %v1304
      %v1613 = vpop.f32.mrf.mxu0
      %v1614 = vadd.f32 %v1135, %v1613
      %v1615 = vpop.f32.mrf.mxu0
      %v1616 = vpop.f32.mrf.mxu0
      %v1617 = vadd.f32 %v1138, %v1616
      %v1618 = vpop.f32.mrf.mxu0
      %1619 = vmatprep.mubr.bf16.mxu0 0
      %1620 = vmatmul.mubr.bf16.gmra.mxu0 %v1307
      %v1621 = vpop.f32.mrf.mxu0
      %v1622 = vadd.f32 %v1143, %v1621
      %v1623 = vpop.f32.mrf.mxu0
      %v1624 = vpop.f32.mrf.mxu0
      %v1625 = vadd.f32 %v1146, %v1624
      %v1626 = vpop.f32.mrf.mxu0
      %1627 = vmatprep.mubr.bf16.mxu0 0
      %1628 = vmatmul.mubr.bf16.gmra.mxu0 %v1310
      %v1629 = vpop.f32.mrf.mxu0
      %v1630 = vadd.f32 %v1151, %v1629
      %v1631 = vpop.f32.mrf.mxu0
      %v1632 = vpop.f32.mrf.mxu0
      %v1633 = vadd.f32 %v1154, %v1632
      %v1634 = vpop.f32.mrf.mxu0
      %1635 = vdwg.mxu0
      %v1636 = vld [vmem:[%s434 + $0x18] sm:$0xf]
      %v1637 = vld [vmem:[%s434 + $0x1c] sm:$0xf]
      %v1638 = vld [vmem:[%s434 + $0x20] sm:$0xf]
      %v1639 = vld [vmem:[%s434 + $0x24] sm:$0xf]
      %v1640 = vld [vmem:[%s434 + $0x28] sm:$0xf]
      %v1641 = vld [vmem:[%s434 + $0x2c] sm:$0xf]
      %v1642 = vld [vmem:[%s434 + $0x30] sm:$0xf]
      %v1643 = vld [vmem:[%s434 + $0x34] sm:$0xf]
      %v1644 = vld [vmem:[%s434 + $0x38] sm:$0xf]
      %v1645 = vld [vmem:[%s434 + $0x3c] sm:$0xf]
      %v1646 = vld [vmem:[%s434 + $0x40] sm:$0xf]
      %v1647 = vld [vmem:[%s434 + $0x44] sm:$0xf]
      %v1648 = vld [vmem:[%s434 + $0x48] sm:$0xf]
      %v1649 = vld [vmem:[%s434 + $0x4c] sm:$0xf]
      %v1650 = vld [vmem:[%s434 + $0x50] sm:$0xf]
      %v1651 = vld [vmem:[%s434 + $0x54] sm:$0xf]
      %v1652 = vld [vmem:[%s434 + $0x58] sm:$0xf]
      %v1653 = vld [vmem:[%s434 + $0x5c] sm:$0xf]
      %v1654 = vld [vmem:[%s434 + $0x60] sm:$0xf]
      %v1655 = vld [vmem:[%s434 + $0x64] sm:$0xf]
      %v1656 = vld [vmem:[%s434 + $0x68] sm:$0xf]
      %v1657 = vld [vmem:[%s434 + $0x6c] sm:$0xf]
      %v1658 = vld [vmem:[%s434 + $0x70] sm:$0xf]
      %v1659 = vld [vmem:[%s434 + $0x74] sm:$0xf]
      %v1660 = vld [vmem:[%s434 + $0x78] sm:$0xf]
      %v1661 = vld [vmem:[%s434 + $0x7c] sm:$0xf]
      %v1662 = vld [vmem:[%s434 + $0x80] sm:$0xf]
      %v1663 = vld [vmem:[%s434 + $0x84] sm:$0xf]
      %v1664 = vld [vmem:[%s434 + $0x88] sm:$0xf]
      %v1665 = vld [vmem:[%s434 + $0x8c] sm:$0xf]
      %v1666 = vld [vmem:[%s434 + $0x90] sm:$0xf]
      %v1667 = vld [vmem:[%s434 + $0x94] sm:$0xf]
      %v1668 = vld [vmem:[%s434 + $0x98] sm:$0xf]
      %v1669 = vld [vmem:[%s434 + $0x9c] sm:$0xf]
      %v1670 = vld [vmem:[%s434 + $0xa0] sm:$0xf]
      %v1671 = vld [vmem:[%s434 + $0xa4] sm:$0xf]
      %v1672 = vld [vmem:[%s434 + $0xa8] sm:$0xf]
      %v1673 = vld [vmem:[%s434 + $0xac] sm:$0xf]
      %v1674 = vld [vmem:[%s434 + $0xb0] sm:$0xf]
      %v1675 = vld [vmem:[%s434 + $0xb4] sm:$0xf]
      %v1676 = vld [vmem:[%s434 + $0xb8] sm:$0xf]
      %v1677 = vld [vmem:[%s434 + $0xbc] sm:$0xf]
      %v1678 = vld [vmem:[%s434 + $0xc0] sm:$0xf]
      %v1679 = vld [vmem:[%s434 + $0xc4] sm:$0xf]
      %v1680 = vld [vmem:[%s434 + $0xc8] sm:$0xf]
      %v1681 = vld [vmem:[%s434 + $0xcc] sm:$0xf]
      %v1682 = vld [vmem:[%s434 + $0xd0] sm:$0xf]
      %v1683 = vld [vmem:[%s434 + $0xd4] sm:$0xf]
      %v1684 = vld [vmem:[%s434 + $0xd8] sm:$0xf]
      %v1685 = vld [vmem:[%s434 + $0xdc] sm:$0xf]
      %v1686 = vld [vmem:[%s434 + $0xe0] sm:$0xf]
      %v1687 = vld [vmem:[%s434 + $0xe4] sm:$0xf]
      %v1688 = vld [vmem:[%s434 + $0xe8] sm:$0xf]
      %v1689 = vld [vmem:[%s434 + $0xec] sm:$0xf]
      %v1690 = vld [vmem:[%s434 + $0xf0] sm:$0xf]
      %v1691 = vld [vmem:[%s434 + $0xf4] sm:$0xf]
      %v1692 = vld [vmem:[%s434 + $0xf8] sm:$0xf]
      %v1693 = vld [vmem:[%s434 + $0xfc] sm:$0xf]
      %v1694 = vld [vmem:[%s434 + $0x100] sm:$0xf]
      %v1695 = vld [vmem:[%s434 + $0x104] sm:$0xf]
      %v1696 = vld [vmem:[%s434 + $0x108] sm:$0xf]
      %v1697 = vld [vmem:[%s434 + $0x10c] sm:$0xf]
      %v1698 = vld [vmem:[%s434 + $0x110] sm:$0xf]
      %v1699 = vld [vmem:[%s434 + $0x114] sm:$0xf]
      %v1700 = vld [vmem:[%s434 + $0x118] sm:$0xf]
      %v1701 = vld [vmem:[%s434 + $0x11c] sm:$0xf]
      %v1702 = vld [vmem:[%s434 + $0x120] sm:$0xf]
      %v1703 = vld [vmem:[%s434 + $0x124] sm:$0xf]
      %v1704 = vld [vmem:[%s434 + $0x128] sm:$0xf]
      %v1705 = vld [vmem:[%s434 + $0x12c] sm:$0xf]
      %v1706 = vld [vmem:[%s434 + $0x130] sm:$0xf]
      %v1707 = vld [vmem:[%s434 + $0x134] sm:$0xf]
      %s1708 = scalar_lea.vmem %s1, 16
      %v1709 = vld [vmem:[%s1708] sm:$0xf]
      %v1710 = vld [vmem:[%s1708 + $0x4] sm:$0x3]
      %v1783 = vunpack.c.l.b16 %v1636
      %v1784 = vunpack.c.l.b16 %v1637
      %v1785 = vunpack.c.l.b16 %v1638
      %v1786 = vunpack.c.l.b16 %v1639
      %v1787 = vunpack.c.l.b16 %v1640
      %v1788 = vunpack.c.l.b16 %v1641
      %v1789 = vunpack.c.l.b16 %v1642
      %v1790 = vunpack.c.l.b16 %v1643
      %v1791 = vunpack.c.l.b16 %v1644
      %v1792 = vunpack.c.l.b16 %v1645
      %v1793 = vunpack.c.l.b16 %v1646
      %v1794 = vunpack.c.l.b16 %v1647
      %v1795 = vunpack.c.l.b16 %v1648
      %v1796 = vunpack.c.l.b16 %v1649
      %v1797 = vunpack.c.l.b16 %v1650
      %v1798 = vunpack.c.l.b16 %v1651
      %v1799 = vunpack.c.l.b16 %v1652
      %v1800 = vunpack.c.l.b16 %v1653
      %v1801 = vunpack.c.l.b16 %v1654
      %v1802 = vunpack.c.l.b16 %v1655
      %v1803 = vunpack.c.l.b16 %v1656
      %v1804 = vunpack.c.l.b16 %v1657
      %v1805 = vunpack.c.l.b16 %v1658
      %v1806 = vunpack.c.l.b16 %v1659
      %v1807 = vunpack.c.l.b16 %v1660
      %v1808 = vunpack.c.l.b16 %v1661
      %v1809 = vunpack.c.l.b16 %v1662
      %v1810 = vunpack.c.l.b16 %v1663
      %v1811 = vunpack.c.l.b16 %v1664
      %v1812 = vunpack.c.l.b16 %v1665
      %v1813 = vunpack.c.l.b16 %v1666
      %v1814 = vunpack.c.l.b16 %v1667
      %v1815 = vunpack.c.l.b16 %v1668
      %v1816 = vunpack.c.l.b16 %v1669
      %v1817 = vunpack.c.l.b16 %v1670
      %v1818 = vunpack.c.l.b16 %v1671
      %v1819 = vunpack.c.l.b16 %v1672
      %v1820 = vunpack.c.l.b16 %v1673
      %v1821 = vunpack.c.l.b16 %v1674
      %v1822 = vunpack.c.l.b16 %v1675
      %v1823 = vunpack.c.l.b16 %v1676
      %v1824 = vunpack.c.l.b16 %v1677
      %v1825 = vunpack.c.l.b16 %v1678
      %v1826 = vunpack.c.l.b16 %v1679
      %v1827 = vunpack.c.l.b16 %v1680
      %v1828 = vunpack.c.l.b16 %v1681
      %v1829 = vunpack.c.l.b16 %v1682
      %v1830 = vunpack.c.l.b16 %v1683
      %v1831 = vunpack.c.l.b16 %v1684
      %v1832 = vunpack.c.l.b16 %v1685
      %v1833 = vunpack.c.l.b16 %v1686
      %v1834 = vunpack.c.l.b16 %v1687
      %v1835 = vunpack.c.l.b16 %v1688
      %v1836 = vunpack.c.l.b16 %v1689
      %v1837 = vunpack.c.l.b16 %v1690
      %v1838 = vunpack.c.l.b16 %v1691
      %v1839 = vunpack.c.l.b16 %v1692
      %v1840 = vunpack.c.l.b16 %v1693
      %v1841 = vunpack.c.l.b16 %v1694
      %v1842 = vunpack.c.l.b16 %v1695
      %v1843 = vunpack.c.l.b16 %v1696
      %v1844 = vunpack.c.l.b16 %v1697
      %v1845 = vunpack.c.l.b16 %v1698
      %v1846 = vunpack.c.l.b16 %v1699
      %v1847 = vunpack.c.l.b16 %v1700
      %v1848 = vunpack.c.l.b16 %v1701
      %v1849 = vunpack.c.l.b16 %v1702
      %v1850 = vunpack.c.l.b16 %v1703
      %v1851 = vunpack.c.l.b16 %v1704
      %v1852 = vunpack.c.l.b16 %v1705
      %v1853 = vunpack.c.l.b16 %v1706
      %v1854 = vunpack.c.l.b16 %v1707
      %v1855 = vpack.c.b16 %v1784, %v1783
      %v1856 = vpack.c.b16 %v1786, %v1785
      %v1857 = vpack.c.b16 %v1788, %v1787
      %v1858 = vpack.c.b16 %v1790, %v1789
      %v1859 = vpack.c.b16 %v1792, %v1791
      %v1860 = vpack.c.b16 %v1794, %v1793
      %v1861 = vpack.c.b16 %v1796, %v1795
      %v1862 = vpack.c.b16 %v1798, %v1797
      %v1863 = vpack.c.b16 %v1800, %v1799
      %v1864 = vpack.c.b16 %v1802, %v1801
      %v1865 = vpack.c.b16 %v1804, %v1803
      %v1866 = vpack.c.b16 %v1806, %v1805
      %v1867 = vpack.c.b16 %v1808, %v1807
      %v1868 = vpack.c.b16 %v1810, %v1809
      %v1869 = vpack.c.b16 %v1812, %v1811
      %v1870 = vpack.c.b16 %v1814, %v1813
      %v1871 = vpack.c.b16 %v1816, %v1815
      %v1872 = vpack.c.b16 %v1818, %v1817
      %v1873 = vpack.c.b16 %v1820, %v1819
      %v1874 = vpack.c.b16 %v1822, %v1821
      %v1875 = vpack.c.b16 %v1824, %v1823
      %v1876 = vpack.c.b16 %v1826, %v1825
      %v1877 = vpack.c.b16 %v1828, %v1827
      %v1878 = vpack.c.b16 %v1830, %v1829
      %v1879 = vpack.c.b16 %v1832, %v1831
      %v1880 = vpack.c.b16 %v1834, %v1833
      %v1881 = vpack.c.b16 %v1836, %v1835
      %v1882 = vpack.c.b16 %v1838, %v1837
      %v1883 = vpack.c.b16 %v1840, %v1839
      %v1884 = vpack.c.b16 %v1842, %v1841
      %v1885 = vpack.c.b16 %v1844, %v1843
      %v1886 = vpack.c.b16 %v1846, %v1845
      %v1887 = vpack.c.b16 %v1848, %v1847
      %v1888 = vpack.c.b16 %v1850, %v1849
      %v1889 = vpack.c.b16 %v1852, %v1851
      %v1890 = vpack.c.b16 %v1854, %v1853
      %v1893 = vunpack.c.l.b16 %v1709
      %v1894 = vunpack.c.l.b16 %v1710
      %v1895 = vpack.c.b16 %v1894, %v1893
      %v1897 = vsel %vm723, %v1855, 0
      %v1900 = vsel %vm723, %v1856, 0
      %v1903 = vsel %vm723, %v1857, 0
      %v1906 = vsel %vm723, %v1858, 0
      %v1909 = vsel %vm723, %v1859, 0
      %v1912 = vsel %vm723, %v1860, 0
      %v1915 = vsel %vm723, %v1861, 0
      %v1918 = vsel %vm723, %v1862, 0
      %v1921 = vsel %vm723, %v1863, 0
      %v1924 = vsel %vm723, %v1864, 0
      %v1927 = vsel %vm723, %v1865, 0
      %v1930 = vsel %vm723, %v1866, 0
      %v1933 = vsel %vm723, %v1867, 0
      %v1936 = vsel %vm723, %v1868, 0
      %v1939 = vsel %vm723, %v1869, 0
      %v1942 = vsel %vm723, %v1870, 0
      %v1945 = vsel %vm723, %v1871, 0
      %v1948 = vsel %vm723, %v1872, 0
      %v1951 = vsel %vm723, %v1873, 0
      %v1954 = vsel %vm723, %v1874, 0
      %v1957 = vsel %vm723, %v1875, 0
      %v1960 = vsel %vm723, %v1876, 0
      %v1963 = vsel %vm723, %v1877, 0
      %v1966 = vsel %vm723, %v1878, 0
      %v1969 = vsel %vm723, %v1879, 0
      %v1972 = vsel %vm723, %v1880, 0
      %v1975 = vsel %vm723, %v1881, 0
      %v1978 = vsel %vm723, %v1882, 0
      %v1981 = vsel %vm723, %v1883, 0
      %v1984 = vsel %vm723, %v1884, 0
      %v1987 = vsel %vm723, %v1885, 0
      %v1990 = vsel %vm723, %v1886, 0
      %v1993 = vsel %vm723, %v1887, 0
      %v1996 = vsel %vm723, %v1888, 0
      %v1999 = vsel %vm723, %v1889, 0
      %v2002 = vsel %vm723, %v1890, 0
      %v2005 = vsel %vm832, %v1895, 0
      %2007 = vmatprep.subr.bf16.mxu0 0
      %2008 = vmatpush1.bf16.msra.mxu0 0
      %2009 = vmatprep.subr.bf16.mxu0 0
      %2010 = vmatpush1.bf16.msra.mxu0 0
      %2011 = vmatprep.subr.bf16.mxu0 0
      %2012 = vmatpush1.bf16.msra.mxu0 0
      %2013 = vmatprep.subr.bf16.mxu0 0
      %2014 = vmatpush1.bf16.msra.mxu0 0
      %2015 = vmatprep.subr.bf16.mxu0 0
      %2016 = vmatpush1.bf16.msra.mxu0 0
      %2017 = vmatprep.subr.bf16.mxu0 0
      %2018 = vmatpush1.bf16.msra.mxu0 0
      %2019 = vmatprep.subr.bf16.mxu0 0
      %2020 = vmatpush1.bf16.msra.mxu0 0
      %2021 = vmatprep.subr.bf16.mxu0 0
      %2022 = vmatpush1.bf16.msra.mxu0 %v2005
      %2023 = vmatprep.subr.bf16.mxu0 0
      %2024 = vmatpush2.bf16.msra.mxu0 0
      %2025 = vmatprep.subr.bf16.mxu0 0
      %2026 = vmatpush2.bf16.msra.mxu0 0
      %2027 = vmatprep.subr.bf16.mxu0 0
      %2028 = vmatpush2.bf16.msra.mxu0 0
      %2029 = vmatprep.subr.bf16.mxu0 0
      %2030 = vmatpush2.bf16.msra.mxu0 0
      %2031 = vmatprep.subr.bf16.mxu0 0
      %2032 = vmatpush2.bf16.msra.mxu0 0
      %2033 = vmatprep.subr.bf16.mxu0 0
      %2034 = vmatpush2.bf16.msra.mxu0 0
      %2035 = vmatprep.subr.bf16.mxu0 0
      %2036 = vmatpush2.bf16.msra.mxu0 0
      %2037 = vmatprep.subr.bf16.mxu0 0
      %2038 = vmatpush2.bf16.msra.mxu0 0
      %2039 = vmatprep.mubr.bf16.mxu0 0
      %2040 = vmatmul.mubr.bf16.gmra.mxu0 %v1897
      %v2041 = vpop.f32.mrf.mxu0
      %v2042 = vadd.f32 0.0, %v2041
      %v2043 = vpop.f32.mrf.mxu0
      %v2044 = vpop.f32.mrf.mxu0
      %v2045 = vadd.f32 0.0, %v2044
      %v2046 = vpop.f32.mrf.mxu0
      %2047 = vmatprep.mubr.bf16.mxu0 0
      %2048 = vmatmul.mubr.bf16.gmra.mxu0 %v1900
      %v2049 = vpop.f32.mrf.mxu0
      %v2050 = vadd.f32 0.0, %v2049
      %v2051 = vpop.f32.mrf.mxu0
      %v2052 = vpop.f32.mrf.mxu0
      %v2053 = vadd.f32 0.0, %v2052
      %v2054 = vpop.f32.mrf.mxu0
      %2055 = vmatprep.mubr.bf16.mxu0 0
      %2056 = vmatmul.mubr.bf16.gmra.mxu0 %v1903
      %v2057 = vpop.f32.mrf.mxu0
      %v2058 = vadd.f32 0.0, %v2057
      %v2059 = vpop.f32.mrf.mxu0
      %v2060 = vpop.f32.mrf.mxu0
      %v2061 = vadd.f32 0.0, %v2060
      %v2062 = vpop.f32.mrf.mxu0
      %2063 = vmatprep.mubr.bf16.mxu0 0
      %2064 = vmatmul.mubr.bf16.gmra.mxu0 %v1906
      %v2065 = vpop.f32.mrf.mxu0
      %v2066 = vadd.f32 0.0, %v2065
      %v2067 = vpop.f32.mrf.mxu0
      %v2068 = vpop.f32.mrf.mxu0
      %v2069 = vadd.f32 0.0, %v2068
      %v2070 = vpop.f32.mrf.mxu0
      %2071 = vmatprep.mubr.bf16.mxu0 0
      %2072 = vmatmul.mubr.bf16.gmra.mxu0 %v1909
      %v2073 = vpop.f32.mrf.mxu0
      %v2074 = vadd.f32 0.0, %v2073
      %v2075 = vpop.f32.mrf.mxu0
      %v2076 = vpop.f32.mrf.mxu0
      %v2077 = vadd.f32 0.0, %v2076
      %v2078 = vpop.f32.mrf.mxu0
      %2079 = vmatprep.mubr.bf16.mxu0 0
      %2080 = vmatmul.mubr.bf16.gmra.mxu0 %v1912
      %v2081 = vpop.f32.mrf.mxu0
      %v2082 = vadd.f32 0.0, %v2081
      %v2083 = vpop.f32.mrf.mxu0
      %v2084 = vpop.f32.mrf.mxu0
      %v2085 = vadd.f32 0.0, %v2084
      %v2086 = vpop.f32.mrf.mxu0
      %2087 = vmatprep.mubr.bf16.mxu0 0
      %2088 = vmatmul.mubr.bf16.gmra.mxu0 %v1915
      %v2089 = vpop.f32.mrf.mxu0
      %v2090 = vadd.f32 0.0, %v2089
      %v2091 = vpop.f32.mrf.mxu0
      %v2092 = vpop.f32.mrf.mxu0
      %v2093 = vadd.f32 0.0, %v2092
      %v2094 = vpop.f32.mrf.mxu0
      %2095 = vmatprep.mubr.bf16.mxu0 0
      %2096 = vmatmul.mubr.bf16.gmra.mxu0 %v1918
      %v2097 = vpop.f32.mrf.mxu0
      %v2098 = vadd.f32 0.0, %v2097
      %v2099 = vpop.f32.mrf.mxu0
      %v2100 = vpop.f32.mrf.mxu0
      %v2101 = vadd.f32 0.0, %v2100
      %v2102 = vpop.f32.mrf.mxu0
      %2103 = vmatprep.mubr.bf16.mxu0 0
      %2104 = vmatmul.mubr.bf16.gmra.mxu0 %v1921
      %v2105 = vpop.f32.mrf.mxu0
      %v2106 = vadd.f32 0.0, %v2105
      %v2107 = vpop.f32.mrf.mxu0
      %v2108 = vpop.f32.mrf.mxu0
      %v2109 = vadd.f32 0.0, %v2108
      %v2110 = vpop.f32.mrf.mxu0
      %2111 = vmatprep.mubr.bf16.mxu0 0
      %2112 = vmatmul.mubr.bf16.gmra.mxu0 %v1924
      %v2113 = vpop.f32.mrf.mxu0
      %v2114 = vadd.f32 0.0, %v2113
      %v2115 = vpop.f32.mrf.mxu0
      %v2116 = vpop.f32.mrf.mxu0
      %v2117 = vadd.f32 0.0, %v2116
      %v2118 = vpop.f32.mrf.mxu0
      %2119 = vmatprep.mubr.bf16.mxu0 0
      %2120 = vmatmul.mubr.bf16.gmra.mxu0 %v1927
      %v2121 = vpop.f32.mrf.mxu0
      %v2122 = vadd.f32 0.0, %v2121
      %v2123 = vpop.f32.mrf.mxu0
      %v2124 = vpop.f32.mrf.mxu0
      %v2125 = vadd.f32 0.0, %v2124
      %v2126 = vpop.f32.mrf.mxu0
      %2127 = vmatprep.mubr.bf16.mxu0 0
      %2128 = vmatmul.mubr.bf16.gmra.mxu0 %v1930
      %v2129 = vpop.f32.mrf.mxu0
      %v2130 = vadd.f32 0.0, %v2129
      %v2131 = vpop.f32.mrf.mxu0
      %v2132 = vpop.f32.mrf.mxu0
      %v2133 = vadd.f32 0.0, %v2132
      %v2134 = vpop.f32.mrf.mxu0
      %2135 = vmatprep.mubr.bf16.mxu0 0
      %2136 = vmatmul.mubr.bf16.gmra.mxu0 %v1933
      %v2137 = vpop.f32.mrf.mxu0
      %v2138 = vadd.f32 0.0, %v2137
      %v2139 = vpop.f32.mrf.mxu0
      %v2140 = vpop.f32.mrf.mxu0
      %v2141 = vadd.f32 0.0, %v2140
      %v2142 = vpop.f32.mrf.mxu0
      %2143 = vmatprep.mubr.bf16.mxu0 0
      %2144 = vmatmul.mubr.bf16.gmra.mxu0 %v1936
      %v2145 = vpop.f32.mrf.mxu0
      %v2146 = vadd.f32 0.0, %v2145
      %v2147 = vpop.f32.mrf.mxu0
      %v2148 = vpop.f32.mrf.mxu0
      %v2149 = vadd.f32 0.0, %v2148
      %v2150 = vpop.f32.mrf.mxu0
      %2151 = vmatprep.mubr.bf16.mxu0 0
      %2152 = vmatmul.mubr.bf16.gmra.mxu0 %v1939
      %v2153 = vpop.f32.mrf.mxu0
      %v2154 = vadd.f32 0.0, %v2153
      %v2155 = vpop.f32.mrf.mxu0
      %v2156 = vpop.f32.mrf.mxu0
      %v2157 = vadd.f32 0.0, %v2156
      %v2158 = vpop.f32.mrf.mxu0
      %2159 = vmatprep.mubr.bf16.mxu0 0
      %2160 = vmatmul.mubr.bf16.gmra.mxu0 %v1942
      %v2161 = vpop.f32.mrf.mxu0
      %v2162 = vadd.f32 0.0, %v2161
      %v2163 = vpop.f32.mrf.mxu0
      %v2164 = vpop.f32.mrf.mxu0
      %v2165 = vadd.f32 0.0, %v2164
      %v2166 = vpop.f32.mrf.mxu0
      %2167 = vmatprep.mubr.bf16.mxu0 0
      %2168 = vmatmul.mubr.bf16.gmra.mxu0 %v1945
      %v2169 = vpop.f32.mrf.mxu0
      %v2170 = vadd.f32 0.0, %v2169
      %v2171 = vpop.f32.mrf.mxu0
      %v2172 = vpop.f32.mrf.mxu0
      %v2173 = vadd.f32 0.0, %v2172
      %v2174 = vpop.f32.mrf.mxu0
      %2175 = vmatprep.mubr.bf16.mxu0 0
      %2176 = vmatmul.mubr.bf16.gmra.mxu0 %v1948
      %v2177 = vpop.f32.mrf.mxu0
      %v2178 = vadd.f32 0.0, %v2177
      %v2179 = vpop.f32.mrf.mxu0
      %v2180 = vpop.f32.mrf.mxu0
      %v2181 = vadd.f32 0.0, %v2180
      %v2182 = vpop.f32.mrf.mxu0
      %2183 = vmatprep.mubr.bf16.mxu0 0
      %2184 = vmatmul.mubr.bf16.gmra.mxu0 %v1951
      %v2185 = vpop.f32.mrf.mxu0
      %v2186 = vadd.f32 0.0, %v2185
      %v2187 = vpop.f32.mrf.mxu0
      %v2188 = vpop.f32.mrf.mxu0
      %v2189 = vadd.f32 0.0, %v2188
      %v2190 = vpop.f32.mrf.mxu0
      %2191 = vmatprep.mubr.bf16.mxu0 0
      %2192 = vmatmul.mubr.bf16.gmra.mxu0 %v1954
      %v2193 = vpop.f32.mrf.mxu0
      %v2194 = vadd.f32 0.0, %v2193
      %v2195 = vpop.f32.mrf.mxu0
      %v2196 = vpop.f32.mrf.mxu0
      %v2197 = vadd.f32 0.0, %v2196
      %v2198 = vpop.f32.mrf.mxu0
      %2199 = vmatprep.mubr.bf16.mxu0 0
      %2200 = vmatmul.mubr.bf16.gmra.mxu0 %v1957
      %v2201 = vpop.f32.mrf.mxu0
      %v2202 = vadd.f32 0.0, %v2201
      %v2203 = vpop.f32.mrf.mxu0
      %v2204 = vpop.f32.mrf.mxu0
      %v2205 = vadd.f32 0.0, %v2204
      %v2206 = vpop.f32.mrf.mxu0
      %2207 = vmatprep.mubr.bf16.mxu0 0
      %2208 = vmatmul.mubr.bf16.gmra.mxu0 %v1960
      %v2209 = vpop.f32.mrf.mxu0
      %v2210 = vadd.f32 0.0, %v2209
      %v2211 = vpop.f32.mrf.mxu0
      %v2212 = vpop.f32.mrf.mxu0
      %v2213 = vadd.f32 0.0, %v2212
      %v2214 = vpop.f32.mrf.mxu0
      %2215 = vmatprep.mubr.bf16.mxu0 0
      %2216 = vmatmul.mubr.bf16.gmra.mxu0 %v1963
      %v2217 = vpop.f32.mrf.mxu0
      %v2218 = vadd.f32 0.0, %v2217
      %v2219 = vpop.f32.mrf.mxu0
      %v2220 = vpop.f32.mrf.mxu0
      %v2221 = vadd.f32 0.0, %v2220
      %v2222 = vpop.f32.mrf.mxu0
      %2223 = vmatprep.mubr.bf16.mxu0 0
      %2224 = vmatmul.mubr.bf16.gmra.mxu0 %v1966
      %v2225 = vpop.f32.mrf.mxu0
      %v2226 = vadd.f32 0.0, %v2225
      %v2227 = vpop.f32.mrf.mxu0
      %v2228 = vpop.f32.mrf.mxu0
      %v2229 = vadd.f32 0.0, %v2228
      %v2230 = vpop.f32.mrf.mxu0
      %2231 = vmatprep.mubr.bf16.mxu0 0
      %2232 = vmatmul.mubr.bf16.gmra.mxu0 %v1969
      %v2233 = vpop.f32.mrf.mxu0
      %v2234 = vadd.f32 0.0, %v2233
      %v2235 = vpop.f32.mrf.mxu0
      %v2236 = vpop.f32.mrf.mxu0
      %v2237 = vadd.f32 0.0, %v2236
      %v2238 = vpop.f32.mrf.mxu0
      %2239 = vmatprep.mubr.bf16.mxu0 0
      %2240 = vmatmul.mubr.bf16.gmra.mxu0 %v1972
      %v2241 = vpop.f32.mrf.mxu0
      %v2242 = vadd.f32 0.0, %v2241
      %v2243 = vpop.f32.mrf.mxu0
      %v2244 = vpop.f32.mrf.mxu0
      %v2245 = vadd.f32 0.0, %v2244
      %v2246 = vpop.f32.mrf.mxu0
      %2247 = vmatprep.mubr.bf16.mxu0 0
      %2248 = vmatmul.mubr.bf16.gmra.mxu0 %v1975
      %v2249 = vpop.f32.mrf.mxu0
      %v2250 = vadd.f32 0.0, %v2249
      %v2251 = vpop.f32.mrf.mxu0
      %v2252 = vpop.f32.mrf.mxu0
      %v2253 = vadd.f32 0.0, %v2252
      %v2254 = vpop.f32.mrf.mxu0
      %2255 = vmatprep.mubr.bf16.mxu0 0
      %2256 = vmatmul.mubr.bf16.gmra.mxu0 %v1978
      %v2257 = vpop.f32.mrf.mxu0
      %v2258 = vadd.f32 0.0, %v2257
      %v2259 = vpop.f32.mrf.mxu0
      %v2260 = vpop.f32.mrf.mxu0
      %v2261 = vadd.f32 0.0, %v2260
      %v2262 = vpop.f32.mrf.mxu0
      %2263 = vmatprep.mubr.bf16.mxu0 0
      %2264 = vmatmul.mubr.bf16.gmra.mxu0 %v1981
      %v2265 = vpop.f32.mrf.mxu0
      %v2266 = vadd.f32 0.0, %v2265
      %v2267 = vpop.f32.mrf.mxu0
      %v2268 = vpop.f32.mrf.mxu0
      %v2269 = vadd.f32 0.0, %v2268
      %v2270 = vpop.f32.mrf.mxu0
      %2271 = vmatprep.mubr.bf16.mxu0 0
      %2272 = vmatmul.mubr.bf16.gmra.mxu0 %v1984
      %v2273 = vpop.f32.mrf.mxu0
      %v2274 = vadd.f32 0.0, %v2273
      %v2275 = vpop.f32.mrf.mxu0
      %v2276 = vpop.f32.mrf.mxu0
      %v2277 = vadd.f32 0.0, %v2276
      %v2278 = vpop.f32.mrf.mxu0
      %2279 = vmatprep.mubr.bf16.mxu0 0
      %2280 = vmatmul.mubr.bf16.gmra.mxu0 %v1987
      %v2281 = vpop.f32.mrf.mxu0
      %v2282 = vadd.f32 0.0, %v2281
      %v2283 = vpop.f32.mrf.mxu0
      %v2284 = vpop.f32.mrf.mxu0
      %v2285 = vadd.f32 0.0, %v2284
      %v2286 = vpop.f32.mrf.mxu0
      %2287 = vmatprep.mubr.bf16.mxu0 0
      %2288 = vmatmul.mubr.bf16.gmra.mxu0 %v1990
      %v2289 = vpop.f32.mrf.mxu0
      %v2290 = vadd.f32 0.0, %v2289
      %v2291 = vpop.f32.mrf.mxu0
      %v2292 = vpop.f32.mrf.mxu0
      %v2293 = vadd.f32 0.0, %v2292
      %v2294 = vpop.f32.mrf.mxu0
      %2295 = vmatprep.mubr.bf16.mxu0 0
      %2296 = vmatmul.mubr.bf16.gmra.mxu0 %v1993
      %v2297 = vpop.f32.mrf.mxu0
      %v2298 = vadd.f32 0.0, %v2297
      %v2299 = vpop.f32.mrf.mxu0
      %v2300 = vpop.f32.mrf.mxu0
      %v2301 = vadd.f32 0.0, %v2300
      %v2302 = vpop.f32.mrf.mxu0
      %2303 = vmatprep.mubr.bf16.mxu0 0
      %2304 = vmatmul.mubr.bf16.gmra.mxu0 %v1996
      %v2305 = vpop.f32.mrf.mxu0
      %v2306 = vadd.f32 0.0, %v2305
      %v2307 = vpop.f32.mrf.mxu0
      %v2308 = vpop.f32.mrf.mxu0
      %v2309 = vadd.f32 0.0, %v2308
      %v2310 = vpop.f32.mrf.mxu0
      %2311 = vmatprep.mubr.bf16.mxu0 0
      %2312 = vmatmul.mubr.bf16.gmra.mxu0 %v1999
      %v2313 = vpop.f32.mrf.mxu0
      %v2314 = vadd.f32 0.0, %v2313
      %v2315 = vpop.f32.mrf.mxu0
      %v2316 = vpop.f32.mrf.mxu0
      %v2317 = vadd.f32 0.0, %v2316
      %v2318 = vpop.f32.mrf.mxu0
      %2319 = vmatprep.mubr.bf16.mxu0 0
      %2320 = vmatmul.mubr.bf16.gmra.mxu0 %v2002
      %v2321 = vpop.f32.mrf.mxu0
      %v2322 = vadd.f32 0.0, %v2321
      %v2323 = vpop.f32.mrf.mxu0
      %v2324 = vpop.f32.mrf.mxu0
      %v2325 = vadd.f32 0.0, %v2324
      %v2326 = vpop.f32.mrf.mxu0
      %2327 = vdwg.mxu0
      %v2328 = vadd.f32 %v1350, %v2042
      %v2329 = vadd.f32 %v1353, %v2045
      %v2330 = vadd.f32 %v1358, %v2050
      %v2331 = vadd.f32 %v1361, %v2053
      %v2332 = vadd.f32 %v1366, %v2058
      %v2333 = vadd.f32 %v1369, %v2061
      %v2334 = vadd.f32 %v1374, %v2066
      %v2335 = vadd.f32 %v1377, %v2069
      %v2336 = vadd.f32 %v1382, %v2074
      %v2337 = vadd.f32 %v1385, %v2077
      %v2338 = vadd.f32 %v1390, %v2082
      %v2339 = vadd.f32 %v1393, %v2085
      %v2340 = vadd.f32 %v1398, %v2090
      %v2341 = vadd.f32 %v1401, %v2093
      %v2342 = vadd.f32 %v1406, %v2098
      %v2343 = vadd.f32 %v1409, %v2101
      %v2344 = vadd.f32 %v1414, %v2106
      %v2345 = vadd.f32 %v1417, %v2109
      %v2346 = vadd.f32 %v1422, %v2114
      %v2347 = vadd.f32 %v1425, %v2117
      %v2348 = vadd.f32 %v1430, %v2122
      %v2349 = vadd.f32 %v1433, %v2125
      %v2350 = vadd.f32 %v1438, %v2130
      %v2351 = vadd.f32 %v1441, %v2133
      %v2352 = vadd.f32 %v1446, %v2138
      %v2353 = vadd.f32 %v1449, %v2141
      %v2354 = vadd.f32 %v1454, %v2146
      %v2355 = vadd.f32 %v1457, %v2149
      %v2356 = vadd.f32 %v1462, %v2154
      %v2357 = vadd.f32 %v1465, %v2157
      %v2358 = vadd.f32 %v1470, %v2162
      %v2359 = vadd.f32 %v1473, %v2165
      %v2360 = vadd.f32 %v1478, %v2170
      %v2361 = vadd.f32 %v1481, %v2173
      %v2362 = vadd.f32 %v1486, %v2178
      %v2363 = vadd.f32 %v1489, %v2181
      %v2364 = vadd.f32 %v1494, %v2186
      %v2365 = vadd.f32 %v1497, %v2189
      %v2366 = vadd.f32 %v1502, %v2194
      %v2367 = vadd.f32 %v1505, %v2197
      %v2368 = vadd.f32 %v1510, %v2202
      %v2369 = vadd.f32 %v1513, %v2205
      %v2370 = vadd.f32 %v1518, %v2210
      %v2371 = vadd.f32 %v1521, %v2213
      %v2372 = vadd.f32 %v1526, %v2218
      %v2373 = vadd.f32 %v1529, %v2221
      %v2374 = vadd.f32 %v1534, %v2226
      %v2375 = vadd.f32 %v1537, %v2229
      %v2376 = vadd.f32 %v1542, %v2234
      %v2377 = vadd.f32 %v1545, %v2237
      %v2378 = vadd.f32 %v1550, %v2242
      %v2379 = vadd.f32 %v1553, %v2245
      %v2380 = vadd.f32 %v1558, %v2250
      %v2381 = vadd.f32 %v1561, %v2253
      %v2382 = vadd.f32 %v1566, %v2258
      %v2383 = vadd.f32 %v1569, %v2261
      %v2384 = vadd.f32 %v1574, %v2266
      %v2385 = vadd.f32 %v1577, %v2269
      %v2386 = vadd.f32 %v1582, %v2274
      %v2387 = vadd.f32 %v1585, %v2277
      %v2388 = vadd.f32 %v1590, %v2282
      %v2389 = vadd.f32 %v1593, %v2285
      %v2390 = vadd.f32 %v1598, %v2290
      %v2391 = vadd.f32 %v1601, %v2293
      %v2392 = vadd.f32 %v1606, %v2298
      %v2393 = vadd.f32 %v1609, %v2301
      %v2394 = vadd.f32 %v1614, %v2306
      %v2395 = vadd.f32 %v1617, %v2309
      %v2396 = vadd.f32 %v1622, %v2314
      %v2397 = vadd.f32 %v1625, %v2317
      %v2398 = vadd.f32 %v1630, %v2322
      %v2399 = vadd.f32 %v1633, %v2325
      %v2400 = vld [vmem:[%s2] sm:$0x1]
      %v2402 = vlaneseq
      %v2403 = vshrl.u32 %v2402, 7
      %v2404 = vsub.s32 0, %v2403
      %v2405 = vrot.slane %v2400, %v2404
      %v2407 = vadd.f32 %v2328, %v2405
      %v2408 = vadd.f32 %v2329, %v2405
      %v2409 = vadd.f32 %v2330, %v2405
      %v2410 = vadd.f32 %v2331, %v2405
      %v2411 = vadd.f32 %v2332, %v2405
      %v2412 = vadd.f32 %v2333, %v2405
      %v2413 = vadd.f32 %v2334, %v2405
      %v2414 = vadd.f32 %v2335, %v2405
      %v2415 = vadd.f32 %v2336, %v2405
      %v2416 = vadd.f32 %v2337, %v2405
      %v2417 = vadd.f32 %v2338, %v2405
      %v2418 = vadd.f32 %v2339, %v2405
      %v2419 = vadd.f32 %v2340, %v2405
      %v2420 = vadd.f32 %v2341, %v2405
      %v2421 = vadd.f32 %v2342, %v2405
      %v2422 = vadd.f32 %v2343, %v2405
      %v2423 = vadd.f32 %v2344, %v2405
      %v2424 = vadd.f32 %v2345, %v2405
      %v2425 = vadd.f32 %v2346, %v2405
      %v2426 = vadd.f32 %v2347, %v2405
      %v2427 = vadd.f32 %v2348, %v2405
      %v2428 = vadd.f32 %v2349, %v2405
      %v2429 = vadd.f32 %v2350, %v2405
      %v2430 = vadd.f32 %v2351, %v2405
      %v2431 = vadd.f32 %v2352, %v2405
      %v2432 = vadd.f32 %v2353, %v2405
      %v2433 = vadd.f32 %v2354, %v2405
      %v2434 = vadd.f32 %v2355, %v2405
      %v2435 = vadd.f32 %v2356, %v2405
      %v2436 = vadd.f32 %v2357, %v2405
      %v2437 = vadd.f32 %v2358, %v2405
      %v2438 = vadd.f32 %v2359, %v2405
      %v2439 = vadd.f32 %v2360, %v2405
      %v2440 = vadd.f32 %v2361, %v2405
      %v2441 = vadd.f32 %v2362, %v2405
      %v2442 = vadd.f32 %v2363, %v2405
      %v2443 = vadd.f32 %v2364, %v2405
      %v2444 = vadd.f32 %v2365, %v2405
      %v2445 = vadd.f32 %v2366, %v2405
      %v2446 = vadd.f32 %v2367, %v2405
      %v2447 = vadd.f32 %v2368, %v2405
      %v2448 = vadd.f32 %v2369, %v2405
      %v2449 = vadd.f32 %v2370, %v2405
      %v2450 = vadd.f32 %v2371, %v2405
      %v2451 = vadd.f32 %v2372, %v2405
      %v2452 = vadd.f32 %v2373, %v2405
      %v2453 = vadd.f32 %v2374, %v2405
      %v2454 = vadd.f32 %v2375, %v2405
      %v2455 = vadd.f32 %v2376, %v2405
      %v2456 = vadd.f32 %v2377, %v2405
      %v2457 = vadd.f32 %v2378, %v2405
      %v2458 = vadd.f32 %v2379, %v2405
      %v2459 = vadd.f32 %v2380, %v2405
      %v2460 = vadd.f32 %v2381, %v2405
      %v2461 = vadd.f32 %v2382, %v2405
      %v2462 = vadd.f32 %v2383, %v2405
      %v2463 = vadd.f32 %v2384, %v2405
      %v2464 = vadd.f32 %v2385, %v2405
      %v2465 = vadd.f32 %v2386, %v2405
      %v2466 = vadd.f32 %v2387, %v2405
      %v2467 = vadd.f32 %v2388, %v2405
      %v2468 = vadd.f32 %v2389, %v2405
      %v2469 = vadd.f32 %v2390, %v2405
      %v2470 = vadd.f32 %v2391, %v2405
      %v2471 = vadd.f32 %v2392, %v2405
      %v2472 = vadd.f32 %v2393, %v2405
      %v2473 = vadd.f32 %v2394, %v2405
      %v2474 = vadd.f32 %v2395, %v2405
      %v2475 = vadd.f32 %v2396, %v2405
      %v2476 = vadd.f32 %v2397, %v2405
      %v2477 = vadd.f32 %v2398, %v2405
      %v2478 = vadd.f32 %v2399, %v2405
      %v2479 = vmax.f32 %v2407, 0.0
      %v2480 = vmax.f32 %v2408, 0.0
      %v2481 = vmax.f32 %v2409, 0.0
      %v2482 = vmax.f32 %v2410, 0.0
      %v2483 = vmax.f32 %v2411, 0.0
      %v2484 = vmax.f32 %v2412, 0.0
      %v2485 = vmax.f32 %v2413, 0.0
      %v2486 = vmax.f32 %v2414, 0.0
      %v2487 = vmax.f32 %v2415, 0.0
      %v2488 = vmax.f32 %v2416, 0.0
      %v2489 = vmax.f32 %v2417, 0.0
      %v2490 = vmax.f32 %v2418, 0.0
      %v2491 = vmax.f32 %v2419, 0.0
      %v2492 = vmax.f32 %v2420, 0.0
      %v2493 = vmax.f32 %v2421, 0.0
      %v2494 = vmax.f32 %v2422, 0.0
      %v2495 = vmax.f32 %v2423, 0.0
      %v2496 = vmax.f32 %v2424, 0.0
      %v2497 = vmax.f32 %v2425, 0.0
      %v2498 = vmax.f32 %v2426, 0.0
      %v2499 = vmax.f32 %v2427, 0.0
      %v2500 = vmax.f32 %v2428, 0.0
      %v2501 = vmax.f32 %v2429, 0.0
      %v2502 = vmax.f32 %v2430, 0.0
      %v2503 = vmax.f32 %v2431, 0.0
      %v2504 = vmax.f32 %v2432, 0.0
      %v2505 = vmax.f32 %v2433, 0.0
      %v2506 = vmax.f32 %v2434, 0.0
      %v2507 = vmax.f32 %v2435, 0.0
      %v2508 = vmax.f32 %v2436, 0.0
      %v2509 = vmax.f32 %v2437, 0.0
      %v2510 = vmax.f32 %v2438, 0.0
      %v2511 = vmax.f32 %v2439, 0.0
      %v2512 = vmax.f32 %v2440, 0.0
      %v2513 = vmax.f32 %v2441, 0.0
      %v2514 = vmax.f32 %v2442, 0.0
      %v2515 = vmax.f32 %v2443, 0.0
      %v2516 = vmax.f32 %v2444, 0.0
      %v2517 = vmax.f32 %v2445, 0.0
      %v2518 = vmax.f32 %v2446, 0.0
      %v2519 = vmax.f32 %v2447, 0.0
      %v2520 = vmax.f32 %v2448, 0.0
      %v2521 = vmax.f32 %v2449, 0.0
      %v2522 = vmax.f32 %v2450, 0.0
      %v2523 = vmax.f32 %v2451, 0.0
      %v2524 = vmax.f32 %v2452, 0.0
      %v2525 = vmax.f32 %v2453, 0.0
      %v2526 = vmax.f32 %v2454, 0.0
      %v2527 = vmax.f32 %v2455, 0.0
      %v2528 = vmax.f32 %v2456, 0.0
      %v2529 = vmax.f32 %v2457, 0.0
      %v2530 = vmax.f32 %v2458, 0.0
      %v2531 = vmax.f32 %v2459, 0.0
      %v2532 = vmax.f32 %v2460, 0.0
      %v2533 = vmax.f32 %v2461, 0.0
      %v2534 = vmax.f32 %v2462, 0.0
      %v2535 = vmax.f32 %v2463, 0.0
      %v2536 = vmax.f32 %v2464, 0.0
      %v2537 = vmax.f32 %v2465, 0.0
      %v2538 = vmax.f32 %v2466, 0.0
      %v2539 = vmax.f32 %v2467, 0.0
      %v2540 = vmax.f32 %v2468, 0.0
      %v2541 = vmax.f32 %v2469, 0.0
      %v2542 = vmax.f32 %v2470, 0.0
      %v2543 = vmax.f32 %v2471, 0.0
      %v2544 = vmax.f32 %v2472, 0.0
      %v2545 = vmax.f32 %v2473, 0.0
      %v2546 = vmax.f32 %v2474, 0.0
      %v2547 = vmax.f32 %v2475, 0.0
      %v2548 = vmax.f32 %v2476, 0.0
      %v2549 = vmax.f32 %v2477, 0.0
      %v2550 = vmax.f32 %v2478, 0.0
      %2551 = vst.msk [vmem:[#allocation2] sm:$0xff] %vm440, %v2479
      %2552 = vst.msk [vmem:[#allocation2 + $0x8] sm:$0xff] %vm440, %v2480
      %2553 = vst.msk [vmem:[#allocation2 + $0x10] sm:$0xff] %vm440, %v2481
      %2554 = vst.msk [vmem:[#allocation2 + $0x18] sm:$0xff] %vm440, %v2482
      %2555 = vst.msk [vmem:[#allocation2 + $0x20] sm:$0xff] %vm440, %v2483
      %2556 = vst.msk [vmem:[#allocation2 + $0x28] sm:$0xff] %vm440, %v2484
      %2557 = vst.msk [vmem:[#allocation2 + $0x30] sm:$0xff] %vm440, %v2485
      %2558 = vst.msk [vmem:[#allocation2 + $0x38] sm:$0xff] %vm440, %v2486
      %2559 = vst.msk [vmem:[#allocation2 + $0x40] sm:$0xff] %vm440, %v2487
      %2560 = vst.msk [vmem:[#allocation2 + $0x48] sm:$0xff] %vm440, %v2488
      %2561 = vst.msk [vmem:[#allocation2 + $0x50] sm:$0xff] %vm440, %v2489
      %2562 = vst.msk [vmem:[#allocation2 + $0x58] sm:$0xff] %vm440, %v2490
      %2563 = vst.msk [vmem:[#allocation2 + $0x60] sm:$0xff] %vm440, %v2491
      %2564 = vst.msk [vmem:[#allocation2 + $0x68] sm:$0xff] %vm440, %v2492
      %2565 = vst.msk [vmem:[#allocation2 + $0x70] sm:$0xff] %vm440, %v2493
      %2566 = vst.msk [vmem:[#allocation2 + $0x78] sm:$0xff] %vm440, %v2494
      %2567 = vst.msk [vmem:[#allocation2 + $0x80] sm:$0xff] %vm440, %v2495
      %2568 = vst.msk [vmem:[#allocation2 + $0x88] sm:$0xff] %vm440, %v2496
      %2569 = vst.msk [vmem:[#allocation2 + $0x90] sm:$0xff] %vm440, %v2497
      %2570 = vst.msk [vmem:[#allocation2 + $0x98] sm:$0xff] %vm440, %v2498
      %2571 = vst.msk [vmem:[#allocation2 + $0xa0] sm:$0xff] %vm440, %v2499
      %2572 = vst.msk [vmem:[#allocation2 + $0xa8] sm:$0xff] %vm440, %v2500
      %2573 = vst.msk [vmem:[#allocation2 + $0xb0] sm:$0xff] %vm440, %v2501
      %2574 = vst.msk [vmem:[#allocation2 + $0xb8] sm:$0xff] %vm440, %v2502
      %2575 = vst.msk [vmem:[#allocation2 + $0xc0] sm:$0xff] %vm440, %v2503
      %2576 = vst.msk [vmem:[#allocation2 + $0xc8] sm:$0xff] %vm440, %v2504
      %2577 = vst.msk [vmem:[#allocation2 + $0xd0] sm:$0xff] %vm440, %v2505
      %2578 = vst.msk [vmem:[#allocation2 + $0xd8] sm:$0xff] %vm440, %v2506
      %2579 = vst.msk [vmem:[#allocation2 + $0xe0] sm:$0xff] %vm440, %v2507
      %2580 = vst.msk [vmem:[#allocation2 + $0xe8] sm:$0xff] %vm440, %v2508
      %2581 = vst.msk [vmem:[#allocation2 + $0xf0] sm:$0xff] %vm440, %v2509
      %2582 = vst.msk [vmem:[#allocation2 + $0xf8] sm:$0xff] %vm440, %v2510
      %2583 = vst.msk [vmem:[#allocation2 + $0x100] sm:$0xff] %vm440, %v2511
      %2584 = vst.msk [vmem:[#allocation2 + $0x108] sm:$0xff] %vm440, %v2512
      %2585 = vst.msk [vmem:[#allocation2 + $0x110] sm:$0xff] %vm440, %v2513
      %2586 = vst.msk [vmem:[#allocation2 + $0x118] sm:$0xff] %vm440, %v2514
      %2587 = vst.msk [vmem:[#allocation2 + $0x120] sm:$0xff] %vm440, %v2515
      %2588 = vst.msk [vmem:[#allocation2 + $0x128] sm:$0xff] %vm440, %v2516
      %2589 = vst.msk [vmem:[#allocation2 + $0x130] sm:$0xff] %vm440, %v2517
      %2590 = vst.msk [vmem:[#allocation2 + $0x138] sm:$0xff] %vm440, %v2518
      %2591 = vst.msk [vmem:[#allocation2 + $0x140] sm:$0xff] %vm440, %v2519
      %2592 = vst.msk [vmem:[#allocation2 + $0x148] sm:$0xff] %vm440, %v2520
      %2593 = vst.msk [vmem:[#allocation2 + $0x150] sm:$0xff] %vm440, %v2521
      %2594 = vst.msk [vmem:[#allocation2 + $0x158] sm:$0xff] %vm440, %v2522
      %2595 = vst.msk [vmem:[#allocation2 + $0x160] sm:$0xff] %vm440, %v2523
      %2596 = vst.msk [vmem:[#allocation2 + $0x168] sm:$0xff] %vm440, %v2524
      %2597 = vst.msk [vmem:[#allocation2 + $0x170] sm:$0xff] %vm440, %v2525
      %2598 = vst.msk [vmem:[#allocation2 + $0x178] sm:$0xff] %vm440, %v2526
      %2599 = vst.msk [vmem:[#allocation2 + $0x180] sm:$0xff] %vm440, %v2527
      %2600 = vst.msk [vmem:[#allocation2 + $0x188] sm:$0xff] %vm440, %v2528
      %2601 = vst.msk [vmem:[#allocation2 + $0x190] sm:$0xff] %vm440, %v2529
      %2602 = vst.msk [vmem:[#allocation2 + $0x198] sm:$0xff] %vm440, %v2530
      %2603 = vst.msk [vmem:[#allocation2 + $0x1a0] sm:$0xff] %vm440, %v2531
      %2604 = vst.msk [vmem:[#allocation2 + $0x1a8] sm:$0xff] %vm440, %v2532
      %2605 = vst.msk [vmem:[#allocation2 + $0x1b0] sm:$0xff] %vm440, %v2533
      %2606 = vst.msk [vmem:[#allocation2 + $0x1b8] sm:$0xff] %vm440, %v2534
      %2607 = vst.msk [vmem:[#allocation2 + $0x1c0] sm:$0xff] %vm440, %v2535
      %2608 = vst.msk [vmem:[#allocation2 + $0x1c8] sm:$0xff] %vm440, %v2536
      %2609 = vst.msk [vmem:[#allocation2 + $0x1d0] sm:$0xff] %vm440, %v2537
      %2610 = vst.msk [vmem:[#allocation2 + $0x1d8] sm:$0xff] %vm440, %v2538
      %2611 = vst.msk [vmem:[#allocation2 + $0x1e0] sm:$0xff] %vm440, %v2539
      %2612 = vst.msk [vmem:[#allocation2 + $0x1e8] sm:$0xff] %vm440, %v2540
      %2613 = vst.msk [vmem:[#allocation2 + $0x1f0] sm:$0xff] %vm440, %v2541
      %2614 = vst.msk [vmem:[#allocation2 + $0x1f8] sm:$0xff] %vm440, %v2542
      %2615 = vst.msk [vmem:[#allocation2 + $0x200] sm:$0xff] %vm440, %v2543
      %2616 = vst.msk [vmem:[#allocation2 + $0x208] sm:$0xff] %vm440, %v2544
      %2617 = vst.msk [vmem:[#allocation2 + $0x210] sm:$0xff] %vm440, %v2545
      %2618 = vst.msk [vmem:[#allocation2 + $0x218] sm:$0xff] %vm440, %v2546
      %2619 = vst.msk [vmem:[#allocation2 + $0x220] sm:$0xff] %vm440, %v2547
      %2620 = vst.msk [vmem:[#allocation2 + $0x228] sm:$0xff] %vm440, %v2548
      %2621 = vst.msk [vmem:[#allocation2 + $0x230] sm:$0xff] %vm440, %v2549
      %2622 = vst.msk [vmem:[#allocation2 + $0x238] sm:$0xff] %vm440, %v2550
      %v2623 = vld [vmem:[#allocation2] sm:$0xff]
      %v2624 = vld [vmem:[#allocation2 + $0x8] sm:$0xff]
      %v2625 = vld [vmem:[#allocation2 + $0x10] sm:$0xff]
      %v2626 = vld [vmem:[#allocation2 + $0x18] sm:$0xff]
      %v2627 = vld [vmem:[#allocation2 + $0x20] sm:$0xff]
      %v2628 = vld [vmem:[#allocation2 + $0x28] sm:$0xff]
      %v2629 = vld [vmem:[#allocation2 + $0x30] sm:$0xff]
      %v2630 = vld [vmem:[#allocation2 + $0x38] sm:$0xff]
      %v2631 = vld [vmem:[#allocation2 + $0x40] sm:$0xff]
      %v2632 = vld [vmem:[#allocation2 + $0x48] sm:$0xff]
      %v2633 = vld [vmem:[#allocation2 + $0x50] sm:$0xff]
      %v2634 = vld [vmem:[#allocation2 + $0x58] sm:$0xff]
      %v2635 = vld [vmem:[#allocation2 + $0x60] sm:$0xff]
      %v2636 = vld [vmem:[#allocation2 + $0x68] sm:$0xff]
      %v2637 = vld [vmem:[#allocation2 + $0x70] sm:$0xff]
      %v2638 = vld [vmem:[#allocation2 + $0x78] sm:$0xff]
      %v2639 = vld [vmem:[#allocation2 + $0x80] sm:$0xff]
      %v2640 = vld [vmem:[#allocation2 + $0x88] sm:$0xff]
      %v2641 = vld [vmem:[#allocation2 + $0x90] sm:$0xff]
      %v2642 = vld [vmem:[#allocation2 + $0x98] sm:$0xff]
      %v2643 = vld [vmem:[#allocation2 + $0xa0] sm:$0xff]
      %v2644 = vld [vmem:[#allocation2 + $0xa8] sm:$0xff]
      %v2645 = vld [vmem:[#allocation2 + $0xb0] sm:$0xff]
      %v2646 = vld [vmem:[#allocation2 + $0xb8] sm:$0xff]
      %v2647 = vld [vmem:[#allocation2 + $0xc0] sm:$0xff]
      %v2648 = vld [vmem:[#allocation2 + $0xc8] sm:$0xff]
      %v2649 = vld [vmem:[#allocation2 + $0xd0] sm:$0xff]
      %v2650 = vld [vmem:[#allocation2 + $0xd8] sm:$0xff]
      %v2651 = vld [vmem:[#allocation2 + $0xe0] sm:$0xff]
      %v2652 = vld [vmem:[#allocation2 + $0xe8] sm:$0xff]
      %v2653 = vld [vmem:[#allocation2 + $0xf0] sm:$0xff]
      %v2654 = vld [vmem:[#allocation2 + $0xf8] sm:$0xff]
      %v2655 = vld [vmem:[#allocation2 + $0x100] sm:$0xff]
      %v2656 = vld [vmem:[#allocation2 + $0x108] sm:$0xff]
      %v2657 = vld [vmem:[#allocation2 + $0x110] sm:$0xff]
      %v2658 = vld [vmem:[#allocation2 + $0x118] sm:$0xff]
      %v2659 = vld [vmem:[#allocation2 + $0x120] sm:$0xff]
      %v2660 = vld [vmem:[#allocation2 + $0x128] sm:$0xff]
      %v2661 = vld [vmem:[#allocation2 + $0x130] sm:$0xff]
      %v2662 = vld [vmem:[#allocation2 + $0x138] sm:$0xff]
      %v2663 = vld [vmem:[#allocation2 + $0x140] sm:$0xff]
      %v2664 = vld [vmem:[#allocation2 + $0x148] sm:$0xff]
      %v2665 = vld [vmem:[#allocation2 + $0x150] sm:$0xff]
      %v2666 = vld [vmem:[#allocation2 + $0x158] sm:$0xff]
      %v2667 = vld [vmem:[#allocation2 + $0x160] sm:$0xff]
      %v2668 = vld [vmem:[#allocation2 + $0x168] sm:$0xff]
      %v2669 = vld [vmem:[#allocation2 + $0x170] sm:$0xff]
      %v2670 = vld [vmem:[#allocation2 + $0x178] sm:$0xff]
      %v2671 = vld [vmem:[#allocation2 + $0x180] sm:$0xff]
      %v2672 = vld [vmem:[#allocation2 + $0x188] sm:$0xff]
      %v2673 = vld [vmem:[#allocation2 + $0x190] sm:$0xff]
      %v2674 = vld [vmem:[#allocation2 + $0x198] sm:$0xff]
      %v2675 = vld [vmem:[#allocation2 + $0x1a0] sm:$0xff]
      %v2676 = vld [vmem:[#allocation2 + $0x1a8] sm:$0xff]
      %v2677 = vld [vmem:[#allocation2 + $0x1b0] sm:$0xff]
      %v2678 = vld [vmem:[#allocation2 + $0x1b8] sm:$0xff]
      %v2679 = vld [vmem:[#allocation2 + $0x1c0] sm:$0xff]
      %v2680 = vld [vmem:[#allocation2 + $0x1c8] sm:$0xff]
      %v2681 = vld [vmem:[#allocation2 + $0x1d0] sm:$0xff]
      %v2682 = vld [vmem:[#allocation2 + $0x1d8] sm:$0xff]
      %v2683 = vld [vmem:[#allocation2 + $0x1e0] sm:$0xff]
      %v2684 = vld [vmem:[#allocation2 + $0x1e8] sm:$0xff]
      %v2685 = vld [vmem:[#allocation2 + $0x1f0] sm:$0xff]
      %v2686 = vld [vmem:[#allocation2 + $0x1f8] sm:$0xff]
      %v2687 = vld [vmem:[#allocation2 + $0x200] sm:$0xff]
      %v2688 = vld [vmem:[#allocation2 + $0x208] sm:$0xff]
      %v2689 = vld [vmem:[#allocation2 + $0x210] sm:$0xff]
      %v2690 = vld [vmem:[#allocation2 + $0x218] sm:$0xff]
      %v2691 = vld [vmem:[#allocation2 + $0x220] sm:$0xff]
      %v2692 = vld [vmem:[#allocation2 + $0x228] sm:$0xff]
      %v2693 = vld [vmem:[#allocation2 + $0x230] sm:$0xff]
      %v2694 = vld [vmem:[#allocation2 + $0x238] sm:$0xff]
      %v2695 = vld [vmem:[#allocation2 + $0x1] sm:$0xff]
      %v2696 = vld [vmem:[#allocation2 + $0x9] sm:$0xff]
      %v2697 = vld [vmem:[#allocation2 + $0x11] sm:$0xff]
      %v2698 = vld [vmem:[#allocation2 + $0x19] sm:$0xff]
      %v2699 = vld [vmem:[#allocation2 + $0x21] sm:$0xff]
      %v2700 = vld [vmem:[#allocation2 + $0x29] sm:$0xff]
      %v2701 = vld [vmem:[#allocation2 + $0x31] sm:$0xff]
      %v2702 = vld [vmem:[#allocation2 + $0x39] sm:$0xff]
      %v2703 = vld [vmem:[#allocation2 + $0x41] sm:$0xff]
      %v2704 = vld [vmem:[#allocation2 + $0x49] sm:$0xff]
      %v2705 = vld [vmem:[#allocation2 + $0x51] sm:$0xff]
      %v2706 = vld [vmem:[#allocation2 + $0x59] sm:$0xff]
      %v2707 = vld [vmem:[#allocation2 + $0x61] sm:$0xff]
      %v2708 = vld [vmem:[#allocation2 + $0x69] sm:$0xff]
      %v2709 = vld [vmem:[#allocation2 + $0x71] sm:$0xff]
      %v2710 = vld [vmem:[#allocation2 + $0x79] sm:$0xff]
      %v2711 = vld [vmem:[#allocation2 + $0x81] sm:$0xff]
      %v2712 = vld [vmem:[#allocation2 + $0x89] sm:$0xff]
      %v2713 = vld [vmem:[#allocation2 + $0x91] sm:$0xff]
      %v2714 = vld [vmem:[#allocation2 + $0x99] sm:$0xff]
      %v2715 = vld [vmem:[#allocation2 + $0xa1] sm:$0xff]
      %v2716 = vld [vmem:[#allocation2 + $0xa9] sm:$0xff]
      %v2717 = vld [vmem:[#allocation2 + $0xb1] sm:$0xff]
      %v2718 = vld [vmem:[#allocation2 + $0xb9] sm:$0xff]
      %v2719 = vld [vmem:[#allocation2 + $0xc1] sm:$0xff]
      %v2720 = vld [vmem:[#allocation2 + $0xc9] sm:$0xff]
      %v2721 = vld [vmem:[#allocation2 + $0xd1] sm:$0xff]
      %v2722 = vld [vmem:[#allocation2 + $0xd9] sm:$0xff]
      %v2723 = vld [vmem:[#allocation2 + $0xe1] sm:$0xff]
      %v2724 = vld [vmem:[#allocation2 + $0xe9] sm:$0xff]
      %v2725 = vld [vmem:[#allocation2 + $0xf1] sm:$0xff]
      %v2726 = vld [vmem:[#allocation2 + $0xf9] sm:$0xff]
      %v2727 = vld [vmem:[#allocation2 + $0x101] sm:$0xff]
      %v2728 = vld [vmem:[#allocation2 + $0x109] sm:$0xff]
      %v2729 = vld [vmem:[#allocation2 + $0x111] sm:$0xff]
      %v2730 = vld [vmem:[#allocation2 + $0x119] sm:$0xff]
      %v2731 = vld [vmem:[#allocation2 + $0x121] sm:$0xff]
      %v2732 = vld [vmem:[#allocation2 + $0x129] sm:$0xff]
      %v2733 = vld [vmem:[#allocation2 + $0x131] sm:$0xff]
      %v2734 = vld [vmem:[#allocation2 + $0x139] sm:$0xff]
      %v2735 = vld [vmem:[#allocation2 + $0x141] sm:$0xff]
      %v2736 = vld [vmem:[#allocation2 + $0x149] sm:$0xff]
      %v2737 = vld [vmem:[#allocation2 + $0x151] sm:$0xff]
      %v2738 = vld [vmem:[#allocation2 + $0x159] sm:$0xff]
      %v2739 = vld [vmem:[#allocation2 + $0x161] sm:$0xff]
      %v2740 = vld [vmem:[#allocation2 + $0x169] sm:$0xff]
      %v2741 = vld [vmem:[#allocation2 + $0x171] sm:$0xff]
      %v2742 = vld [vmem:[#allocation2 + $0x179] sm:$0xff]
      %v2743 = vld [vmem:[#allocation2 + $0x181] sm:$0xff]
      %v2744 = vld [vmem:[#allocation2 + $0x189] sm:$0xff]
      %v2745 = vld [vmem:[#allocation2 + $0x191] sm:$0xff]
      %v2746 = vld [vmem:[#allocation2 + $0x199] sm:$0xff]
      %v2747 = vld [vmem:[#allocation2 + $0x1a1] sm:$0xff]
      %v2748 = vld [vmem:[#allocation2 + $0x1a9] sm:$0xff]
      %v2749 = vld [vmem:[#allocation2 + $0x1b1] sm:$0xff]
      %v2750 = vld [vmem:[#allocation2 + $0x1b9] sm:$0xff]
      %v2751 = vld [vmem:[#allocation2 + $0x1c1] sm:$0xff]
      %v2752 = vld [vmem:[#allocation2 + $0x1c9] sm:$0xff]
      %v2753 = vld [vmem:[#allocation2 + $0x1d1] sm:$0xff]
      %v2754 = vld [vmem:[#allocation2 + $0x1d9] sm:$0xff]
      %v2755 = vld [vmem:[#allocation2 + $0x1e1] sm:$0xff]
      %v2756 = vld [vmem:[#allocation2 + $0x1e9] sm:$0xff]
      %v2757 = vld [vmem:[#allocation2 + $0x1f1] sm:$0xff]
      %v2758 = vld [vmem:[#allocation2 + $0x1f9] sm:$0xff]
      %v2759 = vld [vmem:[#allocation2 + $0x201] sm:$0xff]
      %v2760 = vld [vmem:[#allocation2 + $0x209] sm:$0xff]
      %v2761 = vld [vmem:[#allocation2 + $0x211] sm:$0xff]
      %v2762 = vld [vmem:[#allocation2 + $0x219] sm:$0xff]
      %v2763 = vld [vmem:[#allocation2 + $0x221] sm:$0xff]
      %v2764 = vld [vmem:[#allocation2 + $0x229] sm:$0xff]
      %v2765 = vld [vmem:[#allocation2 + $0x231] sm:$0xff]
      %v2766 = vld [vmem:[#allocation2 + $0x239] sm:$0xff]
      %v2767 = vld [vmem:[#allocation2 + $0x2] sm:$0xff]
      %v2768 = vld [vmem:[#allocation2 + $0xa] sm:$0xff]
      %v2769 = vld [vmem:[#allocation2 + $0x12] sm:$0xff]
      %v2770 = vld [vmem:[#allocation2 + $0x1a] sm:$0xff]
      %v2771 = vld [vmem:[#allocation2 + $0x22] sm:$0xff]
      %v2772 = vld [vmem:[#allocation2 + $0x2a] sm:$0xff]
      %v2773 = vld [vmem:[#allocation2 + $0x32] sm:$0xff]
      %v2774 = vld [vmem:[#allocation2 + $0x3a] sm:$0xff]
      %v2775 = vld [vmem:[#allocation2 + $0x42] sm:$0xff]
      %v2776 = vld [vmem:[#allocation2 + $0x4a] sm:$0xff]
      %v2777 = vld [vmem:[#allocation2 + $0x52] sm:$0xff]
      %v2778 = vld [vmem:[#allocation2 + $0x5a] sm:$0xff]
      %v2779 = vld [vmem:[#allocation2 + $0x62] sm:$0xff]
      %v2780 = vld [vmem:[#allocation2 + $0x6a] sm:$0xff]
      %v2781 = vld [vmem:[#allocation2 + $0x72] sm:$0xff]
      %v2782 = vld [vmem:[#allocation2 + $0x7a] sm:$0xff]
      %v2783 = vld [vmem:[#allocation2 + $0x82] sm:$0xff]
      %v2784 = vld [vmem:[#allocation2 + $0x8a] sm:$0xff]
      %v2785 = vld [vmem:[#allocation2 + $0x92] sm:$0xff]
      %v2786 = vld [vmem:[#allocation2 + $0x9a] sm:$0xff]
      %v2787 = vld [vmem:[#allocation2 + $0xa2] sm:$0xff]
      %v2788 = vld [vmem:[#allocation2 + $0xaa] sm:$0xff]
      %v2789 = vld [vmem:[#allocation2 + $0xb2] sm:$0xff]
      %v2790 = vld [vmem:[#allocation2 + $0xba] sm:$0xff]
      %v2791 = vld [vmem:[#allocation2 + $0xc2] sm:$0xff]
      %v2792 = vld [vmem:[#allocation2 + $0xca] sm:$0xff]
      %v2793 = vld [vmem:[#allocation2 + $0xd2] sm:$0xff]
      %v2794 = vld [vmem:[#allocation2 + $0xda] sm:$0xff]
      %v2795 = vld [vmem:[#allocation2 + $0xe2] sm:$0xff]
      %v2796 = vld [vmem:[#allocation2 + $0xea] sm:$0xff]
      %v2797 = vld [vmem:[#allocation2 + $0xf2] sm:$0xff]
      %v2798 = vld [vmem:[#allocation2 + $0xfa] sm:$0xff]
      %v2799 = vld [vmem:[#allocation2 + $0x102] sm:$0xff]
      %v2800 = vld [vmem:[#allocation2 + $0x10a] sm:$0xff]
      %v2801 = vld [vmem:[#allocation2 + $0x112] sm:$0xff]
      %v2802 = vld [vmem:[#allocation2 + $0x11a] sm:$0xff]
      %v2803 = vld [vmem:[#allocation2 + $0x122] sm:$0xff]
      %v2804 = vld [vmem:[#allocation2 + $0x12a] sm:$0xff]
      %v2805 = vld [vmem:[#allocation2 + $0x132] sm:$0xff]
      %v2806 = vld [vmem:[#allocation2 + $0x13a] sm:$0xff]
      %v2807 = vld [vmem:[#allocation2 + $0x142] sm:$0xff]
      %v2808 = vld [vmem:[#allocation2 + $0x14a] sm:$0xff]
      %v2809 = vld [vmem:[#allocation2 + $0x152] sm:$0xff]
      %v2810 = vld [vmem:[#allocation2 + $0x15a] sm:$0xff]
      %v2811 = vld [vmem:[#allocation2 + $0x162] sm:$0xff]
      %v2812 = vld [vmem:[#allocation2 + $0x16a] sm:$0xff]
      %v2813 = vld [vmem:[#allocation2 + $0x172] sm:$0xff]
      %v2814 = vld [vmem:[#allocation2 + $0x17a] sm:$0xff]
      %v2815 = vld [vmem:[#allocation2 + $0x182] sm:$0xff]
      %v2816 = vld [vmem:[#allocation2 + $0x18a] sm:$0xff]
      %v2817 = vld [vmem:[#allocation2 + $0x192] sm:$0xff]
      %v2818 = vld [vmem:[#allocation2 + $0x19a] sm:$0xff]
      %v2819 = vld [vmem:[#allocation2 + $0x1a2] sm:$0xff]
      %v2820 = vld [vmem:[#allocation2 + $0x1aa] sm:$0xff]
      %v2821 = vld [vmem:[#allocation2 + $0x1b2] sm:$0xff]
      %v2822 = vld [vmem:[#allocation2 + $0x1ba] sm:$0xff]
      %v2823 = vld [vmem:[#allocation2 + $0x1c2] sm:$0xff]
      %v2824 = vld [vmem:[#allocation2 + $0x1ca] sm:$0xff]
      %v2825 = vld [vmem:[#allocation2 + $0x1d2] sm:$0xff]
      %v2826 = vld [vmem:[#allocation2 + $0x1da] sm:$0xff]
      %v2827 = vld [vmem:[#allocation2 + $0x1e2] sm:$0xff]
      %v2828 = vld [vmem:[#allocation2 + $0x1ea] sm:$0xff]
      %v2829 = vld [vmem:[#allocation2 + $0x1f2] sm:$0xff]
      %v2830 = vld [vmem:[#allocation2 + $0x1fa] sm:$0xff]
      %v2831 = vld [vmem:[#allocation2 + $0x202] sm:$0xff]
      %v2832 = vld [vmem:[#allocation2 + $0x20a] sm:$0xff]
      %v2833 = vld [vmem:[#allocation2 + $0x212] sm:$0xff]
      %v2834 = vld [vmem:[#allocation2 + $0x21a] sm:$0xff]
      %v2835 = vld [vmem:[#allocation2 + $0x222] sm:$0xff]
      %v2836 = vld [vmem:[#allocation2 + $0x22a] sm:$0xff]
      %v2837 = vld [vmem:[#allocation2 + $0x232] sm:$0xff]
      %v2838 = vld [vmem:[#allocation2 + $0x23a] sm:$0xff]
      %2911 = vrot.lane.b32.xlu0 %v2695, 32
      %v2912 = vpop.permute.xlu0 %2911
      %2913 = vrot.lane.b32.xlu0 %v2696, 32
      %v2914 = vpop.permute.xlu0 %2913
      %2915 = vrot.lane.b32.xlu0 %v2697, 32
      %v2916 = vpop.permute.xlu0 %2915
      %2917 = vrot.lane.b32.xlu0 %v2698, 32
      %v2918 = vpop.permute.xlu0 %2917
      %2919 = vrot.lane.b32.xlu0 %v2699, 32
      %v2920 = vpop.permute.xlu0 %2919
      %2921 = vrot.lane.b32.xlu0 %v2700, 32
      %v2922 = vpop.permute.xlu0 %2921
      %2923 = vrot.lane.b32.xlu0 %v2701, 32
      %v2924 = vpop.permute.xlu0 %2923
      %2925 = vrot.lane.b32.xlu0 %v2702, 32
      %v2926 = vpop.permute.xlu0 %2925
      %2927 = vrot.lane.b32.xlu0 %v2703, 32
      %v2928 = vpop.permute.xlu0 %2927
      %2929 = vrot.lane.b32.xlu0 %v2704, 32
      %v2930 = vpop.permute.xlu0 %2929
      %2931 = vrot.lane.b32.xlu0 %v2705, 32
      %v2932 = vpop.permute.xlu0 %2931
      %2933 = vrot.lane.b32.xlu0 %v2706, 32
      %v2934 = vpop.permute.xlu0 %2933
      %2935 = vrot.lane.b32.xlu0 %v2707, 32
      %v2936 = vpop.permute.xlu0 %2935
      %2937 = vrot.lane.b32.xlu0 %v2708, 32
      %v2938 = vpop.permute.xlu0 %2937
      %2939 = vrot.lane.b32.xlu0 %v2709, 32
      %v2940 = vpop.permute.xlu0 %2939
      %2941 = vrot.lane.b32.xlu0 %v2710, 32
      %v2942 = vpop.permute.xlu0 %2941
      %2943 = vrot.lane.b32.xlu0 %v2711, 32
      %v2944 = vpop.permute.xlu0 %2943
      %2945 = vrot.lane.b32.xlu0 %v2712, 32
      %v2946 = vpop.permute.xlu0 %2945
      %2947 = vrot.lane.b32.xlu0 %v2713, 32
      %v2948 = vpop.permute.xlu0 %2947
      %2949 = vrot.lane.b32.xlu0 %v2714, 32
      %v2950 = vpop.permute.xlu0 %2949
      %2951 = vrot.lane.b32.xlu0 %v2715, 32
      %v2952 = vpop.permute.xlu0 %2951
      %2953 = vrot.lane.b32.xlu0 %v2716, 32
      %v2954 = vpop.permute.xlu0 %2953
      %2955 = vrot.lane.b32.xlu0 %v2717, 32
      %v2956 = vpop.permute.xlu0 %2955
      %2957 = vrot.lane.b32.xlu0 %v2718, 32
      %v2958 = vpop.permute.xlu0 %2957
      %2959 = vrot.lane.b32.xlu0 %v2719, 32
      %v2960 = vpop.permute.xlu0 %2959
      %2961 = vrot.lane.b32.xlu0 %v2720, 32
      %v2962 = vpop.permute.xlu0 %2961
      %2963 = vrot.lane.b32.xlu0 %v2721, 32
      %v2964 = vpop.permute.xlu0 %2963
      %2965 = vrot.lane.b32.xlu0 %v2722, 32
      %v2966 = vpop.permute.xlu0 %2965
      %2967 = vrot.lane.b32.xlu0 %v2723, 32
      %v2968 = vpop.permute.xlu0 %2967
      %2969 = vrot.lane.b32.xlu0 %v2724, 32
      %v2970 = vpop.permute.xlu0 %2969
      %2971 = vrot.lane.b32.xlu0 %v2725, 32
      %v2972 = vpop.permute.xlu0 %2971
      %2973 = vrot.lane.b32.xlu0 %v2726, 32
      %v2974 = vpop.permute.xlu0 %2973
      %2975 = vrot.lane.b32.xlu0 %v2727, 32
      %v2976 = vpop.permute.xlu0 %2975
      %2977 = vrot.lane.b32.xlu0 %v2728, 32
      %v2978 = vpop.permute.xlu0 %2977
      %2979 = vrot.lane.b32.xlu0 %v2729, 32
      %v2980 = vpop.permute.xlu0 %2979
      %2981 = vrot.lane.b32.xlu0 %v2730, 32
      %v2982 = vpop.permute.xlu0 %2981
      %2983 = vrot.lane.b32.xlu0 %v2731, 32
      %v2984 = vpop.permute.xlu0 %2983
      %2985 = vrot.lane.b32.xlu0 %v2732, 32
      %v2986 = vpop.permute.xlu0 %2985
      %2987 = vrot.lane.b32.xlu0 %v2733, 32
      %v2988 = vpop.permute.xlu0 %2987
      %2989 = vrot.lane.b32.xlu0 %v2734, 32
      %v2990 = vpop.permute.xlu0 %2989
      %2991 = vrot.lane.b32.xlu0 %v2735, 32
      %v2992 = vpop.permute.xlu0 %2991
      %2993 = vrot.lane.b32.xlu0 %v2736, 32
      %v2994 = vpop.permute.xlu0 %2993
      %2995 = vrot.lane.b32.xlu0 %v2737, 32
      %v2996 = vpop.permute.xlu0 %2995
      %2997 = vrot.lane.b32.xlu0 %v2738, 32
      %v2998 = vpop.permute.xlu0 %2997
      %2999 = vrot.lane.b32.xlu0 %v2739, 32
      %v3000 = vpop.permute.xlu0 %2999
      %3001 = vrot.lane.b32.xlu0 %v2740, 32
      %v3002 = vpop.permute.xlu0 %3001
      %3003 = vrot.lane.b32.xlu0 %v2741, 32
      %v3004 = vpop.permute.xlu0 %3003
      %3005 = vrot.lane.b32.xlu0 %v2742, 32
      %v3006 = vpop.permute.xlu0 %3005
      %3007 = vrot.lane.b32.xlu0 %v2743, 32
      %v3008 = vpop.permute.xlu0 %3007
      %3009 = vrot.lane.b32.xlu0 %v2744, 32
      %v3010 = vpop.permute.xlu0 %3009
      %3011 = vrot.lane.b32.xlu0 %v2745, 32
      %v3012 = vpop.permute.xlu0 %3011
      %3013 = vrot.lane.b32.xlu0 %v2746, 32
      %v3014 = vpop.permute.xlu0 %3013
      %3015 = vrot.lane.b32.xlu0 %v2747, 32
      %v3016 = vpop.permute.xlu0 %3015
      %3017 = vrot.lane.b32.xlu0 %v2748, 32
      %v3018 = vpop.permute.xlu0 %3017
      %3019 = vrot.lane.b32.xlu0 %v2749, 32
      %v3020 = vpop.permute.xlu0 %3019
      %3021 = vrot.lane.b32.xlu0 %v2750, 32
      %v3022 = vpop.permute.xlu0 %3021
      %3023 = vrot.lane.b32.xlu0 %v2751, 32
      %v3024 = vpop.permute.xlu0 %3023
      %3025 = vrot.lane.b32.xlu0 %v2752, 32
      %v3026 = vpop.permute.xlu0 %3025
      %3027 = vrot.lane.b32.xlu0 %v2753, 32
      %v3028 = vpop.permute.xlu0 %3027
      %3029 = vrot.lane.b32.xlu0 %v2754, 32
      %v3030 = vpop.permute.xlu0 %3029
      %3031 = vrot.lane.b32.xlu0 %v2755, 32
      %v3032 = vpop.permute.xlu0 %3031
      %3033 = vrot.lane.b32.xlu0 %v2756, 32
      %v3034 = vpop.permute.xlu0 %3033
      %3035 = vrot.lane.b32.xlu0 %v2757, 32
      %v3036 = vpop.permute.xlu0 %3035
      %3037 = vrot.lane.b32.xlu0 %v2758, 32
      %v3038 = vpop.permute.xlu0 %3037
      %3039 = vrot.lane.b32.xlu0 %v2759, 32
      %v3040 = vpop.permute.xlu0 %3039
      %3041 = vrot.lane.b32.xlu0 %v2760, 32
      %v3042 = vpop.permute.xlu0 %3041
      %3043 = vrot.lane.b32.xlu0 %v2761, 32
      %v3044 = vpop.permute.xlu0 %3043
      %3045 = vrot.lane.b32.xlu0 %v2762, 32
      %v3046 = vpop.permute.xlu0 %3045
      %3047 = vrot.lane.b32.xlu0 %v2763, 32
      %v3048 = vpop.permute.xlu0 %3047
      %3049 = vrot.lane.b32.xlu0 %v2764, 32
      %v3050 = vpop.permute.xlu0 %3049
      %3051 = vrot.lane.b32.xlu0 %v2765, 32
      %v3052 = vpop.permute.xlu0 %3051
      %3053 = vrot.lane.b32.xlu0 %v2766, 32
      %v3054 = vpop.permute.xlu0 %3053
      %3199 = vrot.lane.b32.xlu0 %v2767, 64
      %v3200 = vpop.permute.xlu0 %3199
      %3201 = vrot.lane.b32.xlu0 %v2768, 64
      %v3202 = vpop.permute.xlu0 %3201
      %3203 = vrot.lane.b32.xlu0 %v2769, 64
      %v3204 = vpop.permute.xlu0 %3203
      %3205 = vrot.lane.b32.xlu0 %v2770, 64
      %v3206 = vpop.permute.xlu0 %3205
      %3207 = vrot.lane.b32.xlu0 %v2771, 64
      %v3208 = vpop.permute.xlu0 %3207
      %3209 = vrot.lane.b32.xlu0 %v2772, 64
      %v3210 = vpop.permute.xlu0 %3209
      %3211 = vrot.lane.b32.xlu0 %v2773, 64
      %v3212 = vpop.permute.xlu0 %3211
      %3213 = vrot.lane.b32.xlu0 %v2774, 64
      %v3214 = vpop.permute.xlu0 %3213
      %3215 = vrot.lane.b32.xlu0 %v2775, 64
      %v3216 = vpop.permute.xlu0 %3215
      %3217 = vrot.lane.b32.xlu0 %v2776, 64
      %v3218 = vpop.permute.xlu0 %3217
      %3219 = vrot.lane.b32.xlu0 %v2777, 64
      %v3220 = vpop.permute.xlu0 %3219
      %3221 = vrot.lane.b32.xlu0 %v2778, 64
      %v3222 = vpop.permute.xlu0 %3221
      %3223 = vrot.lane.b32.xlu0 %v2779, 64
      %v3224 = vpop.permute.xlu0 %3223
      %3225 = vrot.lane.b32.xlu0 %v2780, 64
      %v3226 = vpop.permute.xlu0 %3225
      %3227 = vrot.lane.b32.xlu0 %v2781, 64
      %v3228 = vpop.permute.xlu0 %3227
      %3229 = vrot.lane.b32.xlu0 %v2782, 64
      %v3230 = vpop.permute.xlu0 %3229
      %3231 = vrot.lane.b32.xlu0 %v2783, 64
      %v3232 = vpop.permute.xlu0 %3231
      %3233 = vrot.lane.b32.xlu0 %v2784, 64
      %v3234 = vpop.permute.xlu0 %3233
      %3235 = vrot.lane.b32.xlu0 %v2785, 64
      %v3236 = vpop.permute.xlu0 %3235
      %3237 = vrot.lane.b32.xlu0 %v2786, 64
      %v3238 = vpop.permute.xlu0 %3237
      %3239 = vrot.lane.b32.xlu0 %v2787, 64
      %v3240 = vpop.permute.xlu0 %3239
      %3241 = vrot.lane.b32.xlu0 %v2788, 64
      %v3242 = vpop.permute.xlu0 %3241
      %3243 = vrot.lane.b32.xlu0 %v2789, 64
      %v3244 = vpop.permute.xlu0 %3243
      %3245 = vrot.lane.b32.xlu0 %v2790, 64
      %v3246 = vpop.permute.xlu0 %3245
      %3247 = vrot.lane.b32.xlu0 %v2791, 64
      %v3248 = vpop.permute.xlu0 %3247
      %3249 = vrot.lane.b32.xlu0 %v2792, 64
      %v3250 = vpop.permute.xlu0 %3249
      %3251 = vrot.lane.b32.xlu0 %v2793, 64
      %v3252 = vpop.permute.xlu0 %3251
      %3253 = vrot.lane.b32.xlu0 %v2794, 64
      %v3254 = vpop.permute.xlu0 %3253
      %3255 = vrot.lane.b32.xlu0 %v2795, 64
      %v3256 = vpop.permute.xlu0 %3255
      %3257 = vrot.lane.b32.xlu0 %v2796, 64
      %v3258 = vpop.permute.xlu0 %3257
      %3259 = vrot.lane.b32.xlu0 %v2797, 64
      %v3260 = vpop.permute.xlu0 %3259
      %3261 = vrot.lane.b32.xlu0 %v2798, 64
      %v3262 = vpop.permute.xlu0 %3261
      %3263 = vrot.lane.b32.xlu0 %v2799, 64
      %v3264 = vpop.permute.xlu0 %3263
      %3265 = vrot.lane.b32.xlu0 %v2800, 64
      %v3266 = vpop.permute.xlu0 %3265
      %3267 = vrot.lane.b32.xlu0 %v2801, 64
      %v3268 = vpop.permute.xlu0 %3267
      %3269 = vrot.lane.b32.xlu0 %v2802, 64
      %v3270 = vpop.permute.xlu0 %3269
      %3271 = vrot.lane.b32.xlu0 %v2803, 64
      %v3272 = vpop.permute.xlu0 %3271
      %3273 = vrot.lane.b32.xlu0 %v2804, 64
      %v3274 = vpop.permute.xlu0 %3273
      %3275 = vrot.lane.b32.xlu0 %v2805, 64
      %v3276 = vpop.permute.xlu0 %3275
      %3277 = vrot.lane.b32.xlu0 %v2806, 64
      %v3278 = vpop.permute.xlu0 %3277
      %3279 = vrot.lane.b32.xlu0 %v2807, 64
      %v3280 = vpop.permute.xlu0 %3279
      %3281 = vrot.lane.b32.xlu0 %v2808, 64
      %v3282 = vpop.permute.xlu0 %3281
      %3283 = vrot.lane.b32.xlu0 %v2809, 64
      %v3284 = vpop.permute.xlu0 %3283
      %3285 = vrot.lane.b32.xlu0 %v2810, 64
      %v3286 = vpop.permute.xlu0 %3285
      %3287 = vrot.lane.b32.xlu0 %v2811, 64
      %v3288 = vpop.permute.xlu0 %3287
      %3289 = vrot.lane.b32.xlu0 %v2812, 64
      %v3290 = vpop.permute.xlu0 %3289
      %3291 = vrot.lane.b32.xlu0 %v2813, 64
      %v3292 = vpop.permute.xlu0 %3291
      %3293 = vrot.lane.b32.xlu0 %v2814, 64
      %v3294 = vpop.permute.xlu0 %3293
      %3295 = vrot.lane.b32.xlu0 %v2815, 64
      %v3296 = vpop.permute.xlu0 %3295
      %3297 = vrot.lane.b32.xlu0 %v2816, 64
      %v3298 = vpop.permute.xlu0 %3297
      %3299 = vrot.lane.b32.xlu0 %v2817, 64
      %v3300 = vpop.permute.xlu0 %3299
      %3301 = vrot.lane.b32.xlu0 %v2818, 64
      %v3302 = vpop.permute.xlu0 %3301
      %3303 = vrot.lane.b32.xlu0 %v2819, 64
      %v3304 = vpop.permute.xlu0 %3303
      %3305 = vrot.lane.b32.xlu0 %v2820, 64
      %v3306 = vpop.permute.xlu0 %3305
      %3307 = vrot.lane.b32.xlu0 %v2821, 64
      %v3308 = vpop.permute.xlu0 %3307
      %3309 = vrot.lane.b32.xlu0 %v2822, 64
      %v3310 = vpop.permute.xlu0 %3309
      %3311 = vrot.lane.b32.xlu0 %v2823, 64
      %v3312 = vpop.permute.xlu0 %3311
      %3313 = vrot.lane.b32.xlu0 %v2824, 64
      %v3314 = vpop.permute.xlu0 %3313
      %3315 = vrot.lane.b32.xlu0 %v2825, 64
      %v3316 = vpop.permute.xlu0 %3315
      %3317 = vrot.lane.b32.xlu0 %v2826, 64
      %v3318 = vpop.permute.xlu0 %3317
      %3319 = vrot.lane.b32.xlu0 %v2827, 64
      %v3320 = vpop.permute.xlu0 %3319
      %3321 = vrot.lane.b32.xlu0 %v2828, 64
      %v3322 = vpop.permute.xlu0 %3321
      %3323 = vrot.lane.b32.xlu0 %v2829, 64
      %v3324 = vpop.permute.xlu0 %3323
      %3325 = vrot.lane.b32.xlu0 %v2830, 64
      %v3326 = vpop.permute.xlu0 %3325
      %3327 = vrot.lane.b32.xlu0 %v2831, 64
      %v3328 = vpop.permute.xlu0 %3327
      %3329 = vrot.lane.b32.xlu0 %v2832, 64
      %v3330 = vpop.permute.xlu0 %3329
      %3331 = vrot.lane.b32.xlu0 %v2833, 64
      %v3332 = vpop.permute.xlu0 %3331
      %3333 = vrot.lane.b32.xlu0 %v2834, 64
      %v3334 = vpop.permute.xlu0 %3333
      %3335 = vrot.lane.b32.xlu0 %v2835, 64
      %v3336 = vpop.permute.xlu0 %3335
      %3337 = vrot.lane.b32.xlu0 %v2836, 64
      %v3338 = vpop.permute.xlu0 %3337
      %3339 = vrot.lane.b32.xlu0 %v2837, 64
      %v3340 = vpop.permute.xlu0 %3339
      %3341 = vrot.lane.b32.xlu0 %v2838, 64
      %v3342 = vpop.permute.xlu0 %3341
      %v3415 = vsel %vm440, %v2623, %v2912
      %v3416 = vsel %vm440, %v2624, %v2914
      %v3417 = vsel %vm440, %v2625, %v2916
      %v3418 = vsel %vm440, %v2626, %v2918
      %v3419 = vsel %vm440, %v2627, %v2920
      %v3420 = vsel %vm440, %v2628, %v2922
      %v3421 = vsel %vm440, %v2629, %v2924
      %v3422 = vsel %vm440, %v2630, %v2926
      %v3423 = vsel %vm440, %v2631, %v2928
      %v3424 = vsel %vm440, %v2632, %v2930
      %v3425 = vsel %vm440, %v2633, %v2932
      %v3426 = vsel %vm440, %v2634, %v2934
      %v3427 = vsel %vm440, %v2635, %v2936
      %v3428 = vsel %vm440, %v2636, %v2938
      %v3429 = vsel %vm440, %v2637, %v2940
      %v3430 = vsel %vm440, %v2638, %v2942
      %v3431 = vsel %vm440, %v2639, %v2944
      %v3432 = vsel %vm440, %v2640, %v2946
      %v3433 = vsel %vm440, %v2641, %v2948
      %v3434 = vsel %vm440, %v2642, %v2950
      %v3435 = vsel %vm440, %v2643, %v2952
      %v3436 = vsel %vm440, %v2644, %v2954
      %v3437 = vsel %vm440, %v2645, %v2956
      %v3438 = vsel %vm440, %v2646, %v2958
      %v3439 = vsel %vm440, %v2647, %v2960
      %v3440 = vsel %vm440, %v2648, %v2962
      %v3441 = vsel %vm440, %v2649, %v2964
      %v3442 = vsel %vm440, %v2650, %v2966
      %v3443 = vsel %vm440, %v2651, %v2968
      %v3444 = vsel %vm440, %v2652, %v2970
      %v3445 = vsel %vm440, %v2653, %v2972
      %v3446 = vsel %vm440, %v2654, %v2974
      %v3447 = vsel %vm440, %v2655, %v2976
      %v3448 = vsel %vm440, %v2656, %v2978
      %v3449 = vsel %vm440, %v2657, %v2980
      %v3450 = vsel %vm440, %v2658, %v2982
      %v3451 = vsel %vm440, %v2659, %v2984
      %v3452 = vsel %vm440, %v2660, %v2986
      %v3453 = vsel %vm440, %v2661, %v2988
      %v3454 = vsel %vm440, %v2662, %v2990
      %v3455 = vsel %vm440, %v2663, %v2992
      %v3456 = vsel %vm440, %v2664, %v2994
      %v3457 = vsel %vm440, %v2665, %v2996
      %v3458 = vsel %vm440, %v2666, %v2998
      %v3459 = vsel %vm440, %v2667, %v3000
      %v3460 = vsel %vm440, %v2668, %v3002
      %v3461 = vsel %vm440, %v2669, %v3004
      %v3462 = vsel %vm440, %v2670, %v3006
      %v3463 = vsel %vm440, %v2671, %v3008
      %v3464 = vsel %vm440, %v2672, %v3010
      %v3465 = vsel %vm440, %v2673, %v3012
      %v3466 = vsel %vm440, %v2674, %v3014
      %v3467 = vsel %vm440, %v2675, %v3016
      %v3468 = vsel %vm440, %v2676, %v3018
      %v3469 = vsel %vm440, %v2677, %v3020
      %v3470 = vsel %vm440, %v2678, %v3022
      %v3471 = vsel %vm440, %v2679, %v3024
      %v3472 = vsel %vm440, %v2680, %v3026
      %v3473 = vsel %vm440, %v2681, %v3028
      %v3474 = vsel %vm440, %v2682, %v3030
      %v3475 = vsel %vm440, %v2683, %v3032
      %v3476 = vsel %vm440, %v2684, %v3034
      %v3477 = vsel %vm440, %v2685, %v3036
      %v3478 = vsel %vm440, %v2686, %v3038
      %v3479 = vsel %vm440, %v2687, %v3040
      %v3480 = vsel %vm440, %v2688, %v3042
      %v3481 = vsel %vm440, %v2689, %v3044
      %v3482 = vsel %vm440, %v2690, %v3046
      %v3483 = vsel %vm440, %v2691, %v3048
      %v3484 = vsel %vm440, %v2692, %v3050
      %v3485 = vsel %vm440, %v2693, %v3052
      %v3486 = vsel %vm440, %v2694, %v3054
      %v3487 = vsel %vm449, %v3415, %v3200
      %v3488 = vsel %vm449, %v3416, %v3202
      %v3489 = vsel %vm449, %v3417, %v3204
      %v3490 = vsel %vm449, %v3418, %v3206
      %v3491 = vsel %vm449, %v3419, %v3208
      %v3492 = vsel %vm449, %v3420, %v3210
      %v3493 = vsel %vm449, %v3421, %v3212
      %v3494 = vsel %vm449, %v3422, %v3214
      %v3495 = vsel %vm449, %v3423, %v3216
      %v3496 = vsel %vm449, %v3424, %v3218
      %v3497 = vsel %vm449, %v3425, %v3220
      %v3498 = vsel %vm449, %v3426, %v3222
      %v3499 = vsel %vm449, %v3427, %v3224
      %v3500 = vsel %vm449, %v3428, %v3226
      %v3501 = vsel %vm449, %v3429, %v3228
      %v3502 = vsel %vm449, %v3430, %v3230
      %v3503 = vsel %vm449, %v3431, %v3232
      %v3504 = vsel %vm449, %v3432, %v3234
      %v3505 = vsel %vm449, %v3433, %v3236
      %v3506 = vsel %vm449, %v3434, %v3238
      %v3507 = vsel %vm449, %v3435, %v3240
      %v3508 = vsel %vm449, %v3436, %v3242
      %v3509 = vsel %vm449, %v3437, %v3244
      %v3510 = vsel %vm449, %v3438, %v3246
      %v3511 = vsel %vm449, %v3439, %v3248
      %v3512 = vsel %vm449, %v3440, %v3250
      %v3513 = vsel %vm449, %v3441, %v3252
      %v3514 = vsel %vm449, %v3442, %v3254
      %v3515 = vsel %vm449, %v3443, %v3256
      %v3516 = vsel %vm449, %v3444, %v3258
      %v3517 = vsel %vm449, %v3445, %v3260
      %v3518 = vsel %vm449, %v3446, %v3262
      %v3519 = vsel %vm449, %v3447, %v3264
      %v3520 = vsel %vm449, %v3448, %v3266
      %v3521 = vsel %vm449, %v3449, %v3268
      %v3522 = vsel %vm449, %v3450, %v3270
      %v3523 = vsel %vm449, %v3451, %v3272
      %v3524 = vsel %vm449, %v3452, %v3274
      %v3525 = vsel %vm449, %v3453, %v3276
      %v3526 = vsel %vm449, %v3454, %v3278
      %v3527 = vsel %vm449, %v3455, %v3280
      %v3528 = vsel %vm449, %v3456, %v3282
      %v3529 = vsel %vm449, %v3457, %v3284
      %v3530 = vsel %vm449, %v3458, %v3286
      %v3531 = vsel %vm449, %v3459, %v3288
      %v3532 = vsel %vm449, %v3460, %v3290
      %v3533 = vsel %vm449, %v3461, %v3292
      %v3534 = vsel %vm449, %v3462, %v3294
      %v3535 = vsel %vm449, %v3463, %v3296
      %v3536 = vsel %vm449, %v3464, %v3298
      %v3537 = vsel %vm449, %v3465, %v3300
      %v3538 = vsel %vm449, %v3466, %v3302
      %v3539 = vsel %vm449, %v3467, %v3304
      %v3540 = vsel %vm449, %v3468, %v3306
      %v3541 = vsel %vm449, %v3469, %v3308
      %v3542 = vsel %vm449, %v3470, %v3310
      %v3543 = vsel %vm449, %v3471, %v3312
      %v3544 = vsel %vm449, %v3472, %v3314
      %v3545 = vsel %vm449, %v3473, %v3316
      %v3546 = vsel %vm449, %v3474, %v3318
      %v3547 = vsel %vm449, %v3475, %v3320
      %v3548 = vsel %vm449, %v3476, %v3322
      %v3549 = vsel %vm449, %v3477, %v3324
      %v3550 = vsel %vm449, %v3478, %v3326
      %v3551 = vsel %vm449, %v3479, %v3328
      %v3552 = vsel %vm449, %v3480, %v3330
      %v3553 = vsel %vm449, %v3481, %v3332
      %v3554 = vsel %vm449, %v3482, %v3334
      %v3555 = vsel %vm449, %v3483, %v3336
      %v3556 = vsel %vm449, %v3484, %v3338
      %v3557 = vsel %vm449, %v3485, %v3340
      %v3558 = vsel %vm449, %v3486, %v3342
      %v3559 = vpack.c.bf16 %v3488, %v3487
      %v3560 = vpack.c.bf16 %v3490, %v3489
      %v3561 = vpack.c.bf16 %v3492, %v3491
      %v3562 = vpack.c.bf16 %v3494, %v3493
      %v3563 = vpack.c.bf16 %v3496, %v3495
      %v3564 = vpack.c.bf16 %v3498, %v3497
      %v3565 = vpack.c.bf16 %v3500, %v3499
      %v3566 = vpack.c.bf16 %v3502, %v3501
      %v3567 = vpack.c.bf16 %v3504, %v3503
      %v3568 = vpack.c.bf16 %v3506, %v3505
      %v3569 = vpack.c.bf16 %v3508, %v3507
      %v3570 = vpack.c.bf16 %v3510, %v3509
      %v3571 = vpack.c.bf16 %v3512, %v3511
      %v3572 = vpack.c.bf16 %v3514, %v3513
      %v3573 = vpack.c.bf16 %v3516, %v3515
      %v3574 = vpack.c.bf16 %v3518, %v3517
      %v3575 = vpack.c.bf16 %v3520, %v3519
      %v3576 = vpack.c.bf16 %v3522, %v3521
      %v3577 = vpack.c.bf16 %v3524, %v3523
      %v3578 = vpack.c.bf16 %v3526, %v3525
      %v3579 = vpack.c.bf16 %v3528, %v3527
      %v3580 = vpack.c.bf16 %v3530, %v3529
      %v3581 = vpack.c.bf16 %v3532, %v3531
      %v3582 = vpack.c.bf16 %v3534, %v3533
      %v3583 = vpack.c.bf16 %v3536, %v3535
      %v3584 = vpack.c.bf16 %v3538, %v3537
      %v3585 = vpack.c.bf16 %v3540, %v3539
      %v3586 = vpack.c.bf16 %v3542, %v3541
      %v3587 = vpack.c.bf16 %v3544, %v3543
      %v3588 = vpack.c.bf16 %v3546, %v3545
      %v3589 = vpack.c.bf16 %v3548, %v3547
      %v3590 = vpack.c.bf16 %v3550, %v3549
      %v3591 = vpack.c.bf16 %v3552, %v3551
      %v3592 = vpack.c.bf16 %v3554, %v3553
      %v3593 = vpack.c.bf16 %v3556, %v3555
      %v3594 = vpack.c.bf16 %v3558, %v3557
      %v3595 = vld [vmem:[%s3] sm:$0xf]
      %v3596 = vld [vmem:[%s3 + $0x4] sm:$0xf]
      %v3597 = vld [vmem:[%s3 + $0x8] sm:$0xf]
      %v3598 = vld [vmem:[%s3 + $0xc] sm:$0xf]
      %v3599 = vld [vmem:[%s3 + $0x10] sm:$0xf]
      %v3600 = vld [vmem:[%s3 + $0x14] sm:$0xf]
      %v3601 = vld [vmem:[%s3 + $0x18] sm:$0xf]
      %v3602 = vld [vmem:[%s3 + $0x1c] sm:$0xf]
      %v3603 = vld [vmem:[%s3 + $0x20] sm:$0xf]
      %v3604 = vld [vmem:[%s3 + $0x24] sm:$0xf]
      %v3605 = vld [vmem:[%s3 + $0x28] sm:$0xf]
      %v3606 = vld [vmem:[%s3 + $0x2c] sm:$0xf]
      %v3607 = vld [vmem:[#allocation2 + $0x240] sm:$0xff]
      %v3608 = vld [vmem:[#allocation2 + $0x248] sm:$0xff]
      %v3609 = vld [vmem:[#allocation2 + $0x250] sm:$0xff]
      %v3610 = vld [vmem:[#allocation2 + $0x241] sm:$0xff]
      %v3611 = vld [vmem:[#allocation2 + $0x249] sm:$0xff]
      %v3612 = vld [vmem:[#allocation2 + $0x251] sm:$0xff]
      %v3613 = vld [vmem:[#allocation2 + $0x242] sm:$0xff]
      %v3614 = vld [vmem:[#allocation2 + $0x24a] sm:$0xff]
      %v3615 = vld [vmem:[#allocation2 + $0x252] sm:$0xff]
      %3619 = vrot.lane.b32.xlu0 %v3610, 32
      %v3620 = vpop.permute.xlu0 %3619
      %3621 = vrot.lane.b32.xlu0 %v3611, 32
      %v3622 = vpop.permute.xlu0 %3621
      %3623 = vrot.lane.b32.xlu0 %v3612, 32
      %v3624 = vpop.permute.xlu0 %3623
      %3631 = vrot.lane.b32.xlu0 %v3613, 64
      %v3632 = vpop.permute.xlu0 %3631
      %3633 = vrot.lane.b32.xlu0 %v3614, 64
      %v3634 = vpop.permute.xlu0 %3633
      %3635 = vrot.lane.b32.xlu0 %v3615, 64
      %v3636 = vpop.permute.xlu0 %3635
      %v3640 = vsel %vm440, %v3607, %v3620
      %v3641 = vsel %vm440, %v3608, %v3622
      %v3642 = vsel %vm440, %v3609, %v3624
      %v3643 = vsel %vm449, %v3640, %v3632
      %v3644 = vsel %vm449, %v3641, %v3634
      %v3645 = vsel %vm449, %v3642, %v3636
      %v3646 = vpack.c.bf16 %v3491, %v3490
      %v3647 = vpack.c.bf16 %v3493, %v3492
      %v3648 = vpack.c.bf16 %v3495, %v3494
      %v3649 = vpack.c.bf16 %v3497, %v3496
      %v3650 = vpack.c.bf16 %v3499, %v3498
      %v3651 = vpack.c.bf16 %v3501, %v3500
      %v3652 = vpack.c.bf16 %v3503, %v3502
      %v3653 = vpack.c.bf16 %v3505, %v3504
      %v3654 = vpack.c.bf16 %v3507, %v3506
      %v3655 = vpack.c.bf16 %v3509, %v3508
      %v3656 = vpack.c.bf16 %v3511, %v3510
      %v3657 = vpack.c.bf16 %v3513, %v3512
      %v3658 = vpack.c.bf16 %v3515, %v3514
      %v3659 = vpack.c.bf16 %v3517, %v3516
      %v3660 = vpack.c.bf16 %v3519, %v3518
      %v3661 = vpack.c.bf16 %v3521, %v3520
      %v3662 = vpack.c.bf16 %v3523, %v3522
      %v3663 = vpack.c.bf16 %v3525, %v3524
      %v3664 = vpack.c.bf16 %v3527, %v3526
      %v3665 = vpack.c.bf16 %v3529, %v3528
      %v3666 = vpack.c.bf16 %v3531, %v3530
      %v3667 = vpack.c.bf16 %v3533, %v3532
      %v3668 = vpack.c.bf16 %v3535, %v3534
      %v3669 = vpack.c.bf16 %v3537, %v3536
      %v3670 = vpack.c.bf16 %v3539, %v3538
      %v3671 = vpack.c.bf16 %v3541, %v3540
      %v3672 = vpack.c.bf16 %v3543, %v3542
      %v3673 = vpack.c.bf16 %v3545, %v3544
      %v3674 = vpack.c.bf16 %v3547, %v3546
      %v3675 = vpack.c.bf16 %v3549, %v3548
      %v3676 = vpack.c.bf16 %v3551, %v3550
      %v3677 = vpack.c.bf16 %v3553, %v3552
      %v3678 = vpack.c.bf16 %v3555, %v3554
      %v3679 = vpack.c.bf16 %v3557, %v3556
      %v3680 = vpack.c.bf16 %v3643, %v3558
      %v3681 = vpack.c.bf16 %v3645, %v3644
      %s3682 = scalar_lea.vmem %s3, 48
      %v3683 = vld [vmem:[%s3682] sm:$0xf]
      %v3684 = vld [vmem:[%s3682 + $0x4] sm:$0xf]
      %v3685 = vld [vmem:[%s3682 + $0x8] sm:$0xf]
      %v3686 = vld [vmem:[%s3682 + $0xc] sm:$0xf]
      %v3687 = vld [vmem:[%s3682 + $0x10] sm:$0xf]
      %v3688 = vld [vmem:[%s3682 + $0x14] sm:$0xf]
      %v3689 = vld [vmem:[%s3682 + $0x18] sm:$0xf]
      %v3690 = vld [vmem:[%s3682 + $0x1c] sm:$0xf]
      %v3691 = vld [vmem:[%s3682 + $0x20] sm:$0xf]
      %v3692 = vld [vmem:[%s3682 + $0x24] sm:$0xf]
      %v3693 = vld [vmem:[%s3682 + $0x28] sm:$0xf]
      %v3694 = vld [vmem:[%s3682 + $0x2c] sm:$0xf]
      %v3707 = vunpack.c.l.b16 %v3683
      %v3708 = vunpack.c.l.b16 %v3684
      %v3709 = vunpack.c.l.b16 %v3685
      %v3710 = vunpack.c.l.b16 %v3686
      %v3711 = vunpack.c.l.b16 %v3687
      %v3712 = vunpack.c.l.b16 %v3688
      %v3713 = vunpack.c.l.b16 %v3689
      %v3714 = vunpack.c.l.b16 %v3690
      %v3715 = vunpack.c.l.b16 %v3691
      %v3716 = vunpack.c.l.b16 %v3692
      %v3717 = vunpack.c.l.b16 %v3693
      %v3718 = vunpack.c.l.b16 %v3694
      %v3719 = vpack.c.b16 %v3708, %v3707
      %v3720 = vpack.c.b16 %v3710, %v3709
      %v3721 = vpack.c.b16 %v3712, %v3711
      %v3722 = vpack.c.b16 %v3714, %v3713
      %v3723 = vpack.c.b16 %v3716, %v3715
      %v3724 = vpack.c.b16 %v3718, %v3717
      %vm3731 = vcmask 785408
      %v3733 = vsel %vm3731, %v3646, 0
      %v3736 = vsel %vm3731, %v3647, 0
      %v3739 = vsel %vm3731, %v3648, 0
      %v3742 = vsel %vm3731, %v3649, 0
      %v3745 = vsel %vm3731, %v3650, 0
      %v3748 = vsel %vm3731, %v3651, 0
      %v3751 = vsel %vm3731, %v3652, 0
      %v3754 = vsel %vm3731, %v3653, 0
      %v3757 = vsel %vm3731, %v3654, 0
      %v3760 = vsel %vm3731, %v3655, 0
      %v3763 = vsel %vm3731, %v3656, 0
      %v3766 = vsel %vm3731, %v3657, 0
      %v3769 = vsel %vm3731, %v3658, 0
      %v3772 = vsel %vm3731, %v3659, 0
      %v3775 = vsel %vm3731, %v3660, 0
      %v3778 = vsel %vm3731, %v3661, 0
      %v3781 = vsel %vm3731, %v3662, 0
      %v3784 = vsel %vm3731, %v3663, 0
      %v3787 = vsel %vm3731, %v3664, 0
      %v3790 = vsel %vm3731, %v3665, 0
      %v3793 = vsel %vm3731, %v3666, 0
      %v3796 = vsel %vm3731, %v3667, 0
      %v3799 = vsel %vm3731, %v3668, 0
      %v3802 = vsel %vm3731, %v3669, 0
      %v3805 = vsel %vm3731, %v3670, 0
      %v3808 = vsel %vm3731, %v3671, 0
      %v3811 = vsel %vm3731, %v3672, 0
      %v3814 = vsel %vm3731, %v3673, 0
      %v3817 = vsel %vm3731, %v3674, 0
      %v3820 = vsel %vm3731, %v3675, 0
      %v3823 = vsel %vm3731, %v3676, 0
      %v3826 = vsel %vm3731, %v3677, 0
      %v3829 = vsel %vm3731, %v3678, 0
      %v3832 = vsel %vm3731, %v3679, 0
      %v3835 = vsel %vm3731, %v3680, 0
      %v3838 = vsel %vm3731, %v3681, 0
      %3840 = vmatprep.subr.bf16.mxu0 0
      %3841 = vmatpush1.bf16.msra.mxu0 0
      %3842 = vmatprep.subr.bf16.mxu0 0
      %3843 = vmatpush1.bf16.msra.mxu0 0
      %3844 = vmatprep.subr.bf16.mxu0 0
      %3845 = vmatpush1.bf16.msra.mxu0 %v3724
      %3846 = vmatprep.subr.bf16.mxu0 0
      %3847 = vmatpush1.bf16.msra.mxu0 %v3723
      %3848 = vmatprep.subr.bf16.mxu0 0
      %3849 = vmatpush1.bf16.msra.mxu0 %v3722
      %3850 = vmatprep.subr.bf16.mxu0 0
      %3851 = vmatpush1.bf16.msra.mxu0 %v3721
      %3852 = vmatprep.subr.bf16.mxu0 0
      %3853 = vmatpush1.bf16.msra.mxu0 %v3720
      %3854 = vmatprep.subr.bf16.mxu0 0
      %3855 = vmatpush1.bf16.msra.mxu0 %v3719
      %3856 = vmatprep.subr.bf16.mxu0 0
      %3857 = vmatpush2.bf16.msra.mxu0 0
      %3858 = vmatprep.subr.bf16.mxu0 0
      %3859 = vmatpush2.bf16.msra.mxu0 0
      %3860 = vmatprep.subr.bf16.mxu0 0
      %3861 = vmatpush2.bf16.msra.mxu0 0
      %3862 = vmatprep.subr.bf16.mxu0 0
      %3863 = vmatpush2.bf16.msra.mxu0 0
      %3864 = vmatprep.subr.bf16.mxu0 0
      %3865 = vmatpush2.bf16.msra.mxu0 0
      %3866 = vmatprep.subr.bf16.mxu0 0
      %3867 = vmatpush2.bf16.msra.mxu0 0
      %3868 = vmatprep.subr.bf16.mxu0 0
      %3869 = vmatpush2.bf16.msra.mxu0 0
      %3870 = vmatprep.subr.bf16.mxu0 0
      %3871 = vmatpush2.bf16.msra.mxu0 0
      %3872 = vmatprep.mubr.bf16.mxu0 0
      %3873 = vmatmul.mubr.bf16.gmra.mxu0 %v3733
      %v3874 = vpop.f32.mrf.mxu0
      %v3875 = vadd.f32 0.0, %v3874
      %v3876 = vpop.f32.mrf.mxu0
      %v3877 = vpop.f32.mrf.mxu0
      %v3878 = vadd.f32 0.0, %v3877
      %v3879 = vpop.f32.mrf.mxu0
      %3880 = vmatprep.mubr.bf16.mxu0 0
      %3881 = vmatmul.mubr.bf16.gmra.mxu0 %v3736
      %v3882 = vpop.f32.mrf.mxu0
      %v3883 = vadd.f32 0.0, %v3882
      %v3884 = vpop.f32.mrf.mxu0
      %v3885 = vpop.f32.mrf.mxu0
      %v3886 = vadd.f32 0.0, %v3885
      %v3887 = vpop.f32.mrf.mxu0
      %3888 = vmatprep.mubr.bf16.mxu0 0
      %3889 = vmatmul.mubr.bf16.gmra.mxu0 %v3739
      %v3890 = vpop.f32.mrf.mxu0
      %v3891 = vadd.f32 0.0, %v3890
      %v3892 = vpop.f32.mrf.mxu0
      %v3893 = vpop.f32.mrf.mxu0
      %v3894 = vadd.f32 0.0, %v3893
      %v3895 = vpop.f32.mrf.mxu0
      %3896 = vmatprep.mubr.bf16.mxu0 0
      %3897 = vmatmul.mubr.bf16.gmra.mxu0 %v3742
      %v3898 = vpop.f32.mrf.mxu0
      %v3899 = vadd.f32 0.0, %v3898
      %v3900 = vpop.f32.mrf.mxu0
      %v3901 = vpop.f32.mrf.mxu0
      %v3902 = vadd.f32 0.0, %v3901
      %v3903 = vpop.f32.mrf.mxu0
      %3904 = vmatprep.mubr.bf16.mxu0 0
      %3905 = vmatmul.mubr.bf16.gmra.mxu0 %v3745
      %v3906 = vpop.f32.mrf.mxu0
      %v3907 = vadd.f32 0.0, %v3906
      %v3908 = vpop.f32.mrf.mxu0
      %v3909 = vpop.f32.mrf.mxu0
      %v3910 = vadd.f32 0.0, %v3909
      %v3911 = vpop.f32.mrf.mxu0
      %3912 = vmatprep.mubr.bf16.mxu0 0
      %3913 = vmatmul.mubr.bf16.gmra.mxu0 %v3748
      %v3914 = vpop.f32.mrf.mxu0
      %v3915 = vadd.f32 0.0, %v3914
      %v3916 = vpop.f32.mrf.mxu0
      %v3917 = vpop.f32.mrf.mxu0
      %v3918 = vadd.f32 0.0, %v3917
      %v3919 = vpop.f32.mrf.mxu0
      %3920 = vmatprep.mubr.bf16.mxu0 0
      %3921 = vmatmul.mubr.bf16.gmra.mxu0 %v3751
      %v3922 = vpop.f32.mrf.mxu0
      %v3923 = vadd.f32 0.0, %v3922
      %v3924 = vpop.f32.mrf.mxu0
      %v3925 = vpop.f32.mrf.mxu0
      %v3926 = vadd.f32 0.0, %v3925
      %v3927 = vpop.f32.mrf.mxu0
      %3928 = vmatprep.mubr.bf16.mxu0 0
      %3929 = vmatmul.mubr.bf16.gmra.mxu0 %v3754
      %v3930 = vpop.f32.mrf.mxu0
      %v3931 = vadd.f32 0.0, %v3930
      %v3932 = vpop.f32.mrf.mxu0
      %v3933 = vpop.f32.mrf.mxu0
      %v3934 = vadd.f32 0.0, %v3933
      %v3935 = vpop.f32.mrf.mxu0
      %3936 = vmatprep.mubr.bf16.mxu0 0
      %3937 = vmatmul.mubr.bf16.gmra.mxu0 %v3757
      %v3938 = vpop.f32.mrf.mxu0
      %v3939 = vadd.f32 0.0, %v3938
      %v3940 = vpop.f32.mrf.mxu0
      %v3941 = vpop.f32.mrf.mxu0
      %v3942 = vadd.f32 0.0, %v3941
      %v3943 = vpop.f32.mrf.mxu0
      %3944 = vmatprep.mubr.bf16.mxu0 0
      %3945 = vmatmul.mubr.bf16.gmra.mxu0 %v3760
      %v3946 = vpop.f32.mrf.mxu0
      %v3947 = vadd.f32 0.0, %v3946
      %v3948 = vpop.f32.mrf.mxu0
      %v3949 = vpop.f32.mrf.mxu0
      %v3950 = vadd.f32 0.0, %v3949
      %v3951 = vpop.f32.mrf.mxu0
      %3952 = vmatprep.mubr.bf16.mxu0 0
      %3953 = vmatmul.mubr.bf16.gmra.mxu0 %v3763
      %v3954 = vpop.f32.mrf.mxu0
      %v3955 = vadd.f32 0.0, %v3954
      %v3956 = vpop.f32.mrf.mxu0
      %v3957 = vpop.f32.mrf.mxu0
      %v3958 = vadd.f32 0.0, %v3957
      %v3959 = vpop.f32.mrf.mxu0
      %3960 = vmatprep.mubr.bf16.mxu0 0
      %3961 = vmatmul.mubr.bf16.gmra.mxu0 %v3766
      %v3962 = vpop.f32.mrf.mxu0
      %v3963 = vadd.f32 0.0, %v3962
      %v3964 = vpop.f32.mrf.mxu0
      %v3965 = vpop.f32.mrf.mxu0
      %v3966 = vadd.f32 0.0, %v3965
      %v3967 = vpop.f32.mrf.mxu0
      %3968 = vmatprep.mubr.bf16.mxu0 0
      %3969 = vmatmul.mubr.bf16.gmra.mxu0 %v3769
      %v3970 = vpop.f32.mrf.mxu0
      %v3971 = vadd.f32 0.0, %v3970
      %v3972 = vpop.f32.mrf.mxu0
      %v3973 = vpop.f32.mrf.mxu0
      %v3974 = vadd.f32 0.0, %v3973
      %v3975 = vpop.f32.mrf.mxu0
      %3976 = vmatprep.mubr.bf16.mxu0 0
      %3977 = vmatmul.mubr.bf16.gmra.mxu0 %v3772
      %v3978 = vpop.f32.mrf.mxu0
      %v3979 = vadd.f32 0.0, %v3978
      %v3980 = vpop.f32.mrf.mxu0
      %v3981 = vpop.f32.mrf.mxu0
      %v3982 = vadd.f32 0.0, %v3981
      %v3983 = vpop.f32.mrf.mxu0
      %3984 = vmatprep.mubr.bf16.mxu0 0
      %3985 = vmatmul.mubr.bf16.gmra.mxu0 %v3775
      %v3986 = vpop.f32.mrf.mxu0
      %v3987 = vadd.f32 0.0, %v3986
      %v3988 = vpop.f32.mrf.mxu0
      %v3989 = vpop.f32.mrf.mxu0
      %v3990 = vadd.f32 0.0, %v3989
      %v3991 = vpop.f32.mrf.mxu0
      %3992 = vmatprep.mubr.bf16.mxu0 0
      %3993 = vmatmul.mubr.bf16.gmra.mxu0 %v3778
      %v3994 = vpop.f32.mrf.mxu0
      %v3995 = vadd.f32 0.0, %v3994
      %v3996 = vpop.f32.mrf.mxu0
      %v3997 = vpop.f32.mrf.mxu0
      %v3998 = vadd.f32 0.0, %v3997
      %v3999 = vpop.f32.mrf.mxu0
      %4000 = vmatprep.mubr.bf16.mxu0 0
      %4001 = vmatmul.mubr.bf16.gmra.mxu0 %v3781
      %v4002 = vpop.f32.mrf.mxu0
      %v4003 = vadd.f32 0.0, %v4002
      %v4004 = vpop.f32.mrf.mxu0
      %v4005 = vpop.f32.mrf.mxu0
      %v4006 = vadd.f32 0.0, %v4005
      %v4007 = vpop.f32.mrf.mxu0
      %4008 = vmatprep.mubr.bf16.mxu0 0
      %4009 = vmatmul.mubr.bf16.gmra.mxu0 %v3784
      %v4010 = vpop.f32.mrf.mxu0
      %v4011 = vadd.f32 0.0, %v4010
      %v4012 = vpop.f32.mrf.mxu0
      %v4013 = vpop.f32.mrf.mxu0
      %v4014 = vadd.f32 0.0, %v4013
      %v4015 = vpop.f32.mrf.mxu0
      %4016 = vmatprep.mubr.bf16.mxu0 0
      %4017 = vmatmul.mubr.bf16.gmra.mxu0 %v3787
      %v4018 = vpop.f32.mrf.mxu0
      %v4019 = vadd.f32 0.0, %v4018
      %v4020 = vpop.f32.mrf.mxu0
      %v4021 = vpop.f32.mrf.mxu0
      %v4022 = vadd.f32 0.0, %v4021
      %v4023 = vpop.f32.mrf.mxu0
      %4024 = vmatprep.mubr.bf16.mxu0 0
      %4025 = vmatmul.mubr.bf16.gmra.mxu0 %v3790
      %v4026 = vpop.f32.mrf.mxu0
      %v4027 = vadd.f32 0.0, %v4026
      %v4028 = vpop.f32.mrf.mxu0
      %v4029 = vpop.f32.mrf.mxu0
      %v4030 = vadd.f32 0.0, %v4029
      %v4031 = vpop.f32.mrf.mxu0
      %4032 = vmatprep.mubr.bf16.mxu0 0
      %4033 = vmatmul.mubr.bf16.gmra.mxu0 %v3793
      %v4034 = vpop.f32.mrf.mxu0
      %v4035 = vadd.f32 0.0, %v4034
      %v4036 = vpop.f32.mrf.mxu0
      %v4037 = vpop.f32.mrf.mxu0
      %v4038 = vadd.f32 0.0, %v4037
      %v4039 = vpop.f32.mrf.mxu0
      %4040 = vmatprep.mubr.bf16.mxu0 0
      %4041 = vmatmul.mubr.bf16.gmra.mxu0 %v3796
      %v4042 = vpop.f32.mrf.mxu0
      %v4043 = vadd.f32 0.0, %v4042
      %v4044 = vpop.f32.mrf.mxu0
      %v4045 = vpop.f32.mrf.mxu0
      %v4046 = vadd.f32 0.0, %v4045
      %v4047 = vpop.f32.mrf.mxu0
      %4048 = vmatprep.mubr.bf16.mxu0 0
      %4049 = vmatmul.mubr.bf16.gmra.mxu0 %v3799
      %v4050 = vpop.f32.mrf.mxu0
      %v4051 = vadd.f32 0.0, %v4050
      %v4052 = vpop.f32.mrf.mxu0
      %v4053 = vpop.f32.mrf.mxu0
      %v4054 = vadd.f32 0.0, %v4053
      %v4055 = vpop.f32.mrf.mxu0
      %4056 = vmatprep.mubr.bf16.mxu0 0
      %4057 = vmatmul.mubr.bf16.gmra.mxu0 %v3802
      %v4058 = vpop.f32.mrf.mxu0
      %v4059 = vadd.f32 0.0, %v4058
      %v4060 = vpop.f32.mrf.mxu0
      %v4061 = vpop.f32.mrf.mxu0
      %v4062 = vadd.f32 0.0, %v4061
      %v4063 = vpop.f32.mrf.mxu0
      %4064 = vmatprep.mubr.bf16.mxu0 0
      %4065 = vmatmul.mubr.bf16.gmra.mxu0 %v3805
      %v4066 = vpop.f32.mrf.mxu0
      %v4067 = vadd.f32 0.0, %v4066
      %v4068 = vpop.f32.mrf.mxu0
      %v4069 = vpop.f32.mrf.mxu0
      %v4070 = vadd.f32 0.0, %v4069
      %v4071 = vpop.f32.mrf.mxu0
      %4072 = vmatprep.mubr.bf16.mxu0 0
      %4073 = vmatmul.mubr.bf16.gmra.mxu0 %v3808
      %v4074 = vpop.f32.mrf.mxu0
      %v4075 = vadd.f32 0.0, %v4074
      %v4076 = vpop.f32.mrf.mxu0
      %v4077 = vpop.f32.mrf.mxu0
      %v4078 = vadd.f32 0.0, %v4077
      %v4079 = vpop.f32.mrf.mxu0
      %4080 = vmatprep.mubr.bf16.mxu0 0
      %4081 = vmatmul.mubr.bf16.gmra.mxu0 %v3811
      %v4082 = vpop.f32.mrf.mxu0
      %v4083 = vadd.f32 0.0, %v4082
      %v4084 = vpop.f32.mrf.mxu0
      %v4085 = vpop.f32.mrf.mxu0
      %v4086 = vadd.f32 0.0, %v4085
      %v4087 = vpop.f32.mrf.mxu0
      %4088 = vmatprep.mubr.bf16.mxu0 0
      %4089 = vmatmul.mubr.bf16.gmra.mxu0 %v3814
      %v4090 = vpop.f32.mrf.mxu0
      %v4091 = vadd.f32 0.0, %v4090
      %v4092 = vpop.f32.mrf.mxu0
      %v4093 = vpop.f32.mrf.mxu0
      %v4094 = vadd.f32 0.0, %v4093
      %v4095 = vpop.f32.mrf.mxu0
      %4096 = vmatprep.mubr.bf16.mxu0 0
      %4097 = vmatmul.mubr.bf16.gmra.mxu0 %v3817
      %v4098 = vpop.f32.mrf.mxu0
      %v4099 = vadd.f32 0.0, %v4098
      %v4100 = vpop.f32.mrf.mxu0
      %v4101 = vpop.f32.mrf.mxu0
      %v4102 = vadd.f32 0.0, %v4101
      %v4103 = vpop.f32.mrf.mxu0
      %4104 = vmatprep.mubr.bf16.mxu0 0
      %4105 = vmatmul.mubr.bf16.gmra.mxu0 %v3820
      %v4106 = vpop.f32.mrf.mxu0
      %v4107 = vadd.f32 0.0, %v4106
      %v4108 = vpop.f32.mrf.mxu0
      %v4109 = vpop.f32.mrf.mxu0
      %v4110 = vadd.f32 0.0, %v4109
      %v4111 = vpop.f32.mrf.mxu0
      %4112 = vmatprep.mubr.bf16.mxu0 0
      %4113 = vmatmul.mubr.bf16.gmra.mxu0 %v3823
      %v4114 = vpop.f32.mrf.mxu0
      %v4115 = vadd.f32 0.0, %v4114
      %v4116 = vpop.f32.mrf.mxu0
      %v4117 = vpop.f32.mrf.mxu0
      %v4118 = vadd.f32 0.0, %v4117
      %v4119 = vpop.f32.mrf.mxu0
      %4120 = vmatprep.mubr.bf16.mxu0 0
      %4121 = vmatmul.mubr.bf16.gmra.mxu0 %v3826
      %v4122 = vpop.f32.mrf.mxu0
      %v4123 = vadd.f32 0.0, %v4122
      %v4124 = vpop.f32.mrf.mxu0
      %v4125 = vpop.f32.mrf.mxu0
      %v4126 = vadd.f32 0.0, %v4125
      %v4127 = vpop.f32.mrf.mxu0
      %4128 = vmatprep.mubr.bf16.mxu0 0
      %4129 = vmatmul.mubr.bf16.gmra.mxu0 %v3829
      %v4130 = vpop.f32.mrf.mxu0
      %v4131 = vadd.f32 0.0, %v4130
      %v4132 = vpop.f32.mrf.mxu0
      %v4133 = vpop.f32.mrf.mxu0
      %v4134 = vadd.f32 0.0, %v4133
      %v4135 = vpop.f32.mrf.mxu0
      %4136 = vmatprep.mubr.bf16.mxu0 0
      %4137 = vmatmul.mubr.bf16.gmra.mxu0 %v3832
      %v4138 = vpop.f32.mrf.mxu0
      %v4139 = vadd.f32 0.0, %v4138
      %v4140 = vpop.f32.mrf.mxu0
      %v4141 = vpop.f32.mrf.mxu0
      %v4142 = vadd.f32 0.0, %v4141
      %v4143 = vpop.f32.mrf.mxu0
      %4144 = vmatprep.mubr.bf16.mxu0 0
      %4145 = vmatmul.mubr.bf16.gmra.mxu0 %v3835
      %v4146 = vpop.f32.mrf.mxu0
      %v4147 = vadd.f32 0.0, %v4146
      %v4148 = vpop.f32.mrf.mxu0
      %v4149 = vpop.f32.mrf.mxu0
      %v4150 = vadd.f32 0.0, %v4149
      %v4151 = vpop.f32.mrf.mxu0
      %4152 = vmatprep.mubr.bf16.mxu0 0
      %4153 = vmatmul.mubr.bf16.gmra.mxu0 %v3838
      %v4154 = vpop.f32.mrf.mxu0
      %v4155 = vadd.f32 0.0, %v4154
      %v4156 = vpop.f32.mrf.mxu0
      %v4157 = vpop.f32.mrf.mxu0
      %v4158 = vadd.f32 0.0, %v4157
      %v4159 = vpop.f32.mrf.mxu0
      %4160 = vdwg.mxu0
      %v4173 = vunpack.c.l.b16 %v3595
      %v4174 = vunpack.c.l.b16 %v3596
      %v4175 = vunpack.c.l.b16 %v3597
      %v4176 = vunpack.c.l.b16 %v3598
      %v4177 = vunpack.c.l.b16 %v3599
      %v4178 = vunpack.c.l.b16 %v3600
      %v4179 = vunpack.c.l.b16 %v3601
      %v4180 = vunpack.c.l.b16 %v3602
      %v4181 = vunpack.c.l.b16 %v3603
      %v4182 = vunpack.c.l.b16 %v3604
      %v4183 = vunpack.c.l.b16 %v3605
      %v4184 = vunpack.c.l.b16 %v3606
      %v4185 = vpack.c.b16 %v4174, %v4173
      %v4186 = vpack.c.b16 %v4176, %v4175
      %v4187 = vpack.c.b16 %v4178, %v4177
      %v4188 = vpack.c.b16 %v4180, %v4179
      %v4189 = vpack.c.b16 %v4182, %v4181
      %v4190 = vpack.c.b16 %v4184, %v4183
      %v4198 = vsel %vm3731, %v3559, 0
      %v4201 = vsel %vm3731, %v3560, 0
      %v4204 = vsel %vm3731, %v3561, 0
      %v4207 = vsel %vm3731, %v3562, 0
      %v4210 = vsel %vm3731, %v3563, 0
      %v4213 = vsel %vm3731, %v3564, 0
      %v4216 = vsel %vm3731, %v3565, 0
      %v4219 = vsel %vm3731, %v3566, 0
      %v4222 = vsel %vm3731, %v3567, 0
      %v4225 = vsel %vm3731, %v3568, 0
      %v4228 = vsel %vm3731, %v3569, 0
      %v4231 = vsel %vm3731, %v3570, 0
      %v4234 = vsel %vm3731, %v3571, 0
      %v4237 = vsel %vm3731, %v3572, 0
      %v4240 = vsel %vm3731, %v3573, 0
      %v4243 = vsel %vm3731, %v3574, 0
      %v4246 = vsel %vm3731, %v3575, 0
      %v4249 = vsel %vm3731, %v3576, 0
      %v4252 = vsel %vm3731, %v3577, 0
      %v4255 = vsel %vm3731, %v3578, 0
      %v4258 = vsel %vm3731, %v3579, 0
      %v4261 = vsel %vm3731, %v3580, 0
      %v4264 = vsel %vm3731, %v3581, 0
      %v4267 = vsel %vm3731, %v3582, 0
      %v4270 = vsel %vm3731, %v3583, 0
      %v4273 = vsel %vm3731, %v3584, 0
      %v4276 = vsel %vm3731, %v3585, 0
      %v4279 = vsel %vm3731, %v3586, 0
      %v4282 = vsel %vm3731, %v3587, 0
      %v4285 = vsel %vm3731, %v3588, 0
      %v4288 = vsel %vm3731, %v3589, 0
      %v4291 = vsel %vm3731, %v3590, 0
      %v4294 = vsel %vm3731, %v3591, 0
      %v4297 = vsel %vm3731, %v3592, 0
      %v4300 = vsel %vm3731, %v3593, 0
      %v4303 = vsel %vm3731, %v3594, 0
      %4305 = vmatprep.subr.bf16.mxu0 0
      %4306 = vmatpush1.bf16.msra.mxu0 0
      %4307 = vmatprep.subr.bf16.mxu0 0
      %4308 = vmatpush1.bf16.msra.mxu0 0
      %4309 = vmatprep.subr.bf16.mxu0 0
      %4310 = vmatpush1.bf16.msra.mxu0 %v4190
      %4311 = vmatprep.subr.bf16.mxu0 0
      %4312 = vmatpush1.bf16.msra.mxu0 %v4189
      %4313 = vmatprep.subr.bf16.mxu0 0
      %4314 = vmatpush1.bf16.msra.mxu0 %v4188
      %4315 = vmatprep.subr.bf16.mxu0 0
      %4316 = vmatpush1.bf16.msra.mxu0 %v4187
      %4317 = vmatprep.subr.bf16.mxu0 0
      %4318 = vmatpush1.bf16.msra.mxu0 %v4186
      %4319 = vmatprep.subr.bf16.mxu0 0
      %4320 = vmatpush1.bf16.msra.mxu0 %v4185
      %4321 = vmatprep.subr.bf16.mxu0 0
      %4322 = vmatpush2.bf16.msra.mxu0 0
      %4323 = vmatprep.subr.bf16.mxu0 0
      %4324 = vmatpush2.bf16.msra.mxu0 0
      %4325 = vmatprep.subr.bf16.mxu0 0
      %4326 = vmatpush2.bf16.msra.mxu0 0
      %4327 = vmatprep.subr.bf16.mxu0 0
      %4328 = vmatpush2.bf16.msra.mxu0 0
      %4329 = vmatprep.subr.bf16.mxu0 0
      %4330 = vmatpush2.bf16.msra.mxu0 0
      %4331 = vmatprep.subr.bf16.mxu0 0
      %4332 = vmatpush2.bf16.msra.mxu0 0
      %4333 = vmatprep.subr.bf16.mxu0 0
      %4334 = vmatpush2.bf16.msra.mxu0 0
      %4335 = vmatprep.subr.bf16.mxu0 0
      %4336 = vmatpush2.bf16.msra.mxu0 0
      %4337 = vmatprep.mubr.bf16.mxu0 0
      %4338 = vmatmul.mubr.bf16.gmra.mxu0 %v4198
      %v4339 = vpop.f32.mrf.mxu0
      %v4340 = vadd.f32 %v3875, %v4339
      %v4341 = vpop.f32.mrf.mxu0
      %v4342 = vpop.f32.mrf.mxu0
      %v4343 = vadd.f32 %v3878, %v4342
      %v4344 = vpop.f32.mrf.mxu0
      %4345 = vmatprep.mubr.bf16.mxu0 0
      %4346 = vmatmul.mubr.bf16.gmra.mxu0 %v4201
      %v4347 = vpop.f32.mrf.mxu0
      %v4348 = vadd.f32 %v3883, %v4347
      %v4349 = vpop.f32.mrf.mxu0
      %v4350 = vpop.f32.mrf.mxu0
      %v4351 = vadd.f32 %v3886, %v4350
      %v4352 = vpop.f32.mrf.mxu0
      %4353 = vmatprep.mubr.bf16.mxu0 0
      %4354 = vmatmul.mubr.bf16.gmra.mxu0 %v4204
      %v4355 = vpop.f32.mrf.mxu0
      %v4356 = vadd.f32 %v3891, %v4355
      %v4357 = vpop.f32.mrf.mxu0
      %v4358 = vpop.f32.mrf.mxu0
      %v4359 = vadd.f32 %v3894, %v4358
      %v4360 = vpop.f32.mrf.mxu0
      %4361 = vmatprep.mubr.bf16.mxu0 0
      %4362 = vmatmul.mubr.bf16.gmra.mxu0 %v4207
      %v4363 = vpop.f32.mrf.mxu0
      %v4364 = vadd.f32 %v3899, %v4363
      %v4365 = vpop.f32.mrf.mxu0
      %v4366 = vpop.f32.mrf.mxu0
      %v4367 = vadd.f32 %v3902, %v4366
      %v4368 = vpop.f32.mrf.mxu0
      %4369 = vmatprep.mubr.bf16.mxu0 0
      %4370 = vmatmul.mubr.bf16.gmra.mxu0 %v4210
      %v4371 = vpop.f32.mrf.mxu0
      %v4372 = vadd.f32 %v3907, %v4371
      %v4373 = vpop.f32.mrf.mxu0
      %v4374 = vpop.f32.mrf.mxu0
      %v4375 = vadd.f32 %v3910, %v4374
      %v4376 = vpop.f32.mrf.mxu0
      %4377 = vmatprep.mubr.bf16.mxu0 0
      %4378 = vmatmul.mubr.bf16.gmra.mxu0 %v4213
      %v4379 = vpop.f32.mrf.mxu0
      %v4380 = vadd.f32 %v3915, %v4379
      %v4381 = vpop.f32.mrf.mxu0
      %v4382 = vpop.f32.mrf.mxu0
      %v4383 = vadd.f32 %v3918, %v4382
      %v4384 = vpop.f32.mrf.mxu0
      %4385 = vmatprep.mubr.bf16.mxu0 0
      %4386 = vmatmul.mubr.bf16.gmra.mxu0 %v4216
      %v4387 = vpop.f32.mrf.mxu0
      %v4388 = vadd.f32 %v3923, %v4387
      %v4389 = vpop.f32.mrf.mxu0
      %v4390 = vpop.f32.mrf.mxu0
      %v4391 = vadd.f32 %v3926, %v4390
      %v4392 = vpop.f32.mrf.mxu0
      %4393 = vmatprep.mubr.bf16.mxu0 0
      %4394 = vmatmul.mubr.bf16.gmra.mxu0 %v4219
      %v4395 = vpop.f32.mrf.mxu0
      %v4396 = vadd.f32 %v3931, %v4395
      %v4397 = vpop.f32.mrf.mxu0
      %v4398 = vpop.f32.mrf.mxu0
      %v4399 = vadd.f32 %v3934, %v4398
      %v4400 = vpop.f32.mrf.mxu0
      %4401 = vmatprep.mubr.bf16.mxu0 0
      %4402 = vmatmul.mubr.bf16.gmra.mxu0 %v4222
      %v4403 = vpop.f32.mrf.mxu0
      %v4404 = vadd.f32 %v3939, %v4403
      %v4405 = vpop.f32.mrf.mxu0
      %v4406 = vpop.f32.mrf.mxu0
      %v4407 = vadd.f32 %v3942, %v4406
      %v4408 = vpop.f32.mrf.mxu0
      %4409 = vmatprep.mubr.bf16.mxu0 0
      %4410 = vmatmul.mubr.bf16.gmra.mxu0 %v4225
      %v4411 = vpop.f32.mrf.mxu0
      %v4412 = vadd.f32 %v3947, %v4411
      %v4413 = vpop.f32.mrf.mxu0
      %v4414 = vpop.f32.mrf.mxu0
      %v4415 = vadd.f32 %v3950, %v4414
      %v4416 = vpop.f32.mrf.mxu0
      %4417 = vmatprep.mubr.bf16.mxu0 0
      %4418 = vmatmul.mubr.bf16.gmra.mxu0 %v4228
      %v4419 = vpop.f32.mrf.mxu0
      %v4420 = vadd.f32 %v3955, %v4419
      %v4421 = vpop.f32.mrf.mxu0
      %v4422 = vpop.f32.mrf.mxu0
      %v4423 = vadd.f32 %v3958, %v4422
      %v4424 = vpop.f32.mrf.mxu0
      %4425 = vmatprep.mubr.bf16.mxu0 0
      %4426 = vmatmul.mubr.bf16.gmra.mxu0 %v4231
      %v4427 = vpop.f32.mrf.mxu0
      %v4428 = vadd.f32 %v3963, %v4427
      %v4429 = vpop.f32.mrf.mxu0
      %v4430 = vpop.f32.mrf.mxu0
      %v4431 = vadd.f32 %v3966, %v4430
      %v4432 = vpop.f32.mrf.mxu0
      %4433 = vmatprep.mubr.bf16.mxu0 0
      %4434 = vmatmul.mubr.bf16.gmra.mxu0 %v4234
      %v4435 = vpop.f32.mrf.mxu0
      %v4436 = vadd.f32 %v3971, %v4435
      %v4437 = vpop.f32.mrf.mxu0
      %v4438 = vpop.f32.mrf.mxu0
      %v4439 = vadd.f32 %v3974, %v4438
      %v4440 = vpop.f32.mrf.mxu0
      %4441 = vmatprep.mubr.bf16.mxu0 0
      %4442 = vmatmul.mubr.bf16.gmra.mxu0 %v4237
      %v4443 = vpop.f32.mrf.mxu0
      %v4444 = vadd.f32 %v3979, %v4443
      %v4445 = vpop.f32.mrf.mxu0
      %v4446 = vpop.f32.mrf.mxu0
      %v4447 = vadd.f32 %v3982, %v4446
      %v4448 = vpop.f32.mrf.mxu0
      %4449 = vmatprep.mubr.bf16.mxu0 0
      %4450 = vmatmul.mubr.bf16.gmra.mxu0 %v4240
      %v4451 = vpop.f32.mrf.mxu0
      %v4452 = vadd.f32 %v3987, %v4451
      %v4453 = vpop.f32.mrf.mxu0
      %v4454 = vpop.f32.mrf.mxu0
      %v4455 = vadd.f32 %v3990, %v4454
      %v4456 = vpop.f32.mrf.mxu0
      %4457 = vmatprep.mubr.bf16.mxu0 0
      %4458 = vmatmul.mubr.bf16.gmra.mxu0 %v4243
      %v4459 = vpop.f32.mrf.mxu0
      %v4460 = vadd.f32 %v3995, %v4459
      %v4461 = vpop.f32.mrf.mxu0
      %v4462 = vpop.f32.mrf.mxu0
      %v4463 = vadd.f32 %v3998, %v4462
      %v4464 = vpop.f32.mrf.mxu0
      %4465 = vmatprep.mubr.bf16.mxu0 0
      %4466 = vmatmul.mubr.bf16.gmra.mxu0 %v4246
      %v4467 = vpop.f32.mrf.mxu0
      %v4468 = vadd.f32 %v4003, %v4467
      %v4469 = vpop.f32.mrf.mxu0
      %v4470 = vpop.f32.mrf.mxu0
      %v4471 = vadd.f32 %v4006, %v4470
      %v4472 = vpop.f32.mrf.mxu0
      %4473 = vmatprep.mubr.bf16.mxu0 0
      %4474 = vmatmul.mubr.bf16.gmra.mxu0 %v4249
      %v4475 = vpop.f32.mrf.mxu0
      %v4476 = vadd.f32 %v4011, %v4475
      %v4477 = vpop.f32.mrf.mxu0
      %v4478 = vpop.f32.mrf.mxu0
      %v4479 = vadd.f32 %v4014, %v4478
      %v4480 = vpop.f32.mrf.mxu0
      %4481 = vmatprep.mubr.bf16.mxu0 0
      %4482 = vmatmul.mubr.bf16.gmra.mxu0 %v4252
      %v4483 = vpop.f32.mrf.mxu0
      %v4484 = vadd.f32 %v4019, %v4483
      %v4485 = vpop.f32.mrf.mxu0
      %v4486 = vpop.f32.mrf.mxu0
      %v4487 = vadd.f32 %v4022, %v4486
      %v4488 = vpop.f32.mrf.mxu0
      %4489 = vmatprep.mubr.bf16.mxu0 0
      %4490 = vmatmul.mubr.bf16.gmra.mxu0 %v4255
      %v4491 = vpop.f32.mrf.mxu0
      %v4492 = vadd.f32 %v4027, %v4491
      %v4493 = vpop.f32.mrf.mxu0
      %v4494 = vpop.f32.mrf.mxu0
      %v4495 = vadd.f32 %v4030, %v4494
      %v4496 = vpop.f32.mrf.mxu0
      %4497 = vmatprep.mubr.bf16.mxu0 0
      %4498 = vmatmul.mubr.bf16.gmra.mxu0 %v4258
      %v4499 = vpop.f32.mrf.mxu0
      %v4500 = vadd.f32 %v4035, %v4499
      %v4501 = vpop.f32.mrf.mxu0
      %v4502 = vpop.f32.mrf.mxu0
      %v4503 = vadd.f32 %v4038, %v4502
      %v4504 = vpop.f32.mrf.mxu0
      %4505 = vmatprep.mubr.bf16.mxu0 0
      %4506 = vmatmul.mubr.bf16.gmra.mxu0 %v4261
      %v4507 = vpop.f32.mrf.mxu0
      %v4508 = vadd.f32 %v4043, %v4507
      %v4509 = vpop.f32.mrf.mxu0
      %v4510 = vpop.f32.mrf.mxu0
      %v4511 = vadd.f32 %v4046, %v4510
      %v4512 = vpop.f32.mrf.mxu0
      %4513 = vmatprep.mubr.bf16.mxu0 0
      %4514 = vmatmul.mubr.bf16.gmra.mxu0 %v4264
      %v4515 = vpop.f32.mrf.mxu0
      %v4516 = vadd.f32 %v4051, %v4515
      %v4517 = vpop.f32.mrf.mxu0
      %v4518 = vpop.f32.mrf.mxu0
      %v4519 = vadd.f32 %v4054, %v4518
      %v4520 = vpop.f32.mrf.mxu0
      %4521 = vmatprep.mubr.bf16.mxu0 0
      %4522 = vmatmul.mubr.bf16.gmra.mxu0 %v4267
      %v4523 = vpop.f32.mrf.mxu0
      %v4524 = vadd.f32 %v4059, %v4523
      %v4525 = vpop.f32.mrf.mxu0
      %v4526 = vpop.f32.mrf.mxu0
      %v4527 = vadd.f32 %v4062, %v4526
      %v4528 = vpop.f32.mrf.mxu0
      %4529 = vmatprep.mubr.bf16.mxu0 0
      %4530 = vmatmul.mubr.bf16.gmra.mxu0 %v4270
      %v4531 = vpop.f32.mrf.mxu0
      %v4532 = vadd.f32 %v4067, %v4531
      %v4533 = vpop.f32.mrf.mxu0
      %v4534 = vpop.f32.mrf.mxu0
      %v4535 = vadd.f32 %v4070, %v4534
      %v4536 = vpop.f32.mrf.mxu0
      %4537 = vmatprep.mubr.bf16.mxu0 0
      %4538 = vmatmul.mubr.bf16.gmra.mxu0 %v4273
      %v4539 = vpop.f32.mrf.mxu0
      %v4540 = vadd.f32 %v4075, %v4539
      %v4541 = vpop.f32.mrf.mxu0
      %v4542 = vpop.f32.mrf.mxu0
      %v4543 = vadd.f32 %v4078, %v4542
      %v4544 = vpop.f32.mrf.mxu0
      %4545 = vmatprep.mubr.bf16.mxu0 0
      %4546 = vmatmul.mubr.bf16.gmra.mxu0 %v4276
      %v4547 = vpop.f32.mrf.mxu0
      %v4548 = vadd.f32 %v4083, %v4547
      %v4549 = vpop.f32.mrf.mxu0
      %v4550 = vpop.f32.mrf.mxu0
      %v4551 = vadd.f32 %v4086, %v4550
      %v4552 = vpop.f32.mrf.mxu0
      %4553 = vmatprep.mubr.bf16.mxu0 0
      %4554 = vmatmul.mubr.bf16.gmra.mxu0 %v4279
      %v4555 = vpop.f32.mrf.mxu0
      %v4556 = vadd.f32 %v4091, %v4555
      %v4557 = vpop.f32.mrf.mxu0
      %v4558 = vpop.f32.mrf.mxu0
      %v4559 = vadd.f32 %v4094, %v4558
      %v4560 = vpop.f32.mrf.mxu0
      %4561 = vmatprep.mubr.bf16.mxu0 0
      %4562 = vmatmul.mubr.bf16.gmra.mxu0 %v4282
      %v4563 = vpop.f32.mrf.mxu0
      %v4564 = vadd.f32 %v4099, %v4563
      %v4565 = vpop.f32.mrf.mxu0
      %v4566 = vpop.f32.mrf.mxu0
      %v4567 = vadd.f32 %v4102, %v4566
      %v4568 = vpop.f32.mrf.mxu0
      %4569 = vmatprep.mubr.bf16.mxu0 0
      %4570 = vmatmul.mubr.bf16.gmra.mxu0 %v4285
      %v4571 = vpop.f32.mrf.mxu0
      %v4572 = vadd.f32 %v4107, %v4571
      %v4573 = vpop.f32.mrf.mxu0
      %v4574 = vpop.f32.mrf.mxu0
      %v4575 = vadd.f32 %v4110, %v4574
      %v4576 = vpop.f32.mrf.mxu0
      %4577 = vmatprep.mubr.bf16.mxu0 0
      %4578 = vmatmul.mubr.bf16.gmra.mxu0 %v4288
      %v4579 = vpop.f32.mrf.mxu0
      %v4580 = vadd.f32 %v4115, %v4579
      %v4581 = vpop.f32.mrf.mxu0
      %v4582 = vpop.f32.mrf.mxu0
      %v4583 = vadd.f32 %v4118, %v4582
      %v4584 = vpop.f32.mrf.mxu0
      %4585 = vmatprep.mubr.bf16.mxu0 0
      %4586 = vmatmul.mubr.bf16.gmra.mxu0 %v4291
      %v4587 = vpop.f32.mrf.mxu0
      %v4588 = vadd.f32 %v4123, %v4587
      %v4589 = vpop.f32.mrf.mxu0
      %v4590 = vpop.f32.mrf.mxu0
      %v4591 = vadd.f32 %v4126, %v4590
      %v4592 = vpop.f32.mrf.mxu0
      %4593 = vmatprep.mubr.bf16.mxu0 0
      %4594 = vmatmul.mubr.bf16.gmra.mxu0 %v4294
      %v4595 = vpop.f32.mrf.mxu0
      %v4596 = vadd.f32 %v4131, %v4595
      %v4597 = vpop.f32.mrf.mxu0
      %v4598 = vpop.f32.mrf.mxu0
      %v4599 = vadd.f32 %v4134, %v4598
      %v4600 = vpop.f32.mrf.mxu0
      %4601 = vmatprep.mubr.bf16.mxu0 0
      %4602 = vmatmul.mubr.bf16.gmra.mxu0 %v4297
      %v4603 = vpop.f32.mrf.mxu0
      %v4604 = vadd.f32 %v4139, %v4603
      %v4605 = vpop.f32.mrf.mxu0
      %v4606 = vpop.f32.mrf.mxu0
      %v4607 = vadd.f32 %v4142, %v4606
      %v4608 = vpop.f32.mrf.mxu0
      %4609 = vmatprep.mubr.bf16.mxu0 0
      %4610 = vmatmul.mubr.bf16.gmra.mxu0 %v4300
      %v4611 = vpop.f32.mrf.mxu0
      %v4612 = vadd.f32 %v4147, %v4611
      %v4613 = vpop.f32.mrf.mxu0
      %v4614 = vpop.f32.mrf.mxu0
      %v4615 = vadd.f32 %v4150, %v4614
      %v4616 = vpop.f32.mrf.mxu0
      %4617 = vmatprep.mubr.bf16.mxu0 0
      %4618 = vmatmul.mubr.bf16.gmra.mxu0 %v4303
      %v4619 = vpop.f32.mrf.mxu0
      %v4620 = vadd.f32 %v4155, %v4619
      %v4621 = vpop.f32.mrf.mxu0
      %v4622 = vpop.f32.mrf.mxu0
      %v4623 = vadd.f32 %v4158, %v4622
      %v4624 = vpop.f32.mrf.mxu0
      %4625 = vdwg.mxu0
      %v4626 = vld [vmem:[#allocation2 + $0x30] sm:$0xff]
      %v4627 = vld [vmem:[#allocation2 + $0x38] sm:$0xff]
      %v4628 = vld [vmem:[#allocation2 + $0x40] sm:$0xff]
      %v4629 = vld [vmem:[#allocation2 + $0x48] sm:$0xff]
      %v4630 = vld [vmem:[#allocation2 + $0x50] sm:$0xff]
      %v4631 = vld [vmem:[#allocation2 + $0x58] sm:$0xff]
      %v4632 = vld [vmem:[#allocation2 + $0x60] sm:$0xff]
      %v4633 = vld [vmem:[#allocation2 + $0x68] sm:$0xff]
      %v4634 = vld [vmem:[#allocation2 + $0x70] sm:$0xff]
      %v4635 = vld [vmem:[#allocation2 + $0x78] sm:$0xff]
      %v4636 = vld [vmem:[#allocation2 + $0x80] sm:$0xff]
      %v4637 = vld [vmem:[#allocation2 + $0x88] sm:$0xff]
      %v4638 = vld [vmem:[#allocation2 + $0x90] sm:$0xff]
      %v4639 = vld [vmem:[#allocation2 + $0x98] sm:$0xff]
      %v4640 = vld [vmem:[#allocation2 + $0xa0] sm:$0xff]
      %v4641 = vld [vmem:[#allocation2 + $0xa8] sm:$0xff]
      %v4642 = vld [vmem:[#allocation2 + $0xb0] sm:$0xff]
      %v4643 = vld [vmem:[#allocation2 + $0xb8] sm:$0xff]
      %v4644 = vld [vmem:[#allocation2 + $0xc0] sm:$0xff]
      %v4645 = vld [vmem:[#allocation2 + $0xc8] sm:$0xff]
      %v4646 = vld [vmem:[#allocation2 + $0xd0] sm:$0xff]
      %v4647 = vld [vmem:[#allocation2 + $0xd8] sm:$0xff]
      %v4648 = vld [vmem:[#allocation2 + $0xe0] sm:$0xff]
      %v4649 = vld [vmem:[#allocation2 + $0xe8] sm:$0xff]
      %v4650 = vld [vmem:[#allocation2 + $0xf0] sm:$0xff]
      %v4651 = vld [vmem:[#allocation2 + $0xf8] sm:$0xff]
      %v4652 = vld [vmem:[#allocation2 + $0x100] sm:$0xff]
      %v4653 = vld [vmem:[#allocation2 + $0x108] sm:$0xff]
      %v4654 = vld [vmem:[#allocation2 + $0x110] sm:$0xff]
      %v4655 = vld [vmem:[#allocation2 + $0x118] sm:$0xff]
      %v4656 = vld [vmem:[#allocation2 + $0x120] sm:$0xff]
      %v4657 = vld [vmem:[#allocation2 + $0x128] sm:$0xff]
      %v4658 = vld [vmem:[#allocation2 + $0x130] sm:$0xff]
      %v4659 = vld [vmem:[#allocation2 + $0x138] sm:$0xff]
      %v4660 = vld [vmem:[#allocation2 + $0x140] sm:$0xff]
      %v4661 = vld [vmem:[#allocation2 + $0x148] sm:$0xff]
      %v4662 = vld [vmem:[#allocation2 + $0x150] sm:$0xff]
      %v4663 = vld [vmem:[#allocation2 + $0x158] sm:$0xff]
      %v4664 = vld [vmem:[#allocation2 + $0x160] sm:$0xff]
      %v4665 = vld [vmem:[#allocation2 + $0x168] sm:$0xff]
      %v4666 = vld [vmem:[#allocation2 + $0x170] sm:$0xff]
      %v4667 = vld [vmem:[#allocation2 + $0x178] sm:$0xff]
      %v4668 = vld [vmem:[#allocation2 + $0x180] sm:$0xff]
      %v4669 = vld [vmem:[#allocation2 + $0x188] sm:$0xff]
      %v4670 = vld [vmem:[#allocation2 + $0x190] sm:$0xff]
      %v4671 = vld [vmem:[#allocation2 + $0x198] sm:$0xff]
      %v4672 = vld [vmem:[#allocation2 + $0x1a0] sm:$0xff]
      %v4673 = vld [vmem:[#allocation2 + $0x1a8] sm:$0xff]
      %v4674 = vld [vmem:[#allocation2 + $0x1b0] sm:$0xff]
      %v4675 = vld [vmem:[#allocation2 + $0x1b8] sm:$0xff]
      %v4676 = vld [vmem:[#allocation2 + $0x1c0] sm:$0xff]
      %v4677 = vld [vmem:[#allocation2 + $0x1c8] sm:$0xff]
      %v4678 = vld [vmem:[#allocation2 + $0x1d0] sm:$0xff]
      %v4679 = vld [vmem:[#allocation2 + $0x1d8] sm:$0xff]
      %v4680 = vld [vmem:[#allocation2 + $0x1e0] sm:$0xff]
      %v4681 = vld [vmem:[#allocation2 + $0x1e8] sm:$0xff]
      %v4682 = vld [vmem:[#allocation2 + $0x1f0] sm:$0xff]
      %v4683 = vld [vmem:[#allocation2 + $0x1f8] sm:$0xff]
      %v4684 = vld [vmem:[#allocation2 + $0x200] sm:$0xff]
      %v4685 = vld [vmem:[#allocation2 + $0x208] sm:$0xff]
      %v4686 = vld [vmem:[#allocation2 + $0x210] sm:$0xff]
      %v4687 = vld [vmem:[#allocation2 + $0x218] sm:$0xff]
      %v4688 = vld [vmem:[#allocation2 + $0x220] sm:$0xff]
      %v4689 = vld [vmem:[#allocation2 + $0x228] sm:$0xff]
      %v4690 = vld [vmem:[#allocation2 + $0x230] sm:$0xff]
      %v4691 = vld [vmem:[#allocation2 + $0x238] sm:$0xff]
      %v4692 = vld [vmem:[#allocation2 + $0x240] sm:$0xff]
      %v4693 = vld [vmem:[#allocation2 + $0x248] sm:$0xff]
      %v4694 = vld [vmem:[#allocation2 + $0x250] sm:$0xff]
      %v4695 = vld [vmem:[#allocation2 + $0x258] sm:$0xff]
      %v4696 = vld [vmem:[#allocation2 + $0x260] sm:$0xff]
      %v4697 = vld [vmem:[#allocation2 + $0x268] sm:$0xff]
      %v4698 = vld [vmem:[#allocation2 + $0x31] sm:$0xff]
      %v4699 = vld [vmem:[#allocation2 + $0x39] sm:$0xff]
      %v4700 = vld [vmem:[#allocation2 + $0x41] sm:$0xff]
      %v4701 = vld [vmem:[#allocation2 + $0x49] sm:$0xff]
      %v4702 = vld [vmem:[#allocation2 + $0x51] sm:$0xff]
      %v4703 = vld [vmem:[#allocation2 + $0x59] sm:$0xff]
      %v4704 = vld [vmem:[#allocation2 + $0x61] sm:$0xff]
      %v4705 = vld [vmem:[#allocation2 + $0x69] sm:$0xff]
      %v4706 = vld [vmem:[#allocation2 + $0x71] sm:$0xff]
      %v4707 = vld [vmem:[#allocation2 + $0x79] sm:$0xff]
      %v4708 = vld [vmem:[#allocation2 + $0x81] sm:$0xff]
      %v4709 = vld [vmem:[#allocation2 + $0x89] sm:$0xff]
      %v4710 = vld [vmem:[#allocation2 + $0x91] sm:$0xff]
      %v4711 = vld [vmem:[#allocation2 + $0x99] sm:$0xff]
      %v4712 = vld [vmem:[#allocation2 + $0xa1] sm:$0xff]
      %v4713 = vld [vmem:[#allocation2 + $0xa9] sm:$0xff]
      %v4714 = vld [vmem:[#allocation2 + $0xb1] sm:$0xff]
      %v4715 = vld [vmem:[#allocation2 + $0xb9] sm:$0xff]
      %v4716 = vld [vmem:[#allocation2 + $0xc1] sm:$0xff]
      %v4717 = vld [vmem:[#allocation2 + $0xc9] sm:$0xff]
      %v4718 = vld [vmem:[#allocation2 + $0xd1] sm:$0xff]
      %v4719 = vld [vmem:[#allocation2 + $0xd9] sm:$0xff]
      %v4720 = vld [vmem:[#allocation2 + $0xe1] sm:$0xff]
      %v4721 = vld [vmem:[#allocation2 + $0xe9] sm:$0xff]
      %v4722 = vld [vmem:[#allocation2 + $0xf1] sm:$0xff]
      %v4723 = vld [vmem:[#allocation2 + $0xf9] sm:$0xff]
      %v4724 = vld [vmem:[#allocation2 + $0x101] sm:$0xff]
      %v4725 = vld [vmem:[#allocation2 + $0x109] sm:$0xff]
      %v4726 = vld [vmem:[#allocation2 + $0x111] sm:$0xff]
      %v4727 = vld [vmem:[#allocation2 + $0x119] sm:$0xff]
      %v4728 = vld [vmem:[#allocation2 + $0x121] sm:$0xff]
      %v4729 = vld [vmem:[#allocation2 + $0x129] sm:$0xff]
      %v4730 = vld [vmem:[#allocation2 + $0x131] sm:$0xff]
      %v4731 = vld [vmem:[#allocation2 + $0x139] sm:$0xff]
      %v4732 = vld [vmem:[#allocation2 + $0x141] sm:$0xff]
      %v4733 = vld [vmem:[#allocation2 + $0x149] sm:$0xff]
      %v4734 = vld [vmem:[#allocation2 + $0x151] sm:$0xff]
      %v4735 = vld [vmem:[#allocation2 + $0x159] sm:$0xff]
      %v4736 = vld [vmem:[#allocation2 + $0x161] sm:$0xff]
      %v4737 = vld [vmem:[#allocation2 + $0x169] sm:$0xff]
      %v4738 = vld [vmem:[#allocation2 + $0x171] sm:$0xff]
      %v4739 = vld [vmem:[#allocation2 + $0x179] sm:$0xff]
      %v4740 = vld [vmem:[#allocation2 + $0x181] sm:$0xff]
      %v4741 = vld [vmem:[#allocation2 + $0x189] sm:$0xff]
      %v4742 = vld [vmem:[#allocation2 + $0x191] sm:$0xff]
      %v4743 = vld [vmem:[#allocation2 + $0x199] sm:$0xff]
      %v4744 = vld [vmem:[#allocation2 + $0x1a1] sm:$0xff]
      %v4745 = vld [vmem:[#allocation2 + $0x1a9] sm:$0xff]
      %v4746 = vld [vmem:[#allocation2 + $0x1b1] sm:$0xff]
      %v4747 = vld [vmem:[#allocation2 + $0x1b9] sm:$0xff]
      %v4748 = vld [vmem:[#allocation2 + $0x1c1] sm:$0xff]
      %v4749 = vld [vmem:[#allocation2 + $0x1c9] sm:$0xff]
      %v4750 = vld [vmem:[#allocation2 + $0x1d1] sm:$0xff]
      %v4751 = vld [vmem:[#allocation2 + $0x1d9] sm:$0xff]
      %v4752 = vld [vmem:[#allocation2 + $0x1e1] sm:$0xff]
      %v4753 = vld [vmem:[#allocation2 + $0x1e9] sm:$0xff]
      %v4754 = vld [vmem:[#allocation2 + $0x1f1] sm:$0xff]
      %v4755 = vld [vmem:[#allocation2 + $0x1f9] sm:$0xff]
      %v4756 = vld [vmem:[#allocation2 + $0x201] sm:$0xff]
      %v4757 = vld [vmem:[#allocation2 + $0x209] sm:$0xff]
      %v4758 = vld [vmem:[#allocation2 + $0x211] sm:$0xff]
      %v4759 = vld [vmem:[#allocation2 + $0x219] sm:$0xff]
      %v4760 = vld [vmem:[#allocation2 + $0x221] sm:$0xff]
      %v4761 = vld [vmem:[#allocation2 + $0x229] sm:$0xff]
      %v4762 = vld [vmem:[#allocation2 + $0x231] sm:$0xff]
      %v4763 = vld [vmem:[#allocation2 + $0x239] sm:$0xff]
      %v4764 = vld [vmem:[#allocation2 + $0x241] sm:$0xff]
      %v4765 = vld [vmem:[#allocation2 + $0x249] sm:$0xff]
      %v4766 = vld [vmem:[#allocation2 + $0x251] sm:$0xff]
      %v4767 = vld [vmem:[#allocation2 + $0x259] sm:$0xff]
      %v4768 = vld [vmem:[#allocation2 + $0x261] sm:$0xff]
      %v4769 = vld [vmem:[#allocation2 + $0x269] sm:$0xff]
      %v4770 = vld [vmem:[#allocation2 + $0x32] sm:$0xff]
      %v4771 = vld [vmem:[#allocation2 + $0x3a] sm:$0xff]
      %v4772 = vld [vmem:[#allocation2 + $0x42] sm:$0xff]
      %v4773 = vld [vmem:[#allocation2 + $0x4a] sm:$0xff]
      %v4774 = vld [vmem:[#allocation2 + $0x52] sm:$0xff]
      %v4775 = vld [vmem:[#allocation2 + $0x5a] sm:$0xff]
      %v4776 = vld [vmem:[#allocation2 + $0x62] sm:$0xff]
      %v4777 = vld [vmem:[#allocation2 + $0x6a] sm:$0xff]
      %v4778 = vld [vmem:[#allocation2 + $0x72] sm:$0xff]
      %v4779 = vld [vmem:[#allocation2 + $0x7a] sm:$0xff]
      %v4780 = vld [vmem:[#allocation2 + $0x82] sm:$0xff]
      %v4781 = vld [vmem:[#allocation2 + $0x8a] sm:$0xff]
      %v4782 = vld [vmem:[#allocation2 + $0x92] sm:$0xff]
      %v4783 = vld [vmem:[#allocation2 + $0x9a] sm:$0xff]
      %v4784 = vld [vmem:[#allocation2 + $0xa2] sm:$0xff]
      %v4785 = vld [vmem:[#allocation2 + $0xaa] sm:$0xff]
      %v4786 = vld [vmem:[#allocation2 + $0xb2] sm:$0xff]
      %v4787 = vld [vmem:[#allocation2 + $0xba] sm:$0xff]
      %v4788 = vld [vmem:[#allocation2 + $0xc2] sm:$0xff]
      %v4789 = vld [vmem:[#allocation2 + $0xca] sm:$0xff]
      %v4790 = vld [vmem:[#allocation2 + $0xd2] sm:$0xff]
      %v4791 = vld [vmem:[#allocation2 + $0xda] sm:$0xff]
      %v4792 = vld [vmem:[#allocation2 + $0xe2] sm:$0xff]
      %v4793 = vld [vmem:[#allocation2 + $0xea] sm:$0xff]
      %v4794 = vld [vmem:[#allocation2 + $0xf2] sm:$0xff]
      %v4795 = vld [vmem:[#allocation2 + $0xfa] sm:$0xff]
      %v4796 = vld [vmem:[#allocation2 + $0x102] sm:$0xff]
      %v4797 = vld [vmem:[#allocation2 + $0x10a] sm:$0xff]
      %v4798 = vld [vmem:[#allocation2 + $0x112] sm:$0xff]
      %v4799 = vld [vmem:[#allocation2 + $0x11a] sm:$0xff]
      %v4800 = vld [vmem:[#allocation2 + $0x122] sm:$0xff]
      %v4801 = vld [vmem:[#allocation2 + $0x12a] sm:$0xff]
      %v4802 = vld [vmem:[#allocation2 + $0x132] sm:$0xff]
      %v4803 = vld [vmem:[#allocation2 + $0x13a] sm:$0xff]
      %v4804 = vld [vmem:[#allocation2 + $0x142] sm:$0xff]
      %v4805 = vld [vmem:[#allocation2 + $0x14a] sm:$0xff]
      %v4806 = vld [vmem:[#allocation2 + $0x152] sm:$0xff]
      %v4807 = vld [vmem:[#allocation2 + $0x15a] sm:$0xff]
      %v4808 = vld [vmem:[#allocation2 + $0x162] sm:$0xff]
      %v4809 = vld [vmem:[#allocation2 + $0x16a] sm:$0xff]
      %v4810 = vld [vmem:[#allocation2 + $0x172] sm:$0xff]
      %v4811 = vld [vmem:[#allocation2 + $0x17a] sm:$0xff]
      %v4812 = vld [vmem:[#allocation2 + $0x182] sm:$0xff]
      %v4813 = vld [vmem:[#allocation2 + $0x18a] sm:$0xff]
      %v4814 = vld [vmem:[#allocation2 + $0x192] sm:$0xff]
      %v4815 = vld [vmem:[#allocation2 + $0x19a] sm:$0xff]
      %v4816 = vld [vmem:[#allocation2 + $0x1a2] sm:$0xff]
      %v4817 = vld [vmem:[#allocation2 + $0x1aa] sm:$0xff]
      %v4818 = vld [vmem:[#allocation2 + $0x1b2] sm:$0xff]
      %v4819 = vld [vmem:[#allocation2 + $0x1ba] sm:$0xff]
      %v4820 = vld [vmem:[#allocation2 + $0x1c2] sm:$0xff]
      %v4821 = vld [vmem:[#allocation2 + $0x1ca] sm:$0xff]
      %v4822 = vld [vmem:[#allocation2 + $0x1d2] sm:$0xff]
      %v4823 = vld [vmem:[#allocation2 + $0x1da] sm:$0xff]
      %v4824 = vld [vmem:[#allocation2 + $0x1e2] sm:$0xff]
      %v4825 = vld [vmem:[#allocation2 + $0x1ea] sm:$0xff]
      %v4826 = vld [vmem:[#allocation2 + $0x1f2] sm:$0xff]
      %v4827 = vld [vmem:[#allocation2 + $0x1fa] sm:$0xff]
      %v4828 = vld [vmem:[#allocation2 + $0x202] sm:$0xff]
      %v4829 = vld [vmem:[#allocation2 + $0x20a] sm:$0xff]
      %v4830 = vld [vmem:[#allocation2 + $0x212] sm:$0xff]
      %v4831 = vld [vmem:[#allocation2 + $0x21a] sm:$0xff]
      %v4832 = vld [vmem:[#allocation2 + $0x222] sm:$0xff]
      %v4833 = vld [vmem:[#allocation2 + $0x22a] sm:$0xff]
      %v4834 = vld [vmem:[#allocation2 + $0x232] sm:$0xff]
      %v4835 = vld [vmem:[#allocation2 + $0x23a] sm:$0xff]
      %v4836 = vld [vmem:[#allocation2 + $0x242] sm:$0xff]
      %v4837 = vld [vmem:[#allocation2 + $0x24a] sm:$0xff]
      %v4838 = vld [vmem:[#allocation2 + $0x252] sm:$0xff]
      %v4839 = vld [vmem:[#allocation2 + $0x25a] sm:$0xff]
      %v4840 = vld [vmem:[#allocation2 + $0x262] sm:$0xff]
      %v4841 = vld [vmem:[#allocation2 + $0x26a] sm:$0xff]
      %4914 = vrot.lane.b32.xlu0 %v4698, 32
      %v4915 = vpop.permute.xlu0 %4914
      %4916 = vrot.lane.b32.xlu0 %v4699, 32
      %v4917 = vpop.permute.xlu0 %4916
      %4918 = vrot.lane.b32.xlu0 %v4700, 32
      %v4919 = vpop.permute.xlu0 %4918
      %4920 = vrot.lane.b32.xlu0 %v4701, 32
      %v4921 = vpop.permute.xlu0 %4920
      %4922 = vrot.lane.b32.xlu0 %v4702, 32
      %v4923 = vpop.permute.xlu0 %4922
      %4924 = vrot.lane.b32.xlu0 %v4703, 32
      %v4925 = vpop.permute.xlu0 %4924
      %4926 = vrot.lane.b32.xlu0 %v4704, 32
      %v4927 = vpop.permute.xlu0 %4926
      %4928 = vrot.lane.b32.xlu0 %v4705, 32
      %v4929 = vpop.permute.xlu0 %4928
      %4930 = vrot.lane.b32.xlu0 %v4706, 32
      %v4931 = vpop.permute.xlu0 %4930
      %4932 = vrot.lane.b32.xlu0 %v4707, 32
      %v4933 = vpop.permute.xlu0 %4932
      %4934 = vrot.lane.b32.xlu0 %v4708, 32
      %v4935 = vpop.permute.xlu0 %4934
      %4936 = vrot.lane.b32.xlu0 %v4709, 32
      %v4937 = vpop.permute.xlu0 %4936
      %4938 = vrot.lane.b32.xlu0 %v4710, 32
      %v4939 = vpop.permute.xlu0 %4938
      %4940 = vrot.lane.b32.xlu0 %v4711, 32
      %v4941 = vpop.permute.xlu0 %4940
      %4942 = vrot.lane.b32.xlu0 %v4712, 32
      %v4943 = vpop.permute.xlu0 %4942
      %4944 = vrot.lane.b32.xlu0 %v4713, 32
      %v4945 = vpop.permute.xlu0 %4944
      %4946 = vrot.lane.b32.xlu0 %v4714, 32
      %v4947 = vpop.permute.xlu0 %4946
      %4948 = vrot.lane.b32.xlu0 %v4715, 32
      %v4949 = vpop.permute.xlu0 %4948
      %4950 = vrot.lane.b32.xlu0 %v4716, 32
      %v4951 = vpop.permute.xlu0 %4950
      %4952 = vrot.lane.b32.xlu0 %v4717, 32
      %v4953 = vpop.permute.xlu0 %4952
      %4954 = vrot.lane.b32.xlu0 %v4718, 32
      %v4955 = vpop.permute.xlu0 %4954
      %4956 = vrot.lane.b32.xlu0 %v4719, 32
      %v4957 = vpop.permute.xlu0 %4956
      %4958 = vrot.lane.b32.xlu0 %v4720, 32
      %v4959 = vpop.permute.xlu0 %4958
      %4960 = vrot.lane.b32.xlu0 %v4721, 32
      %v4961 = vpop.permute.xlu0 %4960
      %4962 = vrot.lane.b32.xlu0 %v4722, 32
      %v4963 = vpop.permute.xlu0 %4962
      %4964 = vrot.lane.b32.xlu0 %v4723, 32
      %v4965 = vpop.permute.xlu0 %4964
      %4966 = vrot.lane.b32.xlu0 %v4724, 32
      %v4967 = vpop.permute.xlu0 %4966
      %4968 = vrot.lane.b32.xlu0 %v4725, 32
      %v4969 = vpop.permute.xlu0 %4968
      %4970 = vrot.lane.b32.xlu0 %v4726, 32
      %v4971 = vpop.permute.xlu0 %4970
      %4972 = vrot.lane.b32.xlu0 %v4727, 32
      %v4973 = vpop.permute.xlu0 %4972
      %4974 = vrot.lane.b32.xlu0 %v4728, 32
      %v4975 = vpop.permute.xlu0 %4974
      %4976 = vrot.lane.b32.xlu0 %v4729, 32
      %v4977 = vpop.permute.xlu0 %4976
      %4978 = vrot.lane.b32.xlu0 %v4730, 32
      %v4979 = vpop.permute.xlu0 %4978
      %4980 = vrot.lane.b32.xlu0 %v4731, 32
      %v4981 = vpop.permute.xlu0 %4980
      %4982 = vrot.lane.b32.xlu0 %v4732, 32
      %v4983 = vpop.permute.xlu0 %4982
      %4984 = vrot.lane.b32.xlu0 %v4733, 32
      %v4985 = vpop.permute.xlu0 %4984
      %4986 = vrot.lane.b32.xlu0 %v4734, 32
      %v4987 = vpop.permute.xlu0 %4986
      %4988 = vrot.lane.b32.xlu0 %v4735, 32
      %v4989 = vpop.permute.xlu0 %4988
      %4990 = vrot.lane.b32.xlu0 %v4736, 32
      %v4991 = vpop.permute.xlu0 %4990
      %4992 = vrot.lane.b32.xlu0 %v4737, 32
      %v4993 = vpop.permute.xlu0 %4992
      %4994 = vrot.lane.b32.xlu0 %v4738, 32
      %v4995 = vpop.permute.xlu0 %4994
      %4996 = vrot.lane.b32.xlu0 %v4739, 32
      %v4997 = vpop.permute.xlu0 %4996
      %4998 = vrot.lane.b32.xlu0 %v4740, 32
      %v4999 = vpop.permute.xlu0 %4998
      %5000 = vrot.lane.b32.xlu0 %v4741, 32
      %v5001 = vpop.permute.xlu0 %5000
      %5002 = vrot.lane.b32.xlu0 %v4742, 32
      %v5003 = vpop.permute.xlu0 %5002
      %5004 = vrot.lane.b32.xlu0 %v4743, 32
      %v5005 = vpop.permute.xlu0 %5004
      %5006 = vrot.lane.b32.xlu0 %v4744, 32
      %v5007 = vpop.permute.xlu0 %5006
      %5008 = vrot.lane.b32.xlu0 %v4745, 32
      %v5009 = vpop.permute.xlu0 %5008
      %5010 = vrot.lane.b32.xlu0 %v4746, 32
      %v5011 = vpop.permute.xlu0 %5010
      %5012 = vrot.lane.b32.xlu0 %v4747, 32
      %v5013 = vpop.permute.xlu0 %5012
      %5014 = vrot.lane.b32.xlu0 %v4748, 32
      %v5015 = vpop.permute.xlu0 %5014
      %5016 = vrot.lane.b32.xlu0 %v4749, 32
      %v5017 = vpop.permute.xlu0 %5016
      %5018 = vrot.lane.b32.xlu0 %v4750, 32
      %v5019 = vpop.permute.xlu0 %5018
      %5020 = vrot.lane.b32.xlu0 %v4751, 32
      %v5021 = vpop.permute.xlu0 %5020
      %5022 = vrot.lane.b32.xlu0 %v4752, 32
      %v5023 = vpop.permute.xlu0 %5022
      %5024 = vrot.lane.b32.xlu0 %v4753, 32
      %v5025 = vpop.permute.xlu0 %5024
      %5026 = vrot.lane.b32.xlu0 %v4754, 32
      %v5027 = vpop.permute.xlu0 %5026
      %5028 = vrot.lane.b32.xlu0 %v4755, 32
      %v5029 = vpop.permute.xlu0 %5028
      %5030 = vrot.lane.b32.xlu0 %v4756, 32
      %v5031 = vpop.permute.xlu0 %5030
      %5032 = vrot.lane.b32.xlu0 %v4757, 32
      %v5033 = vpop.permute.xlu0 %5032
      %5034 = vrot.lane.b32.xlu0 %v4758, 32
      %v5035 = vpop.permute.xlu0 %5034
      %5036 = vrot.lane.b32.xlu0 %v4759, 32
      %v5037 = vpop.permute.xlu0 %5036
      %5038 = vrot.lane.b32.xlu0 %v4760, 32
      %v5039 = vpop.permute.xlu0 %5038
      %5040 = vrot.lane.b32.xlu0 %v4761, 32
      %v5041 = vpop.permute.xlu0 %5040
      %5042 = vrot.lane.b32.xlu0 %v4762, 32
      %v5043 = vpop.permute.xlu0 %5042
      %5044 = vrot.lane.b32.xlu0 %v4763, 32
      %v5045 = vpop.permute.xlu0 %5044
      %5046 = vrot.lane.b32.xlu0 %v4764, 32
      %v5047 = vpop.permute.xlu0 %5046
      %5048 = vrot.lane.b32.xlu0 %v4765, 32
      %v5049 = vpop.permute.xlu0 %5048
      %5050 = vrot.lane.b32.xlu0 %v4766, 32
      %v5051 = vpop.permute.xlu0 %5050
      %5052 = vrot.lane.b32.xlu0 %v4767, 32
      %v5053 = vpop.permute.xlu0 %5052
      %5054 = vrot.lane.b32.xlu0 %v4768, 32
      %v5055 = vpop.permute.xlu0 %5054
      %5056 = vrot.lane.b32.xlu0 %v4769, 32
      %v5057 = vpop.permute.xlu0 %5056
      %5202 = vrot.lane.b32.xlu0 %v4770, 64
      %v5203 = vpop.permute.xlu0 %5202
      %5204 = vrot.lane.b32.xlu0 %v4771, 64
      %v5205 = vpop.permute.xlu0 %5204
      %5206 = vrot.lane.b32.xlu0 %v4772, 64
      %v5207 = vpop.permute.xlu0 %5206
      %5208 = vrot.lane.b32.xlu0 %v4773, 64
      %v5209 = vpop.permute.xlu0 %5208
      %5210 = vrot.lane.b32.xlu0 %v4774, 64
      %v5211 = vpop.permute.xlu0 %5210
      %5212 = vrot.lane.b32.xlu0 %v4775, 64
      %v5213 = vpop.permute.xlu0 %5212
      %5214 = vrot.lane.b32.xlu0 %v4776, 64
      %v5215 = vpop.permute.xlu0 %5214
      %5216 = vrot.lane.b32.xlu0 %v4777, 64
      %v5217 = vpop.permute.xlu0 %5216
      %5218 = vrot.lane.b32.xlu0 %v4778, 64
      %v5219 = vpop.permute.xlu0 %5218
      %5220 = vrot.lane.b32.xlu0 %v4779, 64
      %v5221 = vpop.permute.xlu0 %5220
      %5222 = vrot.lane.b32.xlu0 %v4780, 64
      %v5223 = vpop.permute.xlu0 %5222
      %5224 = vrot.lane.b32.xlu0 %v4781, 64
      %v5225 = vpop.permute.xlu0 %5224
      %5226 = vrot.lane.b32.xlu0 %v4782, 64
      %v5227 = vpop.permute.xlu0 %5226
      %5228 = vrot.lane.b32.xlu0 %v4783, 64
      %v5229 = vpop.permute.xlu0 %5228
      %5230 = vrot.lane.b32.xlu0 %v4784, 64
      %v5231 = vpop.permute.xlu0 %5230
      %5232 = vrot.lane.b32.xlu0 %v4785, 64
      %v5233 = vpop.permute.xlu0 %5232
      %5234 = vrot.lane.b32.xlu0 %v4786, 64
      %v5235 = vpop.permute.xlu0 %5234
      %5236 = vrot.lane.b32.xlu0 %v4787, 64
      %v5237 = vpop.permute.xlu0 %5236
      %5238 = vrot.lane.b32.xlu0 %v4788, 64
      %v5239 = vpop.permute.xlu0 %5238
      %5240 = vrot.lane.b32.xlu0 %v4789, 64
      %v5241 = vpop.permute.xlu0 %5240
      %5242 = vrot.lane.b32.xlu0 %v4790, 64
      %v5243 = vpop.permute.xlu0 %5242
      %5244 = vrot.lane.b32.xlu0 %v4791, 64
      %v5245 = vpop.permute.xlu0 %5244
      %5246 = vrot.lane.b32.xlu0 %v4792, 64
      %v5247 = vpop.permute.xlu0 %5246
      %5248 = vrot.lane.b32.xlu0 %v4793, 64
      %v5249 = vpop.permute.xlu0 %5248
      %5250 = vrot.lane.b32.xlu0 %v4794, 64
      %v5251 = vpop.permute.xlu0 %5250
      %5252 = vrot.lane.b32.xlu0 %v4795, 64
      %v5253 = vpop.permute.xlu0 %5252
      %5254 = vrot.lane.b32.xlu0 %v4796, 64
      %v5255 = vpop.permute.xlu0 %5254
      %5256 = vrot.lane.b32.xlu0 %v4797, 64
      %v5257 = vpop.permute.xlu0 %5256
      %5258 = vrot.lane.b32.xlu0 %v4798, 64
      %v5259 = vpop.permute.xlu0 %5258
      %5260 = vrot.lane.b32.xlu0 %v4799, 64
      %v5261 = vpop.permute.xlu0 %5260
      %5262 = vrot.lane.b32.xlu0 %v4800, 64
      %v5263 = vpop.permute.xlu0 %5262
      %5264 = vrot.lane.b32.xlu0 %v4801, 64
      %v5265 = vpop.permute.xlu0 %5264
      %5266 = vrot.lane.b32.xlu0 %v4802, 64
      %v5267 = vpop.permute.xlu0 %5266
      %5268 = vrot.lane.b32.xlu0 %v4803, 64
      %v5269 = vpop.permute.xlu0 %5268
      %5270 = vrot.lane.b32.xlu0 %v4804, 64
      %v5271 = vpop.permute.xlu0 %5270
      %5272 = vrot.lane.b32.xlu0 %v4805, 64
      %v5273 = vpop.permute.xlu0 %5272
      %5274 = vrot.lane.b32.xlu0 %v4806, 64
      %v5275 = vpop.permute.xlu0 %5274
      %5276 = vrot.lane.b32.xlu0 %v4807, 64
      %v5277 = vpop.permute.xlu0 %5276
      %5278 = vrot.lane.b32.xlu0 %v4808, 64
      %v5279 = vpop.permute.xlu0 %5278
      %5280 = vrot.lane.b32.xlu0 %v4809, 64
      %v5281 = vpop.permute.xlu0 %5280
      %5282 = vrot.lane.b32.xlu0 %v4810, 64
      %v5283 = vpop.permute.xlu0 %5282
      %5284 = vrot.lane.b32.xlu0 %v4811, 64
      %v5285 = vpop.permute.xlu0 %5284
      %5286 = vrot.lane.b32.xlu0 %v4812, 64
      %v5287 = vpop.permute.xlu0 %5286
      %5288 = vrot.lane.b32.xlu0 %v4813, 64
      %v5289 = vpop.permute.xlu0 %5288
      %5290 = vrot.lane.b32.xlu0 %v4814, 64
      %v5291 = vpop.permute.xlu0 %5290
      %5292 = vrot.lane.b32.xlu0 %v4815, 64
      %v5293 = vpop.permute.xlu0 %5292
      %5294 = vrot.lane.b32.xlu0 %v4816, 64
      %v5295 = vpop.permute.xlu0 %5294
      %5296 = vrot.lane.b32.xlu0 %v4817, 64
      %v5297 = vpop.permute.xlu0 %5296
      %5298 = vrot.lane.b32.xlu0 %v4818, 64
      %v5299 = vpop.permute.xlu0 %5298
      %5300 = vrot.lane.b32.xlu0 %v4819, 64
      %v5301 = vpop.permute.xlu0 %5300
      %5302 = vrot.lane.b32.xlu0 %v4820, 64
      %v5303 = vpop.permute.xlu0 %5302
      %5304 = vrot.lane.b32.xlu0 %v4821, 64
      %v5305 = vpop.permute.xlu0 %5304
      %5306 = vrot.lane.b32.xlu0 %v4822, 64
      %v5307 = vpop.permute.xlu0 %5306
      %5308 = vrot.lane.b32.xlu0 %v4823, 64
      %v5309 = vpop.permute.xlu0 %5308
      %5310 = vrot.lane.b32.xlu0 %v4824, 64
      %v5311 = vpop.permute.xlu0 %5310
      %5312 = vrot.lane.b32.xlu0 %v4825, 64
      %v5313 = vpop.permute.xlu0 %5312
      %5314 = vrot.lane.b32.xlu0 %v4826, 64
      %v5315 = vpop.permute.xlu0 %5314
      %5316 = vrot.lane.b32.xlu0 %v4827, 64
      %v5317 = vpop.permute.xlu0 %5316
      %5318 = vrot.lane.b32.xlu0 %v4828, 64
      %v5319 = vpop.permute.xlu0 %5318
      %5320 = vrot.lane.b32.xlu0 %v4829, 64
      %v5321 = vpop.permute.xlu0 %5320
      %5322 = vrot.lane.b32.xlu0 %v4830, 64
      %v5323 = vpop.permute.xlu0 %5322
      %5324 = vrot.lane.b32.xlu0 %v4831, 64
      %v5325 = vpop.permute.xlu0 %5324
      %5326 = vrot.lane.b32.xlu0 %v4832, 64
      %v5327 = vpop.permute.xlu0 %5326
      %5328 = vrot.lane.b32.xlu0 %v4833, 64
      %v5329 = vpop.permute.xlu0 %5328
      %5330 = vrot.lane.b32.xlu0 %v4834, 64
      %v5331 = vpop.permute.xlu0 %5330
      %5332 = vrot.lane.b32.xlu0 %v4835, 64
      %v5333 = vpop.permute.xlu0 %5332
      %5334 = vrot.lane.b32.xlu0 %v4836, 64
      %v5335 = vpop.permute.xlu0 %5334
      %5336 = vrot.lane.b32.xlu0 %v4837, 64
      %v5337 = vpop.permute.xlu0 %5336
      %5338 = vrot.lane.b32.xlu0 %v4838, 64
      %v5339 = vpop.permute.xlu0 %5338
      %5340 = vrot.lane.b32.xlu0 %v4839, 64
      %v5341 = vpop.permute.xlu0 %5340
      %5342 = vrot.lane.b32.xlu0 %v4840, 64
      %v5343 = vpop.permute.xlu0 %5342
      %5344 = vrot.lane.b32.xlu0 %v4841, 64
      %v5345 = vpop.permute.xlu0 %5344
      %v5418 = vsel %vm440, %v4626, %v4915
      %v5419 = vsel %vm440, %v4627, %v4917
      %v5420 = vsel %vm440, %v4628, %v4919
      %v5421 = vsel %vm440, %v4629, %v4921
      %v5422 = vsel %vm440, %v4630, %v4923
      %v5423 = vsel %vm440, %v4631, %v4925
      %v5424 = vsel %vm440, %v4632, %v4927
      %v5425 = vsel %vm440, %v4633, %v4929
      %v5426 = vsel %vm440, %v4634, %v4931
      %v5427 = vsel %vm440, %v4635, %v4933
      %v5428 = vsel %vm440, %v4636, %v4935
      %v5429 = vsel %vm440, %v4637, %v4937
      %v5430 = vsel %vm440, %v4638, %v4939
      %v5431 = vsel %vm440, %v4639, %v4941
      %v5432 = vsel %vm440, %v4640, %v4943
      %v5433 = vsel %vm440, %v4641, %v4945
      %v5434 = vsel %vm440, %v4642, %v4947
      %v5435 = vsel %vm440, %v4643, %v4949
      %v5436 = vsel %vm440, %v4644, %v4951
      %v5437 = vsel %vm440, %v4645, %v4953
      %v5438 = vsel %vm440, %v4646, %v4955
      %v5439 = vsel %vm440, %v4647, %v4957
      %v5440 = vsel %vm440, %v4648, %v4959
      %v5441 = vsel %vm440, %v4649, %v4961
      %v5442 = vsel %vm440, %v4650, %v4963
      %v5443 = vsel %vm440, %v4651, %v4965
      %v5444 = vsel %vm440, %v4652, %v4967
      %v5445 = vsel %vm440, %v4653, %v4969
      %v5446 = vsel %vm440, %v4654, %v4971
      %v5447 = vsel %vm440, %v4655, %v4973
      %v5448 = vsel %vm440, %v4656, %v4975
      %v5449 = vsel %vm440, %v4657, %v4977
      %v5450 = vsel %vm440, %v4658, %v4979
      %v5451 = vsel %vm440, %v4659, %v4981
      %v5452 = vsel %vm440, %v4660, %v4983
      %v5453 = vsel %vm440, %v4661, %v4985
      %v5454 = vsel %vm440, %v4662, %v4987
      %v5455 = vsel %vm440, %v4663, %v4989
      %v5456 = vsel %vm440, %v4664, %v4991
      %v5457 = vsel %vm440, %v4665, %v4993
      %v5458 = vsel %vm440, %v4666, %v4995
      %v5459 = vsel %vm440, %v4667, %v4997
      %v5460 = vsel %vm440, %v4668, %v4999
      %v5461 = vsel %vm440, %v4669, %v5001
      %v5462 = vsel %vm440, %v4670, %v5003
      %v5463 = vsel %vm440, %v4671, %v5005
      %v5464 = vsel %vm440, %v4672, %v5007
      %v5465 = vsel %vm440, %v4673, %v5009
      %v5466 = vsel %vm440, %v4674, %v5011
      %v5467 = vsel %vm440, %v4675, %v5013
      %v5468 = vsel %vm440, %v4676, %v5015
      %v5469 = vsel %vm440, %v4677, %v5017
      %v5470 = vsel %vm440, %v4678, %v5019
      %v5471 = vsel %vm440, %v4679, %v5021
      %v5472 = vsel %vm440, %v4680, %v5023
      %v5473 = vsel %vm440, %v4681, %v5025
      %v5474 = vsel %vm440, %v4682, %v5027
      %v5475 = vsel %vm440, %v4683, %v5029
      %v5476 = vsel %vm440, %v4684, %v5031
      %v5477 = vsel %vm440, %v4685, %v5033
      %v5478 = vsel %vm440, %v4686, %v5035
      %v5479 = vsel %vm440, %v4687, %v5037
      %v5480 = vsel %vm440, %v4688, %v5039
      %v5481 = vsel %vm440, %v4689, %v5041
      %v5482 = vsel %vm440, %v4690, %v5043
      %v5483 = vsel %vm440, %v4691, %v5045
      %v5484 = vsel %vm440, %v4692, %v5047
      %v5485 = vsel %vm440, %v4693, %v5049
      %v5486 = vsel %vm440, %v4694, %v5051
      %v5487 = vsel %vm440, %v4695, %v5053
      %v5488 = vsel %vm440, %v4696, %v5055
      %v5489 = vsel %vm440, %v4697, %v5057
      %v5490 = vsel %vm449, %v5418, %v5203
      %v5491 = vsel %vm449, %v5419, %v5205
      %v5492 = vsel %vm449, %v5420, %v5207
      %v5493 = vsel %vm449, %v5421, %v5209
      %v5494 = vsel %vm449, %v5422, %v5211
      %v5495 = vsel %vm449, %v5423, %v5213
      %v5496 = vsel %vm449, %v5424, %v5215
      %v5497 = vsel %vm449, %v5425, %v5217
      %v5498 = vsel %vm449, %v5426, %v5219
      %v5499 = vsel %vm449, %v5427, %v5221
      %v5500 = vsel %vm449, %v5428, %v5223
      %v5501 = vsel %vm449, %v5429, %v5225
      %v5502 = vsel %vm449, %v5430, %v5227
      %v5503 = vsel %vm449, %v5431, %v5229
      %v5504 = vsel %vm449, %v5432, %v5231
      %v5505 = vsel %vm449, %v5433, %v5233
      %v5506 = vsel %vm449, %v5434, %v5235
      %v5507 = vsel %vm449, %v5435, %v5237
      %v5508 = vsel %vm449, %v5436, %v5239
      %v5509 = vsel %vm449, %v5437, %v5241
      %v5510 = vsel %vm449, %v5438, %v5243
      %v5511 = vsel %vm449, %v5439, %v5245
      %v5512 = vsel %vm449, %v5440, %v5247
      %v5513 = vsel %vm449, %v5441, %v5249
      %v5514 = vsel %vm449, %v5442, %v5251
      %v5515 = vsel %vm449, %v5443, %v5253
      %v5516 = vsel %vm449, %v5444, %v5255
      %v5517 = vsel %vm449, %v5445, %v5257
      %v5518 = vsel %vm449, %v5446, %v5259
      %v5519 = vsel %vm449, %v5447, %v5261
      %v5520 = vsel %vm449, %v5448, %v5263
      %v5521 = vsel %vm449, %v5449, %v5265
      %v5522 = vsel %vm449, %v5450, %v5267
      %v5523 = vsel %vm449, %v5451, %v5269
      %v5524 = vsel %vm449, %v5452, %v5271
      %v5525 = vsel %vm449, %v5453, %v5273
      %v5526 = vsel %vm449, %v5454, %v5275
      %v5527 = vsel %vm449, %v5455, %v5277
      %v5528 = vsel %vm449, %v5456, %v5279
      %v5529 = vsel %vm449, %v5457, %v5281
      %v5530 = vsel %vm449, %v5458, %v5283
      %v5531 = vsel %vm449, %v5459, %v5285
      %v5532 = vsel %vm449, %v5460, %v5287
      %v5533 = vsel %vm449, %v5461, %v5289
      %v5534 = vsel %vm449, %v5462, %v5291
      %v5535 = vsel %vm449, %v5463, %v5293
      %v5536 = vsel %vm449, %v5464, %v5295
      %v5537 = vsel %vm449, %v5465, %v5297
      %v5538 = vsel %vm449, %v5466, %v5299
      %v5539 = vsel %vm449, %v5467, %v5301
      %v5540 = vsel %vm449, %v5468, %v5303
      %v5541 = vsel %vm449, %v5469, %v5305
      %v5542 = vsel %vm449, %v5470, %v5307
      %v5543 = vsel %vm449, %v5471, %v5309
      %v5544 = vsel %vm449, %v5472, %v5311
      %v5545 = vsel %vm449, %v5473, %v5313
      %v5546 = vsel %vm449, %v5474, %v5315
      %v5547 = vsel %vm449, %v5475, %v5317
      %v5548 = vsel %vm449, %v5476, %v5319
      %v5549 = vsel %vm449, %v5477, %v5321
      %v5550 = vsel %vm449, %v5478, %v5323
      %v5551 = vsel %vm449, %v5479, %v5325
      %v5552 = vsel %vm449, %v5480, %v5327
      %v5553 = vsel %vm449, %v5481, %v5329
      %v5554 = vsel %vm449, %v5482, %v5331
      %v5555 = vsel %vm449, %v5483, %v5333
      %v5556 = vsel %vm449, %v5484, %v5335
      %v5557 = vsel %vm449, %v5485, %v5337
      %v5558 = vsel %vm449, %v5486, %v5339
      %v5559 = vsel %vm449, %v5487, %v5341
      %v5560 = vsel %vm449, %v5488, %v5343
      %v5561 = vsel %vm449, %v5489, %v5345
      %v5562 = vpack.c.bf16 %v5491, %v5490
      %v5563 = vpack.c.bf16 %v5493, %v5492
      %v5564 = vpack.c.bf16 %v5495, %v5494
      %v5565 = vpack.c.bf16 %v5497, %v5496
      %v5566 = vpack.c.bf16 %v5499, %v5498
      %v5567 = vpack.c.bf16 %v5501, %v5500
      %v5568 = vpack.c.bf16 %v5503, %v5502
      %v5569 = vpack.c.bf16 %v5505, %v5504
      %v5570 = vpack.c.bf16 %v5507, %v5506
      %v5571 = vpack.c.bf16 %v5509, %v5508
      %v5572 = vpack.c.bf16 %v5511, %v5510
      %v5573 = vpack.c.bf16 %v5513, %v5512
      %v5574 = vpack.c.bf16 %v5515, %v5514
      %v5575 = vpack.c.bf16 %v5517, %v5516
      %v5576 = vpack.c.bf16 %v5519, %v5518
      %v5577 = vpack.c.bf16 %v5521, %v5520
      %v5578 = vpack.c.bf16 %v5523, %v5522
      %v5579 = vpack.c.bf16 %v5525, %v5524
      %v5580 = vpack.c.bf16 %v5527, %v5526
      %v5581 = vpack.c.bf16 %v5529, %v5528
      %v5582 = vpack.c.bf16 %v5531, %v5530
      %v5583 = vpack.c.bf16 %v5533, %v5532
      %v5584 = vpack.c.bf16 %v5535, %v5534
      %v5585 = vpack.c.bf16 %v5537, %v5536
      %v5586 = vpack.c.bf16 %v5539, %v5538
      %v5587 = vpack.c.bf16 %v5541, %v5540
      %v5588 = vpack.c.bf16 %v5543, %v5542
      %v5589 = vpack.c.bf16 %v5545, %v5544
      %v5590 = vpack.c.bf16 %v5547, %v5546
      %v5591 = vpack.c.bf16 %v5549, %v5548
      %v5592 = vpack.c.bf16 %v5551, %v5550
      %v5593 = vpack.c.bf16 %v5553, %v5552
      %v5594 = vpack.c.bf16 %v5555, %v5554
      %v5595 = vpack.c.bf16 %v5557, %v5556
      %v5596 = vpack.c.bf16 %v5559, %v5558
      %v5597 = vpack.c.bf16 %v5561, %v5560
      %s5598 = scalar_lea.vmem %s3, 96
      %v5599 = vld [vmem:[%s5598] sm:$0xf]
      %v5600 = vld [vmem:[%s5598 + $0x4] sm:$0xf]
      %v5601 = vld [vmem:[%s5598 + $0x8] sm:$0xf]
      %v5602 = vld [vmem:[%s5598 + $0xc] sm:$0xf]
      %v5603 = vld [vmem:[%s5598 + $0x10] sm:$0xf]
      %v5604 = vld [vmem:[%s5598 + $0x14] sm:$0xf]
      %v5605 = vld [vmem:[%s5598 + $0x18] sm:$0xf]
      %v5606 = vld [vmem:[%s5598 + $0x1c] sm:$0xf]
      %v5607 = vld [vmem:[%s5598 + $0x20] sm:$0xf]
      %v5608 = vld [vmem:[%s5598 + $0x24] sm:$0xf]
      %v5609 = vld [vmem:[%s5598 + $0x28] sm:$0xf]
      %v5610 = vld [vmem:[%s5598 + $0x2c] sm:$0xf]
      %v5623 = vunpack.c.l.b16 %v5599
      %v5624 = vunpack.c.l.b16 %v5600
      %v5625 = vunpack.c.l.b16 %v5601
      %v5626 = vunpack.c.l.b16 %v5602
      %v5627 = vunpack.c.l.b16 %v5603
      %v5628 = vunpack.c.l.b16 %v5604
      %v5629 = vunpack.c.l.b16 %v5605
      %v5630 = vunpack.c.l.b16 %v5606
      %v5631 = vunpack.c.l.b16 %v5607
      %v5632 = vunpack.c.l.b16 %v5608
      %v5633 = vunpack.c.l.b16 %v5609
      %v5634 = vunpack.c.l.b16 %v5610
      %v5635 = vpack.c.b16 %v5624, %v5623
      %v5636 = vpack.c.b16 %v5626, %v5625
      %v5637 = vpack.c.b16 %v5628, %v5627
      %v5638 = vpack.c.b16 %v5630, %v5629
      %v5639 = vpack.c.b16 %v5632, %v5631
      %v5640 = vpack.c.b16 %v5634, %v5633
      %v5648 = vsel %vm3731, %v5562, 0
      %v5651 = vsel %vm3731, %v5563, 0
      %v5654 = vsel %vm3731, %v5564, 0
      %v5657 = vsel %vm3731, %v5565, 0
      %v5660 = vsel %vm3731, %v5566, 0
      %v5663 = vsel %vm3731, %v5567, 0
      %v5666 = vsel %vm3731, %v5568, 0
      %v5669 = vsel %vm3731, %v5569, 0
      %v5672 = vsel %vm3731, %v5570, 0
      %v5675 = vsel %vm3731, %v5571, 0
      %v5678 = vsel %vm3731, %v5572, 0
      %v5681 = vsel %vm3731, %v5573, 0
      %v5684 = vsel %vm3731, %v5574, 0
      %v5687 = vsel %vm3731, %v5575, 0
      %v5690 = vsel %vm3731, %v5576, 0
      %v5693 = vsel %vm3731, %v5577, 0
      %v5696 = vsel %vm3731, %v5578, 0
      %v5699 = vsel %vm3731, %v5579, 0
      %v5702 = vsel %vm3731, %v5580, 0
      %v5705 = vsel %vm3731, %v5581, 0
      %v5708 = vsel %vm3731, %v5582, 0
      %v5711 = vsel %vm3731, %v5583, 0
      %v5714 = vsel %vm3731, %v5584, 0
      %v5717 = vsel %vm3731, %v5585, 0
      %v5720 = vsel %vm3731, %v5586, 0
      %v5723 = vsel %vm3731, %v5587, 0
      %v5726 = vsel %vm3731, %v5588, 0
      %v5729 = vsel %vm3731, %v5589, 0
      %v5732 = vsel %vm3731, %v5590, 0
      %v5735 = vsel %vm3731, %v5591, 0
      %v5738 = vsel %vm3731, %v5592, 0
      %v5741 = vsel %vm3731, %v5593, 0
      %v5744 = vsel %vm3731, %v5594, 0
      %v5747 = vsel %vm3731, %v5595, 0
      %v5750 = vsel %vm3731, %v5596, 0
      %v5753 = vsel %vm3731, %v5597, 0
      %5755 = vmatprep.subr.bf16.mxu0 0
      %5756 = vmatpush1.bf16.msra.mxu0 0
      %5757 = vmatprep.subr.bf16.mxu0 0
      %5758 = vmatpush1.bf16.msra.mxu0 0
      %5759 = vmatprep.subr.bf16.mxu0 0
      %5760 = vmatpush1.bf16.msra.mxu0 %v5640
      %5761 = vmatprep.subr.bf16.mxu0 0
      %5762 = vmatpush1.bf16.msra.mxu0 %v5639
      %5763 = vmatprep.subr.bf16.mxu0 0
      %5764 = vmatpush1.bf16.msra.mxu0 %v5638
      %5765 = vmatprep.subr.bf16.mxu0 0
      %5766 = vmatpush1.bf16.msra.mxu0 %v5637
      %5767 = vmatprep.subr.bf16.mxu0 0
      %5768 = vmatpush1.bf16.msra.mxu0 %v5636
      %5769 = vmatprep.subr.bf16.mxu0 0
      %5770 = vmatpush1.bf16.msra.mxu0 %v5635
      %5771 = vmatprep.subr.bf16.mxu0 0
      %5772 = vmatpush2.bf16.msra.mxu0 0
      %5773 = vmatprep.subr.bf16.mxu0 0
      %5774 = vmatpush2.bf16.msra.mxu0 0
      %5775 = vmatprep.subr.bf16.mxu0 0
      %5776 = vmatpush2.bf16.msra.mxu0 0
      %5777 = vmatprep.subr.bf16.mxu0 0
      %5778 = vmatpush2.bf16.msra.mxu0 0
      %5779 = vmatprep.subr.bf16.mxu0 0
      %5780 = vmatpush2.bf16.msra.mxu0 0
      %5781 = vmatprep.subr.bf16.mxu0 0
      %5782 = vmatpush2.bf16.msra.mxu0 0
      %5783 = vmatprep.subr.bf16.mxu0 0
      %5784 = vmatpush2.bf16.msra.mxu0 0
      %5785 = vmatprep.subr.bf16.mxu0 0
      %5786 = vmatpush2.bf16.msra.mxu0 0
      %5787 = vmatprep.mubr.bf16.mxu0 0
      %5788 = vmatmul.mubr.bf16.gmra.mxu0 %v5648
      %v5789 = vpop.f32.mrf.mxu0
      %v5790 = vadd.f32 0.0, %v5789
      %v5791 = vpop.f32.mrf.mxu0
      %v5792 = vpop.f32.mrf.mxu0
      %v5793 = vadd.f32 0.0, %v5792
      %v5794 = vpop.f32.mrf.mxu0
      %5795 = vmatprep.mubr.bf16.mxu0 0
      %5796 = vmatmul.mubr.bf16.gmra.mxu0 %v5651
      %v5797 = vpop.f32.mrf.mxu0
      %v5798 = vadd.f32 0.0, %v5797
      %v5799 = vpop.f32.mrf.mxu0
      %v5800 = vpop.f32.mrf.mxu0
      %v5801 = vadd.f32 0.0, %v5800
      %v5802 = vpop.f32.mrf.mxu0
      %5803 = vmatprep.mubr.bf16.mxu0 0
      %5804 = vmatmul.mubr.bf16.gmra.mxu0 %v5654
      %v5805 = vpop.f32.mrf.mxu0
      %v5806 = vadd.f32 0.0, %v5805
      %v5807 = vpop.f32.mrf.mxu0
      %v5808 = vpop.f32.mrf.mxu0
      %v5809 = vadd.f32 0.0, %v5808
      %v5810 = vpop.f32.mrf.mxu0
      %5811 = vmatprep.mubr.bf16.mxu0 0
      %5812 = vmatmul.mubr.bf16.gmra.mxu0 %v5657
      %v5813 = vpop.f32.mrf.mxu0
      %v5814 = vadd.f32 0.0, %v5813
      %v5815 = vpop.f32.mrf.mxu0
      %v5816 = vpop.f32.mrf.mxu0
      %v5817 = vadd.f32 0.0, %v5816
      %v5818 = vpop.f32.mrf.mxu0
      %5819 = vmatprep.mubr.bf16.mxu0 0
      %5820 = vmatmul.mubr.bf16.gmra.mxu0 %v5660
      %v5821 = vpop.f32.mrf.mxu0
      %v5822 = vadd.f32 0.0, %v5821
      %v5823 = vpop.f32.mrf.mxu0
      %v5824 = vpop.f32.mrf.mxu0
      %v5825 = vadd.f32 0.0, %v5824
      %v5826 = vpop.f32.mrf.mxu0
      %5827 = vmatprep.mubr.bf16.mxu0 0
      %5828 = vmatmul.mubr.bf16.gmra.mxu0 %v5663
      %v5829 = vpop.f32.mrf.mxu0
      %v5830 = vadd.f32 0.0, %v5829
      %v5831 = vpop.f32.mrf.mxu0
      %v5832 = vpop.f32.mrf.mxu0
      %v5833 = vadd.f32 0.0, %v5832
      %v5834 = vpop.f32.mrf.mxu0
      %5835 = vmatprep.mubr.bf16.mxu0 0
      %5836 = vmatmul.mubr.bf16.gmra.mxu0 %v5666
      %v5837 = vpop.f32.mrf.mxu0
      %v5838 = vadd.f32 0.0, %v5837
      %v5839 = vpop.f32.mrf.mxu0
      %v5840 = vpop.f32.mrf.mxu0
      %v5841 = vadd.f32 0.0, %v5840
      %v5842 = vpop.f32.mrf.mxu0
      %5843 = vmatprep.mubr.bf16.mxu0 0
      %5844 = vmatmul.mubr.bf16.gmra.mxu0 %v5669
      %v5845 = vpop.f32.mrf.mxu0
      %v5846 = vadd.f32 0.0, %v5845
      %v5847 = vpop.f32.mrf.mxu0
      %v5848 = vpop.f32.mrf.mxu0
      %v5849 = vadd.f32 0.0, %v5848
      %v5850 = vpop.f32.mrf.mxu0
      %5851 = vmatprep.mubr.bf16.mxu0 0
      %5852 = vmatmul.mubr.bf16.gmra.mxu0 %v5672
      %v5853 = vpop.f32.mrf.mxu0
      %v5854 = vadd.f32 0.0, %v5853
      %v5855 = vpop.f32.mrf.mxu0
      %v5856 = vpop.f32.mrf.mxu0
      %v5857 = vadd.f32 0.0, %v5856
      %v5858 = vpop.f32.mrf.mxu0
      %5859 = vmatprep.mubr.bf16.mxu0 0
      %5860 = vmatmul.mubr.bf16.gmra.mxu0 %v5675
      %v5861 = vpop.f32.mrf.mxu0
      %v5862 = vadd.f32 0.0, %v5861
      %v5863 = vpop.f32.mrf.mxu0
      %v5864 = vpop.f32.mrf.mxu0
      %v5865 = vadd.f32 0.0, %v5864
      %v5866 = vpop.f32.mrf.mxu0
      %5867 = vmatprep.mubr.bf16.mxu0 0
      %5868 = vmatmul.mubr.bf16.gmra.mxu0 %v5678
      %v5869 = vpop.f32.mrf.mxu0
      %v5870 = vadd.f32 0.0, %v5869
      %v5871 = vpop.f32.mrf.mxu0
      %v5872 = vpop.f32.mrf.mxu0
      %v5873 = vadd.f32 0.0, %v5872
      %v5874 = vpop.f32.mrf.mxu0
      %5875 = vmatprep.mubr.bf16.mxu0 0
      %5876 = vmatmul.mubr.bf16.gmra.mxu0 %v5681
      %v5877 = vpop.f32.mrf.mxu0
      %v5878 = vadd.f32 0.0, %v5877
      %v5879 = vpop.f32.mrf.mxu0
      %v5880 = vpop.f32.mrf.mxu0
      %v5881 = vadd.f32 0.0, %v5880
      %v5882 = vpop.f32.mrf.mxu0
      %5883 = vmatprep.mubr.bf16.mxu0 0
      %5884 = vmatmul.mubr.bf16.gmra.mxu0 %v5684
      %v5885 = vpop.f32.mrf.mxu0
      %v5886 = vadd.f32 0.0, %v5885
      %v5887 = vpop.f32.mrf.mxu0
      %v5888 = vpop.f32.mrf.mxu0
      %v5889 = vadd.f32 0.0, %v5888
      %v5890 = vpop.f32.mrf.mxu0
      %5891 = vmatprep.mubr.bf16.mxu0 0
      %5892 = vmatmul.mubr.bf16.gmra.mxu0 %v5687
      %v5893 = vpop.f32.mrf.mxu0
      %v5894 = vadd.f32 0.0, %v5893
      %v5895 = vpop.f32.mrf.mxu0
      %v5896 = vpop.f32.mrf.mxu0
      %v5897 = vadd.f32 0.0, %v5896
      %v5898 = vpop.f32.mrf.mxu0
      %5899 = vmatprep.mubr.bf16.mxu0 0
      %5900 = vmatmul.mubr.bf16.gmra.mxu0 %v5690
      %v5901 = vpop.f32.mrf.mxu0
      %v5902 = vadd.f32 0.0, %v5901
      %v5903 = vpop.f32.mrf.mxu0
      %v5904 = vpop.f32.mrf.mxu0
      %v5905 = vadd.f32 0.0, %v5904
      %v5906 = vpop.f32.mrf.mxu0
      %5907 = vmatprep.mubr.bf16.mxu0 0
      %5908 = vmatmul.mubr.bf16.gmra.mxu0 %v5693
      %v5909 = vpop.f32.mrf.mxu0
      %v5910 = vadd.f32 0.0, %v5909
      %v5911 = vpop.f32.mrf.mxu0
      %v5912 = vpop.f32.mrf.mxu0
      %v5913 = vadd.f32 0.0, %v5912
      %v5914 = vpop.f32.mrf.mxu0
      %5915 = vmatprep.mubr.bf16.mxu0 0
      %5916 = vmatmul.mubr.bf16.gmra.mxu0 %v5696
      %v5917 = vpop.f32.mrf.mxu0
      %v5918 = vadd.f32 0.0, %v5917
      %v5919 = vpop.f32.mrf.mxu0
      %v5920 = vpop.f32.mrf.mxu0
      %v5921 = vadd.f32 0.0, %v5920
      %v5922 = vpop.f32.mrf.mxu0
      %5923 = vmatprep.mubr.bf16.mxu0 0
      %5924 = vmatmul.mubr.bf16.gmra.mxu0 %v5699
      %v5925 = vpop.f32.mrf.mxu0
      %v5926 = vadd.f32 0.0, %v5925
      %v5927 = vpop.f32.mrf.mxu0
      %v5928 = vpop.f32.mrf.mxu0
      %v5929 = vadd.f32 0.0, %v5928
      %v5930 = vpop.f32.mrf.mxu0
      %5931 = vmatprep.mubr.bf16.mxu0 0
      %5932 = vmatmul.mubr.bf16.gmra.mxu0 %v5702
      %v5933 = vpop.f32.mrf.mxu0
      %v5934 = vadd.f32 0.0, %v5933
      %v5935 = vpop.f32.mrf.mxu0
      %v5936 = vpop.f32.mrf.mxu0
      %v5937 = vadd.f32 0.0, %v5936
      %v5938 = vpop.f32.mrf.mxu0
      %5939 = vmatprep.mubr.bf16.mxu0 0
      %5940 = vmatmul.mubr.bf16.gmra.mxu0 %v5705
      %v5941 = vpop.f32.mrf.mxu0
      %v5942 = vadd.f32 0.0, %v5941
      %v5943 = vpop.f32.mrf.mxu0
      %v5944 = vpop.f32.mrf.mxu0
      %v5945 = vadd.f32 0.0, %v5944
      %v5946 = vpop.f32.mrf.mxu0
      %5947 = vmatprep.mubr.bf16.mxu0 0
      %5948 = vmatmul.mubr.bf16.gmra.mxu0 %v5708
      %v5949 = vpop.f32.mrf.mxu0
      %v5950 = vadd.f32 0.0, %v5949
      %v5951 = vpop.f32.mrf.mxu0
      %v5952 = vpop.f32.mrf.mxu0
      %v5953 = vadd.f32 0.0, %v5952
      %v5954 = vpop.f32.mrf.mxu0
      %5955 = vmatprep.mubr.bf16.mxu0 0
      %5956 = vmatmul.mubr.bf16.gmra.mxu0 %v5711
      %v5957 = vpop.f32.mrf.mxu0
      %v5958 = vadd.f32 0.0, %v5957
      %v5959 = vpop.f32.mrf.mxu0
      %v5960 = vpop.f32.mrf.mxu0
      %v5961 = vadd.f32 0.0, %v5960
      %v5962 = vpop.f32.mrf.mxu0
      %5963 = vmatprep.mubr.bf16.mxu0 0
      %5964 = vmatmul.mubr.bf16.gmra.mxu0 %v5714
      %v5965 = vpop.f32.mrf.mxu0
      %v5966 = vadd.f32 0.0, %v5965
      %v5967 = vpop.f32.mrf.mxu0
      %v5968 = vpop.f32.mrf.mxu0
      %v5969 = vadd.f32 0.0, %v5968
      %v5970 = vpop.f32.mrf.mxu0
      %5971 = vmatprep.mubr.bf16.mxu0 0
      %5972 = vmatmul.mubr.bf16.gmra.mxu0 %v5717
      %v5973 = vpop.f32.mrf.mxu0
      %v5974 = vadd.f32 0.0, %v5973
      %v5975 = vpop.f32.mrf.mxu0
      %v5976 = vpop.f32.mrf.mxu0
      %v5977 = vadd.f32 0.0, %v5976
      %v5978 = vpop.f32.mrf.mxu0
      %5979 = vmatprep.mubr.bf16.mxu0 0
      %5980 = vmatmul.mubr.bf16.gmra.mxu0 %v5720
      %v5981 = vpop.f32.mrf.mxu0
      %v5982 = vadd.f32 0.0, %v5981
      %v5983 = vpop.f32.mrf.mxu0
      %v5984 = vpop.f32.mrf.mxu0
      %v5985 = vadd.f32 0.0, %v5984
      %v5986 = vpop.f32.mrf.mxu0
      %5987 = vmatprep.mubr.bf16.mxu0 0
      %5988 = vmatmul.mubr.bf16.gmra.mxu0 %v5723
      %v5989 = vpop.f32.mrf.mxu0
      %v5990 = vadd.f32 0.0, %v5989
      %v5991 = vpop.f32.mrf.mxu0
      %v5992 = vpop.f32.mrf.mxu0
      %v5993 = vadd.f32 0.0, %v5992
      %v5994 = vpop.f32.mrf.mxu0
      %5995 = vmatprep.mubr.bf16.mxu0 0
      %5996 = vmatmul.mubr.bf16.gmra.mxu0 %v5726
      %v5997 = vpop.f32.mrf.mxu0
      %v5998 = vadd.f32 0.0, %v5997
      %v5999 = vpop.f32.mrf.mxu0
      %v6000 = vpop.f32.mrf.mxu0
      %v6001 = vadd.f32 0.0, %v6000
      %v6002 = vpop.f32.mrf.mxu0
      %6003 = vmatprep.mubr.bf16.mxu0 0
      %6004 = vmatmul.mubr.bf16.gmra.mxu0 %v5729
      %v6005 = vpop.f32.mrf.mxu0
      %v6006 = vadd.f32 0.0, %v6005
      %v6007 = vpop.f32.mrf.mxu0
      %v6008 = vpop.f32.mrf.mxu0
      %v6009 = vadd.f32 0.0, %v6008
      %v6010 = vpop.f32.mrf.mxu0
      %6011 = vmatprep.mubr.bf16.mxu0 0
      %6012 = vmatmul.mubr.bf16.gmra.mxu0 %v5732
      %v6013 = vpop.f32.mrf.mxu0
      %v6014 = vadd.f32 0.0, %v6013
      %v6015 = vpop.f32.mrf.mxu0
      %v6016 = vpop.f32.mrf.mxu0
      %v6017 = vadd.f32 0.0, %v6016
      %v6018 = vpop.f32.mrf.mxu0
      %6019 = vmatprep.mubr.bf16.mxu0 0
      %6020 = vmatmul.mubr.bf16.gmra.mxu0 %v5735
      %v6021 = vpop.f32.mrf.mxu0
      %v6022 = vadd.f32 0.0, %v6021
      %v6023 = vpop.f32.mrf.mxu0
      %v6024 = vpop.f32.mrf.mxu0
      %v6025 = vadd.f32 0.0, %v6024
      %v6026 = vpop.f32.mrf.mxu0
      %6027 = vmatprep.mubr.bf16.mxu0 0
      %6028 = vmatmul.mubr.bf16.gmra.mxu0 %v5738
      %v6029 = vpop.f32.mrf.mxu0
      %v6030 = vadd.f32 0.0, %v6029
      %v6031 = vpop.f32.mrf.mxu0
      %v6032 = vpop.f32.mrf.mxu0
      %v6033 = vadd.f32 0.0, %v6032
      %v6034 = vpop.f32.mrf.mxu0
      %6035 = vmatprep.mubr.bf16.mxu0 0
      %6036 = vmatmul.mubr.bf16.gmra.mxu0 %v5741
      %v6037 = vpop.f32.mrf.mxu0
      %v6038 = vadd.f32 0.0, %v6037
      %v6039 = vpop.f32.mrf.mxu0
      %v6040 = vpop.f32.mrf.mxu0
      %v6041 = vadd.f32 0.0, %v6040
      %v6042 = vpop.f32.mrf.mxu0
      %6043 = vmatprep.mubr.bf16.mxu0 0
      %6044 = vmatmul.mubr.bf16.gmra.mxu0 %v5744
      %v6045 = vpop.f32.mrf.mxu0
      %v6046 = vadd.f32 0.0, %v6045
      %v6047 = vpop.f32.mrf.mxu0
      %v6048 = vpop.f32.mrf.mxu0
      %v6049 = vadd.f32 0.0, %v6048
      %v6050 = vpop.f32.mrf.mxu0
      %6051 = vmatprep.mubr.bf16.mxu0 0
      %6052 = vmatmul.mubr.bf16.gmra.mxu0 %v5747
      %v6053 = vpop.f32.mrf.mxu0
      %v6054 = vadd.f32 0.0, %v6053
      %v6055 = vpop.f32.mrf.mxu0
      %v6056 = vpop.f32.mrf.mxu0
      %v6057 = vadd.f32 0.0, %v6056
      %v6058 = vpop.f32.mrf.mxu0
      %6059 = vmatprep.mubr.bf16.mxu0 0
      %6060 = vmatmul.mubr.bf16.gmra.mxu0 %v5750
      %v6061 = vpop.f32.mrf.mxu0
      %v6062 = vadd.f32 0.0, %v6061
      %v6063 = vpop.f32.mrf.mxu0
      %v6064 = vpop.f32.mrf.mxu0
      %v6065 = vadd.f32 0.0, %v6064
      %v6066 = vpop.f32.mrf.mxu0
      %6067 = vmatprep.mubr.bf16.mxu0 0
      %6068 = vmatmul.mubr.bf16.gmra.mxu0 %v5753
      %v6069 = vpop.f32.mrf.mxu0
      %v6070 = vadd.f32 0.0, %v6069
      %v6071 = vpop.f32.mrf.mxu0
      %v6072 = vpop.f32.mrf.mxu0
      %v6073 = vadd.f32 0.0, %v6072
      %v6074 = vpop.f32.mrf.mxu0
      %6075 = vdwg.mxu0
      %v6076 = vadd.f32 %v4340, %v5790
      %v6077 = vadd.f32 %v4343, %v5793
      %v6078 = vadd.f32 %v4348, %v5798
      %v6079 = vadd.f32 %v4351, %v5801
      %v6080 = vadd.f32 %v4356, %v5806
      %v6081 = vadd.f32 %v4359, %v5809
      %v6082 = vadd.f32 %v4364, %v5814
      %v6083 = vadd.f32 %v4367, %v5817
      %v6084 = vadd.f32 %v4372, %v5822
      %v6085 = vadd.f32 %v4375, %v5825
      %v6086 = vadd.f32 %v4380, %v5830
      %v6087 = vadd.f32 %v4383, %v5833
      %v6088 = vadd.f32 %v4388, %v5838
      %v6089 = vadd.f32 %v4391, %v5841
      %v6090 = vadd.f32 %v4396, %v5846
      %v6091 = vadd.f32 %v4399, %v5849
      %v6092 = vadd.f32 %v4404, %v5854
      %v6093 = vadd.f32 %v4407, %v5857
      %v6094 = vadd.f32 %v4412, %v5862
      %v6095 = vadd.f32 %v4415, %v5865
      %v6096 = vadd.f32 %v4420, %v5870
      %v6097 = vadd.f32 %v4423, %v5873
      %v6098 = vadd.f32 %v4428, %v5878
      %v6099 = vadd.f32 %v4431, %v5881
      %v6100 = vadd.f32 %v4436, %v5886
      %v6101 = vadd.f32 %v4439, %v5889
      %v6102 = vadd.f32 %v4444, %v5894
      %v6103 = vadd.f32 %v4447, %v5897
      %v6104 = vadd.f32 %v4452, %v5902
      %v6105 = vadd.f32 %v4455, %v5905
      %v6106 = vadd.f32 %v4460, %v5910
      %v6107 = vadd.f32 %v4463, %v5913
      %v6108 = vadd.f32 %v4468, %v5918
      %v6109 = vadd.f32 %v4471, %v5921
      %v6110 = vadd.f32 %v4476, %v5926
      %v6111 = vadd.f32 %v4479, %v5929
      %v6112 = vadd.f32 %v4484, %v5934
      %v6113 = vadd.f32 %v4487, %v5937
      %v6114 = vadd.f32 %v4492, %v5942
      %v6115 = vadd.f32 %v4495, %v5945
      %v6116 = vadd.f32 %v4500, %v5950
      %v6117 = vadd.f32 %v4503, %v5953
      %v6118 = vadd.f32 %v4508, %v5958
      %v6119 = vadd.f32 %v4511, %v5961
      %v6120 = vadd.f32 %v4516, %v5966
      %v6121 = vadd.f32 %v4519, %v5969
      %v6122 = vadd.f32 %v4524, %v5974
      %v6123 = vadd.f32 %v4527, %v5977
      %v6124 = vadd.f32 %v4532, %v5982
      %v6125 = vadd.f32 %v4535, %v5985
      %v6126 = vadd.f32 %v4540, %v5990
      %v6127 = vadd.f32 %v4543, %v5993
      %v6128 = vadd.f32 %v4548, %v5998
      %v6129 = vadd.f32 %v4551, %v6001
      %v6130 = vadd.f32 %v4556, %v6006
      %v6131 = vadd.f32 %v4559, %v6009
      %v6132 = vadd.f32 %v4564, %v6014
      %v6133 = vadd.f32 %v4567, %v6017
      %v6134 = vadd.f32 %v4572, %v6022
      %v6135 = vadd.f32 %v4575, %v6025
      %v6136 = vadd.f32 %v4580, %v6030
      %v6137 = vadd.f32 %v4583, %v6033
      %v6138 = vadd.f32 %v4588, %v6038
      %v6139 = vadd.f32 %v4591, %v6041
      %v6140 = vadd.f32 %v4596, %v6046
      %v6141 = vadd.f32 %v4599, %v6049
      %v6142 = vadd.f32 %v4604, %v6054
      %v6143 = vadd.f32 %v4607, %v6057
      %v6144 = vadd.f32 %v4612, %v6062
      %v6145 = vadd.f32 %v4615, %v6065
      %v6146 = vadd.f32 %v4620, %v6070
      %v6147 = vadd.f32 %v4623, %v6073
      %v6148 = vld [vmem:[%s4] sm:$0x1]
      %v6150 = vlaneseq
      %v6151 = vshrl.u32 %v6150, 7
      %v6152 = vsub.s32 0, %v6151
      %v6153 = vrot.slane %v6148, %v6152
      %v6155 = vadd.f32 %v6076, %v6153
      %v6156 = vadd.f32 %v6077, %v6153
      %v6157 = vadd.f32 %v6078, %v6153
      %v6158 = vadd.f32 %v6079, %v6153
      %v6159 = vadd.f32 %v6080, %v6153
      %v6160 = vadd.f32 %v6081, %v6153
      %v6161 = vadd.f32 %v6082, %v6153
      %v6162 = vadd.f32 %v6083, %v6153
      %v6163 = vadd.f32 %v6084, %v6153
      %v6164 = vadd.f32 %v6085, %v6153
      %v6165 = vadd.f32 %v6086, %v6153
      %v6166 = vadd.f32 %v6087, %v6153
      %v6167 = vadd.f32 %v6088, %v6153
      %v6168 = vadd.f32 %v6089, %v6153
      %v6169 = vadd.f32 %v6090, %v6153
      %v6170 = vadd.f32 %v6091, %v6153
      %v6171 = vadd.f32 %v6092, %v6153
      %v6172 = vadd.f32 %v6093, %v6153
      %v6173 = vadd.f32 %v6094, %v6153
      %v6174 = vadd.f32 %v6095, %v6153
      %v6175 = vadd.f32 %v6096, %v6153
      %v6176 = vadd.f32 %v6097, %v6153
      %v6177 = vadd.f32 %v6098, %v6153
      %v6178 = vadd.f32 %v6099, %v6153
      %v6179 = vadd.f32 %v6100, %v6153
      %v6180 = vadd.f32 %v6101, %v6153
      %v6181 = vadd.f32 %v6102, %v6153
      %v6182 = vadd.f32 %v6103, %v6153
      %v6183 = vadd.f32 %v6104, %v6153
      %v6184 = vadd.f32 %v6105, %v6153
      %v6185 = vadd.f32 %v6106, %v6153
      %v6186 = vadd.f32 %v6107, %v6153
      %v6187 = vadd.f32 %v6108, %v6153
      %v6188 = vadd.f32 %v6109, %v6153
      %v6189 = vadd.f32 %v6110, %v6153
      %v6190 = vadd.f32 %v6111, %v6153
      %v6191 = vadd.f32 %v6112, %v6153
      %v6192 = vadd.f32 %v6113, %v6153
      %v6193 = vadd.f32 %v6114, %v6153
      %v6194 = vadd.f32 %v6115, %v6153
      %v6195 = vadd.f32 %v6116, %v6153
      %v6196 = vadd.f32 %v6117, %v6153
      %v6197 = vadd.f32 %v6118, %v6153
      %v6198 = vadd.f32 %v6119, %v6153
      %v6199 = vadd.f32 %v6120, %v6153
      %v6200 = vadd.f32 %v6121, %v6153
      %v6201 = vadd.f32 %v6122, %v6153
      %v6202 = vadd.f32 %v6123, %v6153
      %v6203 = vadd.f32 %v6124, %v6153
      %v6204 = vadd.f32 %v6125, %v6153
      %v6205 = vadd.f32 %v6126, %v6153
      %v6206 = vadd.f32 %v6127, %v6153
      %v6207 = vadd.f32 %v6128, %v6153
      %v6208 = vadd.f32 %v6129, %v6153
      %v6209 = vadd.f32 %v6130, %v6153
      %v6210 = vadd.f32 %v6131, %v6153
      %v6211 = vadd.f32 %v6132, %v6153
      %v6212 = vadd.f32 %v6133, %v6153
      %v6213 = vadd.f32 %v6134, %v6153
      %v6214 = vadd.f32 %v6135, %v6153
      %v6215 = vadd.f32 %v6136, %v6153
      %v6216 = vadd.f32 %v6137, %v6153
      %v6217 = vadd.f32 %v6138, %v6153
      %v6218 = vadd.f32 %v6139, %v6153
      %v6219 = vadd.f32 %v6140, %v6153
      %v6220 = vadd.f32 %v6141, %v6153
      %v6221 = vadd.f32 %v6142, %v6153
      %v6222 = vadd.f32 %v6143, %v6153
      %v6223 = vadd.f32 %v6144, %v6153
      %v6224 = vadd.f32 %v6145, %v6153
      %v6225 = vadd.f32 %v6146, %v6153
      %v6226 = vadd.f32 %v6147, %v6153
      %v6227 = vmax.f32 %v6155, 0.0
      %v6228 = vmax.f32 %v6156, 0.0
      %v6229 = vmax.f32 %v6157, 0.0
      %v6230 = vmax.f32 %v6158, 0.0
      %v6231 = vmax.f32 %v6159, 0.0
      %v6232 = vmax.f32 %v6160, 0.0
      %v6233 = vmax.f32 %v6161, 0.0
      %v6234 = vmax.f32 %v6162, 0.0
      %v6235 = vmax.f32 %v6163, 0.0
      %v6236 = vmax.f32 %v6164, 0.0
      %v6237 = vmax.f32 %v6165, 0.0
      %v6238 = vmax.f32 %v6166, 0.0
      %v6239 = vmax.f32 %v6167, 0.0
      %v6240 = vmax.f32 %v6168, 0.0
      %v6241 = vmax.f32 %v6169, 0.0
      %v6242 = vmax.f32 %v6170, 0.0
      %v6243 = vmax.f32 %v6171, 0.0
      %v6244 = vmax.f32 %v6172, 0.0
      %v6245 = vmax.f32 %v6173, 0.0
      %v6246 = vmax.f32 %v6174, 0.0
      %v6247 = vmax.f32 %v6175, 0.0
      %v6248 = vmax.f32 %v6176, 0.0
      %v6249 = vmax.f32 %v6177, 0.0
      %v6250 = vmax.f32 %v6178, 0.0
      %v6251 = vmax.f32 %v6179, 0.0
      %v6252 = vmax.f32 %v6180, 0.0
      %v6253 = vmax.f32 %v6181, 0.0
      %v6254 = vmax.f32 %v6182, 0.0
      %v6255 = vmax.f32 %v6183, 0.0
      %v6256 = vmax.f32 %v6184, 0.0
      %v6257 = vmax.f32 %v6185, 0.0
      %v6258 = vmax.f32 %v6186, 0.0
      %v6259 = vmax.f32 %v6187, 0.0
      %v6260 = vmax.f32 %v6188, 0.0
      %v6261 = vmax.f32 %v6189, 0.0
      %v6262 = vmax.f32 %v6190, 0.0
      %v6263 = vmax.f32 %v6191, 0.0
      %v6264 = vmax.f32 %v6192, 0.0
      %v6265 = vmax.f32 %v6193, 0.0
      %v6266 = vmax.f32 %v6194, 0.0
      %v6267 = vmax.f32 %v6195, 0.0
      %v6268 = vmax.f32 %v6196, 0.0
      %v6269 = vmax.f32 %v6197, 0.0
      %v6270 = vmax.f32 %v6198, 0.0
      %v6271 = vmax.f32 %v6199, 0.0
      %v6272 = vmax.f32 %v6200, 0.0
      %v6273 = vmax.f32 %v6201, 0.0
      %v6274 = vmax.f32 %v6202, 0.0
      %v6275 = vmax.f32 %v6203, 0.0
      %v6276 = vmax.f32 %v6204, 0.0
      %v6277 = vmax.f32 %v6205, 0.0
      %v6278 = vmax.f32 %v6206, 0.0
      %v6279 = vmax.f32 %v6207, 0.0
      %v6280 = vmax.f32 %v6208, 0.0
      %v6281 = vmax.f32 %v6209, 0.0
      %v6282 = vmax.f32 %v6210, 0.0
      %v6283 = vmax.f32 %v6211, 0.0
      %v6284 = vmax.f32 %v6212, 0.0
      %v6285 = vmax.f32 %v6213, 0.0
      %v6286 = vmax.f32 %v6214, 0.0
      %v6287 = vmax.f32 %v6215, 0.0
      %v6288 = vmax.f32 %v6216, 0.0
      %v6289 = vmax.f32 %v6217, 0.0
      %v6290 = vmax.f32 %v6218, 0.0
      %v6291 = vmax.f32 %v6219, 0.0
      %v6292 = vmax.f32 %v6220, 0.0
      %v6293 = vmax.f32 %v6221, 0.0
      %v6294 = vmax.f32 %v6222, 0.0
      %v6295 = vmax.f32 %v6223, 0.0
      %v6296 = vmax.f32 %v6224, 0.0
      %v6297 = vmax.f32 %v6225, 0.0
      %v6298 = vmax.f32 %v6226, 0.0
      %6299 = vst.msk [vmem:[#allocation3] sm:$0xff] %vm449, %v6227
      %6300 = vst.msk [vmem:[#allocation3 + $0x8] sm:$0xff] %vm449, %v6228
      %6301 = vst.msk [vmem:[#allocation3 + $0x10] sm:$0xff] %vm449, %v6229
      %6302 = vst.msk [vmem:[#allocation3 + $0x18] sm:$0xff] %vm449, %v6230
      %6303 = vst.msk [vmem:[#allocation3 + $0x20] sm:$0xff] %vm449, %v6231
      %6304 = vst.msk [vmem:[#allocation3 + $0x28] sm:$0xff] %vm449, %v6232
      %6305 = vst.msk [vmem:[#allocation3 + $0x30] sm:$0xff] %vm449, %v6233
      %6306 = vst.msk [vmem:[#allocation3 + $0x38] sm:$0xff] %vm449, %v6234
      %6307 = vst.msk [vmem:[#allocation3 + $0x40] sm:$0xff] %vm449, %v6235
      %6308 = vst.msk [vmem:[#allocation3 + $0x48] sm:$0xff] %vm449, %v6236
      %6309 = vst.msk [vmem:[#allocation3 + $0x50] sm:$0xff] %vm449, %v6237
      %6310 = vst.msk [vmem:[#allocation3 + $0x58] sm:$0xff] %vm449, %v6238
      %6311 = vst.msk [vmem:[#allocation3 + $0x60] sm:$0xff] %vm449, %v6239
      %6312 = vst.msk [vmem:[#allocation3 + $0x68] sm:$0xff] %vm449, %v6240
      %6313 = vst.msk [vmem:[#allocation3 + $0x70] sm:$0xff] %vm449, %v6241
      %6314 = vst.msk [vmem:[#allocation3 + $0x78] sm:$0xff] %vm449, %v6242
      %6315 = vst.msk [vmem:[#allocation3 + $0x80] sm:$0xff] %vm449, %v6243
      %6316 = vst.msk [vmem:[#allocation3 + $0x88] sm:$0xff] %vm449, %v6244
      %6317 = vst.msk [vmem:[#allocation3 + $0x90] sm:$0xff] %vm449, %v6245
      %6318 = vst.msk [vmem:[#allocation3 + $0x98] sm:$0xff] %vm449, %v6246
      %6319 = vst.msk [vmem:[#allocation3 + $0xa0] sm:$0xff] %vm449, %v6247
      %6320 = vst.msk [vmem:[#allocation3 + $0xa8] sm:$0xff] %vm449, %v6248
      %6321 = vst.msk [vmem:[#allocation3 + $0xb0] sm:$0xff] %vm449, %v6249
      %6322 = vst.msk [vmem:[#allocation3 + $0xb8] sm:$0xff] %vm449, %v6250
      %6323 = vst.msk [vmem:[#allocation3 + $0xc0] sm:$0xff] %vm449, %v6251
      %6324 = vst.msk [vmem:[#allocation3 + $0xc8] sm:$0xff] %vm449, %v6252
      %6325 = vst.msk [vmem:[#allocation3 + $0xd0] sm:$0xff] %vm449, %v6253
      %6326 = vst.msk [vmem:[#allocation3 + $0xd8] sm:$0xff] %vm449, %v6254
      %6327 = vst.msk [vmem:[#allocation3 + $0xe0] sm:$0xff] %vm449, %v6255
      %6328 = vst.msk [vmem:[#allocation3 + $0xe8] sm:$0xff] %vm449, %v6256
      %6329 = vst.msk [vmem:[#allocation3 + $0xf0] sm:$0xff] %vm449, %v6257
      %6330 = vst.msk [vmem:[#allocation3 + $0xf8] sm:$0xff] %vm449, %v6258
      %6331 = vst.msk [vmem:[#allocation3 + $0x100] sm:$0xff] %vm449, %v6259
      %6332 = vst.msk [vmem:[#allocation3 + $0x108] sm:$0xff] %vm449, %v6260
      %6333 = vst.msk [vmem:[#allocation3 + $0x110] sm:$0xff] %vm449, %v6261
      %6334 = vst.msk [vmem:[#allocation3 + $0x118] sm:$0xff] %vm449, %v6262
      %6335 = vst.msk [vmem:[#allocation3 + $0x120] sm:$0xff] %vm449, %v6263
      %6336 = vst.msk [vmem:[#allocation3 + $0x128] sm:$0xff] %vm449, %v6264
      %6337 = vst.msk [vmem:[#allocation3 + $0x130] sm:$0xff] %vm449, %v6265
      %6338 = vst.msk [vmem:[#allocation3 + $0x138] sm:$0xff] %vm449, %v6266
      %6339 = vst.msk [vmem:[#allocation3 + $0x140] sm:$0xff] %vm449, %v6267
      %6340 = vst.msk [vmem:[#allocation3 + $0x148] sm:$0xff] %vm449, %v6268
      %6341 = vst.msk [vmem:[#allocation3 + $0x150] sm:$0xff] %vm449, %v6269
      %6342 = vst.msk [vmem:[#allocation3 + $0x158] sm:$0xff] %vm449, %v6270
      %6343 = vst.msk [vmem:[#allocation3 + $0x160] sm:$0xff] %vm449, %v6271
      %6344 = vst.msk [vmem:[#allocation3 + $0x168] sm:$0xff] %vm449, %v6272
      %6345 = vst.msk [vmem:[#allocation3 + $0x170] sm:$0xff] %vm449, %v6273
      %6346 = vst.msk [vmem:[#allocation3 + $0x178] sm:$0xff] %vm449, %v6274
      %6347 = vst.msk [vmem:[#allocation3 + $0x180] sm:$0xff] %vm449, %v6275
      %6348 = vst.msk [vmem:[#allocation3 + $0x188] sm:$0xff] %vm449, %v6276
      %6349 = vst.msk [vmem:[#allocation3 + $0x190] sm:$0xff] %vm449, %v6277
      %6350 = vst.msk [vmem:[#allocation3 + $0x198] sm:$0xff] %vm449, %v6278
      %6351 = vst.msk [vmem:[#allocation3 + $0x1a0] sm:$0xff] %vm449, %v6279
      %6352 = vst.msk [vmem:[#allocation3 + $0x1a8] sm:$0xff] %vm449, %v6280
      %6353 = vst.msk [vmem:[#allocation3 + $0x1b0] sm:$0xff] %vm449, %v6281
      %6354 = vst.msk [vmem:[#allocation3 + $0x1b8] sm:$0xff] %vm449, %v6282
      %6355 = vst.msk [vmem:[#allocation3 + $0x1c0] sm:$0xff] %vm449, %v6283
      %6356 = vst.msk [vmem:[#allocation3 + $0x1c8] sm:$0xff] %vm449, %v6284
      %6357 = vst.msk [vmem:[#allocation3 + $0x1d0] sm:$0xff] %vm449, %v6285
      %6358 = vst.msk [vmem:[#allocation3 + $0x1d8] sm:$0xff] %vm449, %v6286
      %6359 = vst.msk [vmem:[#allocation3 + $0x1e0] sm:$0xff] %vm449, %v6287
      %6360 = vst.msk [vmem:[#allocation3 + $0x1e8] sm:$0xff] %vm449, %v6288
      %6361 = vst.msk [vmem:[#allocation3 + $0x1f0] sm:$0xff] %vm449, %v6289
      %6362 = vst.msk [vmem:[#allocation3 + $0x1f8] sm:$0xff] %vm449, %v6290
      %6363 = vst.msk [vmem:[#allocation3 + $0x200] sm:$0xff] %vm449, %v6291
      %6364 = vst.msk [vmem:[#allocation3 + $0x208] sm:$0xff] %vm449, %v6292
      %6365 = vst.msk [vmem:[#allocation3 + $0x210] sm:$0xff] %vm449, %v6293
      %6366 = vst.msk [vmem:[#allocation3 + $0x218] sm:$0xff] %vm449, %v6294
      %6367 = vst.msk [vmem:[#allocation3 + $0x220] sm:$0xff] %vm449, %v6295
      %6368 = vst.msk [vmem:[#allocation3 + $0x228] sm:$0xff] %vm449, %v6296
      %6369 = vst.msk [vmem:[#allocation3 + $0x230] sm:$0xff] %vm449, %v6297
      %6370 = vst.msk [vmem:[#allocation3 + $0x238] sm:$0xff] %vm449, %v6298
      %v6371 = vld [vmem:[#allocation3] sm:$0xff]
      %v6372 = vld [vmem:[#allocation3 + $0x8] sm:$0xff]
      %v6373 = vld [vmem:[#allocation3 + $0x10] sm:$0xff]
      %v6374 = vld [vmem:[#allocation3 + $0x18] sm:$0xff]
      %v6375 = vld [vmem:[#allocation3 + $0x20] sm:$0xff]
      %v6376 = vld [vmem:[#allocation3 + $0x28] sm:$0xff]
      %v6377 = vld [vmem:[#allocation3 + $0x30] sm:$0xff]
      %v6378 = vld [vmem:[#allocation3 + $0x38] sm:$0xff]
      %v6379 = vld [vmem:[#allocation3 + $0x40] sm:$0xff]
      %v6380 = vld [vmem:[#allocation3 + $0x48] sm:$0xff]
      %v6381 = vld [vmem:[#allocation3 + $0x50] sm:$0xff]
      %v6382 = vld [vmem:[#allocation3 + $0x58] sm:$0xff]
      %v6383 = vld [vmem:[#allocation3 + $0x60] sm:$0xff]
      %v6384 = vld [vmem:[#allocation3 + $0x68] sm:$0xff]
      %v6385 = vld [vmem:[#allocation3 + $0x70] sm:$0xff]
      %v6386 = vld [vmem:[#allocation3 + $0x78] sm:$0xff]
      %v6387 = vld [vmem:[#allocation3 + $0x80] sm:$0xff]
      %v6388 = vld [vmem:[#allocation3 + $0x88] sm:$0xff]
      %v6389 = vld [vmem:[#allocation3 + $0x90] sm:$0xff]
      %v6390 = vld [vmem:[#allocation3 + $0x98] sm:$0xff]
      %v6391 = vld [vmem:[#allocation3 + $0xa0] sm:$0xff]
      %v6392 = vld [vmem:[#allocation3 + $0xa8] sm:$0xff]
      %v6393 = vld [vmem:[#allocation3 + $0xb0] sm:$0xff]
      %v6394 = vld [vmem:[#allocation3 + $0xb8] sm:$0xff]
      %v6395 = vld [vmem:[#allocation3 + $0xc0] sm:$0xff]
      %v6396 = vld [vmem:[#allocation3 + $0xc8] sm:$0xff]
      %v6397 = vld [vmem:[#allocation3 + $0xd0] sm:$0xff]
      %v6398 = vld [vmem:[#allocation3 + $0xd8] sm:$0xff]
      %v6399 = vld [vmem:[#allocation3 + $0xe0] sm:$0xff]
      %v6400 = vld [vmem:[#allocation3 + $0xe8] sm:$0xff]
      %v6401 = vld [vmem:[#allocation3 + $0xf0] sm:$0xff]
      %v6402 = vld [vmem:[#allocation3 + $0xf8] sm:$0xff]
      %v6403 = vld [vmem:[#allocation3 + $0x100] sm:$0xff]
      %v6404 = vld [vmem:[#allocation3 + $0x108] sm:$0xff]
      %v6405 = vld [vmem:[#allocation3 + $0x110] sm:$0xff]
      %v6406 = vld [vmem:[#allocation3 + $0x118] sm:$0xff]
      %v6407 = vld [vmem:[#allocation3 + $0x120] sm:$0xff]
      %v6408 = vld [vmem:[#allocation3 + $0x128] sm:$0xff]
      %v6409 = vld [vmem:[#allocation3 + $0x130] sm:$0xff]
      %v6410 = vld [vmem:[#allocation3 + $0x138] sm:$0xff]
      %v6411 = vld [vmem:[#allocation3 + $0x140] sm:$0xff]
      %v6412 = vld [vmem:[#allocation3 + $0x148] sm:$0xff]
      %v6413 = vld [vmem:[#allocation3 + $0x150] sm:$0xff]
      %v6414 = vld [vmem:[#allocation3 + $0x158] sm:$0xff]
      %v6415 = vld [vmem:[#allocation3 + $0x160] sm:$0xff]
      %v6416 = vld [vmem:[#allocation3 + $0x168] sm:$0xff]
      %v6417 = vld [vmem:[#allocation3 + $0x170] sm:$0xff]
      %v6418 = vld [vmem:[#allocation3 + $0x178] sm:$0xff]
      %v6419 = vld [vmem:[#allocation3 + $0x180] sm:$0xff]
      %v6420 = vld [vmem:[#allocation3 + $0x188] sm:$0xff]
      %v6421 = vld [vmem:[#allocation3 + $0x190] sm:$0xff]
      %v6422 = vld [vmem:[#allocation3 + $0x198] sm:$0xff]
      %v6423 = vld [vmem:[#allocation3 + $0x1a0] sm:$0xff]
      %v6424 = vld [vmem:[#allocation3 + $0x1a8] sm:$0xff]
      %v6425 = vld [vmem:[#allocation3 + $0x1b0] sm:$0xff]
      %v6426 = vld [vmem:[#allocation3 + $0x1b8] sm:$0xff]
      %v6427 = vld [vmem:[#allocation3 + $0x1c0] sm:$0xff]
      %v6428 = vld [vmem:[#allocation3 + $0x1c8] sm:$0xff]
      %v6429 = vld [vmem:[#allocation3 + $0x1d0] sm:$0xff]
      %v6430 = vld [vmem:[#allocation3 + $0x1d8] sm:$0xff]
      %v6431 = vld [vmem:[#allocation3 + $0x1e0] sm:$0xff]
      %v6432 = vld [vmem:[#allocation3 + $0x1e8] sm:$0xff]
      %v6433 = vld [vmem:[#allocation3 + $0x1f0] sm:$0xff]
      %v6434 = vld [vmem:[#allocation3 + $0x1f8] sm:$0xff]
      %v6435 = vld [vmem:[#allocation3 + $0x200] sm:$0xff]
      %v6436 = vld [vmem:[#allocation3 + $0x208] sm:$0xff]
      %v6437 = vld [vmem:[#allocation3 + $0x210] sm:$0xff]
      %v6438 = vld [vmem:[#allocation3 + $0x218] sm:$0xff]
      %v6439 = vld [vmem:[#allocation3 + $0x220] sm:$0xff]
      %v6440 = vld [vmem:[#allocation3 + $0x228] sm:$0xff]
      %v6441 = vld [vmem:[#allocation3 + $0x230] sm:$0xff]
      %v6442 = vld [vmem:[#allocation3 + $0x238] sm:$0xff]
      %v6443 = vld [vmem:[#allocation3 + $0x1] sm:$0xff]
      %v6444 = vld [vmem:[#allocation3 + $0x9] sm:$0xff]
      %v6445 = vld [vmem:[#allocation3 + $0x11] sm:$0xff]
      %v6446 = vld [vmem:[#allocation3 + $0x19] sm:$0xff]
      %v6447 = vld [vmem:[#allocation3 + $0x21] sm:$0xff]
      %v6448 = vld [vmem:[#allocation3 + $0x29] sm:$0xff]
      %v6449 = vld [vmem:[#allocation3 + $0x31] sm:$0xff]
      %v6450 = vld [vmem:[#allocation3 + $0x39] sm:$0xff]
      %v6451 = vld [vmem:[#allocation3 + $0x41] sm:$0xff]
      %v6452 = vld [vmem:[#allocation3 + $0x49] sm:$0xff]
      %v6453 = vld [vmem:[#allocation3 + $0x51] sm:$0xff]
      %v6454 = vld [vmem:[#allocation3 + $0x59] sm:$0xff]
      %v6455 = vld [vmem:[#allocation3 + $0x61] sm:$0xff]
      %v6456 = vld [vmem:[#allocation3 + $0x69] sm:$0xff]
      %v6457 = vld [vmem:[#allocation3 + $0x71] sm:$0xff]
      %v6458 = vld [vmem:[#allocation3 + $0x79] sm:$0xff]
      %v6459 = vld [vmem:[#allocation3 + $0x81] sm:$0xff]
      %v6460 = vld [vmem:[#allocation3 + $0x89] sm:$0xff]
      %v6461 = vld [vmem:[#allocation3 + $0x91] sm:$0xff]
      %v6462 = vld [vmem:[#allocation3 + $0x99] sm:$0xff]
      %v6463 = vld [vmem:[#allocation3 + $0xa1] sm:$0xff]
      %v6464 = vld [vmem:[#allocation3 + $0xa9] sm:$0xff]
      %v6465 = vld [vmem:[#allocation3 + $0xb1] sm:$0xff]
      %v6466 = vld [vmem:[#allocation3 + $0xb9] sm:$0xff]
      %v6467 = vld [vmem:[#allocation3 + $0xc1] sm:$0xff]
      %v6468 = vld [vmem:[#allocation3 + $0xc9] sm:$0xff]
      %v6469 = vld [vmem:[#allocation3 + $0xd1] sm:$0xff]
      %v6470 = vld [vmem:[#allocation3 + $0xd9] sm:$0xff]
      %v6471 = vld [vmem:[#allocation3 + $0xe1] sm:$0xff]
      %v6472 = vld [vmem:[#allocation3 + $0xe9] sm:$0xff]
      %v6473 = vld [vmem:[#allocation3 + $0xf1] sm:$0xff]
      %v6474 = vld [vmem:[#allocation3 + $0xf9] sm:$0xff]
      %v6475 = vld [vmem:[#allocation3 + $0x101] sm:$0xff]
      %v6476 = vld [vmem:[#allocation3 + $0x109] sm:$0xff]
      %v6477 = vld [vmem:[#allocation3 + $0x111] sm:$0xff]
      %v6478 = vld [vmem:[#allocation3 + $0x119] sm:$0xff]
      %v6479 = vld [vmem:[#allocation3 + $0x121] sm:$0xff]
      %v6480 = vld [vmem:[#allocation3 + $0x129] sm:$0xff]
      %v6481 = vld [vmem:[#allocation3 + $0x131] sm:$0xff]
      %v6482 = vld [vmem:[#allocation3 + $0x139] sm:$0xff]
      %v6483 = vld [vmem:[#allocation3 + $0x141] sm:$0xff]
      %v6484 = vld [vmem:[#allocation3 + $0x149] sm:$0xff]
      %v6485 = vld [vmem:[#allocation3 + $0x151] sm:$0xff]
      %v6486 = vld [vmem:[#allocation3 + $0x159] sm:$0xff]
      %v6487 = vld [vmem:[#allocation3 + $0x161] sm:$0xff]
      %v6488 = vld [vmem:[#allocation3 + $0x169] sm:$0xff]
      %v6489 = vld [vmem:[#allocation3 + $0x171] sm:$0xff]
      %v6490 = vld [vmem:[#allocation3 + $0x179] sm:$0xff]
      %v6491 = vld [vmem:[#allocation3 + $0x181] sm:$0xff]
      %v6492 = vld [vmem:[#allocation3 + $0x189] sm:$0xff]
      %v6493 = vld [vmem:[#allocation3 + $0x191] sm:$0xff]
      %v6494 = vld [vmem:[#allocation3 + $0x199] sm:$0xff]
      %v6495 = vld [vmem:[#allocation3 + $0x1a1] sm:$0xff]
      %v6496 = vld [vmem:[#allocation3 + $0x1a9] sm:$0xff]
      %v6497 = vld [vmem:[#allocation3 + $0x1b1] sm:$0xff]
      %v6498 = vld [vmem:[#allocation3 + $0x1b9] sm:$0xff]
      %v6499 = vld [vmem:[#allocation3 + $0x1c1] sm:$0xff]
      %v6500 = vld [vmem:[#allocation3 + $0x1c9] sm:$0xff]
      %v6501 = vld [vmem:[#allocation3 + $0x1d1] sm:$0xff]
      %v6502 = vld [vmem:[#allocation3 + $0x1d9] sm:$0xff]
      %v6503 = vld [vmem:[#allocation3 + $0x1e1] sm:$0xff]
      %v6504 = vld [vmem:[#allocation3 + $0x1e9] sm:$0xff]
      %v6505 = vld [vmem:[#allocation3 + $0x1f1] sm:$0xff]
      %v6506 = vld [vmem:[#allocation3 + $0x1f9] sm:$0xff]
      %v6507 = vld [vmem:[#allocation3 + $0x201] sm:$0xff]
      %v6508 = vld [vmem:[#allocation3 + $0x209] sm:$0xff]
      %v6509 = vld [vmem:[#allocation3 + $0x211] sm:$0xff]
      %v6510 = vld [vmem:[#allocation3 + $0x219] sm:$0xff]
      %v6511 = vld [vmem:[#allocation3 + $0x221] sm:$0xff]
      %v6512 = vld [vmem:[#allocation3 + $0x229] sm:$0xff]
      %v6513 = vld [vmem:[#allocation3 + $0x231] sm:$0xff]
      %v6514 = vld [vmem:[#allocation3 + $0x239] sm:$0xff]
      %v6515 = vld [vmem:[#allocation3 + $0x2] sm:$0xff]
      %v6516 = vld [vmem:[#allocation3 + $0xa] sm:$0xff]
      %v6517 = vld [vmem:[#allocation3 + $0x12] sm:$0xff]
      %v6518 = vld [vmem:[#allocation3 + $0x1a] sm:$0xff]
      %v6519 = vld [vmem:[#allocation3 + $0x22] sm:$0xff]
      %v6520 = vld [vmem:[#allocation3 + $0x2a] sm:$0xff]
      %v6521 = vld [vmem:[#allocation3 + $0x32] sm:$0xff]
      %v6522 = vld [vmem:[#allocation3 + $0x3a] sm:$0xff]
      %v6523 = vld [vmem:[#allocation3 + $0x42] sm:$0xff]
      %v6524 = vld [vmem:[#allocation3 + $0x4a] sm:$0xff]
      %v6525 = vld [vmem:[#allocation3 + $0x52] sm:$0xff]
      %v6526 = vld [vmem:[#allocation3 + $0x5a] sm:$0xff]
      %v6527 = vld [vmem:[#allocation3 + $0x62] sm:$0xff]
      %v6528 = vld [vmem:[#allocation3 + $0x6a] sm:$0xff]
      %v6529 = vld [vmem:[#allocation3 + $0x72] sm:$0xff]
      %v6530 = vld [vmem:[#allocation3 + $0x7a] sm:$0xff]
      %v6531 = vld [vmem:[#allocation3 + $0x82] sm:$0xff]
      %v6532 = vld [vmem:[#allocation3 + $0x8a] sm:$0xff]
      %v6533 = vld [vmem:[#allocation3 + $0x92] sm:$0xff]
      %v6534 = vld [vmem:[#allocation3 + $0x9a] sm:$0xff]
      %v6535 = vld [vmem:[#allocation3 + $0xa2] sm:$0xff]
      %v6536 = vld [vmem:[#allocation3 + $0xaa] sm:$0xff]
      %v6537 = vld [vmem:[#allocation3 + $0xb2] sm:$0xff]
      %v6538 = vld [vmem:[#allocation3 + $0xba] sm:$0xff]
      %v6539 = vld [vmem:[#allocation3 + $0xc2] sm:$0xff]
      %v6540 = vld [vmem:[#allocation3 + $0xca] sm:$0xff]
      %v6541 = vld [vmem:[#allocation3 + $0xd2] sm:$0xff]
      %v6542 = vld [vmem:[#allocation3 + $0xda] sm:$0xff]
      %v6543 = vld [vmem:[#allocation3 + $0xe2] sm:$0xff]
      %v6544 = vld [vmem:[#allocation3 + $0xea] sm:$0xff]
      %v6545 = vld [vmem:[#allocation3 + $0xf2] sm:$0xff]
      %v6546 = vld [vmem:[#allocation3 + $0xfa] sm:$0xff]
      %v6547 = vld [vmem:[#allocation3 + $0x102] sm:$0xff]
      %v6548 = vld [vmem:[#allocation3 + $0x10a] sm:$0xff]
      %v6549 = vld [vmem:[#allocation3 + $0x112] sm:$0xff]
      %v6550 = vld [vmem:[#allocation3 + $0x11a] sm:$0xff]
      %v6551 = vld [vmem:[#allocation3 + $0x122] sm:$0xff]
      %v6552 = vld [vmem:[#allocation3 + $0x12a] sm:$0xff]
      %v6553 = vld [vmem:[#allocation3 + $0x132] sm:$0xff]
      %v6554 = vld [vmem:[#allocation3 + $0x13a] sm:$0xff]
      %v6555 = vld [vmem:[#allocation3 + $0x142] sm:$0xff]
      %v6556 = vld [vmem:[#allocation3 + $0x14a] sm:$0xff]
      %v6557 = vld [vmem:[#allocation3 + $0x152] sm:$0xff]
      %v6558 = vld [vmem:[#allocation3 + $0x15a] sm:$0xff]
      %v6559 = vld [vmem:[#allocation3 + $0x162] sm:$0xff]
      %v6560 = vld [vmem:[#allocation3 + $0x16a] sm:$0xff]
      %v6561 = vld [vmem:[#allocation3 + $0x172] sm:$0xff]
      %v6562 = vld [vmem:[#allocation3 + $0x17a] sm:$0xff]
      %v6563 = vld [vmem:[#allocation3 + $0x182] sm:$0xff]
      %v6564 = vld [vmem:[#allocation3 + $0x18a] sm:$0xff]
      %v6565 = vld [vmem:[#allocation3 + $0x192] sm:$0xff]
      %v6566 = vld [vmem:[#allocation3 + $0x19a] sm:$0xff]
      %v6567 = vld [vmem:[#allocation3 + $0x1a2] sm:$0xff]
      %v6568 = vld [vmem:[#allocation3 + $0x1aa] sm:$0xff]
      %v6569 = vld [vmem:[#allocation3 + $0x1b2] sm:$0xff]
      %v6570 = vld [vmem:[#allocation3 + $0x1ba] sm:$0xff]
      %v6571 = vld [vmem:[#allocation3 + $0x1c2] sm:$0xff]
      %v6572 = vld [vmem:[#allocation3 + $0x1ca] sm:$0xff]
      %v6573 = vld [vmem:[#allocation3 + $0x1d2] sm:$0xff]
      %v6574 = vld [vmem:[#allocation3 + $0x1da] sm:$0xff]
      %v6575 = vld [vmem:[#allocation3 + $0x1e2] sm:$0xff]
      %v6576 = vld [vmem:[#allocation3 + $0x1ea] sm:$0xff]
      %v6577 = vld [vmem:[#allocation3 + $0x1f2] sm:$0xff]
      %v6578 = vld [vmem:[#allocation3 + $0x1fa] sm:$0xff]
      %v6579 = vld [vmem:[#allocation3 + $0x202] sm:$0xff]
      %v6580 = vld [vmem:[#allocation3 + $0x20a] sm:$0xff]
      %v6581 = vld [vmem:[#allocation3 + $0x212] sm:$0xff]
      %v6582 = vld [vmem:[#allocation3 + $0x21a] sm:$0xff]
      %v6583 = vld [vmem:[#allocation3 + $0x222] sm:$0xff]
      %v6584 = vld [vmem:[#allocation3 + $0x22a] sm:$0xff]
      %v6585 = vld [vmem:[#allocation3 + $0x232] sm:$0xff]
      %v6586 = vld [vmem:[#allocation3 + $0x23a] sm:$0xff]
      %6659 = vrot.lane.b32.xlu0 %v6443, 64
      %v6660 = vpop.permute.xlu0 %6659
      %6661 = vrot.lane.b32.xlu0 %v6444, 64
      %v6662 = vpop.permute.xlu0 %6661
      %6663 = vrot.lane.b32.xlu0 %v6445, 64
      %v6664 = vpop.permute.xlu0 %6663
      %6665 = vrot.lane.b32.xlu0 %v6446, 64
      %v6666 = vpop.permute.xlu0 %6665
      %6667 = vrot.lane.b32.xlu0 %v6447, 64
      %v6668 = vpop.permute.xlu0 %6667
      %6669 = vrot.lane.b32.xlu0 %v6448, 64
      %v6670 = vpop.permute.xlu0 %6669
      %6671 = vrot.lane.b32.xlu0 %v6449, 64
      %v6672 = vpop.permute.xlu0 %6671
      %6673 = vrot.lane.b32.xlu0 %v6450, 64
      %v6674 = vpop.permute.xlu0 %6673
      %6675 = vrot.lane.b32.xlu0 %v6451, 64
      %v6676 = vpop.permute.xlu0 %6675
      %6677 = vrot.lane.b32.xlu0 %v6452, 64
      %v6678 = vpop.permute.xlu0 %6677
      %6679 = vrot.lane.b32.xlu0 %v6453, 64
      %v6680 = vpop.permute.xlu0 %6679
      %6681 = vrot.lane.b32.xlu0 %v6454, 64
      %v6682 = vpop.permute.xlu0 %6681
      %6683 = vrot.lane.b32.xlu0 %v6455, 64
      %v6684 = vpop.permute.xlu0 %6683
      %6685 = vrot.lane.b32.xlu0 %v6456, 64
      %v6686 = vpop.permute.xlu0 %6685
      %6687 = vrot.lane.b32.xlu0 %v6457, 64
      %v6688 = vpop.permute.xlu0 %6687
      %6689 = vrot.lane.b32.xlu0 %v6458, 64
      %v6690 = vpop.permute.xlu0 %6689
      %6691 = vrot.lane.b32.xlu0 %v6459, 64
      %v6692 = vpop.permute.xlu0 %6691
      %6693 = vrot.lane.b32.xlu0 %v6460, 64
      %v6694 = vpop.permute.xlu0 %6693
      %6695 = vrot.lane.b32.xlu0 %v6461, 64
      %v6696 = vpop.permute.xlu0 %6695
      %6697 = vrot.lane.b32.xlu0 %v6462, 64
      %v6698 = vpop.permute.xlu0 %6697
      %6699 = vrot.lane.b32.xlu0 %v6463, 64
      %v6700 = vpop.permute.xlu0 %6699
      %6701 = vrot.lane.b32.xlu0 %v6464, 64
      %v6702 = vpop.permute.xlu0 %6701
      %6703 = vrot.lane.b32.xlu0 %v6465, 64
      %v6704 = vpop.permute.xlu0 %6703
      %6705 = vrot.lane.b32.xlu0 %v6466, 64
      %v6706 = vpop.permute.xlu0 %6705
      %6707 = vrot.lane.b32.xlu0 %v6467, 64
      %v6708 = vpop.permute.xlu0 %6707
      %6709 = vrot.lane.b32.xlu0 %v6468, 64
      %v6710 = vpop.permute.xlu0 %6709
      %6711 = vrot.lane.b32.xlu0 %v6469, 64
      %v6712 = vpop.permute.xlu0 %6711
      %6713 = vrot.lane.b32.xlu0 %v6470, 64
      %v6714 = vpop.permute.xlu0 %6713
      %6715 = vrot.lane.b32.xlu0 %v6471, 64
      %v6716 = vpop.permute.xlu0 %6715
      %6717 = vrot.lane.b32.xlu0 %v6472, 64
      %v6718 = vpop.permute.xlu0 %6717
      %6719 = vrot.lane.b32.xlu0 %v6473, 64
      %v6720 = vpop.permute.xlu0 %6719
      %6721 = vrot.lane.b32.xlu0 %v6474, 64
      %v6722 = vpop.permute.xlu0 %6721
      %6723 = vrot.lane.b32.xlu0 %v6475, 64
      %v6724 = vpop.permute.xlu0 %6723
      %6725 = vrot.lane.b32.xlu0 %v6476, 64
      %v6726 = vpop.permute.xlu0 %6725
      %6727 = vrot.lane.b32.xlu0 %v6477, 64
      %v6728 = vpop.permute.xlu0 %6727
      %6729 = vrot.lane.b32.xlu0 %v6478, 64
      %v6730 = vpop.permute.xlu0 %6729
      %6731 = vrot.lane.b32.xlu0 %v6479, 64
      %v6732 = vpop.permute.xlu0 %6731
      %6733 = vrot.lane.b32.xlu0 %v6480, 64
      %v6734 = vpop.permute.xlu0 %6733
      %6735 = vrot.lane.b32.xlu0 %v6481, 64
      %v6736 = vpop.permute.xlu0 %6735
      %6737 = vrot.lane.b32.xlu0 %v6482, 64
      %v6738 = vpop.permute.xlu0 %6737
      %6739 = vrot.lane.b32.xlu0 %v6483, 64
      %v6740 = vpop.permute.xlu0 %6739
      %6741 = vrot.lane.b32.xlu0 %v6484, 64
      %v6742 = vpop.permute.xlu0 %6741
      %6743 = vrot.lane.b32.xlu0 %v6485, 64
      %v6744 = vpop.permute.xlu0 %6743
      %6745 = vrot.lane.b32.xlu0 %v6486, 64
      %v6746 = vpop.permute.xlu0 %6745
      %6747 = vrot.lane.b32.xlu0 %v6487, 64
      %v6748 = vpop.permute.xlu0 %6747
      %6749 = vrot.lane.b32.xlu0 %v6488, 64
      %v6750 = vpop.permute.xlu0 %6749
      %6751 = vrot.lane.b32.xlu0 %v6489, 64
      %v6752 = vpop.permute.xlu0 %6751
      %6753 = vrot.lane.b32.xlu0 %v6490, 64
      %v6754 = vpop.permute.xlu0 %6753
      %6755 = vrot.lane.b32.xlu0 %v6491, 64
      %v6756 = vpop.permute.xlu0 %6755
      %6757 = vrot.lane.b32.xlu0 %v6492, 64
      %v6758 = vpop.permute.xlu0 %6757
      %6759 = vrot.lane.b32.xlu0 %v6493, 64
      %v6760 = vpop.permute.xlu0 %6759
      %6761 = vrot.lane.b32.xlu0 %v6494, 64
      %v6762 = vpop.permute.xlu0 %6761
      %6763 = vrot.lane.b32.xlu0 %v6495, 64
      %v6764 = vpop.permute.xlu0 %6763
      %6765 = vrot.lane.b32.xlu0 %v6496, 64
      %v6766 = vpop.permute.xlu0 %6765
      %6767 = vrot.lane.b32.xlu0 %v6497, 64
      %v6768 = vpop.permute.xlu0 %6767
      %6769 = vrot.lane.b32.xlu0 %v6498, 64
      %v6770 = vpop.permute.xlu0 %6769
      %6771 = vrot.lane.b32.xlu0 %v6499, 64
      %v6772 = vpop.permute.xlu0 %6771
      %6773 = vrot.lane.b32.xlu0 %v6500, 64
      %v6774 = vpop.permute.xlu0 %6773
      %6775 = vrot.lane.b32.xlu0 %v6501, 64
      %v6776 = vpop.permute.xlu0 %6775
      %6777 = vrot.lane.b32.xlu0 %v6502, 64
      %v6778 = vpop.permute.xlu0 %6777
      %6779 = vrot.lane.b32.xlu0 %v6503, 64
      %v6780 = vpop.permute.xlu0 %6779
      %6781 = vrot.lane.b32.xlu0 %v6504, 64
      %v6782 = vpop.permute.xlu0 %6781
      %6783 = vrot.lane.b32.xlu0 %v6505, 64
      %v6784 = vpop.permute.xlu0 %6783
      %6785 = vrot.lane.b32.xlu0 %v6506, 64
      %v6786 = vpop.permute.xlu0 %6785
      %6787 = vrot.lane.b32.xlu0 %v6507, 64
      %v6788 = vpop.permute.xlu0 %6787
      %6789 = vrot.lane.b32.xlu0 %v6508, 64
      %v6790 = vpop.permute.xlu0 %6789
      %6791 = vrot.lane.b32.xlu0 %v6509, 64
      %v6792 = vpop.permute.xlu0 %6791
      %6793 = vrot.lane.b32.xlu0 %v6510, 64
      %v6794 = vpop.permute.xlu0 %6793
      %6795 = vrot.lane.b32.xlu0 %v6511, 64
      %v6796 = vpop.permute.xlu0 %6795
      %6797 = vrot.lane.b32.xlu0 %v6512, 64
      %v6798 = vpop.permute.xlu0 %6797
      %6799 = vrot.lane.b32.xlu0 %v6513, 64
      %v6800 = vpop.permute.xlu0 %6799
      %6801 = vrot.lane.b32.xlu0 %v6514, 64
      %v6802 = vpop.permute.xlu0 %6801
      %v6875 = vsel %vm449, %v6371, %v6660
      %v6876 = vsel %vm449, %v6372, %v6662
      %v6877 = vsel %vm449, %v6373, %v6664
      %v6878 = vsel %vm449, %v6374, %v6666
      %v6879 = vsel %vm449, %v6375, %v6668
      %v6880 = vsel %vm449, %v6376, %v6670
      %v6881 = vsel %vm449, %v6377, %v6672
      %v6882 = vsel %vm449, %v6378, %v6674
      %v6883 = vsel %vm449, %v6379, %v6676
      %v6884 = vsel %vm449, %v6380, %v6678
      %v6885 = vsel %vm449, %v6381, %v6680
      %v6886 = vsel %vm449, %v6382, %v6682
      %v6887 = vsel %vm449, %v6383, %v6684
      %v6888 = vsel %vm449, %v6384, %v6686
      %v6889 = vsel %vm449, %v6385, %v6688
      %v6890 = vsel %vm449, %v6386, %v6690
      %v6891 = vsel %vm449, %v6387, %v6692
      %v6892 = vsel %vm449, %v6388, %v6694
      %v6893 = vsel %vm449, %v6389, %v6696
      %v6894 = vsel %vm449, %v6390, %v6698
      %v6895 = vsel %vm449, %v6391, %v6700
      %v6896 = vsel %vm449, %v6392, %v6702
      %v6897 = vsel %vm449, %v6393, %v6704
      %v6898 = vsel %vm449, %v6394, %v6706
      %v6899 = vsel %vm449, %v6395, %v6708
      %v6900 = vsel %vm449, %v6396, %v6710
      %v6901 = vsel %vm449, %v6397, %v6712
      %v6902 = vsel %vm449, %v6398, %v6714
      %v6903 = vsel %vm449, %v6399, %v6716
      %v6904 = vsel %vm449, %v6400, %v6718
      %v6905 = vsel %vm449, %v6401, %v6720
      %v6906 = vsel %vm449, %v6402, %v6722
      %v6907 = vsel %vm449, %v6403, %v6724
      %v6908 = vsel %vm449, %v6404, %v6726
      %v6909 = vsel %vm449, %v6405, %v6728
      %v6910 = vsel %vm449, %v6406, %v6730
      %v6911 = vsel %vm449, %v6407, %v6732
      %v6912 = vsel %vm449, %v6408, %v6734
      %v6913 = vsel %vm449, %v6409, %v6736
      %v6914 = vsel %vm449, %v6410, %v6738
      %v6915 = vsel %vm449, %v6411, %v6740
      %v6916 = vsel %vm449, %v6412, %v6742
      %v6917 = vsel %vm449, %v6413, %v6744
      %v6918 = vsel %vm449, %v6414, %v6746
      %v6919 = vsel %vm449, %v6415, %v6748
      %v6920 = vsel %vm449, %v6416, %v6750
      %v6921 = vsel %vm449, %v6417, %v6752
      %v6922 = vsel %vm449, %v6418, %v6754
      %v6923 = vsel %vm449, %v6419, %v6756
      %v6924 = vsel %vm449, %v6420, %v6758
      %v6925 = vsel %vm449, %v6421, %v6760
      %v6926 = vsel %vm449, %v6422, %v6762
      %v6927 = vsel %vm449, %v6423, %v6764
      %v6928 = vsel %vm449, %v6424, %v6766
      %v6929 = vsel %vm449, %v6425, %v6768
      %v6930 = vsel %vm449, %v6426, %v6770
      %v6931 = vsel %vm449, %v6427, %v6772
      %v6932 = vsel %vm449, %v6428, %v6774
      %v6933 = vsel %vm449, %v6429, %v6776
      %v6934 = vsel %vm449, %v6430, %v6778
      %v6935 = vsel %vm449, %v6431, %v6780
      %v6936 = vsel %vm449, %v6432, %v6782
      %v6937 = vsel %vm449, %v6433, %v6784
      %v6938 = vsel %vm449, %v6434, %v6786
      %v6939 = vsel %vm449, %v6435, %v6788
      %v6940 = vsel %vm449, %v6436, %v6790
      %v6941 = vsel %vm449, %v6437, %v6792
      %v6942 = vsel %vm449, %v6438, %v6794
      %v6943 = vsel %vm449, %v6439, %v6796
      %v6944 = vsel %vm449, %v6440, %v6798
      %v6945 = vsel %vm449, %v6441, %v6800
      %v6946 = vsel %vm449, %v6442, %v6802
      %v6947 = vpack.c.bf16 %v6876, %v6875
      %v6948 = vpack.c.bf16 %v6516, %v6515
      %v6949 = vpack.c.bf16 %v6878, %v6877
      %v6950 = vpack.c.bf16 %v6518, %v6517
      %v6951 = vpack.c.bf16 %v6880, %v6879
      %v6952 = vpack.c.bf16 %v6520, %v6519
      %v6953 = vpack.c.bf16 %v6882, %v6881
      %v6954 = vpack.c.bf16 %v6522, %v6521
      %v6955 = vpack.c.bf16 %v6884, %v6883
      %v6956 = vpack.c.bf16 %v6524, %v6523
      %v6957 = vpack.c.bf16 %v6886, %v6885
      %v6958 = vpack.c.bf16 %v6526, %v6525
      %v6959 = vpack.c.bf16 %v6888, %v6887
      %v6960 = vpack.c.bf16 %v6528, %v6527
      %v6961 = vpack.c.bf16 %v6890, %v6889
      %v6962 = vpack.c.bf16 %v6530, %v6529
      %v6963 = vpack.c.bf16 %v6892, %v6891
      %v6964 = vpack.c.bf16 %v6532, %v6531
      %v6965 = vpack.c.bf16 %v6894, %v6893
      %v6966 = vpack.c.bf16 %v6534, %v6533
      %v6967 = vpack.c.bf16 %v6896, %v6895
      %v6968 = vpack.c.bf16 %v6536, %v6535
      %v6969 = vpack.c.bf16 %v6898, %v6897
      %v6970 = vpack.c.bf16 %v6538, %v6537
      %v6971 = vpack.c.bf16 %v6900, %v6899
      %v6972 = vpack.c.bf16 %v6540, %v6539
      %v6973 = vpack.c.bf16 %v6902, %v6901
      %v6974 = vpack.c.bf16 %v6542, %v6541
      %v6975 = vpack.c.bf16 %v6904, %v6903
      %v6976 = vpack.c.bf16 %v6544, %v6543
      %v6977 = vpack.c.bf16 %v6906, %v6905
      %v6978 = vpack.c.bf16 %v6546, %v6545
      %v6979 = vpack.c.bf16 %v6908, %v6907
      %v6980 = vpack.c.bf16 %v6548, %v6547
      %v6981 = vpack.c.bf16 %v6910, %v6909
      %v6982 = vpack.c.bf16 %v6550, %v6549
      %v6983 = vpack.c.bf16 %v6912, %v6911
      %v6984 = vpack.c.bf16 %v6552, %v6551
      %v6985 = vpack.c.bf16 %v6914, %v6913
      %v6986 = vpack.c.bf16 %v6554, %v6553
      %v6987 = vpack.c.bf16 %v6916, %v6915
      %v6988 = vpack.c.bf16 %v6556, %v6555
      %v6989 = vpack.c.bf16 %v6918, %v6917
      %v6990 = vpack.c.bf16 %v6558, %v6557
      %v6991 = vpack.c.bf16 %v6920, %v6919
      %v6992 = vpack.c.bf16 %v6560, %v6559
      %v6993 = vpack.c.bf16 %v6922, %v6921
      %v6994 = vpack.c.bf16 %v6562, %v6561
      %v6995 = vpack.c.bf16 %v6924, %v6923
      %v6996 = vpack.c.bf16 %v6564, %v6563
      %v6997 = vpack.c.bf16 %v6926, %v6925
      %v6998 = vpack.c.bf16 %v6566, %v6565
      %v6999 = vpack.c.bf16 %v6928, %v6927
      %v7000 = vpack.c.bf16 %v6568, %v6567
      %v7001 = vpack.c.bf16 %v6930, %v6929
      %v7002 = vpack.c.bf16 %v6570, %v6569
      %v7003 = vpack.c.bf16 %v6932, %v6931
      %v7004 = vpack.c.bf16 %v6572, %v6571
      %v7005 = vpack.c.bf16 %v6934, %v6933
      %v7006 = vpack.c.bf16 %v6574, %v6573
      %v7007 = vpack.c.bf16 %v6936, %v6935
      %v7008 = vpack.c.bf16 %v6576, %v6575
      %v7009 = vpack.c.bf16 %v6938, %v6937
      %v7010 = vpack.c.bf16 %v6578, %v6577
      %v7011 = vpack.c.bf16 %v6940, %v6939
      %v7012 = vpack.c.bf16 %v6580, %v6579
      %v7013 = vpack.c.bf16 %v6942, %v6941
      %v7014 = vpack.c.bf16 %v6582, %v6581
      %v7015 = vpack.c.bf16 %v6944, %v6943
      %v7016 = vpack.c.bf16 %v6584, %v6583
      %v7017 = vpack.c.bf16 %v6946, %v6945
      %v7018 = vpack.c.bf16 %v6586, %v6585
      %v7019 = vld [vmem:[%s5] sm:$0xf]
      %v7020 = vld [vmem:[%s5 + $0x4] sm:$0xf]
      %v7021 = vld [vmem:[%s5 + $0x8] sm:$0xf]
      %v7022 = vld [vmem:[%s5 + $0xc] sm:$0xf]
      %v7023 = vld [vmem:[%s5 + $0x10] sm:$0xf]
      %v7024 = vld [vmem:[%s5 + $0x14] sm:$0xf]
      %v7025 = vld [vmem:[%s5 + $0x18] sm:$0xf]
      %v7026 = vld [vmem:[%s5 + $0x1c] sm:$0xf]
      %v7027 = vld [vmem:[%s5 + $0x20] sm:$0xf]
      %v7028 = vld [vmem:[%s5 + $0x24] sm:$0xf]
      %v7029 = vld [vmem:[%s5 + $0x28] sm:$0xf]
      %v7030 = vld [vmem:[%s5 + $0x2c] sm:$0xf]
      %v7031 = vld [vmem:[%s5 + $0x30] sm:$0xf]
      %v7032 = vld [vmem:[%s5 + $0x34] sm:$0xf]
      %v7033 = vld [vmem:[%s5 + $0x38] sm:$0xf]
      %v7034 = vld [vmem:[%s5 + $0x3c] sm:$0xf]
      %v7035 = vld [vmem:[%s5 + $0x40] sm:$0xf]
      %v7036 = vld [vmem:[%s5 + $0x44] sm:$0xf]
      %v7037 = vld [vmem:[%s5 + $0x48] sm:$0xf]
      %v7038 = vld [vmem:[%s5 + $0x4c] sm:$0xf]
      %v7039 = vld [vmem:[%s5 + $0x50] sm:$0xf]
      %v7040 = vld [vmem:[%s5 + $0x54] sm:$0xf]
      %v7041 = vld [vmem:[%s5 + $0x58] sm:$0xf]
      %v7042 = vld [vmem:[%s5 + $0x5c] sm:$0xf]
      %v7043 = vld [vmem:[#allocation3 + $0x240] sm:$0xff]
      %v7044 = vld [vmem:[#allocation3 + $0x248] sm:$0xff]
      %v7045 = vld [vmem:[#allocation3 + $0x250] sm:$0xff]
      %v7046 = vld [vmem:[#allocation3 + $0x241] sm:$0xff]
      %v7047 = vld [vmem:[#allocation3 + $0x249] sm:$0xff]
      %v7048 = vld [vmem:[#allocation3 + $0x251] sm:$0xff]
      %v7049 = vld [vmem:[#allocation3 + $0x242] sm:$0xff]
      %v7050 = vld [vmem:[#allocation3 + $0x24a] sm:$0xff]
      %v7051 = vld [vmem:[#allocation3 + $0x252] sm:$0xff]
      %7055 = vrot.lane.b32.xlu0 %v7046, 64
      %v7056 = vpop.permute.xlu0 %7055
      %7057 = vrot.lane.b32.xlu0 %v7047, 64
      %v7058 = vpop.permute.xlu0 %7057
      %7059 = vrot.lane.b32.xlu0 %v7048, 64
      %v7060 = vpop.permute.xlu0 %7059
      %v7064 = vsel %vm449, %v7043, %v7056
      %v7065 = vsel %vm449, %v7044, %v7058
      %v7066 = vsel %vm449, %v7045, %v7060
      %v7067 = vpack.c.bf16 %v6879, %v6878
      %v7068 = vpack.c.bf16 %v6519, %v6518
      %v7069 = vpack.c.bf16 %v6881, %v6880
      %v7070 = vpack.c.bf16 %v6521, %v6520
      %v7071 = vpack.c.bf16 %v6883, %v6882
      %v7072 = vpack.c.bf16 %v6523, %v6522
      %v7073 = vpack.c.bf16 %v6885, %v6884
      %v7074 = vpack.c.bf16 %v6525, %v6524
      %v7075 = vpack.c.bf16 %v6887, %v6886
      %v7076 = vpack.c.bf16 %v6527, %v6526
      %v7077 = vpack.c.bf16 %v6889, %v6888
      %v7078 = vpack.c.bf16 %v6529, %v6528
      %v7079 = vpack.c.bf16 %v6891, %v6890
      %v7080 = vpack.c.bf16 %v6531, %v6530
      %v7081 = vpack.c.bf16 %v6893, %v6892
      %v7082 = vpack.c.bf16 %v6533, %v6532
      %v7083 = vpack.c.bf16 %v6895, %v6894
      %v7084 = vpack.c.bf16 %v6535, %v6534
      %v7085 = vpack.c.bf16 %v6897, %v6896
      %v7086 = vpack.c.bf16 %v6537, %v6536
      %v7087 = vpack.c.bf16 %v6899, %v6898
      %v7088 = vpack.c.bf16 %v6539, %v6538
      %v7089 = vpack.c.bf16 %v6901, %v6900
      %v7090 = vpack.c.bf16 %v6541, %v6540
      %v7091 = vpack.c.bf16 %v6903, %v6902
      %v7092 = vpack.c.bf16 %v6543, %v6542
      %v7093 = vpack.c.bf16 %v6905, %v6904
      %v7094 = vpack.c.bf16 %v6545, %v6544
      %v7095 = vpack.c.bf16 %v6907, %v6906
      %v7096 = vpack.c.bf16 %v6547, %v6546
      %v7097 = vpack.c.bf16 %v6909, %v6908
      %v7098 = vpack.c.bf16 %v6549, %v6548
      %v7099 = vpack.c.bf16 %v6911, %v6910
      %v7100 = vpack.c.bf16 %v6551, %v6550
      %v7101 = vpack.c.bf16 %v6913, %v6912
      %v7102 = vpack.c.bf16 %v6553, %v6552
      %v7103 = vpack.c.bf16 %v6915, %v6914
      %v7104 = vpack.c.bf16 %v6555, %v6554
      %v7105 = vpack.c.bf16 %v6917, %v6916
      %v7106 = vpack.c.bf16 %v6557, %v6556
      %v7107 = vpack.c.bf16 %v6919, %v6918
      %v7108 = vpack.c.bf16 %v6559, %v6558
      %v7109 = vpack.c.bf16 %v6921, %v6920
      %v7110 = vpack.c.bf16 %v6561, %v6560
      %v7111 = vpack.c.bf16 %v6923, %v6922
      %v7112 = vpack.c.bf16 %v6563, %v6562
      %v7113 = vpack.c.bf16 %v6925, %v6924
      %v7114 = vpack.c.bf16 %v6565, %v6564
      %v7115 = vpack.c.bf16 %v6927, %v6926
      %v7116 = vpack.c.bf16 %v6567, %v6566
      %v7117 = vpack.c.bf16 %v6929, %v6928
      %v7118 = vpack.c.bf16 %v6569, %v6568
      %v7119 = vpack.c.bf16 %v6931, %v6930
      %v7120 = vpack.c.bf16 %v6571, %v6570
      %v7121 = vpack.c.bf16 %v6933, %v6932
      %v7122 = vpack.c.bf16 %v6573, %v6572
      %v7123 = vpack.c.bf16 %v6935, %v6934
      %v7124 = vpack.c.bf16 %v6575, %v6574
      %v7125 = vpack.c.bf16 %v6937, %v6936
      %v7126 = vpack.c.bf16 %v6577, %v6576
      %v7127 = vpack.c.bf16 %v6939, %v6938
      %v7128 = vpack.c.bf16 %v6579, %v6578
      %v7129 = vpack.c.bf16 %v6941, %v6940
      %v7130 = vpack.c.bf16 %v6581, %v6580
      %v7131 = vpack.c.bf16 %v6943, %v6942
      %v7132 = vpack.c.bf16 %v6583, %v6582
      %v7133 = vpack.c.bf16 %v6945, %v6944
      %v7134 = vpack.c.bf16 %v6585, %v6584
      %v7135 = vpack.c.bf16 %v7064, %v6946
      %v7136 = vpack.c.bf16 %v7049, %v6586
      %v7137 = vpack.c.bf16 %v7066, %v7065
      %v7138 = vpack.c.bf16 %v7051, %v7050
      %s7139 = scalar_lea.vmem %s5, 96
      %v7140 = vld [vmem:[%s7139] sm:$0xf]
      %v7141 = vld [vmem:[%s7139 + $0x4] sm:$0xf]
      %v7142 = vld [vmem:[%s7139 + $0x8] sm:$0xf]
      %v7143 = vld [vmem:[%s7139 + $0xc] sm:$0xf]
      %v7144 = vld [vmem:[%s7139 + $0x10] sm:$0xf]
      %v7145 = vld [vmem:[%s7139 + $0x14] sm:$0xf]
      %v7146 = vld [vmem:[%s7139 + $0x18] sm:$0xf]
      %v7147 = vld [vmem:[%s7139 + $0x1c] sm:$0xf]
      %v7148 = vld [vmem:[%s7139 + $0x20] sm:$0xf]
      %v7149 = vld [vmem:[%s7139 + $0x24] sm:$0xf]
      %v7150 = vld [vmem:[%s7139 + $0x28] sm:$0xf]
      %v7151 = vld [vmem:[%s7139 + $0x2c] sm:$0xf]
      %v7152 = vld [vmem:[%s7139 + $0x30] sm:$0xf]
      %v7153 = vld [vmem:[%s7139 + $0x34] sm:$0xf]
      %v7154 = vld [vmem:[%s7139 + $0x38] sm:$0xf]
      %v7155 = vld [vmem:[%s7139 + $0x3c] sm:$0xf]
      %v7156 = vld [vmem:[%s7139 + $0x40] sm:$0xf]
      %v7157 = vld [vmem:[%s7139 + $0x44] sm:$0xf]
      %v7158 = vld [vmem:[%s7139 + $0x48] sm:$0xf]
      %v7159 = vld [vmem:[%s7139 + $0x4c] sm:$0xf]
      %v7160 = vld [vmem:[%s7139 + $0x50] sm:$0xf]
      %v7161 = vld [vmem:[%s7139 + $0x54] sm:$0xf]
      %v7162 = vld [vmem:[%s7139 + $0x58] sm:$0xf]
      %v7163 = vld [vmem:[%s7139 + $0x5c] sm:$0xf]
      %v7188 = vunpack.c.l.b16 %v7140
      %v7189 = vunpack.c.l.b16 %v7141
      %v7190 = vunpack.c.l.b16 %v7142
      %v7191 = vunpack.c.l.b16 %v7143
      %v7192 = vunpack.c.l.b16 %v7144
      %v7193 = vunpack.c.l.b16 %v7145
      %v7194 = vunpack.c.l.b16 %v7146
      %v7195 = vunpack.c.l.b16 %v7147
      %v7196 = vunpack.c.l.b16 %v7148
      %v7197 = vunpack.c.l.b16 %v7149
      %v7198 = vunpack.c.l.b16 %v7150
      %v7199 = vunpack.c.l.b16 %v7151
      %v7200 = vunpack.c.l.b16 %v7152
      %v7201 = vunpack.c.l.b16 %v7153
      %v7202 = vunpack.c.l.b16 %v7154
      %v7203 = vunpack.c.l.b16 %v7155
      %v7204 = vunpack.c.l.b16 %v7156
      %v7205 = vunpack.c.l.b16 %v7157
      %v7206 = vunpack.c.l.b16 %v7158
      %v7207 = vunpack.c.l.b16 %v7159
      %v7208 = vunpack.c.l.b16 %v7160
      %v7209 = vunpack.c.l.b16 %v7161
      %v7210 = vunpack.c.l.b16 %v7162
      %v7211 = vunpack.c.l.b16 %v7163
      %v7212 = vpack.c.b16 %v7189, %v7188
      %v7213 = vpack.c.b16 %v7191, %v7190
      %v7214 = vpack.c.b16 %v7193, %v7192
      %v7215 = vpack.c.b16 %v7195, %v7194
      %v7216 = vpack.c.b16 %v7197, %v7196
      %v7217 = vpack.c.b16 %v7199, %v7198
      %v7218 = vpack.c.b16 %v7201, %v7200
      %v7219 = vpack.c.b16 %v7203, %v7202
      %v7220 = vpack.c.b16 %v7205, %v7204
      %v7221 = vpack.c.b16 %v7207, %v7206
      %v7222 = vpack.c.b16 %v7209, %v7208
      %v7223 = vpack.c.b16 %v7211, %v7210
      %v7237 = vsel %vm449, %v7068, 0
      %v7240 = vsel %vm449, %v7070, 0
      %v7243 = vsel %vm449, %v7072, 0
      %v7246 = vsel %vm449, %v7074, 0
      %v7249 = vsel %vm449, %v7076, 0
      %v7252 = vsel %vm449, %v7078, 0
      %v7255 = vsel %vm449, %v7080, 0
      %v7258 = vsel %vm449, %v7082, 0
      %v7261 = vsel %vm449, %v7084, 0
      %v7264 = vsel %vm449, %v7086, 0
      %v7267 = vsel %vm449, %v7088, 0
      %v7270 = vsel %vm449, %v7090, 0
      %v7273 = vsel %vm449, %v7092, 0
      %v7276 = vsel %vm449, %v7094, 0
      %v7279 = vsel %vm449, %v7096, 0
      %v7282 = vsel %vm449, %v7098, 0
      %v7285 = vsel %vm449, %v7100, 0
      %v7288 = vsel %vm449, %v7102, 0
      %v7291 = vsel %vm449, %v7104, 0
      %v7294 = vsel %vm449, %v7106, 0
      %v7297 = vsel %vm449, %v7108, 0
      %v7300 = vsel %vm449, %v7110, 0
      %v7303 = vsel %vm449, %v7112, 0
      %v7306 = vsel %vm449, %v7114, 0
      %v7309 = vsel %vm449, %v7116, 0
      %v7312 = vsel %vm449, %v7118, 0
      %v7315 = vsel %vm449, %v7120, 0
      %v7318 = vsel %vm449, %v7122, 0
      %v7321 = vsel %vm449, %v7124, 0
      %v7324 = vsel %vm449, %v7126, 0
      %v7327 = vsel %vm449, %v7128, 0
      %v7330 = vsel %vm449, %v7130, 0
      %v7333 = vsel %vm449, %v7132, 0
      %v7336 = vsel %vm449, %v7134, 0
      %v7339 = vsel %vm449, %v7136, 0
      %v7342 = vsel %vm449, %v7138, 0
      %7344 = vmatprep.subr.bf16.mxu0 0
      %7345 = vmatpush1.bf16.msra.mxu0 %v7219
      %7346 = vmatprep.subr.bf16.mxu0 0
      %7347 = vmatpush1.bf16.msra.mxu0 %v7218
      %7348 = vmatprep.subr.bf16.mxu0 0
      %7349 = vmatpush1.bf16.msra.mxu0 %v7217
      %7350 = vmatprep.subr.bf16.mxu0 0
      %7351 = vmatpush1.bf16.msra.mxu0 %v7216
      %7352 = vmatprep.subr.bf16.mxu0 0
      %7353 = vmatpush1.bf16.msra.mxu0 %v7215
      %7354 = vmatprep.subr.bf16.mxu0 0
      %7355 = vmatpush1.bf16.msra.mxu0 %v7214
      %7356 = vmatprep.subr.bf16.mxu0 0
      %7357 = vmatpush1.bf16.msra.mxu0 %v7213
      %7358 = vmatprep.subr.bf16.mxu0 0
      %7359 = vmatpush1.bf16.msra.mxu0 %v7212
      %7360 = vmatprep.subr.bf16.mxu0 0
      %7361 = vmatpush2.bf16.msra.mxu0 0
      %7362 = vmatprep.subr.bf16.mxu0 0
      %7363 = vmatpush2.bf16.msra.mxu0 0
      %7364 = vmatprep.subr.bf16.mxu0 0
      %7365 = vmatpush2.bf16.msra.mxu0 0
      %7366 = vmatprep.subr.bf16.mxu0 0
      %7367 = vmatpush2.bf16.msra.mxu0 0
      %7368 = vmatprep.subr.bf16.mxu0 0
      %7369 = vmatpush2.bf16.msra.mxu0 %v7223
      %7370 = vmatprep.subr.bf16.mxu0 0
      %7371 = vmatpush2.bf16.msra.mxu0 %v7222
      %7372 = vmatprep.subr.bf16.mxu0 0
      %7373 = vmatpush2.bf16.msra.mxu0 %v7221
      %7374 = vmatprep.subr.bf16.mxu0 0
      %7375 = vmatpush2.bf16.msra.mxu0 %v7220
      %7376 = vmatprep.mubr.bf16.mxu0 %v7237
      %7377 = vmatmul.mubr.bf16.gmra.mxu0 %v7067
      %v7378 = vpop.f32.mrf.mxu0
      %v7379 = vadd.f32 0.0, %v7378
      %v7380 = vpop.f32.mrf.mxu0
      %v7381 = vpop.f32.mrf.mxu0
      %v7382 = vadd.f32 0.0, %v7381
      %v7383 = vpop.f32.mrf.mxu0
      %7384 = vmatprep.mubr.bf16.mxu0 %v7240
      %7385 = vmatmul.mubr.bf16.gmra.mxu0 %v7069
      %v7386 = vpop.f32.mrf.mxu0
      %v7387 = vadd.f32 0.0, %v7386
      %v7388 = vpop.f32.mrf.mxu0
      %v7389 = vpop.f32.mrf.mxu0
      %v7390 = vadd.f32 0.0, %v7389
      %v7391 = vpop.f32.mrf.mxu0
      %7392 = vmatprep.mubr.bf16.mxu0 %v7243
      %7393 = vmatmul.mubr.bf16.gmra.mxu0 %v7071
      %v7394 = vpop.f32.mrf.mxu0
      %v7395 = vadd.f32 0.0, %v7394
      %v7396 = vpop.f32.mrf.mxu0
      %v7397 = vpop.f32.mrf.mxu0
      %v7398 = vadd.f32 0.0, %v7397
      %v7399 = vpop.f32.mrf.mxu0
      %7400 = vmatprep.mubr.bf16.mxu0 %v7246
      %7401 = vmatmul.mubr.bf16.gmra.mxu0 %v7073
      %v7402 = vpop.f32.mrf.mxu0
      %v7403 = vadd.f32 0.0, %v7402
      %v7404 = vpop.f32.mrf.mxu0
      %v7405 = vpop.f32.mrf.mxu0
      %v7406 = vadd.f32 0.0, %v7405
      %v7407 = vpop.f32.mrf.mxu0
      %7408 = vmatprep.mubr.bf16.mxu0 %v7249
      %7409 = vmatmul.mubr.bf16.gmra.mxu0 %v7075
      %v7410 = vpop.f32.mrf.mxu0
      %v7411 = vadd.f32 0.0, %v7410
      %v7412 = vpop.f32.mrf.mxu0
      %v7413 = vpop.f32.mrf.mxu0
      %v7414 = vadd.f32 0.0, %v7413
      %v7415 = vpop.f32.mrf.mxu0
      %7416 = vmatprep.mubr.bf16.mxu0 %v7252
      %7417 = vmatmul.mubr.bf16.gmra.mxu0 %v7077
      %v7418 = vpop.f32.mrf.mxu0
      %v7419 = vadd.f32 0.0, %v7418
      %v7420 = vpop.f32.mrf.mxu0
      %v7421 = vpop.f32.mrf.mxu0
      %v7422 = vadd.f32 0.0, %v7421
      %v7423 = vpop.f32.mrf.mxu0
      %7424 = vmatprep.mubr.bf16.mxu0 %v7255
      %7425 = vmatmul.mubr.bf16.gmra.mxu0 %v7079
      %v7426 = vpop.f32.mrf.mxu0
      %v7427 = vadd.f32 0.0, %v7426
      %v7428 = vpop.f32.mrf.mxu0
      %v7429 = vpop.f32.mrf.mxu0
      %v7430 = vadd.f32 0.0, %v7429
      %v7431 = vpop.f32.mrf.mxu0
      %7432 = vmatprep.mubr.bf16.mxu0 %v7258
      %7433 = vmatmul.mubr.bf16.gmra.mxu0 %v7081
      %v7434 = vpop.f32.mrf.mxu0
      %v7435 = vadd.f32 0.0, %v7434
      %v7436 = vpop.f32.mrf.mxu0
      %v7437 = vpop.f32.mrf.mxu0
      %v7438 = vadd.f32 0.0, %v7437
      %v7439 = vpop.f32.mrf.mxu0
      %7440 = vmatprep.mubr.bf16.mxu0 %v7261
      %7441 = vmatmul.mubr.bf16.gmra.mxu0 %v7083
      %v7442 = vpop.f32.mrf.mxu0
      %v7443 = vadd.f32 0.0, %v7442
      %v7444 = vpop.f32.mrf.mxu0
      %v7445 = vpop.f32.mrf.mxu0
      %v7446 = vadd.f32 0.0, %v7445
      %v7447 = vpop.f32.mrf.mxu0
      %7448 = vmatprep.mubr.bf16.mxu0 %v7264
      %7449 = vmatmul.mubr.bf16.gmra.mxu0 %v7085
      %v7450 = vpop.f32.mrf.mxu0
      %v7451 = vadd.f32 0.0, %v7450
      %v7452 = vpop.f32.mrf.mxu0
      %v7453 = vpop.f32.mrf.mxu0
      %v7454 = vadd.f32 0.0, %v7453
      %v7455 = vpop.f32.mrf.mxu0
      %7456 = vmatprep.mubr.bf16.mxu0 %v7267
      %7457 = vmatmul.mubr.bf16.gmra.mxu0 %v7087
      %v7458 = vpop.f32.mrf.mxu0
      %v7459 = vadd.f32 0.0, %v7458
      %v7460 = vpop.f32.mrf.mxu0
      %v7461 = vpop.f32.mrf.mxu0
      %v7462 = vadd.f32 0.0, %v7461
      %v7463 = vpop.f32.mrf.mxu0
      %7464 = vmatprep.mubr.bf16.mxu0 %v7270
      %7465 = vmatmul.mubr.bf16.gmra.mxu0 %v7089
      %v7466 = vpop.f32.mrf.mxu0
      %v7467 = vadd.f32 0.0, %v7466
      %v7468 = vpop.f32.mrf.mxu0
      %v7469 = vpop.f32.mrf.mxu0
      %v7470 = vadd.f32 0.0, %v7469
      %v7471 = vpop.f32.mrf.mxu0
      %7472 = vmatprep.mubr.bf16.mxu0 %v7273
      %7473 = vmatmul.mubr.bf16.gmra.mxu0 %v7091
      %v7474 = vpop.f32.mrf.mxu0
      %v7475 = vadd.f32 0.0, %v7474
      %v7476 = vpop.f32.mrf.mxu0
      %v7477 = vpop.f32.mrf.mxu0
      %v7478 = vadd.f32 0.0, %v7477
      %v7479 = vpop.f32.mrf.mxu0
      %7480 = vmatprep.mubr.bf16.mxu0 %v7276
      %7481 = vmatmul.mubr.bf16.gmra.mxu0 %v7093
      %v7482 = vpop.f32.mrf.mxu0
      %v7483 = vadd.f32 0.0, %v7482
      %v7484 = vpop.f32.mrf.mxu0
      %v7485 = vpop.f32.mrf.mxu0
      %v7486 = vadd.f32 0.0, %v7485
      %v7487 = vpop.f32.mrf.mxu0
      %7488 = vmatprep.mubr.bf16.mxu0 %v7279
      %7489 = vmatmul.mubr.bf16.gmra.mxu0 %v7095
      %v7490 = vpop.f32.mrf.mxu0
      %v7491 = vadd.f32 0.0, %v7490
      %v7492 = vpop.f32.mrf.mxu0
      %v7493 = vpop.f32.mrf.mxu0
      %v7494 = vadd.f32 0.0, %v7493
      %v7495 = vpop.f32.mrf.mxu0
      %7496 = vmatprep.mubr.bf16.mxu0 %v7282
      %7497 = vmatmul.mubr.bf16.gmra.mxu0 %v7097
      %v7498 = vpop.f32.mrf.mxu0
      %v7499 = vadd.f32 0.0, %v7498
      %v7500 = vpop.f32.mrf.mxu0
      %v7501 = vpop.f32.mrf.mxu0
      %v7502 = vadd.f32 0.0, %v7501
      %v7503 = vpop.f32.mrf.mxu0
      %7504 = vmatprep.mubr.bf16.mxu0 %v7285
      %7505 = vmatmul.mubr.bf16.gmra.mxu0 %v7099
      %v7506 = vpop.f32.mrf.mxu0
      %v7507 = vadd.f32 0.0, %v7506
      %v7508 = vpop.f32.mrf.mxu0
      %v7509 = vpop.f32.mrf.mxu0
      %v7510 = vadd.f32 0.0, %v7509
      %v7511 = vpop.f32.mrf.mxu0
      %7512 = vmatprep.mubr.bf16.mxu0 %v7288
      %7513 = vmatmul.mubr.bf16.gmra.mxu0 %v7101
      %v7514 = vpop.f32.mrf.mxu0
      %v7515 = vadd.f32 0.0, %v7514
      %v7516 = vpop.f32.mrf.mxu0
      %v7517 = vpop.f32.mrf.mxu0
      %v7518 = vadd.f32 0.0, %v7517
      %v7519 = vpop.f32.mrf.mxu0
      %7520 = vmatprep.mubr.bf16.mxu0 %v7291
      %7521 = vmatmul.mubr.bf16.gmra.mxu0 %v7103
      %v7522 = vpop.f32.mrf.mxu0
      %v7523 = vadd.f32 0.0, %v7522
      %v7524 = vpop.f32.mrf.mxu0
      %v7525 = vpop.f32.mrf.mxu0
      %v7526 = vadd.f32 0.0, %v7525
      %v7527 = vpop.f32.mrf.mxu0
      %7528 = vmatprep.mubr.bf16.mxu0 %v7294
      %7529 = vmatmul.mubr.bf16.gmra.mxu0 %v7105
      %v7530 = vpop.f32.mrf.mxu0
      %v7531 = vadd.f32 0.0, %v7530
      %v7532 = vpop.f32.mrf.mxu0
      %v7533 = vpop.f32.mrf.mxu0
      %v7534 = vadd.f32 0.0, %v7533
      %v7535 = vpop.f32.mrf.mxu0
      %7536 = vmatprep.mubr.bf16.mxu0 %v7297
      %7537 = vmatmul.mubr.bf16.gmra.mxu0 %v7107
      %v7538 = vpop.f32.mrf.mxu0
      %v7539 = vadd.f32 0.0, %v7538
      %v7540 = vpop.f32.mrf.mxu0
      %v7541 = vpop.f32.mrf.mxu0
      %v7542 = vadd.f32 0.0, %v7541
      %v7543 = vpop.f32.mrf.mxu0
      %7544 = vmatprep.mubr.bf16.mxu0 %v7300
      %7545 = vmatmul.mubr.bf16.gmra.mxu0 %v7109
      %v7546 = vpop.f32.mrf.mxu0
      %v7547 = vadd.f32 0.0, %v7546
      %v7548 = vpop.f32.mrf.mxu0
      %v7549 = vpop.f32.mrf.mxu0
      %v7550 = vadd.f32 0.0, %v7549
      %v7551 = vpop.f32.mrf.mxu0
      %7552 = vmatprep.mubr.bf16.mxu0 %v7303
      %7553 = vmatmul.mubr.bf16.gmra.mxu0 %v7111
      %v7554 = vpop.f32.mrf.mxu0
      %v7555 = vadd.f32 0.0, %v7554
      %v7556 = vpop.f32.mrf.mxu0
      %v7557 = vpop.f32.mrf.mxu0
      %v7558 = vadd.f32 0.0, %v7557
      %v7559 = vpop.f32.mrf.mxu0
      %7560 = vmatprep.mubr.bf16.mxu0 %v7306
      %7561 = vmatmul.mubr.bf16.gmra.mxu0 %v7113
      %v7562 = vpop.f32.mrf.mxu0
      %v7563 = vadd.f32 0.0, %v7562
      %v7564 = vpop.f32.mrf.mxu0
      %v7565 = vpop.f32.mrf.mxu0
      %v7566 = vadd.f32 0.0, %v7565
      %v7567 = vpop.f32.mrf.mxu0
      %7568 = vmatprep.mubr.bf16.mxu0 %v7309
      %7569 = vmatmul.mubr.bf16.gmra.mxu0 %v7115
      %v7570 = vpop.f32.mrf.mxu0
      %v7571 = vadd.f32 0.0, %v7570
      %v7572 = vpop.f32.mrf.mxu0
      %v7573 = vpop.f32.mrf.mxu0
      %v7574 = vadd.f32 0.0, %v7573
      %v7575 = vpop.f32.mrf.mxu0
      %7576 = vmatprep.mubr.bf16.mxu0 %v7312
      %7577 = vmatmul.mubr.bf16.gmra.mxu0 %v7117
      %v7578 = vpop.f32.mrf.mxu0
      %v7579 = vadd.f32 0.0, %v7578
      %v7580 = vpop.f32.mrf.mxu0
      %v7581 = vpop.f32.mrf.mxu0
      %v7582 = vadd.f32 0.0, %v7581
      %v7583 = vpop.f32.mrf.mxu0
      %7584 = vmatprep.mubr.bf16.mxu0 %v7315
      %7585 = vmatmul.mubr.bf16.gmra.mxu0 %v7119
      %v7586 = vpop.f32.mrf.mxu0
      %v7587 = vadd.f32 0.0, %v7586
      %v7588 = vpop.f32.mrf.mxu0
      %v7589 = vpop.f32.mrf.mxu0
      %v7590 = vadd.f32 0.0, %v7589
      %v7591 = vpop.f32.mrf.mxu0
      %7592 = vmatprep.mubr.bf16.mxu0 %v7318
      %7593 = vmatmul.mubr.bf16.gmra.mxu0 %v7121
      %v7594 = vpop.f32.mrf.mxu0
      %v7595 = vadd.f32 0.0, %v7594
      %v7596 = vpop.f32.mrf.mxu0
      %v7597 = vpop.f32.mrf.mxu0
      %v7598 = vadd.f32 0.0, %v7597
      %v7599 = vpop.f32.mrf.mxu0
      %7600 = vmatprep.mubr.bf16.mxu0 %v7321
      %7601 = vmatmul.mubr.bf16.gmra.mxu0 %v7123
      %v7602 = vpop.f32.mrf.mxu0
      %v7603 = vadd.f32 0.0, %v7602
      %v7604 = vpop.f32.mrf.mxu0
      %v7605 = vpop.f32.mrf.mxu0
      %v7606 = vadd.f32 0.0, %v7605
      %v7607 = vpop.f32.mrf.mxu0
      %7608 = vmatprep.mubr.bf16.mxu0 %v7324
      %7609 = vmatmul.mubr.bf16.gmra.mxu0 %v7125
      %v7610 = vpop.f32.mrf.mxu0
      %v7611 = vadd.f32 0.0, %v7610
      %v7612 = vpop.f32.mrf.mxu0
      %v7613 = vpop.f32.mrf.mxu0
      %v7614 = vadd.f32 0.0, %v7613
      %v7615 = vpop.f32.mrf.mxu0
      %7616 = vmatprep.mubr.bf16.mxu0 %v7327
      %7617 = vmatmul.mubr.bf16.gmra.mxu0 %v7127
      %v7618 = vpop.f32.mrf.mxu0
      %v7619 = vadd.f32 0.0, %v7618
      %v7620 = vpop.f32.mrf.mxu0
      %v7621 = vpop.f32.mrf.mxu0
      %v7622 = vadd.f32 0.0, %v7621
      %v7623 = vpop.f32.mrf.mxu0
      %7624 = vmatprep.mubr.bf16.mxu0 %v7330
      %7625 = vmatmul.mubr.bf16.gmra.mxu0 %v7129
      %v7626 = vpop.f32.mrf.mxu0
      %v7627 = vadd.f32 0.0, %v7626
      %v7628 = vpop.f32.mrf.mxu0
      %v7629 = vpop.f32.mrf.mxu0
      %v7630 = vadd.f32 0.0, %v7629
      %v7631 = vpop.f32.mrf.mxu0
      %7632 = vmatprep.mubr.bf16.mxu0 %v7333
      %7633 = vmatmul.mubr.bf16.gmra.mxu0 %v7131
      %v7634 = vpop.f32.mrf.mxu0
      %v7635 = vadd.f32 0.0, %v7634
      %v7636 = vpop.f32.mrf.mxu0
      %v7637 = vpop.f32.mrf.mxu0
      %v7638 = vadd.f32 0.0, %v7637
      %v7639 = vpop.f32.mrf.mxu0
      %7640 = vmatprep.mubr.bf16.mxu0 %v7336
      %7641 = vmatmul.mubr.bf16.gmra.mxu0 %v7133
      %v7642 = vpop.f32.mrf.mxu0
      %v7643 = vadd.f32 0.0, %v7642
      %v7644 = vpop.f32.mrf.mxu0
      %v7645 = vpop.f32.mrf.mxu0
      %v7646 = vadd.f32 0.0, %v7645
      %v7647 = vpop.f32.mrf.mxu0
      %7648 = vmatprep.mubr.bf16.mxu0 %v7339
      %7649 = vmatmul.mubr.bf16.gmra.mxu0 %v7135
      %v7650 = vpop.f32.mrf.mxu0
      %v7651 = vadd.f32 0.0, %v7650
      %v7652 = vpop.f32.mrf.mxu0
      %v7653 = vpop.f32.mrf.mxu0
      %v7654 = vadd.f32 0.0, %v7653
      %v7655 = vpop.f32.mrf.mxu0
      %7656 = vmatprep.mubr.bf16.mxu0 %v7342
      %7657 = vmatmul.mubr.bf16.gmra.mxu0 %v7137
      %v7658 = vpop.f32.mrf.mxu0
      %v7659 = vadd.f32 0.0, %v7658
      %v7660 = vpop.f32.mrf.mxu0
      %v7661 = vpop.f32.mrf.mxu0
      %v7662 = vadd.f32 0.0, %v7661
      %v7663 = vpop.f32.mrf.mxu0
      %7664 = vdwg.mxu0
      %v7689 = vunpack.c.l.b16 %v7019
      %v7690 = vunpack.c.l.b16 %v7020
      %v7691 = vunpack.c.l.b16 %v7021
      %v7692 = vunpack.c.l.b16 %v7022
      %v7693 = vunpack.c.l.b16 %v7023
      %v7694 = vunpack.c.l.b16 %v7024
      %v7695 = vunpack.c.l.b16 %v7025
      %v7696 = vunpack.c.l.b16 %v7026
      %v7697 = vunpack.c.l.b16 %v7027
      %v7698 = vunpack.c.l.b16 %v7028
      %v7699 = vunpack.c.l.b16 %v7029
      %v7700 = vunpack.c.l.b16 %v7030
      %v7701 = vunpack.c.l.b16 %v7031
      %v7702 = vunpack.c.l.b16 %v7032
      %v7703 = vunpack.c.l.b16 %v7033
      %v7704 = vunpack.c.l.b16 %v7034
      %v7705 = vunpack.c.l.b16 %v7035
      %v7706 = vunpack.c.l.b16 %v7036
      %v7707 = vunpack.c.l.b16 %v7037
      %v7708 = vunpack.c.l.b16 %v7038
      %v7709 = vunpack.c.l.b16 %v7039
      %v7710 = vunpack.c.l.b16 %v7040
      %v7711 = vunpack.c.l.b16 %v7041
      %v7712 = vunpack.c.l.b16 %v7042
      %v7713 = vpack.c.b16 %v7690, %v7689
      %v7714 = vpack.c.b16 %v7692, %v7691
      %v7715 = vpack.c.b16 %v7694, %v7693
      %v7716 = vpack.c.b16 %v7696, %v7695
      %v7717 = vpack.c.b16 %v7698, %v7697
      %v7718 = vpack.c.b16 %v7700, %v7699
      %v7719 = vpack.c.b16 %v7702, %v7701
      %v7720 = vpack.c.b16 %v7704, %v7703
      %v7721 = vpack.c.b16 %v7706, %v7705
      %v7722 = vpack.c.b16 %v7708, %v7707
      %v7723 = vpack.c.b16 %v7710, %v7709
      %v7724 = vpack.c.b16 %v7712, %v7711
      %v7738 = vsel %vm449, %v6948, 0
      %v7741 = vsel %vm449, %v6950, 0
      %v7744 = vsel %vm449, %v6952, 0
      %v7747 = vsel %vm449, %v6954, 0
      %v7750 = vsel %vm449, %v6956, 0
      %v7753 = vsel %vm449, %v6958, 0
      %v7756 = vsel %vm449, %v6960, 0
      %v7759 = vsel %vm449, %v6962, 0
      %v7762 = vsel %vm449, %v6964, 0
      %v7765 = vsel %vm449, %v6966, 0
      %v7768 = vsel %vm449, %v6968, 0
      %v7771 = vsel %vm449, %v6970, 0
      %v7774 = vsel %vm449, %v6972, 0
      %v7777 = vsel %vm449, %v6974, 0
      %v7780 = vsel %vm449, %v6976, 0
      %v7783 = vsel %vm449, %v6978, 0
      %v7786 = vsel %vm449, %v6980, 0
      %v7789 = vsel %vm449, %v6982, 0
      %v7792 = vsel %vm449, %v6984, 0
      %v7795 = vsel %vm449, %v6986, 0
      %v7798 = vsel %vm449, %v6988, 0
      %v7801 = vsel %vm449, %v6990, 0
      %v7804 = vsel %vm449, %v6992, 0
      %v7807 = vsel %vm449, %v6994, 0
      %v7810 = vsel %vm449, %v6996, 0
      %v7813 = vsel %vm449, %v6998, 0
      %v7816 = vsel %vm449, %v7000, 0
      %v7819 = vsel %vm449, %v7002, 0
      %v7822 = vsel %vm449, %v7004, 0
      %v7825 = vsel %vm449, %v7006, 0
      %v7828 = vsel %vm449, %v7008, 0
      %v7831 = vsel %vm449, %v7010, 0
      %v7834 = vsel %vm449, %v7012, 0
      %v7837 = vsel %vm449, %v7014, 0
      %v7840 = vsel %vm449, %v7016, 0
      %v7843 = vsel %vm449, %v7018, 0
      %7845 = vmatprep.subr.bf16.mxu0 0
      %7846 = vmatpush1.bf16.msra.mxu0 %v7720
      %7847 = vmatprep.subr.bf16.mxu0 0
      %7848 = vmatpush1.bf16.msra.mxu0 %v7719
      %7849 = vmatprep.subr.bf16.mxu0 0
      %7850 = vmatpush1.bf16.msra.mxu0 %v7718
      %7851 = vmatprep.subr.bf16.mxu0 0
      %7852 = vmatpush1.bf16.msra.mxu0 %v7717
      %7853 = vmatprep.subr.bf16.mxu0 0
      %7854 = vmatpush1.bf16.msra.mxu0 %v7716
      %7855 = vmatprep.subr.bf16.mxu0 0
      %7856 = vmatpush1.bf16.msra.mxu0 %v7715
      %7857 = vmatprep.subr.bf16.mxu0 0
      %7858 = vmatpush1.bf16.msra.mxu0 %v7714
      %7859 = vmatprep.subr.bf16.mxu0 0
      %7860 = vmatpush1.bf16.msra.mxu0 %v7713
      %7861 = vmatprep.subr.bf16.mxu0 0
      %7862 = vmatpush2.bf16.msra.mxu0 0
      %7863 = vmatprep.subr.bf16.mxu0 0
      %7864 = vmatpush2.bf16.msra.mxu0 0
      %7865 = vmatprep.subr.bf16.mxu0 0
      %7866 = vmatpush2.bf16.msra.mxu0 0
      %7867 = vmatprep.subr.bf16.mxu0 0
      %7868 = vmatpush2.bf16.msra.mxu0 0
      %7869 = vmatprep.subr.bf16.mxu0 0
      %7870 = vmatpush2.bf16.msra.mxu0 %v7724
      %7871 = vmatprep.subr.bf16.mxu0 0
      %7872 = vmatpush2.bf16.msra.mxu0 %v7723
      %7873 = vmatprep.subr.bf16.mxu0 0
      %7874 = vmatpush2.bf16.msra.mxu0 %v7722
      %7875 = vmatprep.subr.bf16.mxu0 0
      %7876 = vmatpush2.bf16.msra.mxu0 %v7721
      %7877 = vmatprep.mubr.bf16.mxu0 %v7738
      %7878 = vmatmul.mubr.bf16.gmra.mxu0 %v6947
      %v7879 = vpop.f32.mrf.mxu0
      %v7880 = vadd.f32 %v7379, %v7879
      %v7881 = vpop.f32.mrf.mxu0
      %v7882 = vpop.f32.mrf.mxu0
      %v7883 = vadd.f32 %v7382, %v7882
      %v7884 = vpop.f32.mrf.mxu0
      %7885 = vmatprep.mubr.bf16.mxu0 %v7741
      %7886 = vmatmul.mubr.bf16.gmra.mxu0 %v6949
      %v7887 = vpop.f32.mrf.mxu0
      %v7888 = vadd.f32 %v7387, %v7887
      %v7889 = vpop.f32.mrf.mxu0
      %v7890 = vpop.f32.mrf.mxu0
      %v7891 = vadd.f32 %v7390, %v7890
      %v7892 = vpop.f32.mrf.mxu0
      %7893 = vmatprep.mubr.bf16.mxu0 %v7744
      %7894 = vmatmul.mubr.bf16.gmra.mxu0 %v6951
      %v7895 = vpop.f32.mrf.mxu0
      %v7896 = vadd.f32 %v7395, %v7895
      %v7897 = vpop.f32.mrf.mxu0
      %v7898 = vpop.f32.mrf.mxu0
      %v7899 = vadd.f32 %v7398, %v7898
      %v7900 = vpop.f32.mrf.mxu0
      %7901 = vmatprep.mubr.bf16.mxu0 %v7747
      %7902 = vmatmul.mubr.bf16.gmra.mxu0 %v6953
      %v7903 = vpop.f32.mrf.mxu0
      %v7904 = vadd.f32 %v7403, %v7903
      %v7905 = vpop.f32.mrf.mxu0
      %v7906 = vpop.f32.mrf.mxu0
      %v7907 = vadd.f32 %v7406, %v7906
      %v7908 = vpop.f32.mrf.mxu0
      %7909 = vmatprep.mubr.bf16.mxu0 %v7750
      %7910 = vmatmul.mubr.bf16.gmra.mxu0 %v6955
      %v7911 = vpop.f32.mrf.mxu0
      %v7912 = vadd.f32 %v7411, %v7911
      %v7913 = vpop.f32.mrf.mxu0
      %v7914 = vpop.f32.mrf.mxu0
      %v7915 = vadd.f32 %v7414, %v7914
      %v7916 = vpop.f32.mrf.mxu0
      %7917 = vmatprep.mubr.bf16.mxu0 %v7753
      %7918 = vmatmul.mubr.bf16.gmra.mxu0 %v6957
      %v7919 = vpop.f32.mrf.mxu0
      %v7920 = vadd.f32 %v7419, %v7919
      %v7921 = vpop.f32.mrf.mxu0
      %v7922 = vpop.f32.mrf.mxu0
      %v7923 = vadd.f32 %v7422, %v7922
      %v7924 = vpop.f32.mrf.mxu0
      %7925 = vmatprep.mubr.bf16.mxu0 %v7756
      %7926 = vmatmul.mubr.bf16.gmra.mxu0 %v6959
      %v7927 = vpop.f32.mrf.mxu0
      %v7928 = vadd.f32 %v7427, %v7927
      %v7929 = vpop.f32.mrf.mxu0
      %v7930 = vpop.f32.mrf.mxu0
      %v7931 = vadd.f32 %v7430, %v7930
      %v7932 = vpop.f32.mrf.mxu0
      %7933 = vmatprep.mubr.bf16.mxu0 %v7759
      %7934 = vmatmul.mubr.bf16.gmra.mxu0 %v6961
      %v7935 = vpop.f32.mrf.mxu0
      %v7936 = vadd.f32 %v7435, %v7935
      %v7937 = vpop.f32.mrf.mxu0
      %v7938 = vpop.f32.mrf.mxu0
      %v7939 = vadd.f32 %v7438, %v7938
      %v7940 = vpop.f32.mrf.mxu0
      %7941 = vmatprep.mubr.bf16.mxu0 %v7762
      %7942 = vmatmul.mubr.bf16.gmra.mxu0 %v6963
      %v7943 = vpop.f32.mrf.mxu0
      %v7944 = vadd.f32 %v7443, %v7943
      %v7945 = vpop.f32.mrf.mxu0
      %v7946 = vpop.f32.mrf.mxu0
      %v7947 = vadd.f32 %v7446, %v7946
      %v7948 = vpop.f32.mrf.mxu0
      %7949 = vmatprep.mubr.bf16.mxu0 %v7765
      %7950 = vmatmul.mubr.bf16.gmra.mxu0 %v6965
      %v7951 = vpop.f32.mrf.mxu0
      %v7952 = vadd.f32 %v7451, %v7951
      %v7953 = vpop.f32.mrf.mxu0
      %v7954 = vpop.f32.mrf.mxu0
      %v7955 = vadd.f32 %v7454, %v7954
      %v7956 = vpop.f32.mrf.mxu0
      %7957 = vmatprep.mubr.bf16.mxu0 %v7768
      %7958 = vmatmul.mubr.bf16.gmra.mxu0 %v6967
      %v7959 = vpop.f32.mrf.mxu0
      %v7960 = vadd.f32 %v7459, %v7959
      %v7961 = vpop.f32.mrf.mxu0
      %v7962 = vpop.f32.mrf.mxu0
      %v7963 = vadd.f32 %v7462, %v7962
      %v7964 = vpop.f32.mrf.mxu0
      %7965 = vmatprep.mubr.bf16.mxu0 %v7771
      %7966 = vmatmul.mubr.bf16.gmra.mxu0 %v6969
      %v7967 = vpop.f32.mrf.mxu0
      %v7968 = vadd.f32 %v7467, %v7967
      %v7969 = vpop.f32.mrf.mxu0
      %v7970 = vpop.f32.mrf.mxu0
      %v7971 = vadd.f32 %v7470, %v7970
      %v7972 = vpop.f32.mrf.mxu0
      %7973 = vmatprep.mubr.bf16.mxu0 %v7774
      %7974 = vmatmul.mubr.bf16.gmra.mxu0 %v6971
      %v7975 = vpop.f32.mrf.mxu0
      %v7976 = vadd.f32 %v7475, %v7975
      %v7977 = vpop.f32.mrf.mxu0
      %v7978 = vpop.f32.mrf.mxu0
      %v7979 = vadd.f32 %v7478, %v7978
      %v7980 = vpop.f32.mrf.mxu0
      %7981 = vmatprep.mubr.bf16.mxu0 %v7777
      %7982 = vmatmul.mubr.bf16.gmra.mxu0 %v6973
      %v7983 = vpop.f32.mrf.mxu0
      %v7984 = vadd.f32 %v7483, %v7983
      %v7985 = vpop.f32.mrf.mxu0
      %v7986 = vpop.f32.mrf.mxu0
      %v7987 = vadd.f32 %v7486, %v7986
      %v7988 = vpop.f32.mrf.mxu0
      %7989 = vmatprep.mubr.bf16.mxu0 %v7780
      %7990 = vmatmul.mubr.bf16.gmra.mxu0 %v6975
      %v7991 = vpop.f32.mrf.mxu0
      %v7992 = vadd.f32 %v7491, %v7991
      %v7993 = vpop.f32.mrf.mxu0
      %v7994 = vpop.f32.mrf.mxu0
      %v7995 = vadd.f32 %v7494, %v7994
      %v7996 = vpop.f32.mrf.mxu0
      %7997 = vmatprep.mubr.bf16.mxu0 %v7783
      %7998 = vmatmul.mubr.bf16.gmra.mxu0 %v6977
      %v7999 = vpop.f32.mrf.mxu0
      %v8000 = vadd.f32 %v7499, %v7999
      %v8001 = vpop.f32.mrf.mxu0
      %v8002 = vpop.f32.mrf.mxu0
      %v8003 = vadd.f32 %v7502, %v8002
      %v8004 = vpop.f32.mrf.mxu0
      %8005 = vmatprep.mubr.bf16.mxu0 %v7786
      %8006 = vmatmul.mubr.bf16.gmra.mxu0 %v6979
      %v8007 = vpop.f32.mrf.mxu0
      %v8008 = vadd.f32 %v7507, %v8007
      %v8009 = vpop.f32.mrf.mxu0
      %v8010 = vpop.f32.mrf.mxu0
      %v8011 = vadd.f32 %v7510, %v8010
      %v8012 = vpop.f32.mrf.mxu0
      %8013 = vmatprep.mubr.bf16.mxu0 %v7789
      %8014 = vmatmul.mubr.bf16.gmra.mxu0 %v6981
      %v8015 = vpop.f32.mrf.mxu0
      %v8016 = vadd.f32 %v7515, %v8015
      %v8017 = vpop.f32.mrf.mxu0
      %v8018 = vpop.f32.mrf.mxu0
      %v8019 = vadd.f32 %v7518, %v8018
      %v8020 = vpop.f32.mrf.mxu0
      %8021 = vmatprep.mubr.bf16.mxu0 %v7792
      %8022 = vmatmul.mubr.bf16.gmra.mxu0 %v6983
      %v8023 = vpop.f32.mrf.mxu0
      %v8024 = vadd.f32 %v7523, %v8023
      %v8025 = vpop.f32.mrf.mxu0
      %v8026 = vpop.f32.mrf.mxu0
      %v8027 = vadd.f32 %v7526, %v8026
      %v8028 = vpop.f32.mrf.mxu0
      %8029 = vmatprep.mubr.bf16.mxu0 %v7795
      %8030 = vmatmul.mubr.bf16.gmra.mxu0 %v6985
      %v8031 = vpop.f32.mrf.mxu0
      %v8032 = vadd.f32 %v7531, %v8031
      %v8033 = vpop.f32.mrf.mxu0
      %v8034 = vpop.f32.mrf.mxu0
      %v8035 = vadd.f32 %v7534, %v8034
      %v8036 = vpop.f32.mrf.mxu0
      %8037 = vmatprep.mubr.bf16.mxu0 %v7798
      %8038 = vmatmul.mubr.bf16.gmra.mxu0 %v6987
      %v8039 = vpop.f32.mrf.mxu0
      %v8040 = vadd.f32 %v7539, %v8039
      %v8041 = vpop.f32.mrf.mxu0
      %v8042 = vpop.f32.mrf.mxu0
      %v8043 = vadd.f32 %v7542, %v8042
      %v8044 = vpop.f32.mrf.mxu0
      %8045 = vmatprep.mubr.bf16.mxu0 %v7801
      %8046 = vmatmul.mubr.bf16.gmra.mxu0 %v6989
      %v8047 = vpop.f32.mrf.mxu0
      %v8048 = vadd.f32 %v7547, %v8047
      %v8049 = vpop.f32.mrf.mxu0
      %v8050 = vpop.f32.mrf.mxu0
      %v8051 = vadd.f32 %v7550, %v8050
      %v8052 = vpop.f32.mrf.mxu0
      %8053 = vmatprep.mubr.bf16.mxu0 %v7804
      %8054 = vmatmul.mubr.bf16.gmra.mxu0 %v6991
      %v8055 = vpop.f32.mrf.mxu0
      %v8056 = vadd.f32 %v7555, %v8055
      %v8057 = vpop.f32.mrf.mxu0
      %v8058 = vpop.f32.mrf.mxu0
      %v8059 = vadd.f32 %v7558, %v8058
      %v8060 = vpop.f32.mrf.mxu0
      %8061 = vmatprep.mubr.bf16.mxu0 %v7807
      %8062 = vmatmul.mubr.bf16.gmra.mxu0 %v6993
      %v8063 = vpop.f32.mrf.mxu0
      %v8064 = vadd.f32 %v7563, %v8063
      %v8065 = vpop.f32.mrf.mxu0
      %v8066 = vpop.f32.mrf.mxu0
      %v8067 = vadd.f32 %v7566, %v8066
      %v8068 = vpop.f32.mrf.mxu0
      %8069 = vmatprep.mubr.bf16.mxu0 %v7810
      %8070 = vmatmul.mubr.bf16.gmra.mxu0 %v6995
      %v8071 = vpop.f32.mrf.mxu0
      %v8072 = vadd.f32 %v7571, %v8071
      %v8073 = vpop.f32.mrf.mxu0
      %v8074 = vpop.f32.mrf.mxu0
      %v8075 = vadd.f32 %v7574, %v8074
      %v8076 = vpop.f32.mrf.mxu0
      %8077 = vmatprep.mubr.bf16.mxu0 %v7813
      %8078 = vmatmul.mubr.bf16.gmra.mxu0 %v6997
      %v8079 = vpop.f32.mrf.mxu0
      %v8080 = vadd.f32 %v7579, %v8079
      %v8081 = vpop.f32.mrf.mxu0
      %v8082 = vpop.f32.mrf.mxu0
      %v8083 = vadd.f32 %v7582, %v8082
      %v8084 = vpop.f32.mrf.mxu0
      %8085 = vmatprep.mubr.bf16.mxu0 %v7816
      %8086 = vmatmul.mubr.bf16.gmra.mxu0 %v6999
      %v8087 = vpop.f32.mrf.mxu0
      %v8088 = vadd.f32 %v7587, %v8087
      %v8089 = vpop.f32.mrf.mxu0
      %v8090 = vpop.f32.mrf.mxu0
      %v8091 = vadd.f32 %v7590, %v8090
      %v8092 = vpop.f32.mrf.mxu0
      %8093 = vmatprep.mubr.bf16.mxu0 %v7819
      %8094 = vmatmul.mubr.bf16.gmra.mxu0 %v7001
      %v8095 = vpop.f32.mrf.mxu0
      %v8096 = vadd.f32 %v7595, %v8095
      %v8097 = vpop.f32.mrf.mxu0
      %v8098 = vpop.f32.mrf.mxu0
      %v8099 = vadd.f32 %v7598, %v8098
      %v8100 = vpop.f32.mrf.mxu0
      %8101 = vmatprep.mubr.bf16.mxu0 %v7822
      %8102 = vmatmul.mubr.bf16.gmra.mxu0 %v7003
      %v8103 = vpop.f32.mrf.mxu0
      %v8104 = vadd.f32 %v7603, %v8103
      %v8105 = vpop.f32.mrf.mxu0
      %v8106 = vpop.f32.mrf.mxu0
      %v8107 = vadd.f32 %v7606, %v8106
      %v8108 = vpop.f32.mrf.mxu0
      %8109 = vmatprep.mubr.bf16.mxu0 %v7825
      %8110 = vmatmul.mubr.bf16.gmra.mxu0 %v7005
      %v8111 = vpop.f32.mrf.mxu0
      %v8112 = vadd.f32 %v7611, %v8111
      %v8113 = vpop.f32.mrf.mxu0
      %v8114 = vpop.f32.mrf.mxu0
      %v8115 = vadd.f32 %v7614, %v8114
      %v8116 = vpop.f32.mrf.mxu0
      %8117 = vmatprep.mubr.bf16.mxu0 %v7828
      %8118 = vmatmul.mubr.bf16.gmra.mxu0 %v7007
      %v8119 = vpop.f32.mrf.mxu0
      %v8120 = vadd.f32 %v7619, %v8119
      %v8121 = vpop.f32.mrf.mxu0
      %v8122 = vpop.f32.mrf.mxu0
      %v8123 = vadd.f32 %v7622, %v8122
      %v8124 = vpop.f32.mrf.mxu0
      %8125 = vmatprep.mubr.bf16.mxu0 %v7831
      %8126 = vmatmul.mubr.bf16.gmra.mxu0 %v7009
      %v8127 = vpop.f32.mrf.mxu0
      %v8128 = vadd.f32 %v7627, %v8127
      %v8129 = vpop.f32.mrf.mxu0
      %v8130 = vpop.f32.mrf.mxu0
      %v8131 = vadd.f32 %v7630, %v8130
      %v8132 = vpop.f32.mrf.mxu0
      %8133 = vmatprep.mubr.bf16.mxu0 %v7834
      %8134 = vmatmul.mubr.bf16.gmra.mxu0 %v7011
      %v8135 = vpop.f32.mrf.mxu0
      %v8136 = vadd.f32 %v7635, %v8135
      %v8137 = vpop.f32.mrf.mxu0
      %v8138 = vpop.f32.mrf.mxu0
      %v8139 = vadd.f32 %v7638, %v8138
      %v8140 = vpop.f32.mrf.mxu0
      %8141 = vmatprep.mubr.bf16.mxu0 %v7837
      %8142 = vmatmul.mubr.bf16.gmra.mxu0 %v7013
      %v8143 = vpop.f32.mrf.mxu0
      %v8144 = vadd.f32 %v7643, %v8143
      %v8145 = vpop.f32.mrf.mxu0
      %v8146 = vpop.f32.mrf.mxu0
      %v8147 = vadd.f32 %v7646, %v8146
      %v8148 = vpop.f32.mrf.mxu0
      %8149 = vmatprep.mubr.bf16.mxu0 %v7840
      %8150 = vmatmul.mubr.bf16.gmra.mxu0 %v7015
      %v8151 = vpop.f32.mrf.mxu0
      %v8152 = vadd.f32 %v7651, %v8151
      %v8153 = vpop.f32.mrf.mxu0
      %v8154 = vpop.f32.mrf.mxu0
      %v8155 = vadd.f32 %v7654, %v8154
      %v8156 = vpop.f32.mrf.mxu0
      %8157 = vmatprep.mubr.bf16.mxu0 %v7843
      %8158 = vmatmul.mubr.bf16.gmra.mxu0 %v7017
      %v8159 = vpop.f32.mrf.mxu0
      %v8160 = vadd.f32 %v7659, %v8159
      %v8161 = vpop.f32.mrf.mxu0
      %v8162 = vpop.f32.mrf.mxu0
      %v8163 = vadd.f32 %v7662, %v8162
      %v8164 = vpop.f32.mrf.mxu0
      %8165 = vdwg.mxu0
      %v8166 = vld [vmem:[#allocation3 + $0x30] sm:$0xff]
      %v8167 = vld [vmem:[#allocation3 + $0x38] sm:$0xff]
      %v8168 = vld [vmem:[#allocation3 + $0x40] sm:$0xff]
      %v8169 = vld [vmem:[#allocation3 + $0x48] sm:$0xff]
      %v8170 = vld [vmem:[#allocation3 + $0x50] sm:$0xff]
      %v8171 = vld [vmem:[#allocation3 + $0x58] sm:$0xff]
      %v8172 = vld [vmem:[#allocation3 + $0x60] sm:$0xff]
      %v8173 = vld [vmem:[#allocation3 + $0x68] sm:$0xff]
      %v8174 = vld [vmem:[#allocation3 + $0x70] sm:$0xff]
      %v8175 = vld [vmem:[#allocation3 + $0x78] sm:$0xff]
      %v8176 = vld [vmem:[#allocation3 + $0x80] sm:$0xff]
      %v8177 = vld [vmem:[#allocation3 + $0x88] sm:$0xff]
      %v8178 = vld [vmem:[#allocation3 + $0x90] sm:$0xff]
      %v8179 = vld [vmem:[#allocation3 + $0x98] sm:$0xff]
      %v8180 = vld [vmem:[#allocation3 + $0xa0] sm:$0xff]
      %v8181 = vld [vmem:[#allocation3 + $0xa8] sm:$0xff]
      %v8182 = vld [vmem:[#allocation3 + $0xb0] sm:$0xff]
      %v8183 = vld [vmem:[#allocation3 + $0xb8] sm:$0xff]
      %v8184 = vld [vmem:[#allocation3 + $0xc0] sm:$0xff]
      %v8185 = vld [vmem:[#allocation3 + $0xc8] sm:$0xff]
      %v8186 = vld [vmem:[#allocation3 + $0xd0] sm:$0xff]
      %v8187 = vld [vmem:[#allocation3 + $0xd8] sm:$0xff]
      %v8188 = vld [vmem:[#allocation3 + $0xe0] sm:$0xff]
      %v8189 = vld [vmem:[#allocation3 + $0xe8] sm:$0xff]
      %v8190 = vld [vmem:[#allocation3 + $0xf0] sm:$0xff]
      %v8191 = vld [vmem:[#allocation3 + $0xf8] sm:$0xff]
      %v8192 = vld [vmem:[#allocation3 + $0x100] sm:$0xff]
      %v8193 = vld [vmem:[#allocation3 + $0x108] sm:$0xff]
      %v8194 = vld [vmem:[#allocation3 + $0x110] sm:$0xff]
      %v8195 = vld [vmem:[#allocation3 + $0x118] sm:$0xff]
      %v8196 = vld [vmem:[#allocation3 + $0x120] sm:$0xff]
      %v8197 = vld [vmem:[#allocation3 + $0x128] sm:$0xff]
      %v8198 = vld [vmem:[#allocation3 + $0x130] sm:$0xff]
      %v8199 = vld [vmem:[#allocation3 + $0x138] sm:$0xff]
      %v8200 = vld [vmem:[#allocation3 + $0x140] sm:$0xff]
      %v8201 = vld [vmem:[#allocation3 + $0x148] sm:$0xff]
      %v8202 = vld [vmem:[#allocation3 + $0x150] sm:$0xff]
      %v8203 = vld [vmem:[#allocation3 + $0x158] sm:$0xff]
      %v8204 = vld [vmem:[#allocation3 + $0x160] sm:$0xff]
      %v8205 = vld [vmem:[#allocation3 + $0x168] sm:$0xff]
      %v8206 = vld [vmem:[#allocation3 + $0x170] sm:$0xff]
      %v8207 = vld [vmem:[#allocation3 + $0x178] sm:$0xff]
      %v8208 = vld [vmem:[#allocation3 + $0x180] sm:$0xff]
      %v8209 = vld [vmem:[#allocation3 + $0x188] sm:$0xff]
      %v8210 = vld [vmem:[#allocation3 + $0x190] sm:$0xff]
      %v8211 = vld [vmem:[#allocation3 + $0x198] sm:$0xff]
      %v8212 = vld [vmem:[#allocation3 + $0x1a0] sm:$0xff]
      %v8213 = vld [vmem:[#allocation3 + $0x1a8] sm:$0xff]
      %v8214 = vld [vmem:[#allocation3 + $0x1b0] sm:$0xff]
      %v8215 = vld [vmem:[#allocation3 + $0x1b8] sm:$0xff]
      %v8216 = vld [vmem:[#allocation3 + $0x1c0] sm:$0xff]
      %v8217 = vld [vmem:[#allocation3 + $0x1c8] sm:$0xff]
      %v8218 = vld [vmem:[#allocation3 + $0x1d0] sm:$0xff]
      %v8219 = vld [vmem:[#allocation3 + $0x1d8] sm:$0xff]
      %v8220 = vld [vmem:[#allocation3 + $0x1e0] sm:$0xff]
      %v8221 = vld [vmem:[#allocation3 + $0x1e8] sm:$0xff]
      %v8222 = vld [vmem:[#allocation3 + $0x1f0] sm:$0xff]
      %v8223 = vld [vmem:[#allocation3 + $0x1f8] sm:$0xff]
      %v8224 = vld [vmem:[#allocation3 + $0x200] sm:$0xff]
      %v8225 = vld [vmem:[#allocation3 + $0x208] sm:$0xff]
      %v8226 = vld [vmem:[#allocation3 + $0x210] sm:$0xff]
      %v8227 = vld [vmem:[#allocation3 + $0x218] sm:$0xff]
      %v8228 = vld [vmem:[#allocation3 + $0x220] sm:$0xff]
      %v8229 = vld [vmem:[#allocation3 + $0x228] sm:$0xff]
      %v8230 = vld [vmem:[#allocation3 + $0x230] sm:$0xff]
      %v8231 = vld [vmem:[#allocation3 + $0x238] sm:$0xff]
      %v8232 = vld [vmem:[#allocation3 + $0x240] sm:$0xff]
      %v8233 = vld [vmem:[#allocation3 + $0x248] sm:$0xff]
      %v8234 = vld [vmem:[#allocation3 + $0x250] sm:$0xff]
      %v8235 = vld [vmem:[#allocation3 + $0x258] sm:$0xff]
      %v8236 = vld [vmem:[#allocation3 + $0x260] sm:$0xff]
      %v8237 = vld [vmem:[#allocation3 + $0x268] sm:$0xff]
      %v8238 = vld [vmem:[#allocation3 + $0x31] sm:$0xff]
      %v8239 = vld [vmem:[#allocation3 + $0x39] sm:$0xff]
      %v8240 = vld [vmem:[#allocation3 + $0x41] sm:$0xff]
      %v8241 = vld [vmem:[#allocation3 + $0x49] sm:$0xff]
      %v8242 = vld [vmem:[#allocation3 + $0x51] sm:$0xff]
      %v8243 = vld [vmem:[#allocation3 + $0x59] sm:$0xff]
      %v8244 = vld [vmem:[#allocation3 + $0x61] sm:$0xff]
      %v8245 = vld [vmem:[#allocation3 + $0x69] sm:$0xff]
      %v8246 = vld [vmem:[#allocation3 + $0x71] sm:$0xff]
      %v8247 = vld [vmem:[#allocation3 + $0x79] sm:$0xff]
      %v8248 = vld [vmem:[#allocation3 + $0x81] sm:$0xff]
      %v8249 = vld [vmem:[#allocation3 + $0x89] sm:$0xff]
      %v8250 = vld [vmem:[#allocation3 + $0x91] sm:$0xff]
      %v8251 = vld [vmem:[#allocation3 + $0x99] sm:$0xff]
      %v8252 = vld [vmem:[#allocation3 + $0xa1] sm:$0xff]
      %v8253 = vld [vmem:[#allocation3 + $0xa9] sm:$0xff]
      %v8254 = vld [vmem:[#allocation3 + $0xb1] sm:$0xff]
      %v8255 = vld [vmem:[#allocation3 + $0xb9] sm:$0xff]
      %v8256 = vld [vmem:[#allocation3 + $0xc1] sm:$0xff]
      %v8257 = vld [vmem:[#allocation3 + $0xc9] sm:$0xff]
      %v8258 = vld [vmem:[#allocation3 + $0xd1] sm:$0xff]
      %v8259 = vld [vmem:[#allocation3 + $0xd9] sm:$0xff]
      %v8260 = vld [vmem:[#allocation3 + $0xe1] sm:$0xff]
      %v8261 = vld [vmem:[#allocation3 + $0xe9] sm:$0xff]
      %v8262 = vld [vmem:[#allocation3 + $0xf1] sm:$0xff]
      %v8263 = vld [vmem:[#allocation3 + $0xf9] sm:$0xff]
      %v8264 = vld [vmem:[#allocation3 + $0x101] sm:$0xff]
      %v8265 = vld [vmem:[#allocation3 + $0x109] sm:$0xff]
      %v8266 = vld [vmem:[#allocation3 + $0x111] sm:$0xff]
      %v8267 = vld [vmem:[#allocation3 + $0x119] sm:$0xff]
      %v8268 = vld [vmem:[#allocation3 + $0x121] sm:$0xff]
      %v8269 = vld [vmem:[#allocation3 + $0x129] sm:$0xff]
      %v8270 = vld [vmem:[#allocation3 + $0x131] sm:$0xff]
      %v8271 = vld [vmem:[#allocation3 + $0x139] sm:$0xff]
      %v8272 = vld [vmem:[#allocation3 + $0x141] sm:$0xff]
      %v8273 = vld [vmem:[#allocation3 + $0x149] sm:$0xff]
      %v8274 = vld [vmem:[#allocation3 + $0x151] sm:$0xff]
      %v8275 = vld [vmem:[#allocation3 + $0x159] sm:$0xff]
      %v8276 = vld [vmem:[#allocation3 + $0x161] sm:$0xff]
      %v8277 = vld [vmem:[#allocation3 + $0x169] sm:$0xff]
      %v8278 = vld [vmem:[#allocation3 + $0x171] sm:$0xff]
      %v8279 = vld [vmem:[#allocation3 + $0x179] sm:$0xff]
      %v8280 = vld [vmem:[#allocation3 + $0x181] sm:$0xff]
      %v8281 = vld [vmem:[#allocation3 + $0x189] sm:$0xff]
      %v8282 = vld [vmem:[#allocation3 + $0x191] sm:$0xff]
      %v8283 = vld [vmem:[#allocation3 + $0x199] sm:$0xff]
      %v8284 = vld [vmem:[#allocation3 + $0x1a1] sm:$0xff]
      %v8285 = vld [vmem:[#allocation3 + $0x1a9] sm:$0xff]
      %v8286 = vld [vmem:[#allocation3 + $0x1b1] sm:$0xff]
      %v8287 = vld [vmem:[#allocation3 + $0x1b9] sm:$0xff]
      %v8288 = vld [vmem:[#allocation3 + $0x1c1] sm:$0xff]
      %v8289 = vld [vmem:[#allocation3 + $0x1c9] sm:$0xff]
      %v8290 = vld [vmem:[#allocation3 + $0x1d1] sm:$0xff]
      %v8291 = vld [vmem:[#allocation3 + $0x1d9] sm:$0xff]
      %v8292 = vld [vmem:[#allocation3 + $0x1e1] sm:$0xff]
      %v8293 = vld [vmem:[#allocation3 + $0x1e9] sm:$0xff]
      %v8294 = vld [vmem:[#allocation3 + $0x1f1] sm:$0xff]
      %v8295 = vld [vmem:[#allocation3 + $0x1f9] sm:$0xff]
      %v8296 = vld [vmem:[#allocation3 + $0x201] sm:$0xff]
      %v8297 = vld [vmem:[#allocation3 + $0x209] sm:$0xff]
      %v8298 = vld [vmem:[#allocation3 + $0x211] sm:$0xff]
      %v8299 = vld [vmem:[#allocation3 + $0x219] sm:$0xff]
      %v8300 = vld [vmem:[#allocation3 + $0x221] sm:$0xff]
      %v8301 = vld [vmem:[#allocation3 + $0x229] sm:$0xff]
      %v8302 = vld [vmem:[#allocation3 + $0x231] sm:$0xff]
      %v8303 = vld [vmem:[#allocation3 + $0x239] sm:$0xff]
      %v8304 = vld [vmem:[#allocation3 + $0x241] sm:$0xff]
      %v8305 = vld [vmem:[#allocation3 + $0x249] sm:$0xff]
      %v8306 = vld [vmem:[#allocation3 + $0x251] sm:$0xff]
      %v8307 = vld [vmem:[#allocation3 + $0x259] sm:$0xff]
      %v8308 = vld [vmem:[#allocation3 + $0x261] sm:$0xff]
      %v8309 = vld [vmem:[#allocation3 + $0x269] sm:$0xff]
      %v8310 = vld [vmem:[#allocation3 + $0x32] sm:$0xff]
      %v8311 = vld [vmem:[#allocation3 + $0x3a] sm:$0xff]
      %v8312 = vld [vmem:[#allocation3 + $0x42] sm:$0xff]
      %v8313 = vld [vmem:[#allocation3 + $0x4a] sm:$0xff]
      %v8314 = vld [vmem:[#allocation3 + $0x52] sm:$0xff]
      %v8315 = vld [vmem:[#allocation3 + $0x5a] sm:$0xff]
      %v8316 = vld [vmem:[#allocation3 + $0x62] sm:$0xff]
      %v8317 = vld [vmem:[#allocation3 + $0x6a] sm:$0xff]
      %v8318 = vld [vmem:[#allocation3 + $0x72] sm:$0xff]
      %v8319 = vld [vmem:[#allocation3 + $0x7a] sm:$0xff]
      %v8320 = vld [vmem:[#allocation3 + $0x82] sm:$0xff]
      %v8321 = vld [vmem:[#allocation3 + $0x8a] sm:$0xff]
      %v8322 = vld [vmem:[#allocation3 + $0x92] sm:$0xff]
      %v8323 = vld [vmem:[#allocation3 + $0x9a] sm:$0xff]
      %v8324 = vld [vmem:[#allocation3 + $0xa2] sm:$0xff]
      %v8325 = vld [vmem:[#allocation3 + $0xaa] sm:$0xff]
      %v8326 = vld [vmem:[#allocation3 + $0xb2] sm:$0xff]
      %v8327 = vld [vmem:[#allocation3 + $0xba] sm:$0xff]
      %v8328 = vld [vmem:[#allocation3 + $0xc2] sm:$0xff]
      %v8329 = vld [vmem:[#allocation3 + $0xca] sm:$0xff]
      %v8330 = vld [vmem:[#allocation3 + $0xd2] sm:$0xff]
      %v8331 = vld [vmem:[#allocation3 + $0xda] sm:$0xff]
      %v8332 = vld [vmem:[#allocation3 + $0xe2] sm:$0xff]
      %v8333 = vld [vmem:[#allocation3 + $0xea] sm:$0xff]
      %v8334 = vld [vmem:[#allocation3 + $0xf2] sm:$0xff]
      %v8335 = vld [vmem:[#allocation3 + $0xfa] sm:$0xff]
      %v8336 = vld [vmem:[#allocation3 + $0x102] sm:$0xff]
      %v8337 = vld [vmem:[#allocation3 + $0x10a] sm:$0xff]
      %v8338 = vld [vmem:[#allocation3 + $0x112] sm:$0xff]
      %v8339 = vld [vmem:[#allocation3 + $0x11a] sm:$0xff]
      %v8340 = vld [vmem:[#allocation3 + $0x122] sm:$0xff]
      %v8341 = vld [vmem:[#allocation3 + $0x12a] sm:$0xff]
      %v8342 = vld [vmem:[#allocation3 + $0x132] sm:$0xff]
      %v8343 = vld [vmem:[#allocation3 + $0x13a] sm:$0xff]
      %v8344 = vld [vmem:[#allocation3 + $0x142] sm:$0xff]
      %v8345 = vld [vmem:[#allocation3 + $0x14a] sm:$0xff]
      %v8346 = vld [vmem:[#allocation3 + $0x152] sm:$0xff]
      %v8347 = vld [vmem:[#allocation3 + $0x15a] sm:$0xff]
      %v8348 = vld [vmem:[#allocation3 + $0x162] sm:$0xff]
      %v8349 = vld [vmem:[#allocation3 + $0x16a] sm:$0xff]
      %v8350 = vld [vmem:[#allocation3 + $0x172] sm:$0xff]
      %v8351 = vld [vmem:[#allocation3 + $0x17a] sm:$0xff]
      %v8352 = vld [vmem:[#allocation3 + $0x182] sm:$0xff]
      %v8353 = vld [vmem:[#allocation3 + $0x18a] sm:$0xff]
      %v8354 = vld [vmem:[#allocation3 + $0x192] sm:$0xff]
      %v8355 = vld [vmem:[#allocation3 + $0x19a] sm:$0xff]
      %v8356 = vld [vmem:[#allocation3 + $0x1a2] sm:$0xff]
      %v8357 = vld [vmem:[#allocation3 + $0x1aa] sm:$0xff]
      %v8358 = vld [vmem:[#allocation3 + $0x1b2] sm:$0xff]
      %v8359 = vld [vmem:[#allocation3 + $0x1ba] sm:$0xff]
      %v8360 = vld [vmem:[#allocation3 + $0x1c2] sm:$0xff]
      %v8361 = vld [vmem:[#allocation3 + $0x1ca] sm:$0xff]
      %v8362 = vld [vmem:[#allocation3 + $0x1d2] sm:$0xff]
      %v8363 = vld [vmem:[#allocation3 + $0x1da] sm:$0xff]
      %v8364 = vld [vmem:[#allocation3 + $0x1e2] sm:$0xff]
      %v8365 = vld [vmem:[#allocation3 + $0x1ea] sm:$0xff]
      %v8366 = vld [vmem:[#allocation3 + $0x1f2] sm:$0xff]
      %v8367 = vld [vmem:[#allocation3 + $0x1fa] sm:$0xff]
      %v8368 = vld [vmem:[#allocation3 + $0x202] sm:$0xff]
      %v8369 = vld [vmem:[#allocation3 + $0x20a] sm:$0xff]
      %v8370 = vld [vmem:[#allocation3 + $0x212] sm:$0xff]
      %v8371 = vld [vmem:[#allocation3 + $0x21a] sm:$0xff]
      %v8372 = vld [vmem:[#allocation3 + $0x222] sm:$0xff]
      %v8373 = vld [vmem:[#allocation3 + $0x22a] sm:$0xff]
      %v8374 = vld [vmem:[#allocation3 + $0x232] sm:$0xff]
      %v8375 = vld [vmem:[#allocation3 + $0x23a] sm:$0xff]
      %v8376 = vld [vmem:[#allocation3 + $0x242] sm:$0xff]
      %v8377 = vld [vmem:[#allocation3 + $0x24a] sm:$0xff]
      %v8378 = vld [vmem:[#allocation3 + $0x252] sm:$0xff]
      %v8379 = vld [vmem:[#allocation3 + $0x25a] sm:$0xff]
      %v8380 = vld [vmem:[#allocation3 + $0x262] sm:$0xff]
      %v8381 = vld [vmem:[#allocation3 + $0x26a] sm:$0xff]
      %8454 = vrot.lane.b32.xlu0 %v8238, 64
      %v8455 = vpop.permute.xlu0 %8454
      %8456 = vrot.lane.b32.xlu0 %v8239, 64
      %v8457 = vpop.permute.xlu0 %8456
      %8458 = vrot.lane.b32.xlu0 %v8240, 64
      %v8459 = vpop.permute.xlu0 %8458
      %8460 = vrot.lane.b32.xlu0 %v8241, 64
      %v8461 = vpop.permute.xlu0 %8460
      %8462 = vrot.lane.b32.xlu0 %v8242, 64
      %v8463 = vpop.permute.xlu0 %8462
      %8464 = vrot.lane.b32.xlu0 %v8243, 64
      %v8465 = vpop.permute.xlu0 %8464
      %8466 = vrot.lane.b32.xlu0 %v8244, 64
      %v8467 = vpop.permute.xlu0 %8466
      %8468 = vrot.lane.b32.xlu0 %v8245, 64
      %v8469 = vpop.permute.xlu0 %8468
      %8470 = vrot.lane.b32.xlu0 %v8246, 64
      %v8471 = vpop.permute.xlu0 %8470
      %8472 = vrot.lane.b32.xlu0 %v8247, 64
      %v8473 = vpop.permute.xlu0 %8472
      %8474 = vrot.lane.b32.xlu0 %v8248, 64
      %v8475 = vpop.permute.xlu0 %8474
      %8476 = vrot.lane.b32.xlu0 %v8249, 64
      %v8477 = vpop.permute.xlu0 %8476
      %8478 = vrot.lane.b32.xlu0 %v8250, 64
      %v8479 = vpop.permute.xlu0 %8478
      %8480 = vrot.lane.b32.xlu0 %v8251, 64
      %v8481 = vpop.permute.xlu0 %8480
      %8482 = vrot.lane.b32.xlu0 %v8252, 64
      %v8483 = vpop.permute.xlu0 %8482
      %8484 = vrot.lane.b32.xlu0 %v8253, 64
      %v8485 = vpop.permute.xlu0 %8484
      %8486 = vrot.lane.b32.xlu0 %v8254, 64
      %v8487 = vpop.permute.xlu0 %8486
      %8488 = vrot.lane.b32.xlu0 %v8255, 64
      %v8489 = vpop.permute.xlu0 %8488
      %8490 = vrot.lane.b32.xlu0 %v8256, 64
      %v8491 = vpop.permute.xlu0 %8490
      %8492 = vrot.lane.b32.xlu0 %v8257, 64
      %v8493 = vpop.permute.xlu0 %8492
      %8494 = vrot.lane.b32.xlu0 %v8258, 64
      %v8495 = vpop.permute.xlu0 %8494
      %8496 = vrot.lane.b32.xlu0 %v8259, 64
      %v8497 = vpop.permute.xlu0 %8496
      %8498 = vrot.lane.b32.xlu0 %v8260, 64
      %v8499 = vpop.permute.xlu0 %8498
      %8500 = vrot.lane.b32.xlu0 %v8261, 64
      %v8501 = vpop.permute.xlu0 %8500
      %8502 = vrot.lane.b32.xlu0 %v8262, 64
      %v8503 = vpop.permute.xlu0 %8502
      %8504 = vrot.lane.b32.xlu0 %v8263, 64
      %v8505 = vpop.permute.xlu0 %8504
      %8506 = vrot.lane.b32.xlu0 %v8264, 64
      %v8507 = vpop.permute.xlu0 %8506
      %8508 = vrot.lane.b32.xlu0 %v8265, 64
      %v8509 = vpop.permute.xlu0 %8508
      %8510 = vrot.lane.b32.xlu0 %v8266, 64
      %v8511 = vpop.permute.xlu0 %8510
      %8512 = vrot.lane.b32.xlu0 %v8267, 64
      %v8513 = vpop.permute.xlu0 %8512
      %8514 = vrot.lane.b32.xlu0 %v8268, 64
      %v8515 = vpop.permute.xlu0 %8514
      %8516 = vrot.lane.b32.xlu0 %v8269, 64
      %v8517 = vpop.permute.xlu0 %8516
      %8518 = vrot.lane.b32.xlu0 %v8270, 64
      %v8519 = vpop.permute.xlu0 %8518
      %8520 = vrot.lane.b32.xlu0 %v8271, 64
      %v8521 = vpop.permute.xlu0 %8520
      %8522 = vrot.lane.b32.xlu0 %v8272, 64
      %v8523 = vpop.permute.xlu0 %8522
      %8524 = vrot.lane.b32.xlu0 %v8273, 64
      %v8525 = vpop.permute.xlu0 %8524
      %8526 = vrot.lane.b32.xlu0 %v8274, 64
      %v8527 = vpop.permute.xlu0 %8526
      %8528 = vrot.lane.b32.xlu0 %v8275, 64
      %v8529 = vpop.permute.xlu0 %8528
      %8530 = vrot.lane.b32.xlu0 %v8276, 64
      %v8531 = vpop.permute.xlu0 %8530
      %8532 = vrot.lane.b32.xlu0 %v8277, 64
      %v8533 = vpop.permute.xlu0 %8532
      %8534 = vrot.lane.b32.xlu0 %v8278, 64
      %v8535 = vpop.permute.xlu0 %8534
      %8536 = vrot.lane.b32.xlu0 %v8279, 64
      %v8537 = vpop.permute.xlu0 %8536
      %8538 = vrot.lane.b32.xlu0 %v8280, 64
      %v8539 = vpop.permute.xlu0 %8538
      %8540 = vrot.lane.b32.xlu0 %v8281, 64
      %v8541 = vpop.permute.xlu0 %8540
      %8542 = vrot.lane.b32.xlu0 %v8282, 64
      %v8543 = vpop.permute.xlu0 %8542
      %8544 = vrot.lane.b32.xlu0 %v8283, 64
      %v8545 = vpop.permute.xlu0 %8544
      %8546 = vrot.lane.b32.xlu0 %v8284, 64
      %v8547 = vpop.permute.xlu0 %8546
      %8548 = vrot.lane.b32.xlu0 %v8285, 64
      %v8549 = vpop.permute.xlu0 %8548
      %8550 = vrot.lane.b32.xlu0 %v8286, 64
      %v8551 = vpop.permute.xlu0 %8550
      %8552 = vrot.lane.b32.xlu0 %v8287, 64
      %v8553 = vpop.permute.xlu0 %8552
      %8554 = vrot.lane.b32.xlu0 %v8288, 64
      %v8555 = vpop.permute.xlu0 %8554
      %8556 = vrot.lane.b32.xlu0 %v8289, 64
      %v8557 = vpop.permute.xlu0 %8556
      %8558 = vrot.lane.b32.xlu0 %v8290, 64
      %v8559 = vpop.permute.xlu0 %8558
      %8560 = vrot.lane.b32.xlu0 %v8291, 64
      %v8561 = vpop.permute.xlu0 %8560
      %8562 = vrot.lane.b32.xlu0 %v8292, 64
      %v8563 = vpop.permute.xlu0 %8562
      %8564 = vrot.lane.b32.xlu0 %v8293, 64
      %v8565 = vpop.permute.xlu0 %8564
      %8566 = vrot.lane.b32.xlu0 %v8294, 64
      %v8567 = vpop.permute.xlu0 %8566
      %8568 = vrot.lane.b32.xlu0 %v8295, 64
      %v8569 = vpop.permute.xlu0 %8568
      %8570 = vrot.lane.b32.xlu0 %v8296, 64
      %v8571 = vpop.permute.xlu0 %8570
      %8572 = vrot.lane.b32.xlu0 %v8297, 64
      %v8573 = vpop.permute.xlu0 %8572
      %8574 = vrot.lane.b32.xlu0 %v8298, 64
      %v8575 = vpop.permute.xlu0 %8574
      %8576 = vrot.lane.b32.xlu0 %v8299, 64
      %v8577 = vpop.permute.xlu0 %8576
      %8578 = vrot.lane.b32.xlu0 %v8300, 64
      %v8579 = vpop.permute.xlu0 %8578
      %8580 = vrot.lane.b32.xlu0 %v8301, 64
      %v8581 = vpop.permute.xlu0 %8580
      %8582 = vrot.lane.b32.xlu0 %v8302, 64
      %v8583 = vpop.permute.xlu0 %8582
      %8584 = vrot.lane.b32.xlu0 %v8303, 64
      %v8585 = vpop.permute.xlu0 %8584
      %8586 = vrot.lane.b32.xlu0 %v8304, 64
      %v8587 = vpop.permute.xlu0 %8586
      %8588 = vrot.lane.b32.xlu0 %v8305, 64
      %v8589 = vpop.permute.xlu0 %8588
      %8590 = vrot.lane.b32.xlu0 %v8306, 64
      %v8591 = vpop.permute.xlu0 %8590
      %8592 = vrot.lane.b32.xlu0 %v8307, 64
      %v8593 = vpop.permute.xlu0 %8592
      %8594 = vrot.lane.b32.xlu0 %v8308, 64
      %v8595 = vpop.permute.xlu0 %8594
      %8596 = vrot.lane.b32.xlu0 %v8309, 64
      %v8597 = vpop.permute.xlu0 %8596
      %v8670 = vsel %vm449, %v8166, %v8455
      %v8671 = vsel %vm449, %v8167, %v8457
      %v8672 = vsel %vm449, %v8168, %v8459
      %v8673 = vsel %vm449, %v8169, %v8461
      %v8674 = vsel %vm449, %v8170, %v8463
      %v8675 = vsel %vm449, %v8171, %v8465
      %v8676 = vsel %vm449, %v8172, %v8467
      %v8677 = vsel %vm449, %v8173, %v8469
      %v8678 = vsel %vm449, %v8174, %v8471
      %v8679 = vsel %vm449, %v8175, %v8473
      %v8680 = vsel %vm449, %v8176, %v8475
      %v8681 = vsel %vm449, %v8177, %v8477
      %v8682 = vsel %vm449, %v8178, %v8479
      %v8683 = vsel %vm449, %v8179, %v8481
      %v8684 = vsel %vm449, %v8180, %v8483
      %v8685 = vsel %vm449, %v8181, %v8485
      %v8686 = vsel %vm449, %v8182, %v8487
      %v8687 = vsel %vm449, %v8183, %v8489
      %v8688 = vsel %vm449, %v8184, %v8491
      %v8689 = vsel %vm449, %v8185, %v8493
      %v8690 = vsel %vm449, %v8186, %v8495
      %v8691 = vsel %vm449, %v8187, %v8497
      %v8692 = vsel %vm449, %v8188, %v8499
      %v8693 = vsel %vm449, %v8189, %v8501
      %v8694 = vsel %vm449, %v8190, %v8503
      %v8695 = vsel %vm449, %v8191, %v8505
      %v8696 = vsel %vm449, %v8192, %v8507
      %v8697 = vsel %vm449, %v8193, %v8509
      %v8698 = vsel %vm449, %v8194, %v8511
      %v8699 = vsel %vm449, %v8195, %v8513
      %v8700 = vsel %vm449, %v8196, %v8515
      %v8701 = vsel %vm449, %v8197, %v8517
      %v8702 = vsel %vm449, %v8198, %v8519
      %v8703 = vsel %vm449, %v8199, %v8521
      %v8704 = vsel %vm449, %v8200, %v8523
      %v8705 = vsel %vm449, %v8201, %v8525
      %v8706 = vsel %vm449, %v8202, %v8527
      %v8707 = vsel %vm449, %v8203, %v8529
      %v8708 = vsel %vm449, %v8204, %v8531
      %v8709 = vsel %vm449, %v8205, %v8533
      %v8710 = vsel %vm449, %v8206, %v8535
      %v8711 = vsel %vm449, %v8207, %v8537
      %v8712 = vsel %vm449, %v8208, %v8539
      %v8713 = vsel %vm449, %v8209, %v8541
      %v8714 = vsel %vm449, %v8210, %v8543
      %v8715 = vsel %vm449, %v8211, %v8545
      %v8716 = vsel %vm449, %v8212, %v8547
      %v8717 = vsel %vm449, %v8213, %v8549
      %v8718 = vsel %vm449, %v8214, %v8551
      %v8719 = vsel %vm449, %v8215, %v8553
      %v8720 = vsel %vm449, %v8216, %v8555
      %v8721 = vsel %vm449, %v8217, %v8557
      %v8722 = vsel %vm449, %v8218, %v8559
      %v8723 = vsel %vm449, %v8219, %v8561
      %v8724 = vsel %vm449, %v8220, %v8563
      %v8725 = vsel %vm449, %v8221, %v8565
      %v8726 = vsel %vm449, %v8222, %v8567
      %v8727 = vsel %vm449, %v8223, %v8569
      %v8728 = vsel %vm449, %v8224, %v8571
      %v8729 = vsel %vm449, %v8225, %v8573
      %v8730 = vsel %vm449, %v8226, %v8575
      %v8731 = vsel %vm449, %v8227, %v8577
      %v8732 = vsel %vm449, %v8228, %v8579
      %v8733 = vsel %vm449, %v8229, %v8581
      %v8734 = vsel %vm449, %v8230, %v8583
      %v8735 = vsel %vm449, %v8231, %v8585
      %v8736 = vsel %vm449, %v8232, %v8587
      %v8737 = vsel %vm449, %v8233, %v8589
      %v8738 = vsel %vm449, %v8234, %v8591
      %v8739 = vsel %vm449, %v8235, %v8593
      %v8740 = vsel %vm449, %v8236, %v8595
      %v8741 = vsel %vm449, %v8237, %v8597
      %v8742 = vpack.c.bf16 %v8671, %v8670
      %v8743 = vpack.c.bf16 %v8311, %v8310
      %v8744 = vpack.c.bf16 %v8673, %v8672
      %v8745 = vpack.c.bf16 %v8313, %v8312
      %v8746 = vpack.c.bf16 %v8675, %v8674
      %v8747 = vpack.c.bf16 %v8315, %v8314
      %v8748 = vpack.c.bf16 %v8677, %v8676
      %v8749 = vpack.c.bf16 %v8317, %v8316
      %v8750 = vpack.c.bf16 %v8679, %v8678
      %v8751 = vpack.c.bf16 %v8319, %v8318
      %v8752 = vpack.c.bf16 %v8681, %v8680
      %v8753 = vpack.c.bf16 %v8321, %v8320
      %v8754 = vpack.c.bf16 %v8683, %v8682
      %v8755 = vpack.c.bf16 %v8323, %v8322
      %v8756 = vpack.c.bf16 %v8685, %v8684
      %v8757 = vpack.c.bf16 %v8325, %v8324
      %v8758 = vpack.c.bf16 %v8687, %v8686
      %v8759 = vpack.c.bf16 %v8327, %v8326
      %v8760 = vpack.c.bf16 %v8689, %v8688
      %v8761 = vpack.c.bf16 %v8329, %v8328
      %v8762 = vpack.c.bf16 %v8691, %v8690
      %v8763 = vpack.c.bf16 %v8331, %v8330
      %v8764 = vpack.c.bf16 %v8693, %v8692
      %v8765 = vpack.c.bf16 %v8333, %v8332
      %v8766 = vpack.c.bf16 %v8695, %v8694
      %v8767 = vpack.c.bf16 %v8335, %v8334
      %v8768 = vpack.c.bf16 %v8697, %v8696
      %v8769 = vpack.c.bf16 %v8337, %v8336
      %v8770 = vpack.c.bf16 %v8699, %v8698
      %v8771 = vpack.c.bf16 %v8339, %v8338
      %v8772 = vpack.c.bf16 %v8701, %v8700
      %v8773 = vpack.c.bf16 %v8341, %v8340
      %v8774 = vpack.c.bf16 %v8703, %v8702
      %v8775 = vpack.c.bf16 %v8343, %v8342
      %v8776 = vpack.c.bf16 %v8705, %v8704
      %v8777 = vpack.c.bf16 %v8345, %v8344
      %v8778 = vpack.c.bf16 %v8707, %v8706
      %v8779 = vpack.c.bf16 %v8347, %v8346
      %v8780 = vpack.c.bf16 %v8709, %v8708
      %v8781 = vpack.c.bf16 %v8349, %v8348
      %v8782 = vpack.c.bf16 %v8711, %v8710
      %v8783 = vpack.c.bf16 %v8351, %v8350
      %v8784 = vpack.c.bf16 %v8713, %v8712
      %v8785 = vpack.c.bf16 %v8353, %v8352
      %v8786 = vpack.c.bf16 %v8715, %v8714
      %v8787 = vpack.c.bf16 %v8355, %v8354
      %v8788 = vpack.c.bf16 %v8717, %v8716
      %v8789 = vpack.c.bf16 %v8357, %v8356
      %v8790 = vpack.c.bf16 %v8719, %v8718
      %v8791 = vpack.c.bf16 %v8359, %v8358
      %v8792 = vpack.c.bf16 %v8721, %v8720
      %v8793 = vpack.c.bf16 %v8361, %v8360
      %v8794 = vpack.c.bf16 %v8723, %v8722
      %v8795 = vpack.c.bf16 %v8363, %v8362
      %v8796 = vpack.c.bf16 %v8725, %v8724
      %v8797 = vpack.c.bf16 %v8365, %v8364
      %v8798 = vpack.c.bf16 %v8727, %v8726
      %v8799 = vpack.c.bf16 %v8367, %v8366
      %v8800 = vpack.c.bf16 %v8729, %v8728
      %v8801 = vpack.c.bf16 %v8369, %v8368
      %v8802 = vpack.c.bf16 %v8731, %v8730
      %v8803 = vpack.c.bf16 %v8371, %v8370
      %v8804 = vpack.c.bf16 %v8733, %v8732
      %v8805 = vpack.c.bf16 %v8373, %v8372
      %v8806 = vpack.c.bf16 %v8735, %v8734
      %v8807 = vpack.c.bf16 %v8375, %v8374
      %v8808 = vpack.c.bf16 %v8737, %v8736
      %v8809 = vpack.c.bf16 %v8377, %v8376
      %v8810 = vpack.c.bf16 %v8739, %v8738
      %v8811 = vpack.c.bf16 %v8379, %v8378
      %v8812 = vpack.c.bf16 %v8741, %v8740
      %v8813 = vpack.c.bf16 %v8381, %v8380
      %s8814 = scalar_lea.vmem %s5, 192
      %v8815 = vld [vmem:[%s8814] sm:$0xf]
      %v8816 = vld [vmem:[%s8814 + $0x4] sm:$0xf]
      %v8817 = vld [vmem:[%s8814 + $0x8] sm:$0xf]
      %v8818 = vld [vmem:[%s8814 + $0xc] sm:$0xf]
      %v8819 = vld [vmem:[%s8814 + $0x10] sm:$0xf]
      %v8820 = vld [vmem:[%s8814 + $0x14] sm:$0xf]
      %v8821 = vld [vmem:[%s8814 + $0x18] sm:$0xf]
      %v8822 = vld [vmem:[%s8814 + $0x1c] sm:$0xf]
      %v8823 = vld [vmem:[%s8814 + $0x20] sm:$0xf]
      %v8824 = vld [vmem:[%s8814 + $0x24] sm:$0xf]
      %v8825 = vld [vmem:[%s8814 + $0x28] sm:$0xf]
      %v8826 = vld [vmem:[%s8814 + $0x2c] sm:$0xf]
      %v8827 = vld [vmem:[%s8814 + $0x30] sm:$0xf]
      %v8828 = vld [vmem:[%s8814 + $0x34] sm:$0xf]
      %v8829 = vld [vmem:[%s8814 + $0x38] sm:$0xf]
      %v8830 = vld [vmem:[%s8814 + $0x3c] sm:$0xf]
      %v8831 = vld [vmem:[%s8814 + $0x40] sm:$0xf]
      %v8832 = vld [vmem:[%s8814 + $0x44] sm:$0xf]
      %v8833 = vld [vmem:[%s8814 + $0x48] sm:$0xf]
      %v8834 = vld [vmem:[%s8814 + $0x4c] sm:$0xf]
      %v8835 = vld [vmem:[%s8814 + $0x50] sm:$0xf]
      %v8836 = vld [vmem:[%s8814 + $0x54] sm:$0xf]
      %v8837 = vld [vmem:[%s8814 + $0x58] sm:$0xf]
      %v8838 = vld [vmem:[%s8814 + $0x5c] sm:$0xf]
      %v8863 = vunpack.c.l.b16 %v8815
      %v8864 = vunpack.c.l.b16 %v8816
      %v8865 = vunpack.c.l.b16 %v8817
      %v8866 = vunpack.c.l.b16 %v8818
      %v8867 = vunpack.c.l.b16 %v8819
      %v8868 = vunpack.c.l.b16 %v8820
      %v8869 = vunpack.c.l.b16 %v8821
      %v8870 = vunpack.c.l.b16 %v8822
      %v8871 = vunpack.c.l.b16 %v8823
      %v8872 = vunpack.c.l.b16 %v8824
      %v8873 = vunpack.c.l.b16 %v8825
      %v8874 = vunpack.c.l.b16 %v8826
      %v8875 = vunpack.c.l.b16 %v8827
      %v8876 = vunpack.c.l.b16 %v8828
      %v8877 = vunpack.c.l.b16 %v8829
      %v8878 = vunpack.c.l.b16 %v8830
      %v8879 = vunpack.c.l.b16 %v8831
      %v8880 = vunpack.c.l.b16 %v8832
      %v8881 = vunpack.c.l.b16 %v8833
      %v8882 = vunpack.c.l.b16 %v8834
      %v8883 = vunpack.c.l.b16 %v8835
      %v8884 = vunpack.c.l.b16 %v8836
      %v8885 = vunpack.c.l.b16 %v8837
      %v8886 = vunpack.c.l.b16 %v8838
      %v8887 = vpack.c.b16 %v8864, %v8863
      %v8888 = vpack.c.b16 %v8866, %v8865
      %v8889 = vpack.c.b16 %v8868, %v8867
      %v8890 = vpack.c.b16 %v8870, %v8869
      %v8891 = vpack.c.b16 %v8872, %v8871
      %v8892 = vpack.c.b16 %v8874, %v8873
      %v8893 = vpack.c.b16 %v8876, %v8875
      %v8894 = vpack.c.b16 %v8878, %v8877
      %v8895 = vpack.c.b16 %v8880, %v8879
      %v8896 = vpack.c.b16 %v8882, %v8881
      %v8897 = vpack.c.b16 %v8884, %v8883
      %v8898 = vpack.c.b16 %v8886, %v8885
      %v8912 = vsel %vm449, %v8743, 0
      %v8915 = vsel %vm449, %v8745, 0
      %v8918 = vsel %vm449, %v8747, 0
      %v8921 = vsel %vm449, %v8749, 0
      %v8924 = vsel %vm449, %v8751, 0
      %v8927 = vsel %vm449, %v8753, 0
      %v8930 = vsel %vm449, %v8755, 0
      %v8933 = vsel %vm449, %v8757, 0
      %v8936 = vsel %vm449, %v8759, 0
      %v8939 = vsel %vm449, %v8761, 0
      %v8942 = vsel %vm449, %v8763, 0
      %v8945 = vsel %vm449, %v8765, 0
      %v8948 = vsel %vm449, %v8767, 0
      %v8951 = vsel %vm449, %v8769, 0
      %v8954 = vsel %vm449, %v8771, 0
      %v8957 = vsel %vm449, %v8773, 0
      %v8960 = vsel %vm449, %v8775, 0
      %v8963 = vsel %vm449, %v8777, 0
      %v8966 = vsel %vm449, %v8779, 0
      %v8969 = vsel %vm449, %v8781, 0
      %v8972 = vsel %vm449, %v8783, 0
      %v8975 = vsel %vm449, %v8785, 0
      %v8978 = vsel %vm449, %v8787, 0
      %v8981 = vsel %vm449, %v8789, 0
      %v8984 = vsel %vm449, %v8791, 0
      %v8987 = vsel %vm449, %v8793, 0
      %v8990 = vsel %vm449, %v8795, 0
      %v8993 = vsel %vm449, %v8797, 0
      %v8996 = vsel %vm449, %v8799, 0
      %v8999 = vsel %vm449, %v8801, 0
      %v9002 = vsel %vm449, %v8803, 0
      %v9005 = vsel %vm449, %v8805, 0
      %v9008 = vsel %vm449, %v8807, 0
      %v9011 = vsel %vm449, %v8809, 0
      %v9014 = vsel %vm449, %v8811, 0
      %v9017 = vsel %vm449, %v8813, 0
      %9019 = vmatprep.subr.bf16.mxu0 0
      %9020 = vmatpush1.bf16.msra.mxu0 %v8894
      %9021 = vmatprep.subr.bf16.mxu0 0
      %9022 = vmatpush1.bf16.msra.mxu0 %v8893
      %9023 = vmatprep.subr.bf16.mxu0 0
      %9024 = vmatpush1.bf16.msra.mxu0 %v8892
      %9025 = vmatprep.subr.bf16.mxu0 0
      %9026 = vmatpush1.bf16.msra.mxu0 %v8891
      %9027 = vmatprep.subr.bf16.mxu0 0
      %9028 = vmatpush1.bf16.msra.mxu0 %v8890
      %9029 = vmatprep.subr.bf16.mxu0 0
      %9030 = vmatpush1.bf16.msra.mxu0 %v8889
      %9031 = vmatprep.subr.bf16.mxu0 0
      %9032 = vmatpush1.bf16.msra.mxu0 %v8888
      %9033 = vmatprep.subr.bf16.mxu0 0
      %9034 = vmatpush1.bf16.msra.mxu0 %v8887
      %9035 = vmatprep.subr.bf16.mxu0 0
      %9036 = vmatpush2.bf16.msra.mxu0 0
      %9037 = vmatprep.subr.bf16.mxu0 0
      %9038 = vmatpush2.bf16.msra.mxu0 0
      %9039 = vmatprep.subr.bf16.mxu0 0
      %9040 = vmatpush2.bf16.msra.mxu0 0
      %9041 = vmatprep.subr.bf16.mxu0 0
      %9042 = vmatpush2.bf16.msra.mxu0 0
      %9043 = vmatprep.subr.bf16.mxu0 0
      %9044 = vmatpush2.bf16.msra.mxu0 %v8898
      %9045 = vmatprep.subr.bf16.mxu0 0
      %9046 = vmatpush2.bf16.msra.mxu0 %v8897
      %9047 = vmatprep.subr.bf16.mxu0 0
      %9048 = vmatpush2.bf16.msra.mxu0 %v8896
      %9049 = vmatprep.subr.bf16.mxu0 0
      %9050 = vmatpush2.bf16.msra.mxu0 %v8895
      %9051 = vmatprep.mubr.bf16.mxu0 %v8912
      %9052 = vmatmul.mubr.bf16.gmra.mxu0 %v8742
      %v9053 = vpop.f32.mrf.mxu0
      %v9054 = vadd.f32 0.0, %v9053
      %v9055 = vpop.f32.mrf.mxu0
      %v9056 = vpop.f32.mrf.mxu0
      %v9057 = vadd.f32 0.0, %v9056
      %v9058 = vpop.f32.mrf.mxu0
      %9059 = vmatprep.mubr.bf16.mxu0 %v8915
      %9060 = vmatmul.mubr.bf16.gmra.mxu0 %v8744
      %v9061 = vpop.f32.mrf.mxu0
      %v9062 = vadd.f32 0.0, %v9061
      %v9063 = vpop.f32.mrf.mxu0
      %v9064 = vpop.f32.mrf.mxu0
      %v9065 = vadd.f32 0.0, %v9064
      %v9066 = vpop.f32.mrf.mxu0
      %9067 = vmatprep.mubr.bf16.mxu0 %v8918
      %9068 = vmatmul.mubr.bf16.gmra.mxu0 %v8746
      %v9069 = vpop.f32.mrf.mxu0
      %v9070 = vadd.f32 0.0, %v9069
      %v9071 = vpop.f32.mrf.mxu0
      %v9072 = vpop.f32.mrf.mxu0
      %v9073 = vadd.f32 0.0, %v9072
      %v9074 = vpop.f32.mrf.mxu0
      %9075 = vmatprep.mubr.bf16.mxu0 %v8921
      %9076 = vmatmul.mubr.bf16.gmra.mxu0 %v8748
      %v9077 = vpop.f32.mrf.mxu0
      %v9078 = vadd.f32 0.0, %v9077
      %v9079 = vpop.f32.mrf.mxu0
      %v9080 = vpop.f32.mrf.mxu0
      %v9081 = vadd.f32 0.0, %v9080
      %v9082 = vpop.f32.mrf.mxu0
      %9083 = vmatprep.mubr.bf16.mxu0 %v8924
      %9084 = vmatmul.mubr.bf16.gmra.mxu0 %v8750
      %v9085 = vpop.f32.mrf.mxu0
      %v9086 = vadd.f32 0.0, %v9085
      %v9087 = vpop.f32.mrf.mxu0
      %v9088 = vpop.f32.mrf.mxu0
      %v9089 = vadd.f32 0.0, %v9088
      %v9090 = vpop.f32.mrf.mxu0
      %9091 = vmatprep.mubr.bf16.mxu0 %v8927
      %9092 = vmatmul.mubr.bf16.gmra.mxu0 %v8752
      %v9093 = vpop.f32.mrf.mxu0
      %v9094 = vadd.f32 0.0, %v9093
      %v9095 = vpop.f32.mrf.mxu0
      %v9096 = vpop.f32.mrf.mxu0
      %v9097 = vadd.f32 0.0, %v9096
      %v9098 = vpop.f32.mrf.mxu0
      %9099 = vmatprep.mubr.bf16.mxu0 %v8930
      %9100 = vmatmul.mubr.bf16.gmra.mxu0 %v8754
      %v9101 = vpop.f32.mrf.mxu0
      %v9102 = vadd.f32 0.0, %v9101
      %v9103 = vpop.f32.mrf.mxu0
      %v9104 = vpop.f32.mrf.mxu0
      %v9105 = vadd.f32 0.0, %v9104
      %v9106 = vpop.f32.mrf.mxu0
      %9107 = vmatprep.mubr.bf16.mxu0 %v8933
      %9108 = vmatmul.mubr.bf16.gmra.mxu0 %v8756
      %v9109 = vpop.f32.mrf.mxu0
      %v9110 = vadd.f32 0.0, %v9109
      %v9111 = vpop.f32.mrf.mxu0
      %v9112 = vpop.f32.mrf.mxu0
      %v9113 = vadd.f32 0.0, %v9112
      %v9114 = vpop.f32.mrf.mxu0
      %9115 = vmatprep.mubr.bf16.mxu0 %v8936
      %9116 = vmatmul.mubr.bf16.gmra.mxu0 %v8758
      %v9117 = vpop.f32.mrf.mxu0
      %v9118 = vadd.f32 0.0, %v9117
      %v9119 = vpop.f32.mrf.mxu0
      %v9120 = vpop.f32.mrf.mxu0
      %v9121 = vadd.f32 0.0, %v9120
      %v9122 = vpop.f32.mrf.mxu0
      %9123 = vmatprep.mubr.bf16.mxu0 %v8939
      %9124 = vmatmul.mubr.bf16.gmra.mxu0 %v8760
      %v9125 = vpop.f32.mrf.mxu0
      %v9126 = vadd.f32 0.0, %v9125
      %v9127 = vpop.f32.mrf.mxu0
      %v9128 = vpop.f32.mrf.mxu0
      %v9129 = vadd.f32 0.0, %v9128
      %v9130 = vpop.f32.mrf.mxu0
      %9131 = vmatprep.mubr.bf16.mxu0 %v8942
      %9132 = vmatmul.mubr.bf16.gmra.mxu0 %v8762
      %v9133 = vpop.f32.mrf.mxu0
      %v9134 = vadd.f32 0.0, %v9133
      %v9135 = vpop.f32.mrf.mxu0
      %v9136 = vpop.f32.mrf.mxu0
      %v9137 = vadd.f32 0.0, %v9136
      %v9138 = vpop.f32.mrf.mxu0
      %9139 = vmatprep.mubr.bf16.mxu0 %v8945
      %9140 = vmatmul.mubr.bf16.gmra.mxu0 %v8764
      %v9141 = vpop.f32.mrf.mxu0
      %v9142 = vadd.f32 0.0, %v9141
      %v9143 = vpop.f32.mrf.mxu0
      %v9144 = vpop.f32.mrf.mxu0
      %v9145 = vadd.f32 0.0, %v9144
      %v9146 = vpop.f32.mrf.mxu0
      %9147 = vmatprep.mubr.bf16.mxu0 %v8948
      %9148 = vmatmul.mubr.bf16.gmra.mxu0 %v8766
      %v9149 = vpop.f32.mrf.mxu0
      %v9150 = vadd.f32 0.0, %v9149
      %v9151 = vpop.f32.mrf.mxu0
      %v9152 = vpop.f32.mrf.mxu0
      %v9153 = vadd.f32 0.0, %v9152
      %v9154 = vpop.f32.mrf.mxu0
      %9155 = vmatprep.mubr.bf16.mxu0 %v8951
      %9156 = vmatmul.mubr.bf16.gmra.mxu0 %v8768
      %v9157 = vpop.f32.mrf.mxu0
      %v9158 = vadd.f32 0.0, %v9157
      %v9159 = vpop.f32.mrf.mxu0
      %v9160 = vpop.f32.mrf.mxu0
      %v9161 = vadd.f32 0.0, %v9160
      %v9162 = vpop.f32.mrf.mxu0
      %9163 = vmatprep.mubr.bf16.mxu0 %v8954
      %9164 = vmatmul.mubr.bf16.gmra.mxu0 %v8770
      %v9165 = vpop.f32.mrf.mxu0
      %v9166 = vadd.f32 0.0, %v9165
      %v9167 = vpop.f32.mrf.mxu0
      %v9168 = vpop.f32.mrf.mxu0
      %v9169 = vadd.f32 0.0, %v9168
      %v9170 = vpop.f32.mrf.mxu0
      %9171 = vmatprep.mubr.bf16.mxu0 %v8957
      %9172 = vmatmul.mubr.bf16.gmra.mxu0 %v8772
      %v9173 = vpop.f32.mrf.mxu0
      %v9174 = vadd.f32 0.0, %v9173
      %v9175 = vpop.f32.mrf.mxu0
      %v9176 = vpop.f32.mrf.mxu0
      %v9177 = vadd.f32 0.0, %v9176
      %v9178 = vpop.f32.mrf.mxu0
      %9179 = vmatprep.mubr.bf16.mxu0 %v8960
      %9180 = vmatmul.mubr.bf16.gmra.mxu0 %v8774
      %v9181 = vpop.f32.mrf.mxu0
      %v9182 = vadd.f32 0.0, %v9181
      %v9183 = vpop.f32.mrf.mxu0
      %v9184 = vpop.f32.mrf.mxu0
      %v9185 = vadd.f32 0.0, %v9184
      %v9186 = vpop.f32.mrf.mxu0
      %9187 = vmatprep.mubr.bf16.mxu0 %v8963
      %9188 = vmatmul.mubr.bf16.gmra.mxu0 %v8776
      %v9189 = vpop.f32.mrf.mxu0
      %v9190 = vadd.f32 0.0, %v9189
      %v9191 = vpop.f32.mrf.mxu0
      %v9192 = vpop.f32.mrf.mxu0
      %v9193 = vadd.f32 0.0, %v9192
      %v9194 = vpop.f32.mrf.mxu0
      %9195 = vmatprep.mubr.bf16.mxu0 %v8966
      %9196 = vmatmul.mubr.bf16.gmra.mxu0 %v8778
      %v9197 = vpop.f32.mrf.mxu0
      %v9198 = vadd.f32 0.0, %v9197
      %v9199 = vpop.f32.mrf.mxu0
      %v9200 = vpop.f32.mrf.mxu0
      %v9201 = vadd.f32 0.0, %v9200
      %v9202 = vpop.f32.mrf.mxu0
      %9203 = vmatprep.mubr.bf16.mxu0 %v8969
      %9204 = vmatmul.mubr.bf16.gmra.mxu0 %v8780
      %v9205 = vpop.f32.mrf.mxu0
      %v9206 = vadd.f32 0.0, %v9205
      %v9207 = vpop.f32.mrf.mxu0
      %v9208 = vpop.f32.mrf.mxu0
      %v9209 = vadd.f32 0.0, %v9208
      %v9210 = vpop.f32.mrf.mxu0
      %9211 = vmatprep.mubr.bf16.mxu0 %v8972
      %9212 = vmatmul.mubr.bf16.gmra.mxu0 %v8782
      %v9213 = vpop.f32.mrf.mxu0
      %v9214 = vadd.f32 0.0, %v9213
      %v9215 = vpop.f32.mrf.mxu0
      %v9216 = vpop.f32.mrf.mxu0
      %v9217 = vadd.f32 0.0, %v9216
      %v9218 = vpop.f32.mrf.mxu0
      %9219 = vmatprep.mubr.bf16.mxu0 %v8975
      %9220 = vmatmul.mubr.bf16.gmra.mxu0 %v8784
      %v9221 = vpop.f32.mrf.mxu0
      %v9222 = vadd.f32 0.0, %v9221
      %v9223 = vpop.f32.mrf.mxu0
      %v9224 = vpop.f32.mrf.mxu0
      %v9225 = vadd.f32 0.0, %v9224
      %v9226 = vpop.f32.mrf.mxu0
      %9227 = vmatprep.mubr.bf16.mxu0 %v8978
      %9228 = vmatmul.mubr.bf16.gmra.mxu0 %v8786
      %v9229 = vpop.f32.mrf.mxu0
      %v9230 = vadd.f32 0.0, %v9229
      %v9231 = vpop.f32.mrf.mxu0
      %v9232 = vpop.f32.mrf.mxu0
      %v9233 = vadd.f32 0.0, %v9232
      %v9234 = vpop.f32.mrf.mxu0
      %9235 = vmatprep.mubr.bf16.mxu0 %v8981
      %9236 = vmatmul.mubr.bf16.gmra.mxu0 %v8788
      %v9237 = vpop.f32.mrf.mxu0
      %v9238 = vadd.f32 0.0, %v9237
      %v9239 = vpop.f32.mrf.mxu0
      %v9240 = vpop.f32.mrf.mxu0
      %v9241 = vadd.f32 0.0, %v9240
      %v9242 = vpop.f32.mrf.mxu0
      %9243 = vmatprep.mubr.bf16.mxu0 %v8984
      %9244 = vmatmul.mubr.bf16.gmra.mxu0 %v8790
      %v9245 = vpop.f32.mrf.mxu0
      %v9246 = vadd.f32 0.0, %v9245
      %v9247 = vpop.f32.mrf.mxu0
      %v9248 = vpop.f32.mrf.mxu0
      %v9249 = vadd.f32 0.0, %v9248
      %v9250 = vpop.f32.mrf.mxu0
      %9251 = vmatprep.mubr.bf16.mxu0 %v8987
      %9252 = vmatmul.mubr.bf16.gmra.mxu0 %v8792
      %v9253 = vpop.f32.mrf.mxu0
      %v9254 = vadd.f32 0.0, %v9253
      %v9255 = vpop.f32.mrf.mxu0
      %v9256 = vpop.f32.mrf.mxu0
      %v9257 = vadd.f32 0.0, %v9256
      %v9258 = vpop.f32.mrf.mxu0
      %9259 = vmatprep.mubr.bf16.mxu0 %v8990
      %9260 = vmatmul.mubr.bf16.gmra.mxu0 %v8794
      %v9261 = vpop.f32.mrf.mxu0
      %v9262 = vadd.f32 0.0, %v9261
      %v9263 = vpop.f32.mrf.mxu0
      %v9264 = vpop.f32.mrf.mxu0
      %v9265 = vadd.f32 0.0, %v9264
      %v9266 = vpop.f32.mrf.mxu0
      %9267 = vmatprep.mubr.bf16.mxu0 %v8993
      %9268 = vmatmul.mubr.bf16.gmra.mxu0 %v8796
      %v9269 = vpop.f32.mrf.mxu0
      %v9270 = vadd.f32 0.0, %v9269
      %v9271 = vpop.f32.mrf.mxu0
      %v9272 = vpop.f32.mrf.mxu0
      %v9273 = vadd.f32 0.0, %v9272
      %v9274 = vpop.f32.mrf.mxu0
      %9275 = vmatprep.mubr.bf16.mxu0 %v8996
      %9276 = vmatmul.mubr.bf16.gmra.mxu0 %v8798
      %v9277 = vpop.f32.mrf.mxu0
      %v9278 = vadd.f32 0.0, %v9277
      %v9279 = vpop.f32.mrf.mxu0
      %v9280 = vpop.f32.mrf.mxu0
      %v9281 = vadd.f32 0.0, %v9280
      %v9282 = vpop.f32.mrf.mxu0
      %9283 = vmatprep.mubr.bf16.mxu0 %v8999
      %9284 = vmatmul.mubr.bf16.gmra.mxu0 %v8800
      %v9285 = vpop.f32.mrf.mxu0
      %v9286 = vadd.f32 0.0, %v9285
      %v9287 = vpop.f32.mrf.mxu0
      %v9288 = vpop.f32.mrf.mxu0
      %v9289 = vadd.f32 0.0, %v9288
      %v9290 = vpop.f32.mrf.mxu0
      %9291 = vmatprep.mubr.bf16.mxu0 %v9002
      %9292 = vmatmul.mubr.bf16.gmra.mxu0 %v8802
      %v9293 = vpop.f32.mrf.mxu0
      %v9294 = vadd.f32 0.0, %v9293
      %v9295 = vpop.f32.mrf.mxu0
      %v9296 = vpop.f32.mrf.mxu0
      %v9297 = vadd.f32 0.0, %v9296
      %v9298 = vpop.f32.mrf.mxu0
      %9299 = vmatprep.mubr.bf16.mxu0 %v9005
      %9300 = vmatmul.mubr.bf16.gmra.mxu0 %v8804
      %v9301 = vpop.f32.mrf.mxu0
      %v9302 = vadd.f32 0.0, %v9301
      %v9303 = vpop.f32.mrf.mxu0
      %v9304 = vpop.f32.mrf.mxu0
      %v9305 = vadd.f32 0.0, %v9304
      %v9306 = vpop.f32.mrf.mxu0
      %9307 = vmatprep.mubr.bf16.mxu0 %v9008
      %9308 = vmatmul.mubr.bf16.gmra.mxu0 %v8806
      %v9309 = vpop.f32.mrf.mxu0
      %v9310 = vadd.f32 0.0, %v9309
      %v9311 = vpop.f32.mrf.mxu0
      %v9312 = vpop.f32.mrf.mxu0
      %v9313 = vadd.f32 0.0, %v9312
      %v9314 = vpop.f32.mrf.mxu0
      %9315 = vmatprep.mubr.bf16.mxu0 %v9011
      %9316 = vmatmul.mubr.bf16.gmra.mxu0 %v8808
      %v9317 = vpop.f32.mrf.mxu0
      %v9318 = vadd.f32 0.0, %v9317
      %v9319 = vpop.f32.mrf.mxu0
      %v9320 = vpop.f32.mrf.mxu0
      %v9321 = vadd.f32 0.0, %v9320
      %v9322 = vpop.f32.mrf.mxu0
      %9323 = vmatprep.mubr.bf16.mxu0 %v9014
      %9324 = vmatmul.mubr.bf16.gmra.mxu0 %v8810
      %v9325 = vpop.f32.mrf.mxu0
      %v9326 = vadd.f32 0.0, %v9325
      %v9327 = vpop.f32.mrf.mxu0
      %v9328 = vpop.f32.mrf.mxu0
      %v9329 = vadd.f32 0.0, %v9328
      %v9330 = vpop.f32.mrf.mxu0
      %9331 = vmatprep.mubr.bf16.mxu0 %v9017
      %9332 = vmatmul.mubr.bf16.gmra.mxu0 %v8812
      %v9333 = vpop.f32.mrf.mxu0
      %v9334 = vadd.f32 0.0, %v9333
      %v9335 = vpop.f32.mrf.mxu0
      %v9336 = vpop.f32.mrf.mxu0
      %v9337 = vadd.f32 0.0, %v9336
      %v9338 = vpop.f32.mrf.mxu0
      %9339 = vdwg.mxu0
      %v9340 = vadd.f32 %v7880, %v9054
      %v9341 = vadd.f32 %v7883, %v9057
      %v9342 = vadd.f32 %v7888, %v9062
      %v9343 = vadd.f32 %v7891, %v9065
      %v9344 = vadd.f32 %v7896, %v9070
      %v9345 = vadd.f32 %v7899, %v9073
      %v9346 = vadd.f32 %v7904, %v9078
      %v9347 = vadd.f32 %v7907, %v9081
      %v9348 = vadd.f32 %v7912, %v9086
      %v9349 = vadd.f32 %v7915, %v9089
      %v9350 = vadd.f32 %v7920, %v9094
      %v9351 = vadd.f32 %v7923, %v9097
      %v9352 = vadd.f32 %v7928, %v9102
      %v9353 = vadd.f32 %v7931, %v9105
      %v9354 = vadd.f32 %v7936, %v9110
      %v9355 = vadd.f32 %v7939, %v9113
      %v9356 = vadd.f32 %v7944, %v9118
      %v9357 = vadd.f32 %v7947, %v9121
      %v9358 = vadd.f32 %v7952, %v9126
      %v9359 = vadd.f32 %v7955, %v9129
      %v9360 = vadd.f32 %v7960, %v9134
      %v9361 = vadd.f32 %v7963, %v9137
      %v9362 = vadd.f32 %v7968, %v9142
      %v9363 = vadd.f32 %v7971, %v9145
      %v9364 = vadd.f32 %v7976, %v9150
      %v9365 = vadd.f32 %v7979, %v9153
      %v9366 = vadd.f32 %v7984, %v9158
      %v9367 = vadd.f32 %v7987, %v9161
      %v9368 = vadd.f32 %v7992, %v9166
      %v9369 = vadd.f32 %v7995, %v9169
      %v9370 = vadd.f32 %v8000, %v9174
      %v9371 = vadd.f32 %v8003, %v9177
      %v9372 = vadd.f32 %v8008, %v9182
      %v9373 = vadd.f32 %v8011, %v9185
      %v9374 = vadd.f32 %v8016, %v9190
      %v9375 = vadd.f32 %v8019, %v9193
      %v9376 = vadd.f32 %v8024, %v9198
      %v9377 = vadd.f32 %v8027, %v9201
      %v9378 = vadd.f32 %v8032, %v9206
      %v9379 = vadd.f32 %v8035, %v9209
      %v9380 = vadd.f32 %v8040, %v9214
      %v9381 = vadd.f32 %v8043, %v9217
      %v9382 = vadd.f32 %v8048, %v9222
      %v9383 = vadd.f32 %v8051, %v9225
      %v9384 = vadd.f32 %v8056, %v9230
      %v9385 = vadd.f32 %v8059, %v9233
      %v9386 = vadd.f32 %v8064, %v9238
      %v9387 = vadd.f32 %v8067, %v9241
      %v9388 = vadd.f32 %v8072, %v9246
      %v9389 = vadd.f32 %v8075, %v9249
      %v9390 = vadd.f32 %v8080, %v9254
      %v9391 = vadd.f32 %v8083, %v9257
      %v9392 = vadd.f32 %v8088, %v9262
      %v9393 = vadd.f32 %v8091, %v9265
      %v9394 = vadd.f32 %v8096, %v9270
      %v9395 = vadd.f32 %v8099, %v9273
      %v9396 = vadd.f32 %v8104, %v9278
      %v9397 = vadd.f32 %v8107, %v9281
      %v9398 = vadd.f32 %v8112, %v9286
      %v9399 = vadd.f32 %v8115, %v9289
      %v9400 = vadd.f32 %v8120, %v9294
      %v9401 = vadd.f32 %v8123, %v9297
      %v9402 = vadd.f32 %v8128, %v9302
      %v9403 = vadd.f32 %v8131, %v9305
      %v9404 = vadd.f32 %v8136, %v9310
      %v9405 = vadd.f32 %v8139, %v9313
      %v9406 = vadd.f32 %v8144, %v9318
      %v9407 = vadd.f32 %v8147, %v9321
      %v9408 = vadd.f32 %v8152, %v9326
      %v9409 = vadd.f32 %v8155, %v9329
      %v9410 = vadd.f32 %v8160, %v9334
      %v9411 = vadd.f32 %v8163, %v9337
      %v9412 = vld [vmem:[%s6] sm:$0x1]
      %v9414 = vlaneseq
      %v9415 = vshrl.u32 %v9414, 7
      %v9416 = vsub.s32 0, %v9415
      %v9417 = vrot.slane %v9412, %v9416
      %v9419 = vadd.f32 %v9340, %v9417
      %v9420 = vadd.f32 %v9341, %v9417
      %v9421 = vadd.f32 %v9342, %v9417
      %v9422 = vadd.f32 %v9343, %v9417
      %v9423 = vadd.f32 %v9344, %v9417
      %v9424 = vadd.f32 %v9345, %v9417
      %v9425 = vadd.f32 %v9346, %v9417
      %v9426 = vadd.f32 %v9347, %v9417
      %v9427 = vadd.f32 %v9348, %v9417
      %v9428 = vadd.f32 %v9349, %v9417
      %v9429 = vadd.f32 %v9350, %v9417
      %v9430 = vadd.f32 %v9351, %v9417
      %v9431 = vadd.f32 %v9352, %v9417
      %v9432 = vadd.f32 %v9353, %v9417
      %v9433 = vadd.f32 %v9354, %v9417
      %v9434 = vadd.f32 %v9355, %v9417
      %v9435 = vadd.f32 %v9356, %v9417
      %v9436 = vadd.f32 %v9357, %v9417
      %v9437 = vadd.f32 %v9358, %v9417
      %v9438 = vadd.f32 %v9359, %v9417
      %v9439 = vadd.f32 %v9360, %v9417
      %v9440 = vadd.f32 %v9361, %v9417
      %v9441 = vadd.f32 %v9362, %v9417
      %v9442 = vadd.f32 %v9363, %v9417
      %v9443 = vadd.f32 %v9364, %v9417
      %v9444 = vadd.f32 %v9365, %v9417
      %v9445 = vadd.f32 %v9366, %v9417
      %v9446 = vadd.f32 %v9367, %v9417
      %v9447 = vadd.f32 %v9368, %v9417
      %v9448 = vadd.f32 %v9369, %v9417
      %v9449 = vadd.f32 %v9370, %v9417
      %v9450 = vadd.f32 %v9371, %v9417
      %v9451 = vadd.f32 %v9372, %v9417
      %v9452 = vadd.f32 %v9373, %v9417
      %v9453 = vadd.f32 %v9374, %v9417
      %v9454 = vadd.f32 %v9375, %v9417
      %v9455 = vadd.f32 %v9376, %v9417
      %v9456 = vadd.f32 %v9377, %v9417
      %v9457 = vadd.f32 %v9378, %v9417
      %v9458 = vadd.f32 %v9379, %v9417
      %v9459 = vadd.f32 %v9380, %v9417
      %v9460 = vadd.f32 %v9381, %v9417
      %v9461 = vadd.f32 %v9382, %v9417
      %v9462 = vadd.f32 %v9383, %v9417
      %v9463 = vadd.f32 %v9384, %v9417
      %v9464 = vadd.f32 %v9385, %v9417
      %v9465 = vadd.f32 %v9386, %v9417
      %v9466 = vadd.f32 %v9387, %v9417
      %v9467 = vadd.f32 %v9388, %v9417
      %v9468 = vadd.f32 %v9389, %v9417
      %v9469 = vadd.f32 %v9390, %v9417
      %v9470 = vadd.f32 %v9391, %v9417
      %v9471 = vadd.f32 %v9392, %v9417
      %v9472 = vadd.f32 %v9393, %v9417
      %v9473 = vadd.f32 %v9394, %v9417
      %v9474 = vadd.f32 %v9395, %v9417
      %v9475 = vadd.f32 %v9396, %v9417
      %v9476 = vadd.f32 %v9397, %v9417
      %v9477 = vadd.f32 %v9398, %v9417
      %v9478 = vadd.f32 %v9399, %v9417
      %v9479 = vadd.f32 %v9400, %v9417
      %v9480 = vadd.f32 %v9401, %v9417
      %v9481 = vadd.f32 %v9402, %v9417
      %v9482 = vadd.f32 %v9403, %v9417
      %v9483 = vadd.f32 %v9404, %v9417
      %v9484 = vadd.f32 %v9405, %v9417
      %v9485 = vadd.f32 %v9406, %v9417
      %v9486 = vadd.f32 %v9407, %v9417
      %v9487 = vadd.f32 %v9408, %v9417
      %v9488 = vadd.f32 %v9409, %v9417
      %v9489 = vadd.f32 %v9410, %v9417
      %v9490 = vadd.f32 %v9411, %v9417
      %v9491 = vmax.f32 %v9419, 0.0
      %v9492 = vmax.f32 %v9420, 0.0
      %v9493 = vmax.f32 %v9421, 0.0
      %v9494 = vmax.f32 %v9422, 0.0
      %v9495 = vmax.f32 %v9423, 0.0
      %v9496 = vmax.f32 %v9424, 0.0
      %v9497 = vmax.f32 %v9425, 0.0
      %v9498 = vmax.f32 %v9426, 0.0
      %v9499 = vmax.f32 %v9427, 0.0
      %v9500 = vmax.f32 %v9428, 0.0
      %v9501 = vmax.f32 %v9429, 0.0
      %v9502 = vmax.f32 %v9430, 0.0
      %v9503 = vmax.f32 %v9431, 0.0
      %v9504 = vmax.f32 %v9432, 0.0
      %v9505 = vmax.f32 %v9433, 0.0
      %v9506 = vmax.f32 %v9434, 0.0
      %v9507 = vmax.f32 %v9435, 0.0
      %v9508 = vmax.f32 %v9436, 0.0
      %v9509 = vmax.f32 %v9437, 0.0
      %v9510 = vmax.f32 %v9438, 0.0
      %v9511 = vmax.f32 %v9439, 0.0
      %v9512 = vmax.f32 %v9440, 0.0
      %v9513 = vmax.f32 %v9441, 0.0
      %v9514 = vmax.f32 %v9442, 0.0
      %v9515 = vmax.f32 %v9443, 0.0
      %v9516 = vmax.f32 %v9444, 0.0
      %v9517 = vmax.f32 %v9445, 0.0
      %v9518 = vmax.f32 %v9446, 0.0
      %v9519 = vmax.f32 %v9447, 0.0
      %v9520 = vmax.f32 %v9448, 0.0
      %v9521 = vmax.f32 %v9449, 0.0
      %v9522 = vmax.f32 %v9450, 0.0
      %v9523 = vmax.f32 %v9451, 0.0
      %v9524 = vmax.f32 %v9452, 0.0
      %v9525 = vmax.f32 %v9453, 0.0
      %v9526 = vmax.f32 %v9454, 0.0
      %v9527 = vmax.f32 %v9455, 0.0
      %v9528 = vmax.f32 %v9456, 0.0
      %v9529 = vmax.f32 %v9457, 0.0
      %v9530 = vmax.f32 %v9458, 0.0
      %v9531 = vmax.f32 %v9459, 0.0
      %v9532 = vmax.f32 %v9460, 0.0
      %v9533 = vmax.f32 %v9461, 0.0
      %v9534 = vmax.f32 %v9462, 0.0
      %v9535 = vmax.f32 %v9463, 0.0
      %v9536 = vmax.f32 %v9464, 0.0
      %v9537 = vmax.f32 %v9465, 0.0
      %v9538 = vmax.f32 %v9466, 0.0
      %v9539 = vmax.f32 %v9467, 0.0
      %v9540 = vmax.f32 %v9468, 0.0
      %v9541 = vmax.f32 %v9469, 0.0
      %v9542 = vmax.f32 %v9470, 0.0
      %v9543 = vmax.f32 %v9471, 0.0
      %v9544 = vmax.f32 %v9472, 0.0
      %v9545 = vmax.f32 %v9473, 0.0
      %v9546 = vmax.f32 %v9474, 0.0
      %v9547 = vmax.f32 %v9475, 0.0
      %v9548 = vmax.f32 %v9476, 0.0
      %v9549 = vmax.f32 %v9477, 0.0
      %v9550 = vmax.f32 %v9478, 0.0
      %v9551 = vmax.f32 %v9479, 0.0
      %v9552 = vmax.f32 %v9480, 0.0
      %v9553 = vmax.f32 %v9481, 0.0
      %v9554 = vmax.f32 %v9482, 0.0
      %v9555 = vmax.f32 %v9483, 0.0
      %v9556 = vmax.f32 %v9484, 0.0
      %v9557 = vmax.f32 %v9485, 0.0
      %v9558 = vmax.f32 %v9486, 0.0
      %v9559 = vmax.f32 %v9487, 0.0
      %v9560 = vmax.f32 %v9488, 0.0
      %v9561 = vmax.f32 %v9489, 0.0
      %v9562 = vmax.f32 %v9490, 0.0
      %v9563 = vpack.c.bf16 %v9492, %v9491
      %v9564 = vpack.c.bf16 %v9494, %v9493
      %v9565 = vpack.c.bf16 %v9496, %v9495
      %v9566 = vpack.c.bf16 %v9498, %v9497
      %v9567 = vpack.c.bf16 %v9500, %v9499
      %v9568 = vpack.c.bf16 %v9502, %v9501
      %v9569 = vpack.c.bf16 %v9504, %v9503
      %v9570 = vpack.c.bf16 %v9506, %v9505
      %v9571 = vpack.c.bf16 %v9508, %v9507
      %v9572 = vpack.c.bf16 %v9510, %v9509
      %v9573 = vpack.c.bf16 %v9512, %v9511
      %v9574 = vpack.c.bf16 %v9514, %v9513
      %v9575 = vpack.c.bf16 %v9516, %v9515
      %v9576 = vpack.c.bf16 %v9518, %v9517
      %v9577 = vpack.c.bf16 %v9520, %v9519
      %v9578 = vpack.c.bf16 %v9522, %v9521
      %v9579 = vpack.c.bf16 %v9524, %v9523
      %v9580 = vpack.c.bf16 %v9526, %v9525
      %v9581 = vpack.c.bf16 %v9528, %v9527
      %v9582 = vpack.c.bf16 %v9530, %v9529
      %v9583 = vpack.c.bf16 %v9532, %v9531
      %v9584 = vpack.c.bf16 %v9534, %v9533
      %v9585 = vpack.c.bf16 %v9536, %v9535
      %v9586 = vpack.c.bf16 %v9538, %v9537
      %v9587 = vpack.c.bf16 %v9540, %v9539
      %v9588 = vpack.c.bf16 %v9542, %v9541
      %v9589 = vpack.c.bf16 %v9544, %v9543
      %v9590 = vpack.c.bf16 %v9546, %v9545
      %v9591 = vpack.c.bf16 %v9548, %v9547
      %v9592 = vpack.c.bf16 %v9550, %v9549
      %v9593 = vpack.c.bf16 %v9552, %v9551
      %v9594 = vpack.c.bf16 %v9554, %v9553
      %v9595 = vpack.c.bf16 %v9556, %v9555
      %v9596 = vpack.c.bf16 %v9558, %v9557
      %v9597 = vpack.c.bf16 %v9560, %v9559
      %v9598 = vpack.c.bf16 %v9562, %v9561
      %v9599 = vld [vmem:[%s7] sm:$0xf]
      %v9600 = vld [vmem:[%s7 + $0x4] sm:$0xf]
      %v9601 = vld [vmem:[%s7 + $0x8] sm:$0xf]
      %v9602 = vld [vmem:[%s7 + $0xc] sm:$0xf]
      %v9603 = vld [vmem:[%s7 + $0x10] sm:$0xf]
      %v9604 = vld [vmem:[%s7 + $0x14] sm:$0xf]
      %v9605 = vld [vmem:[%s7 + $0x18] sm:$0xf]
      %v9606 = vld [vmem:[%s7 + $0x1c] sm:$0xf]
      %v9607 = vld [vmem:[%s7 + $0x20] sm:$0xf]
      %v9608 = vld [vmem:[%s7 + $0x24] sm:$0xf]
      %v9609 = vld [vmem:[%s7 + $0x28] sm:$0xf]
      %v9610 = vld [vmem:[%s7 + $0x2c] sm:$0xf]
      %v9611 = vld [vmem:[%s7 + $0x30] sm:$0xf]
      %v9612 = vld [vmem:[%s7 + $0x34] sm:$0xf]
      %v9613 = vld [vmem:[%s7 + $0x38] sm:$0xf]
      %v9614 = vld [vmem:[%s7 + $0x3c] sm:$0xf]
      %v9615 = vld [vmem:[%s8] sm:$0x1]
      %v9617 = vlaneseq
      %v9618 = vshrl.u32 %v9617, 7
      %v9619 = vsub.s32 0, %v9618
      %v9620 = vrot.slane %v9615, %v9619
      %v9638 = vunpack.c.l.b16 %v9599
      %v9639 = vunpack.c.l.b16 %v9600
      %v9640 = vunpack.c.l.b16 %v9601
      %v9641 = vunpack.c.l.b16 %v9602
      %v9642 = vunpack.c.l.b16 %v9603
      %v9643 = vunpack.c.l.b16 %v9604
      %v9644 = vunpack.c.l.b16 %v9605
      %v9645 = vunpack.c.l.b16 %v9606
      %v9646 = vunpack.c.l.b16 %v9607
      %v9647 = vunpack.c.l.b16 %v9608
      %v9648 = vunpack.c.l.b16 %v9609
      %v9649 = vunpack.c.l.b16 %v9610
      %v9650 = vunpack.c.l.b16 %v9611
      %v9651 = vunpack.c.l.b16 %v9612
      %v9652 = vunpack.c.l.b16 %v9613
      %v9653 = vunpack.c.l.b16 %v9614
      %v9654 = vpack.c.b16 %v9639, %v9638
      %v9655 = vpack.c.b16 %v9641, %v9640
      %v9656 = vpack.c.b16 %v9643, %v9642
      %v9657 = vpack.c.b16 %v9645, %v9644
      %v9658 = vpack.c.b16 %v9647, %v9646
      %v9659 = vpack.c.b16 %v9649, %v9648
      %v9660 = vpack.c.b16 %v9651, %v9650
      %v9661 = vpack.c.b16 %v9653, %v9652
      %9670 = vmatprep.subr.bf16.mxu0 0
      %9671 = vmatpush1.bf16.msra.mxu0 %v9661
      %9672 = vmatprep.subr.bf16.mxu0 0
      %9673 = vmatpush1.bf16.msra.mxu0 %v9660
      %9674 = vmatprep.subr.bf16.mxu0 0
      %9675 = vmatpush1.bf16.msra.mxu0 %v9659
      %9676 = vmatprep.subr.bf16.mxu0 0
      %9677 = vmatpush1.bf16.msra.mxu0 %v9658
      %9678 = vmatprep.subr.bf16.mxu0 0
      %9679 = vmatpush1.bf16.msra.mxu0 %v9657
      %9680 = vmatprep.subr.bf16.mxu0 0
      %9681 = vmatpush1.bf16.msra.mxu0 %v9656
      %9682 = vmatprep.subr.bf16.mxu0 0
      %9683 = vmatpush1.bf16.msra.mxu0 %v9655
      %9684 = vmatprep.subr.bf16.mxu0 0
      %9685 = vmatpush1.bf16.msra.mxu0 %v9654
      %9686 = vmatprep.subr.bf16.mxu0 0
      %9687 = vmatpush2.bf16.msra.mxu0 0
      %9688 = vmatprep.subr.bf16.mxu0 0
      %9689 = vmatpush2.bf16.msra.mxu0 0
      %9690 = vmatprep.subr.bf16.mxu0 0
      %9691 = vmatpush2.bf16.msra.mxu0 0
      %9692 = vmatprep.subr.bf16.mxu0 0
      %9693 = vmatpush2.bf16.msra.mxu0 0
      %9694 = vmatprep.subr.bf16.mxu0 0
      %9695 = vmatpush2.bf16.msra.mxu0 0
      %9696 = vmatprep.subr.bf16.mxu0 0
      %9697 = vmatpush2.bf16.msra.mxu0 0
      %9698 = vmatprep.subr.bf16.mxu0 0
      %9699 = vmatpush2.bf16.msra.mxu0 0
      %9700 = vmatprep.subr.bf16.mxu0 0
      %9701 = vmatpush2.bf16.msra.mxu0 0
      %9702 = vmatprep.mubr.bf16.mxu0 0
      %9703 = vmatmul.mubr.bf16.gmra.mxu0 %v9563
      %v9704 = vpop.f32.mrf.mxu0
      %v9705 = vadd.f32 %v9620, %v9704
      %v9706 = vpop.f32.mrf.mxu0
      %v9707 = vpop.f32.mrf.mxu0
      %v9708 = vadd.f32 %v9620, %v9707
      %v9709 = vpop.f32.mrf.mxu0
      %9710 = vmatprep.mubr.bf16.mxu0 0
      %9711 = vmatmul.mubr.bf16.gmra.mxu0 %v9564
      %v9712 = vpop.f32.mrf.mxu0
      %v9713 = vadd.f32 %v9620, %v9712
      %v9714 = vpop.f32.mrf.mxu0
      %v9715 = vpop.f32.mrf.mxu0
      %v9716 = vadd.f32 %v9620, %v9715
      %v9717 = vpop.f32.mrf.mxu0
      %9718 = vmatprep.mubr.bf16.mxu0 0
      %9719 = vmatmul.mubr.bf16.gmra.mxu0 %v9565
      %v9720 = vpop.f32.mrf.mxu0
      %v9721 = vadd.f32 %v9620, %v9720
      %v9722 = vpop.f32.mrf.mxu0
      %v9723 = vpop.f32.mrf.mxu0
      %v9724 = vadd.f32 %v9620, %v9723
      %v9725 = vpop.f32.mrf.mxu0
      %9726 = vmatprep.mubr.bf16.mxu0 0
      %9727 = vmatmul.mubr.bf16.gmra.mxu0 %v9566
      %v9728 = vpop.f32.mrf.mxu0
      %v9729 = vadd.f32 %v9620, %v9728
      %v9730 = vpop.f32.mrf.mxu0
      %v9731 = vpop.f32.mrf.mxu0
      %v9732 = vadd.f32 %v9620, %v9731
      %v9733 = vpop.f32.mrf.mxu0
      %9734 = vmatprep.mubr.bf16.mxu0 0
      %9735 = vmatmul.mubr.bf16.gmra.mxu0 %v9567
      %v9736 = vpop.f32.mrf.mxu0
      %v9737 = vadd.f32 %v9620, %v9736
      %v9738 = vpop.f32.mrf.mxu0
      %v9739 = vpop.f32.mrf.mxu0
      %v9740 = vadd.f32 %v9620, %v9739
      %v9741 = vpop.f32.mrf.mxu0
      %9742 = vmatprep.mubr.bf16.mxu0 0
      %9743 = vmatmul.mubr.bf16.gmra.mxu0 %v9568
      %v9744 = vpop.f32.mrf.mxu0
      %v9745 = vadd.f32 %v9620, %v9744
      %v9746 = vpop.f32.mrf.mxu0
      %v9747 = vpop.f32.mrf.mxu0
      %v9748 = vadd.f32 %v9620, %v9747
      %v9749 = vpop.f32.mrf.mxu0
      %9750 = vmatprep.mubr.bf16.mxu0 0
      %9751 = vmatmul.mubr.bf16.gmra.mxu0 %v9569
      %v9752 = vpop.f32.mrf.mxu0
      %v9753 = vadd.f32 %v9620, %v9752
      %v9754 = vpop.f32.mrf.mxu0
      %v9755 = vpop.f32.mrf.mxu0
      %v9756 = vadd.f32 %v9620, %v9755
      %v9757 = vpop.f32.mrf.mxu0
      %9758 = vmatprep.mubr.bf16.mxu0 0
      %9759 = vmatmul.mubr.bf16.gmra.mxu0 %v9570
      %v9760 = vpop.f32.mrf.mxu0
      %v9761 = vadd.f32 %v9620, %v9760
      %v9762 = vpop.f32.mrf.mxu0
      %v9763 = vpop.f32.mrf.mxu0
      %v9764 = vadd.f32 %v9620, %v9763
      %v9765 = vpop.f32.mrf.mxu0
      %9766 = vmatprep.mubr.bf16.mxu0 0
      %9767 = vmatmul.mubr.bf16.gmra.mxu0 %v9571
      %v9768 = vpop.f32.mrf.mxu0
      %v9769 = vadd.f32 %v9620, %v9768
      %v9770 = vpop.f32.mrf.mxu0
      %v9771 = vpop.f32.mrf.mxu0
      %v9772 = vadd.f32 %v9620, %v9771
      %v9773 = vpop.f32.mrf.mxu0
      %9774 = vmatprep.mubr.bf16.mxu0 0
      %9775 = vmatmul.mubr.bf16.gmra.mxu0 %v9572
      %v9776 = vpop.f32.mrf.mxu0
      %v9777 = vadd.f32 %v9620, %v9776
      %v9778 = vpop.f32.mrf.mxu0
      %v9779 = vpop.f32.mrf.mxu0
      %v9780 = vadd.f32 %v9620, %v9779
      %v9781 = vpop.f32.mrf.mxu0
      %9782 = vmatprep.mubr.bf16.mxu0 0
      %9783 = vmatmul.mubr.bf16.gmra.mxu0 %v9573
      %v9784 = vpop.f32.mrf.mxu0
      %v9785 = vadd.f32 %v9620, %v9784
      %v9786 = vpop.f32.mrf.mxu0
      %v9787 = vpop.f32.mrf.mxu0
      %v9788 = vadd.f32 %v9620, %v9787
      %v9789 = vpop.f32.mrf.mxu0
      %9790 = vmatprep.mubr.bf16.mxu0 0
      %9791 = vmatmul.mubr.bf16.gmra.mxu0 %v9574
      %v9792 = vpop.f32.mrf.mxu0
      %v9793 = vadd.f32 %v9620, %v9792
      %v9794 = vpop.f32.mrf.mxu0
      %v9795 = vpop.f32.mrf.mxu0
      %v9796 = vadd.f32 %v9620, %v9795
      %v9797 = vpop.f32.mrf.mxu0
      %9798 = vmatprep.mubr.bf16.mxu0 0
      %9799 = vmatmul.mubr.bf16.gmra.mxu0 %v9575
      %v9800 = vpop.f32.mrf.mxu0
      %v9801 = vadd.f32 %v9620, %v9800
      %v9802 = vpop.f32.mrf.mxu0
      %v9803 = vpop.f32.mrf.mxu0
      %v9804 = vadd.f32 %v9620, %v9803
      %v9805 = vpop.f32.mrf.mxu0
      %9806 = vmatprep.mubr.bf16.mxu0 0
      %9807 = vmatmul.mubr.bf16.gmra.mxu0 %v9576
      %v9808 = vpop.f32.mrf.mxu0
      %v9809 = vadd.f32 %v9620, %v9808
      %v9810 = vpop.f32.mrf.mxu0
      %v9811 = vpop.f32.mrf.mxu0
      %v9812 = vadd.f32 %v9620, %v9811
      %v9813 = vpop.f32.mrf.mxu0
      %9814 = vmatprep.mubr.bf16.mxu0 0
      %9815 = vmatmul.mubr.bf16.gmra.mxu0 %v9577
      %v9816 = vpop.f32.mrf.mxu0
      %v9817 = vadd.f32 %v9620, %v9816
      %v9818 = vpop.f32.mrf.mxu0
      %v9819 = vpop.f32.mrf.mxu0
      %v9820 = vadd.f32 %v9620, %v9819
      %v9821 = vpop.f32.mrf.mxu0
      %9822 = vmatprep.mubr.bf16.mxu0 0
      %9823 = vmatmul.mubr.bf16.gmra.mxu0 %v9578
      %v9824 = vpop.f32.mrf.mxu0
      %v9825 = vadd.f32 %v9620, %v9824
      %v9826 = vpop.f32.mrf.mxu0
      %v9827 = vpop.f32.mrf.mxu0
      %v9828 = vadd.f32 %v9620, %v9827
      %v9829 = vpop.f32.mrf.mxu0
      %9830 = vmatprep.mubr.bf16.mxu0 0
      %9831 = vmatmul.mubr.bf16.gmra.mxu0 %v9579
      %v9832 = vpop.f32.mrf.mxu0
      %v9833 = vadd.f32 %v9620, %v9832
      %v9834 = vpop.f32.mrf.mxu0
      %v9835 = vpop.f32.mrf.mxu0
      %v9836 = vadd.f32 %v9620, %v9835
      %v9837 = vpop.f32.mrf.mxu0
      %9838 = vmatprep.mubr.bf16.mxu0 0
      %9839 = vmatmul.mubr.bf16.gmra.mxu0 %v9580
      %v9840 = vpop.f32.mrf.mxu0
      %v9841 = vadd.f32 %v9620, %v9840
      %v9842 = vpop.f32.mrf.mxu0
      %v9843 = vpop.f32.mrf.mxu0
      %v9844 = vadd.f32 %v9620, %v9843
      %v9845 = vpop.f32.mrf.mxu0
      %9846 = vmatprep.mubr.bf16.mxu0 0
      %9847 = vmatmul.mubr.bf16.gmra.mxu0 %v9581
      %v9848 = vpop.f32.mrf.mxu0
      %v9849 = vadd.f32 %v9620, %v9848
      %v9850 = vpop.f32.mrf.mxu0
      %v9851 = vpop.f32.mrf.mxu0
      %v9852 = vadd.f32 %v9620, %v9851
      %v9853 = vpop.f32.mrf.mxu0
      %9854 = vmatprep.mubr.bf16.mxu0 0
      %9855 = vmatmul.mubr.bf16.gmra.mxu0 %v9582
      %v9856 = vpop.f32.mrf.mxu0
      %v9857 = vadd.f32 %v9620, %v9856
      %v9858 = vpop.f32.mrf.mxu0
      %v9859 = vpop.f32.mrf.mxu0
      %v9860 = vadd.f32 %v9620, %v9859
      %v9861 = vpop.f32.mrf.mxu0
      %9862 = vmatprep.mubr.bf16.mxu0 0
      %9863 = vmatmul.mubr.bf16.gmra.mxu0 %v9583
      %v9864 = vpop.f32.mrf.mxu0
      %v9865 = vadd.f32 %v9620, %v9864
      %v9866 = vpop.f32.mrf.mxu0
      %v9867 = vpop.f32.mrf.mxu0
      %v9868 = vadd.f32 %v9620, %v9867
      %v9869 = vpop.f32.mrf.mxu0
      %9870 = vmatprep.mubr.bf16.mxu0 0
      %9871 = vmatmul.mubr.bf16.gmra.mxu0 %v9584
      %v9872 = vpop.f32.mrf.mxu0
      %v9873 = vadd.f32 %v9620, %v9872
      %v9874 = vpop.f32.mrf.mxu0
      %v9875 = vpop.f32.mrf.mxu0
      %v9876 = vadd.f32 %v9620, %v9875
      %v9877 = vpop.f32.mrf.mxu0
      %9878 = vmatprep.mubr.bf16.mxu0 0
      %9879 = vmatmul.mubr.bf16.gmra.mxu0 %v9585
      %v9880 = vpop.f32.mrf.mxu0
      %v9881 = vadd.f32 %v9620, %v9880
      %v9882 = vpop.f32.mrf.mxu0
      %v9883 = vpop.f32.mrf.mxu0
      %v9884 = vadd.f32 %v9620, %v9883
      %v9885 = vpop.f32.mrf.mxu0
      %9886 = vmatprep.mubr.bf16.mxu0 0
      %9887 = vmatmul.mubr.bf16.gmra.mxu0 %v9586
      %v9888 = vpop.f32.mrf.mxu0
      %v9889 = vadd.f32 %v9620, %v9888
      %v9890 = vpop.f32.mrf.mxu0
      %v9891 = vpop.f32.mrf.mxu0
      %v9892 = vadd.f32 %v9620, %v9891
      %v9893 = vpop.f32.mrf.mxu0
      %9894 = vmatprep.mubr.bf16.mxu0 0
      %9895 = vmatmul.mubr.bf16.gmra.mxu0 %v9587
      %v9896 = vpop.f32.mrf.mxu0
      %v9897 = vadd.f32 %v9620, %v9896
      %v9898 = vpop.f32.mrf.mxu0
      %v9899 = vpop.f32.mrf.mxu0
      %v9900 = vadd.f32 %v9620, %v9899
      %v9901 = vpop.f32.mrf.mxu0
      %9902 = vmatprep.mubr.bf16.mxu0 0
      %9903 = vmatmul.mubr.bf16.gmra.mxu0 %v9588
      %v9904 = vpop.f32.mrf.mxu0
      %v9905 = vadd.f32 %v9620, %v9904
      %v9906 = vpop.f32.mrf.mxu0
      %v9907 = vpop.f32.mrf.mxu0
      %v9908 = vadd.f32 %v9620, %v9907
      %v9909 = vpop.f32.mrf.mxu0
      %9910 = vmatprep.mubr.bf16.mxu0 0
      %9911 = vmatmul.mubr.bf16.gmra.mxu0 %v9589
      %v9912 = vpop.f32.mrf.mxu0
      %v9913 = vadd.f32 %v9620, %v9912
      %v9914 = vpop.f32.mrf.mxu0
      %v9915 = vpop.f32.mrf.mxu0
      %v9916 = vadd.f32 %v9620, %v9915
      %v9917 = vpop.f32.mrf.mxu0
      %9918 = vmatprep.mubr.bf16.mxu0 0
      %9919 = vmatmul.mubr.bf16.gmra.mxu0 %v9590
      %v9920 = vpop.f32.mrf.mxu0
      %v9921 = vadd.f32 %v9620, %v9920
      %v9922 = vpop.f32.mrf.mxu0
      %v9923 = vpop.f32.mrf.mxu0
      %v9924 = vadd.f32 %v9620, %v9923
      %v9925 = vpop.f32.mrf.mxu0
      %9926 = vmatprep.mubr.bf16.mxu0 0
      %9927 = vmatmul.mubr.bf16.gmra.mxu0 %v9591
      %v9928 = vpop.f32.mrf.mxu0
      %v9929 = vadd.f32 %v9620, %v9928
      %v9930 = vpop.f32.mrf.mxu0
      %v9931 = vpop.f32.mrf.mxu0
      %v9932 = vadd.f32 %v9620, %v9931
      %v9933 = vpop.f32.mrf.mxu0
      %9934 = vmatprep.mubr.bf16.mxu0 0
      %9935 = vmatmul.mubr.bf16.gmra.mxu0 %v9592
      %v9936 = vpop.f32.mrf.mxu0
      %v9937 = vadd.f32 %v9620, %v9936
      %v9938 = vpop.f32.mrf.mxu0
      %v9939 = vpop.f32.mrf.mxu0
      %v9940 = vadd.f32 %v9620, %v9939
      %v9941 = vpop.f32.mrf.mxu0
      %9942 = vmatprep.mubr.bf16.mxu0 0
      %9943 = vmatmul.mubr.bf16.gmra.mxu0 %v9593
      %v9944 = vpop.f32.mrf.mxu0
      %v9945 = vadd.f32 %v9620, %v9944
      %v9946 = vpop.f32.mrf.mxu0
      %v9947 = vpop.f32.mrf.mxu0
      %v9948 = vadd.f32 %v9620, %v9947
      %v9949 = vpop.f32.mrf.mxu0
      %9950 = vmatprep.mubr.bf16.mxu0 0
      %9951 = vmatmul.mubr.bf16.gmra.mxu0 %v9594
      %v9952 = vpop.f32.mrf.mxu0
      %v9953 = vadd.f32 %v9620, %v9952
      %v9954 = vpop.f32.mrf.mxu0
      %v9955 = vpop.f32.mrf.mxu0
      %v9956 = vadd.f32 %v9620, %v9955
      %v9957 = vpop.f32.mrf.mxu0
      %9958 = vmatprep.mubr.bf16.mxu0 0
      %9959 = vmatmul.mubr.bf16.gmra.mxu0 %v9595
      %v9960 = vpop.f32.mrf.mxu0
      %v9961 = vadd.f32 %v9620, %v9960
      %v9962 = vpop.f32.mrf.mxu0
      %v9963 = vpop.f32.mrf.mxu0
      %v9964 = vadd.f32 %v9620, %v9963
      %v9965 = vpop.f32.mrf.mxu0
      %9966 = vmatprep.mubr.bf16.mxu0 0
      %9967 = vmatmul.mubr.bf16.gmra.mxu0 %v9596
      %v9968 = vpop.f32.mrf.mxu0
      %v9969 = vadd.f32 %v9620, %v9968
      %v9970 = vpop.f32.mrf.mxu0
      %v9971 = vpop.f32.mrf.mxu0
      %v9972 = vadd.f32 %v9620, %v9971
      %v9973 = vpop.f32.mrf.mxu0
      %9974 = vmatprep.mubr.bf16.mxu0 0
      %9975 = vmatmul.mubr.bf16.gmra.mxu0 %v9597
      %v9976 = vpop.f32.mrf.mxu0
      %v9977 = vadd.f32 %v9620, %v9976
      %v9978 = vpop.f32.mrf.mxu0
      %v9979 = vpop.f32.mrf.mxu0
      %v9980 = vadd.f32 %v9620, %v9979
      %v9981 = vpop.f32.mrf.mxu0
      %9982 = vmatprep.mubr.bf16.mxu0 0
      %9983 = vmatmul.mubr.bf16.gmra.mxu0 %v9598
      %v9984 = vpop.f32.mrf.mxu0
      %v9985 = vadd.f32 %v9620, %v9984
      %v9986 = vpop.f32.mrf.mxu0
      %v9987 = vpop.f32.mrf.mxu0
      %v9988 = vadd.f32 %v9620, %v9987
      %v9989 = vpop.f32.mrf.mxu0
      %9990 = vdwg.mxu0
      %v9991 = vmax.f32 %v9705, 0.0
      %v9992 = vmax.f32 %v9708, 0.0
      %v9993 = vmax.f32 %v9713, 0.0
      %v9994 = vmax.f32 %v9716, 0.0
      %v9995 = vmax.f32 %v9721, 0.0
      %v9996 = vmax.f32 %v9724, 0.0
      %v9997 = vmax.f32 %v9729, 0.0
      %v9998 = vmax.f32 %v9732, 0.0
      %v9999 = vmax.f32 %v9737, 0.0
      %v10000 = vmax.f32 %v9740, 0.0
      %v10001 = vmax.f32 %v9745, 0.0
      %v10002 = vmax.f32 %v9748, 0.0
      %v10003 = vmax.f32 %v9753, 0.0
      %v10004 = vmax.f32 %v9756, 0.0
      %v10005 = vmax.f32 %v9761, 0.0
      %v10006 = vmax.f32 %v9764, 0.0
      %v10007 = vmax.f32 %v9769, 0.0
      %v10008 = vmax.f32 %v9772, 0.0
      %v10009 = vmax.f32 %v9777, 0.0
      %v10010 = vmax.f32 %v9780, 0.0
      %v10011 = vmax.f32 %v9785, 0.0
      %v10012 = vmax.f32 %v9788, 0.0
      %v10013 = vmax.f32 %v9793, 0.0
      %v10014 = vmax.f32 %v9796, 0.0
      %v10015 = vmax.f32 %v9801, 0.0
      %v10016 = vmax.f32 %v9804, 0.0
      %v10017 = vmax.f32 %v9809, 0.0
      %v10018 = vmax.f32 %v9812, 0.0
      %v10019 = vmax.f32 %v9817, 0.0
      %v10020 = vmax.f32 %v9820, 0.0
      %v10021 = vmax.f32 %v9825, 0.0
      %v10022 = vmax.f32 %v9828, 0.0
      %v10023 = vmax.f32 %v9833, 0.0
      %v10024 = vmax.f32 %v9836, 0.0
      %v10025 = vmax.f32 %v9841, 0.0
      %v10026 = vmax.f32 %v9844, 0.0
      %v10027 = vmax.f32 %v9849, 0.0
      %v10028 = vmax.f32 %v9852, 0.0
      %v10029 = vmax.f32 %v9857, 0.0
      %v10030 = vmax.f32 %v9860, 0.0
      %v10031 = vmax.f32 %v9865, 0.0
      %v10032 = vmax.f32 %v9868, 0.0
      %v10033 = vmax.f32 %v9873, 0.0
      %v10034 = vmax.f32 %v9876, 0.0
      %v10035 = vmax.f32 %v9881, 0.0
      %v10036 = vmax.f32 %v9884, 0.0
      %v10037 = vmax.f32 %v9889, 0.0
      %v10038 = vmax.f32 %v9892, 0.0
      %v10039 = vmax.f32 %v9897, 0.0
      %v10040 = vmax.f32 %v9900, 0.0
      %v10041 = vmax.f32 %v9905, 0.0
      %v10042 = vmax.f32 %v9908, 0.0
      %v10043 = vmax.f32 %v9913, 0.0
      %v10044 = vmax.f32 %v9916, 0.0
      %v10045 = vmax.f32 %v9921, 0.0
      %v10046 = vmax.f32 %v9924, 0.0
      %v10047 = vmax.f32 %v9929, 0.0
      %v10048 = vmax.f32 %v9932, 0.0
      %v10049 = vmax.f32 %v9937, 0.0
      %v10050 = vmax.f32 %v9940, 0.0
      %v10051 = vmax.f32 %v9945, 0.0
      %v10052 = vmax.f32 %v9948, 0.0
      %v10053 = vmax.f32 %v9953, 0.0
      %v10054 = vmax.f32 %v9956, 0.0
      %v10055 = vmax.f32 %v9961, 0.0
      %v10056 = vmax.f32 %v9964, 0.0
      %v10057 = vmax.f32 %v9969, 0.0
      %v10058 = vmax.f32 %v9972, 0.0
      %v10059 = vmax.f32 %v9977, 0.0
      %v10060 = vmax.f32 %v9980, 0.0
      %v10061 = vmax.f32 %v9985, 0.0
      %v10062 = vmax.f32 %v9988, 0.0
      %v10063 = vpack.c.bf16 %v9992, %v9991
      %v10064 = vpack.c.bf16 %v9994, %v9993
      %v10065 = vpack.c.bf16 %v9996, %v9995
      %v10066 = vpack.c.bf16 %v9998, %v9997
      %v10067 = vpack.c.bf16 %v10000, %v9999
      %v10068 = vpack.c.bf16 %v10002, %v10001
      %v10069 = vpack.c.bf16 %v10004, %v10003
      %v10070 = vpack.c.bf16 %v10006, %v10005
      %v10071 = vpack.c.bf16 %v10008, %v10007
      %v10072 = vpack.c.bf16 %v10010, %v10009
      %v10073 = vpack.c.bf16 %v10012, %v10011
      %v10074 = vpack.c.bf16 %v10014, %v10013
      %v10075 = vpack.c.bf16 %v10016, %v10015
      %v10076 = vpack.c.bf16 %v10018, %v10017
      %v10077 = vpack.c.bf16 %v10020, %v10019
      %v10078 = vpack.c.bf16 %v10022, %v10021
      %v10079 = vpack.c.bf16 %v10024, %v10023
      %v10080 = vpack.c.bf16 %v10026, %v10025
      %v10081 = vpack.c.bf16 %v10028, %v10027
      %v10082 = vpack.c.bf16 %v10030, %v10029
      %v10083 = vpack.c.bf16 %v10032, %v10031
      %v10084 = vpack.c.bf16 %v10034, %v10033
      %v10085 = vpack.c.bf16 %v10036, %v10035
      %v10086 = vpack.c.bf16 %v10038, %v10037
      %v10087 = vpack.c.bf16 %v10040, %v10039
      %v10088 = vpack.c.bf16 %v10042, %v10041
      %v10089 = vpack.c.bf16 %v10044, %v10043
      %v10090 = vpack.c.bf16 %v10046, %v10045
      %v10091 = vpack.c.bf16 %v10048, %v10047
      %v10092 = vpack.c.bf16 %v10050, %v10049
      %v10093 = vpack.c.bf16 %v10052, %v10051
      %v10094 = vpack.c.bf16 %v10054, %v10053
      %v10095 = vpack.c.bf16 %v10056, %v10055
      %v10096 = vpack.c.bf16 %v10058, %v10057
      %v10097 = vpack.c.bf16 %v10060, %v10059
      %v10098 = vpack.c.bf16 %v10062, %v10061
      %v10099 = vld [vmem:[%s9] sm:$0xff]
      %v10100 = vld [vmem:[%s9 + $0x8] sm:$0xff]
      %v10101 = vld [vmem:[%s9 + $0x10] sm:$0xf]
      %v10102 = vld [vmem:[%s9 + $0x14] sm:$0xff]
      %v10103 = vld [vmem:[%s9 + $0x1c] sm:$0xff]
      %v10104 = vld [vmem:[%s9 + $0x24] sm:$0xf]
      %v10105 = vld [vmem:[%s9 + $0x28] sm:$0xff]
      %v10106 = vld [vmem:[%s9 + $0x30] sm:$0xff]
      %v10107 = vld [vmem:[%s9 + $0x38] sm:$0xf]
      %v10108 = vld [vmem:[%s9 + $0x3c] sm:$0xff]
      %v10109 = vld [vmem:[%s9 + $0x44] sm:$0xff]
      %v10110 = vld [vmem:[%s9 + $0x4c] sm:$0xf]
      %v10111 = vld [vmem:[%s9 + $0x50] sm:$0xff]
      %v10112 = vld [vmem:[%s9 + $0x58] sm:$0xff]
      %v10113 = vld [vmem:[%s9 + $0x60] sm:$0xf]
      %v10114 = vld [vmem:[%s9 + $0x64] sm:$0xff]
      %v10115 = vld [vmem:[%s9 + $0x6c] sm:$0xff]
      %v10116 = vld [vmem:[%s9 + $0x74] sm:$0xf]
      %v10117 = vld [vmem:[%s9 + $0x78] sm:$0xff]
      %v10118 = vld [vmem:[%s9 + $0x80] sm:$0xff]
      %v10119 = vld [vmem:[%s9 + $0x88] sm:$0xf]
      %v10120 = vld [vmem:[%s9 + $0x8c] sm:$0xff]
      %v10121 = vld [vmem:[%s9 + $0x94] sm:$0xff]
      %v10122 = vld [vmem:[%s9 + $0x9c] sm:$0xf]
      %v10123 = vld [vmem:[%s9 + $0xa0] sm:$0xff]
      %v10124 = vld [vmem:[%s9 + $0xa8] sm:$0xff]
      %v10125 = vld [vmem:[%s9 + $0xb0] sm:$0xf]
      %v10126 = vld [vmem:[%s9 + $0xb4] sm:$0xff]
      %v10127 = vld [vmem:[%s9 + $0xbc] sm:$0xff]
      %v10128 = vld [vmem:[%s9 + $0xc4] sm:$0xf]
      %v10129 = vld [vmem:[%s9 + $0xc8] sm:$0xff]
      %v10130 = vld [vmem:[%s9 + $0xd0] sm:$0xff]
      %v10131 = vld [vmem:[%s9 + $0xd8] sm:$0xf]
      %v10132 = vld [vmem:[%s9 + $0xdc] sm:$0xff]
      %v10133 = vld [vmem:[%s9 + $0xe4] sm:$0xff]
      %v10134 = vld [vmem:[%s9 + $0xec] sm:$0xf]
      %v10135 = vld [vmem:[%s9 + $0xf0] sm:$0xff]
      %v10136 = vld [vmem:[%s9 + $0xf8] sm:$0xff]
      %v10137 = vld [vmem:[%s9 + $0x100] sm:$0xf]
      %v10138 = vld [vmem:[%s9 + $0x104] sm:$0xff]
      %v10139 = vld [vmem:[%s9 + $0x10c] sm:$0xff]
      %v10140 = vld [vmem:[%s9 + $0x114] sm:$0xf]
      %v10141 = vld [vmem:[%s9 + $0x118] sm:$0xff]
      %v10142 = vld [vmem:[%s9 + $0x120] sm:$0xff]
      %v10143 = vld [vmem:[%s9 + $0x128] sm:$0xf]
      %v10144 = vld [vmem:[%s9 + $0x12c] sm:$0xff]
      %v10145 = vld [vmem:[%s9 + $0x134] sm:$0xff]
      %v10146 = vld [vmem:[%s9 + $0x13c] sm:$0xf]
      %s10147 = scalar_lea.vmem %s9, 320
      %v10148 = vld [vmem:[%s10147] sm:$0xff]
      %v10149 = vld [vmem:[%s10147 + $0x8] sm:$0xff]
      %v10150 = vld [vmem:[%s10147 + $0x10] sm:$0xf]
      %v10151 = vld [vmem:[%s10147 + $0x14] sm:$0xff]
      %v10152 = vld [vmem:[%s10147 + $0x1c] sm:$0xff]
      %v10153 = vld [vmem:[%s10147 + $0x24] sm:$0xf]
      %v10154 = vld [vmem:[%s10147 + $0x28] sm:$0xff]
      %v10155 = vld [vmem:[%s10147 + $0x30] sm:$0xff]
      %v10156 = vld [vmem:[%s10147 + $0x38] sm:$0xf]
      %v10157 = vld [vmem:[%s10147 + $0x3c] sm:$0xff]
      %v10158 = vld [vmem:[%s10147 + $0x44] sm:$0xff]
      %v10159 = vld [vmem:[%s10147 + $0x4c] sm:$0xf]
      %v10160 = vld [vmem:[%s10147 + $0x50] sm:$0xff]
      %v10161 = vld [vmem:[%s10147 + $0x58] sm:$0xff]
      %v10162 = vld [vmem:[%s10147 + $0x60] sm:$0xf]
      %v10163 = vld [vmem:[%s10147 + $0x64] sm:$0xff]
      %v10164 = vld [vmem:[%s10147 + $0x6c] sm:$0xff]
      %v10165 = vld [vmem:[%s10147 + $0x74] sm:$0xf]
      %v10166 = vld [vmem:[%s10147 + $0x78] sm:$0xff]
      %v10167 = vld [vmem:[%s10147 + $0x80] sm:$0xff]
      %v10168 = vld [vmem:[%s10147 + $0x88] sm:$0xf]
      %v10169 = vld [vmem:[%s10147 + $0x8c] sm:$0xff]
      %v10170 = vld [vmem:[%s10147 + $0x94] sm:$0xff]
      %v10171 = vld [vmem:[%s10147 + $0x9c] sm:$0xf]
      %v10172 = vld [vmem:[%s10147 + $0xa0] sm:$0xff]
      %v10173 = vld [vmem:[%s10147 + $0xa8] sm:$0xff]
      %v10174 = vld [vmem:[%s10147 + $0xb0] sm:$0xf]
      %v10175 = vld [vmem:[%s10147 + $0xb4] sm:$0xff]
      %v10176 = vld [vmem:[%s10147 + $0xbc] sm:$0xff]
      %v10177 = vld [vmem:[%s10147 + $0xc4] sm:$0xf]
      %v10178 = vld [vmem:[%s10147 + $0xc8] sm:$0xff]
      %v10179 = vld [vmem:[%s10147 + $0xd0] sm:$0xff]
      %v10180 = vld [vmem:[%s10147 + $0xd8] sm:$0xf]
      %v10181 = vld [vmem:[%s10147 + $0xdc] sm:$0xff]
      %v10182 = vld [vmem:[%s10147 + $0xe4] sm:$0xff]
      %v10183 = vld [vmem:[%s10147 + $0xec] sm:$0xf]
      %v10184 = vld [vmem:[%s10147 + $0xf0] sm:$0xff]
      %v10185 = vld [vmem:[%s10147 + $0xf8] sm:$0xff]
      %v10186 = vld [vmem:[%s10147 + $0x100] sm:$0xf]
      %v10187 = vld [vmem:[%s10147 + $0x104] sm:$0xff]
      %v10188 = vld [vmem:[%s10147 + $0x10c] sm:$0xff]
      %v10189 = vld [vmem:[%s10147 + $0x114] sm:$0xf]
      %v10190 = vld [vmem:[%s10147 + $0x118] sm:$0xff]
      %v10191 = vld [vmem:[%s10147 + $0x120] sm:$0xff]
      %v10192 = vld [vmem:[%s10147 + $0x128] sm:$0xf]
      %v10193 = vld [vmem:[%s10147 + $0x12c] sm:$0xff]
      %v10194 = vld [vmem:[%s10147 + $0x134] sm:$0xff]
      %v10195 = vld [vmem:[%s10147 + $0x13c] sm:$0xf]
      %v10244 = vunpack.c.l.b16 %v10148
      %v10245 = vunpack.c.h.b16 %v10148
      %v10246 = vunpack.c.l.b16 %v10149
      %v10247 = vunpack.c.h.b16 %v10149
      %v10248 = vunpack.c.l.b16 %v10150
      %v10249 = vunpack.c.l.b16 %v10151
      %v10250 = vunpack.c.h.b16 %v10151
      %v10251 = vunpack.c.l.b16 %v10152
      %v10252 = vunpack.c.h.b16 %v10152
      %v10253 = vunpack.c.l.b16 %v10153
      %v10254 = vunpack.c.l.b16 %v10154
      %v10255 = vunpack.c.h.b16 %v10154
      %v10256 = vunpack.c.l.b16 %v10155
      %v10257 = vunpack.c.h.b16 %v10155
      %v10258 = vunpack.c.l.b16 %v10156
      %v10259 = vunpack.c.l.b16 %v10157
      %v10260 = vunpack.c.h.b16 %v10157
      %v10261 = vunpack.c.l.b16 %v10158
      %v10262 = vunpack.c.h.b16 %v10158
      %v10263 = vunpack.c.l.b16 %v10159
      %v10264 = vunpack.c.l.b16 %v10160
      %v10265 = vunpack.c.h.b16 %v10160
      %v10266 = vunpack.c.l.b16 %v10161
      %v10267 = vunpack.c.h.b16 %v10161
      %v10268 = vunpack.c.l.b16 %v10162
      %v10269 = vunpack.c.l.b16 %v10163
      %v10270 = vunpack.c.h.b16 %v10163
      %v10271 = vunpack.c.l.b16 %v10164
      %v10272 = vunpack.c.h.b16 %v10164
      %v10273 = vunpack.c.l.b16 %v10165
      %v10274 = vunpack.c.l.b16 %v10166
      %v10275 = vunpack.c.h.b16 %v10166
      %v10276 = vunpack.c.l.b16 %v10167
      %v10277 = vunpack.c.h.b16 %v10167
      %v10278 = vunpack.c.l.b16 %v10168
      %v10279 = vunpack.c.l.b16 %v10169
      %v10280 = vunpack.c.h.b16 %v10169
      %v10281 = vunpack.c.l.b16 %v10170
      %v10282 = vunpack.c.h.b16 %v10170
      %v10283 = vunpack.c.l.b16 %v10171
      %v10284 = vunpack.c.l.b16 %v10172
      %v10285 = vunpack.c.h.b16 %v10172
      %v10286 = vunpack.c.l.b16 %v10173
      %v10287 = vunpack.c.h.b16 %v10173
      %v10288 = vunpack.c.l.b16 %v10174
      %v10289 = vunpack.c.l.b16 %v10175
      %v10290 = vunpack.c.h.b16 %v10175
      %v10291 = vunpack.c.l.b16 %v10176
      %v10292 = vunpack.c.h.b16 %v10176
      %v10293 = vunpack.c.l.b16 %v10177
      %v10294 = vunpack.c.l.b16 %v10178
      %v10295 = vunpack.c.h.b16 %v10178
      %v10296 = vunpack.c.l.b16 %v10179
      %v10297 = vunpack.c.h.b16 %v10179
      %v10298 = vunpack.c.l.b16 %v10180
      %v10299 = vunpack.c.l.b16 %v10181
      %v10300 = vunpack.c.h.b16 %v10181
      %v10301 = vunpack.c.l.b16 %v10182
      %v10302 = vunpack.c.h.b16 %v10182
      %v10303 = vunpack.c.l.b16 %v10183
      %v10304 = vunpack.c.l.b16 %v10184
      %v10305 = vunpack.c.h.b16 %v10184
      %v10306 = vunpack.c.l.b16 %v10185
      %v10307 = vunpack.c.h.b16 %v10185
      %v10308 = vunpack.c.l.b16 %v10186
      %v10309 = vunpack.c.l.b16 %v10187
      %v10310 = vunpack.c.h.b16 %v10187
      %v10311 = vunpack.c.l.b16 %v10188
      %v10312 = vunpack.c.h.b16 %v10188
      %v10313 = vunpack.c.l.b16 %v10189
      %v10314 = vunpack.c.l.b16 %v10190
      %v10315 = vunpack.c.h.b16 %v10190
      %v10316 = vunpack.c.l.b16 %v10191
      %v10317 = vunpack.c.h.b16 %v10191
      %v10318 = vunpack.c.l.b16 %v10192
      %v10319 = vunpack.c.l.b16 %v10193
      %v10320 = vunpack.c.h.b16 %v10193
      %v10321 = vunpack.c.l.b16 %v10194
      %v10322 = vunpack.c.h.b16 %v10194
      %v10323 = vunpack.c.l.b16 %v10195
      %v10324 = vpack.c.b16 %v10249, %v10244
      %v10325 = vpack.c.b16 %v10250, %v10245
      %v10326 = vpack.c.b16 %v10251, %v10246
      %v10327 = vpack.c.b16 %v10252, %v10247
      %v10328 = vpack.c.b16 %v10253, %v10248
      %v10329 = vpack.c.b16 %v10259, %v10254
      %v10330 = vpack.c.b16 %v10260, %v10255
      %v10331 = vpack.c.b16 %v10261, %v10256
      %v10332 = vpack.c.b16 %v10262, %v10257
      %v10333 = vpack.c.b16 %v10263, %v10258
      %v10334 = vpack.c.b16 %v10269, %v10264
      %v10335 = vpack.c.b16 %v10270, %v10265
      %v10336 = vpack.c.b16 %v10271, %v10266
      %v10337 = vpack.c.b16 %v10272, %v10267
      %v10338 = vpack.c.b16 %v10273, %v10268
      %v10339 = vpack.c.b16 %v10279, %v10274
      %v10340 = vpack.c.b16 %v10280, %v10275
      %v10341 = vpack.c.b16 %v10281, %v10276
      %v10342 = vpack.c.b16 %v10282, %v10277
      %v10343 = vpack.c.b16 %v10283, %v10278
      %v10344 = vpack.c.b16 %v10289, %v10284
      %v10345 = vpack.c.b16 %v10290, %v10285
      %v10346 = vpack.c.b16 %v10291, %v10286
      %v10347 = vpack.c.b16 %v10292, %v10287
      %v10348 = vpack.c.b16 %v10293, %v10288
      %v10349 = vpack.c.b16 %v10299, %v10294
      %v10350 = vpack.c.b16 %v10300, %v10295
      %v10351 = vpack.c.b16 %v10301, %v10296
      %v10352 = vpack.c.b16 %v10302, %v10297
      %v10353 = vpack.c.b16 %v10303, %v10298
      %v10354 = vpack.c.b16 %v10309, %v10304
      %v10355 = vpack.c.b16 %v10310, %v10305
      %v10356 = vpack.c.b16 %v10311, %v10306
      %v10357 = vpack.c.b16 %v10312, %v10307
      %v10358 = vpack.c.b16 %v10313, %v10308
      %v10359 = vpack.c.b16 %v10319, %v10314
      %v10360 = vpack.c.b16 %v10320, %v10315
      %v10361 = vpack.c.b16 %v10321, %v10316
      %v10362 = vpack.c.b16 %v10322, %v10317
      %v10363 = vpack.c.b16 %v10323, %v10318
      %10432 = vrot.lane.b32.xlu0 %v10063, 127
      %v10433 = vpop.permute.xlu0 %10432
      %10434 = vrot.lane.b32.xlu0 %v10064, 127
      %v10435 = vpop.permute.xlu0 %10434
      %10436 = vrot.lane.b32.xlu0 %v10065, 127
      %v10437 = vpop.permute.xlu0 %10436
      %10438 = vrot.lane.b32.xlu0 %v10066, 127
      %v10439 = vpop.permute.xlu0 %10438
      %10440 = vrot.lane.b32.xlu0 %v10067, 127
      %v10441 = vpop.permute.xlu0 %10440
      %10442 = vrot.lane.b32.xlu0 %v10068, 127
      %v10443 = vpop.permute.xlu0 %10442
      %10444 = vrot.lane.b32.xlu0 %v10069, 127
      %v10445 = vpop.permute.xlu0 %10444
      %10446 = vrot.lane.b32.xlu0 %v10070, 127
      %v10447 = vpop.permute.xlu0 %10446
      %10448 = vrot.lane.b32.xlu0 %v10071, 127
      %v10449 = vpop.permute.xlu0 %10448
      %10450 = vrot.lane.b32.xlu0 %v10072, 127
      %v10451 = vpop.permute.xlu0 %10450
      %10452 = vrot.lane.b32.xlu0 %v10073, 127
      %v10453 = vpop.permute.xlu0 %10452
      %10454 = vrot.lane.b32.xlu0 %v10074, 127
      %v10455 = vpop.permute.xlu0 %10454
      %10456 = vrot.lane.b32.xlu0 %v10075, 127
      %v10457 = vpop.permute.xlu0 %10456
      %10458 = vrot.lane.b32.xlu0 %v10076, 127
      %v10459 = vpop.permute.xlu0 %10458
      %10460 = vrot.lane.b32.xlu0 %v10077, 127
      %v10461 = vpop.permute.xlu0 %10460
      %10462 = vrot.lane.b32.xlu0 %v10078, 127
      %v10463 = vpop.permute.xlu0 %10462
      %10464 = vrot.lane.b32.xlu0 %v10079, 127
      %v10465 = vpop.permute.xlu0 %10464
      %10466 = vrot.lane.b32.xlu0 %v10080, 127
      %v10467 = vpop.permute.xlu0 %10466
      %10468 = vrot.lane.b32.xlu0 %v10081, 127
      %v10469 = vpop.permute.xlu0 %10468
      %10470 = vrot.lane.b32.xlu0 %v10082, 127
      %v10471 = vpop.permute.xlu0 %10470
      %10472 = vrot.lane.b32.xlu0 %v10083, 127
      %v10473 = vpop.permute.xlu0 %10472
      %10474 = vrot.lane.b32.xlu0 %v10084, 127
      %v10475 = vpop.permute.xlu0 %10474
      %10476 = vrot.lane.b32.xlu0 %v10085, 127
      %v10477 = vpop.permute.xlu0 %10476
      %10478 = vrot.lane.b32.xlu0 %v10086, 127
      %v10479 = vpop.permute.xlu0 %10478
      %10480 = vrot.lane.b32.xlu0 %v10087, 127
      %v10481 = vpop.permute.xlu0 %10480
      %10482 = vrot.lane.b32.xlu0 %v10088, 127
      %v10483 = vpop.permute.xlu0 %10482
      %10484 = vrot.lane.b32.xlu0 %v10089, 127
      %v10485 = vpop.permute.xlu0 %10484
      %10486 = vrot.lane.b32.xlu0 %v10090, 127
      %v10487 = vpop.permute.xlu0 %10486
      %10488 = vrot.lane.b32.xlu0 %v10091, 127
      %v10489 = vpop.permute.xlu0 %10488
      %10490 = vrot.lane.b32.xlu0 %v10092, 127
      %v10491 = vpop.permute.xlu0 %10490
      %10492 = vrot.lane.b32.xlu0 %v10093, 127
      %v10493 = vpop.permute.xlu0 %10492
      %10494 = vrot.lane.b32.xlu0 %v10094, 127
      %v10495 = vpop.permute.xlu0 %10494
      %10496 = vrot.lane.b32.xlu0 %v10095, 127
      %v10497 = vpop.permute.xlu0 %10496
      %10498 = vrot.lane.b32.xlu0 %v10096, 127
      %v10499 = vpop.permute.xlu0 %10498
      %10500 = vrot.lane.b32.xlu0 %v10097, 127
      %v10501 = vpop.permute.xlu0 %10500
      %10502 = vrot.lane.b32.xlu0 %v10098, 127
      %v10503 = vpop.permute.xlu0 %10502
      %v10541 = vsel %vm449, %v10328, 0
      %v10544 = vsel %vm449, %v10333, 0
      %v10547 = vsel %vm449, %v10338, 0
      %v10550 = vsel %vm449, %v10343, 0
      %v10553 = vsel %vm449, %v10348, 0
      %v10556 = vsel %vm449, %v10353, 0
      %v10559 = vsel %vm449, %v10358, 0
      %v10562 = vsel %vm449, %v10363, 0
      %10564 = vmatprep.subr.bf16.mxu0 0
      %10565 = vmatpush1.bf16.msra.mxu0 %v10447
      %10566 = vmatprep.subr.bf16.mxu0 0
      %10567 = vmatpush1.bf16.msra.mxu0 %v10445
      %10568 = vmatprep.subr.bf16.mxu0 0
      %10569 = vmatpush1.bf16.msra.mxu0 %v10443
      %10570 = vmatprep.subr.bf16.mxu0 0
      %10571 = vmatpush1.bf16.msra.mxu0 %v10441
      %10572 = vmatprep.subr.bf16.mxu0 0
      %10573 = vmatpush1.bf16.msra.mxu0 %v10439
      %10574 = vmatprep.subr.bf16.mxu0 0
      %10575 = vmatpush1.bf16.msra.mxu0 %v10437
      %10576 = vmatprep.subr.bf16.mxu0 0
      %10577 = vmatpush1.bf16.msra.mxu0 %v10435
      %10578 = vmatprep.subr.bf16.mxu0 0
      %10579 = vmatpush1.bf16.msra.mxu0 %v10433
      %10580 = vmatprep.subr.bf16.mxu0 0
      %10581 = vmatpush2.bf16.msra.mxu0 %v10463
      %10582 = vmatprep.subr.bf16.mxu0 0
      %10583 = vmatpush2.bf16.msra.mxu0 %v10461
      %10584 = vmatprep.subr.bf16.mxu0 0
      %10585 = vmatpush2.bf16.msra.mxu0 %v10459
      %10586 = vmatprep.subr.bf16.mxu0 0
      %10587 = vmatpush2.bf16.msra.mxu0 %v10457
      %10588 = vmatprep.subr.bf16.mxu0 0
      %10589 = vmatpush2.bf16.msra.mxu0 %v10455
      %10590 = vmatprep.subr.bf16.mxu0 0
      %10591 = vmatpush2.bf16.msra.mxu0 %v10453
      %10592 = vmatprep.subr.bf16.mxu0 0
      %10593 = vmatpush2.bf16.msra.mxu0 %v10451
      %10594 = vmatprep.subr.bf16.mxu0 0
      %10595 = vmatpush2.bf16.msra.mxu0 %v10449
      %10596 = vmatprep.mubr.bf16.mxu0 %v10325
      %10597 = vmatmul.mubr.bf16.gmra.mxu0 %v10324
      %v10598 = vpop.f32.mrf.mxu0
      %v10599 = vadd.f32 0.0, %v10598
      %v10600 = vpop.f32.mrf.mxu0
      %v10601 = vpop.f32.mrf.mxu0
      %v10602 = vadd.f32 0.0, %v10601
      %v10603 = vpop.f32.mrf.mxu0
      %10604 = vmatprep.mubr.bf16.mxu0 %v10330
      %10605 = vmatmul.mubr.bf16.gmra.mxu0 %v10329
      %v10606 = vpop.f32.mrf.mxu0
      %v10607 = vadd.f32 0.0, %v10606
      %v10608 = vpop.f32.mrf.mxu0
      %v10609 = vpop.f32.mrf.mxu0
      %v10610 = vadd.f32 0.0, %v10609
      %v10611 = vpop.f32.mrf.mxu0
      %10612 = vmatprep.mubr.bf16.mxu0 %v10335
      %10613 = vmatmul.mubr.bf16.gmra.mxu0 %v10334
      %v10614 = vpop.f32.mrf.mxu0
      %v10615 = vadd.f32 0.0, %v10614
      %v10616 = vpop.f32.mrf.mxu0
      %v10617 = vpop.f32.mrf.mxu0
      %v10618 = vadd.f32 0.0, %v10617
      %v10619 = vpop.f32.mrf.mxu0
      %10620 = vmatprep.mubr.bf16.mxu0 %v10340
      %10621 = vmatmul.mubr.bf16.gmra.mxu0 %v10339
      %v10622 = vpop.f32.mrf.mxu0
      %v10623 = vadd.f32 0.0, %v10622
      %v10624 = vpop.f32.mrf.mxu0
      %v10625 = vpop.f32.mrf.mxu0
      %v10626 = vadd.f32 0.0, %v10625
      %v10627 = vpop.f32.mrf.mxu0
      %10628 = vmatprep.mubr.bf16.mxu0 %v10345
      %10629 = vmatmul.mubr.bf16.gmra.mxu0 %v10344
      %v10630 = vpop.f32.mrf.mxu0
      %v10631 = vadd.f32 0.0, %v10630
      %v10632 = vpop.f32.mrf.mxu0
      %v10633 = vpop.f32.mrf.mxu0
      %v10634 = vadd.f32 0.0, %v10633
      %v10635 = vpop.f32.mrf.mxu0
      %10636 = vmatprep.mubr.bf16.mxu0 %v10350
      %10637 = vmatmul.mubr.bf16.gmra.mxu0 %v10349
      %v10638 = vpop.f32.mrf.mxu0
      %v10639 = vadd.f32 0.0, %v10638
      %v10640 = vpop.f32.mrf.mxu0
      %v10641 = vpop.f32.mrf.mxu0
      %v10642 = vadd.f32 0.0, %v10641
      %v10643 = vpop.f32.mrf.mxu0
      %10644 = vmatprep.mubr.bf16.mxu0 %v10355
      %10645 = vmatmul.mubr.bf16.gmra.mxu0 %v10354
      %v10646 = vpop.f32.mrf.mxu0
      %v10647 = vadd.f32 0.0, %v10646
      %v10648 = vpop.f32.mrf.mxu0
      %v10649 = vpop.f32.mrf.mxu0
      %v10650 = vadd.f32 0.0, %v10649
      %v10651 = vpop.f32.mrf.mxu0
      %10652 = vmatprep.mubr.bf16.mxu0 %v10360
      %10653 = vmatmul.mubr.bf16.gmra.mxu0 %v10359
      %v10654 = vpop.f32.mrf.mxu0
      %v10655 = vadd.f32 0.0, %v10654
      %v10656 = vpop.f32.mrf.mxu0
      %v10657 = vpop.f32.mrf.mxu0
      %v10658 = vadd.f32 0.0, %v10657
      %v10659 = vpop.f32.mrf.mxu0
      %10660 = vdwg.mxu0
      %10661 = vmatprep.subr.bf16.mxu0 0
      %10662 = vmatpush1.bf16.msra.mxu0 %v10479
      %10663 = vmatprep.subr.bf16.mxu0 0
      %10664 = vmatpush1.bf16.msra.mxu0 %v10477
      %10665 = vmatprep.subr.bf16.mxu0 0
      %10666 = vmatpush1.bf16.msra.mxu0 %v10475
      %10667 = vmatprep.subr.bf16.mxu0 0
      %10668 = vmatpush1.bf16.msra.mxu0 %v10473
      %10669 = vmatprep.subr.bf16.mxu0 0
      %10670 = vmatpush1.bf16.msra.mxu0 %v10471
      %10671 = vmatprep.subr.bf16.mxu0 0
      %10672 = vmatpush1.bf16.msra.mxu0 %v10469
      %10673 = vmatprep.subr.bf16.mxu0 0
      %10674 = vmatpush1.bf16.msra.mxu0 %v10467
      %10675 = vmatprep.subr.bf16.mxu0 0
      %10676 = vmatpush1.bf16.msra.mxu0 %v10465
      %10677 = vmatprep.subr.bf16.mxu0 0
      %10678 = vmatpush2.bf16.msra.mxu0 %v10495
      %10679 = vmatprep.subr.bf16.mxu0 0
      %10680 = vmatpush2.bf16.msra.mxu0 %v10493
      %10681 = vmatprep.subr.bf16.mxu0 0
      %10682 = vmatpush2.bf16.msra.mxu0 %v10491
      %10683 = vmatprep.subr.bf16.mxu0 0
      %10684 = vmatpush2.bf16.msra.mxu0 %v10489
      %10685 = vmatprep.subr.bf16.mxu0 0
      %10686 = vmatpush2.bf16.msra.mxu0 %v10487
      %10687 = vmatprep.subr.bf16.mxu0 0
      %10688 = vmatpush2.bf16.msra.mxu0 %v10485
      %10689 = vmatprep.subr.bf16.mxu0 0
      %10690 = vmatpush2.bf16.msra.mxu0 %v10483
      %10691 = vmatprep.subr.bf16.mxu0 0
      %10692 = vmatpush2.bf16.msra.mxu0 %v10481
      %10693 = vmatprep.mubr.bf16.mxu0 %v10327
      %10694 = vmatmul.mubr.bf16.gmra.mxu0 %v10326
      %v10695 = vpop.f32.mrf.mxu0
      %v10696 = vadd.f32 %v10599, %v10695
      %v10697 = vpop.f32.mrf.mxu0
      %v10698 = vpop.f32.mrf.mxu0
      %v10699 = vadd.f32 %v10602, %v10698
      %v10700 = vpop.f32.mrf.mxu0
      %10701 = vmatprep.mubr.bf16.mxu0 %v10332
      %10702 = vmatmul.mubr.bf16.gmra.mxu0 %v10331
      %v10703 = vpop.f32.mrf.mxu0
      %v10704 = vadd.f32 %v10607, %v10703
      %v10705 = vpop.f32.mrf.mxu0
      %v10706 = vpop.f32.mrf.mxu0
      %v10707 = vadd.f32 %v10610, %v10706
      %v10708 = vpop.f32.mrf.mxu0
      %10709 = vmatprep.mubr.bf16.mxu0 %v10337
      %10710 = vmatmul.mubr.bf16.gmra.mxu0 %v10336
      %v10711 = vpop.f32.mrf.mxu0
      %v10712 = vadd.f32 %v10615, %v10711
      %v10713 = vpop.f32.mrf.mxu0
      %v10714 = vpop.f32.mrf.mxu0
      %v10715 = vadd.f32 %v10618, %v10714
      %v10716 = vpop.f32.mrf.mxu0
      %10717 = vmatprep.mubr.bf16.mxu0 %v10342
      %10718 = vmatmul.mubr.bf16.gmra.mxu0 %v10341
      %v10719 = vpop.f32.mrf.mxu0
      %v10720 = vadd.f32 %v10623, %v10719
      %v10721 = vpop.f32.mrf.mxu0
      %v10722 = vpop.f32.mrf.mxu0
      %v10723 = vadd.f32 %v10626, %v10722
      %v10724 = vpop.f32.mrf.mxu0
      %10725 = vmatprep.mubr.bf16.mxu0 %v10347
      %10726 = vmatmul.mubr.bf16.gmra.mxu0 %v10346
      %v10727 = vpop.f32.mrf.mxu0
      %v10728 = vadd.f32 %v10631, %v10727
      %v10729 = vpop.f32.mrf.mxu0
      %v10730 = vpop.f32.mrf.mxu0
      %v10731 = vadd.f32 %v10634, %v10730
      %v10732 = vpop.f32.mrf.mxu0
      %10733 = vmatprep.mubr.bf16.mxu0 %v10352
      %10734 = vmatmul.mubr.bf16.gmra.mxu0 %v10351
      %v10735 = vpop.f32.mrf.mxu0
      %v10736 = vadd.f32 %v10639, %v10735
      %v10737 = vpop.f32.mrf.mxu0
      %v10738 = vpop.f32.mrf.mxu0
      %v10739 = vadd.f32 %v10642, %v10738
      %v10740 = vpop.f32.mrf.mxu0
      %10741 = vmatprep.mubr.bf16.mxu0 %v10357
      %10742 = vmatmul.mubr.bf16.gmra.mxu0 %v10356
      %v10743 = vpop.f32.mrf.mxu0
      %v10744 = vadd.f32 %v10647, %v10743
      %v10745 = vpop.f32.mrf.mxu0
      %v10746 = vpop.f32.mrf.mxu0
      %v10747 = vadd.f32 %v10650, %v10746
      %v10748 = vpop.f32.mrf.mxu0
      %10749 = vmatprep.mubr.bf16.mxu0 %v10362
      %10750 = vmatmul.mubr.bf16.gmra.mxu0 %v10361
      %v10751 = vpop.f32.mrf.mxu0
      %v10752 = vadd.f32 %v10655, %v10751
      %v10753 = vpop.f32.mrf.mxu0
      %v10754 = vpop.f32.mrf.mxu0
      %v10755 = vadd.f32 %v10658, %v10754
      %v10756 = vpop.f32.mrf.mxu0
      %10757 = vdwg.mxu0
      %10758 = vmatprep.subr.bf16.mxu0 0
      %10759 = vmatpush1.bf16.msra.mxu0 0
      %10760 = vmatprep.subr.bf16.mxu0 0
      %10761 = vmatpush1.bf16.msra.mxu0 0
      %10762 = vmatprep.subr.bf16.mxu0 0
      %10763 = vmatpush1.bf16.msra.mxu0 0
      %10764 = vmatprep.subr.bf16.mxu0 0
      %10765 = vmatpush1.bf16.msra.mxu0 0
      %10766 = vmatprep.subr.bf16.mxu0 0
      %10767 = vmatpush1.bf16.msra.mxu0 %v10503
      %10768 = vmatprep.subr.bf16.mxu0 0
      %10769 = vmatpush1.bf16.msra.mxu0 %v10501
      %10770 = vmatprep.subr.bf16.mxu0 0
      %10771 = vmatpush1.bf16.msra.mxu0 %v10499
      %10772 = vmatprep.subr.bf16.mxu0 0
      %10773 = vmatpush1.bf16.msra.mxu0 %v10497
      %10774 = vmatprep.subr.bf16.mxu0 0
      %10775 = vmatpush2.bf16.msra.mxu0 0
      %10776 = vmatprep.subr.bf16.mxu0 0
      %10777 = vmatpush2.bf16.msra.mxu0 0
      %10778 = vmatprep.subr.bf16.mxu0 0
      %10779 = vmatpush2.bf16.msra.mxu0 0
      %10780 = vmatprep.subr.bf16.mxu0 0
      %10781 = vmatpush2.bf16.msra.mxu0 0
      %10782 = vmatprep.subr.bf16.mxu0 0
      %10783 = vmatpush2.bf16.msra.mxu0 0
      %10784 = vmatprep.subr.bf16.mxu0 0
      %10785 = vmatpush2.bf16.msra.mxu0 0
      %10786 = vmatprep.subr.bf16.mxu0 0
      %10787 = vmatpush2.bf16.msra.mxu0 0
      %10788 = vmatprep.subr.bf16.mxu0 0
      %10789 = vmatpush2.bf16.msra.mxu0 0
      %10790 = vmatprep.mubr.bf16.mxu0 0
      %10791 = vmatmul.mubr.bf16.gmra.mxu0 %v10541
      %v10792 = vpop.f32.mrf.mxu0
      %v10793 = vadd.f32 %v10696, %v10792
      %v10794 = vpop.f32.mrf.mxu0
      %v10795 = vpop.f32.mrf.mxu0
      %v10796 = vadd.f32 %v10699, %v10795
      %v10797 = vpop.f32.mrf.mxu0
      %10798 = vmatprep.mubr.bf16.mxu0 0
      %10799 = vmatmul.mubr.bf16.gmra.mxu0 %v10544
      %v10800 = vpop.f32.mrf.mxu0
      %v10801 = vadd.f32 %v10704, %v10800
      %v10802 = vpop.f32.mrf.mxu0
      %v10803 = vpop.f32.mrf.mxu0
      %v10804 = vadd.f32 %v10707, %v10803
      %v10805 = vpop.f32.mrf.mxu0
      %10806 = vmatprep.mubr.bf16.mxu0 0
      %10807 = vmatmul.mubr.bf16.gmra.mxu0 %v10547
      %v10808 = vpop.f32.mrf.mxu0
      %v10809 = vadd.f32 %v10712, %v10808
      %v10810 = vpop.f32.mrf.mxu0
      %v10811 = vpop.f32.mrf.mxu0
      %v10812 = vadd.f32 %v10715, %v10811
      %v10813 = vpop.f32.mrf.mxu0
      %10814 = vmatprep.mubr.bf16.mxu0 0
      %10815 = vmatmul.mubr.bf16.gmra.mxu0 %v10550
      %v10816 = vpop.f32.mrf.mxu0
      %v10817 = vadd.f32 %v10720, %v10816
      %v10818 = vpop.f32.mrf.mxu0
      %v10819 = vpop.f32.mrf.mxu0
      %v10820 = vadd.f32 %v10723, %v10819
      %v10821 = vpop.f32.mrf.mxu0
      %10822 = vmatprep.mubr.bf16.mxu0 0
      %10823 = vmatmul.mubr.bf16.gmra.mxu0 %v10553
      %v10824 = vpop.f32.mrf.mxu0
      %v10825 = vadd.f32 %v10728, %v10824
      %v10826 = vpop.f32.mrf.mxu0
      %v10827 = vpop.f32.mrf.mxu0
      %v10828 = vadd.f32 %v10731, %v10827
      %v10829 = vpop.f32.mrf.mxu0
      %10830 = vmatprep.mubr.bf16.mxu0 0
      %10831 = vmatmul.mubr.bf16.gmra.mxu0 %v10556
      %v10832 = vpop.f32.mrf.mxu0
      %v10833 = vadd.f32 %v10736, %v10832
      %v10834 = vpop.f32.mrf.mxu0
      %v10835 = vpop.f32.mrf.mxu0
      %v10836 = vadd.f32 %v10739, %v10835
      %v10837 = vpop.f32.mrf.mxu0
      %10838 = vmatprep.mubr.bf16.mxu0 0
      %10839 = vmatmul.mubr.bf16.gmra.mxu0 %v10559
      %v10840 = vpop.f32.mrf.mxu0
      %v10841 = vadd.f32 %v10744, %v10840
      %v10842 = vpop.f32.mrf.mxu0
      %v10843 = vpop.f32.mrf.mxu0
      %v10844 = vadd.f32 %v10747, %v10843
      %v10845 = vpop.f32.mrf.mxu0
      %10846 = vmatprep.mubr.bf16.mxu0 0
      %10847 = vmatmul.mubr.bf16.gmra.mxu0 %v10562
      %v10848 = vpop.f32.mrf.mxu0
      %v10849 = vadd.f32 %v10752, %v10848
      %v10850 = vpop.f32.mrf.mxu0
      %v10851 = vpop.f32.mrf.mxu0
      %v10852 = vadd.f32 %v10755, %v10851
      %v10853 = vpop.f32.mrf.mxu0
      %10854 = vdwg.mxu0
      %v10903 = vunpack.c.l.b16 %v10099
      %v10904 = vunpack.c.h.b16 %v10099
      %v10905 = vunpack.c.l.b16 %v10100
      %v10906 = vunpack.c.h.b16 %v10100
      %v10907 = vunpack.c.l.b16 %v10101
      %v10908 = vunpack.c.l.b16 %v10102
      %v10909 = vunpack.c.h.b16 %v10102
      %v10910 = vunpack.c.l.b16 %v10103
      %v10911 = vunpack.c.h.b16 %v10103
      %v10912 = vunpack.c.l.b16 %v10104
      %v10913 = vunpack.c.l.b16 %v10105
      %v10914 = vunpack.c.h.b16 %v10105
      %v10915 = vunpack.c.l.b16 %v10106
      %v10916 = vunpack.c.h.b16 %v10106
      %v10917 = vunpack.c.l.b16 %v10107
      %v10918 = vunpack.c.l.b16 %v10108
      %v10919 = vunpack.c.h.b16 %v10108
      %v10920 = vunpack.c.l.b16 %v10109
      %v10921 = vunpack.c.h.b16 %v10109
      %v10922 = vunpack.c.l.b16 %v10110
      %v10923 = vunpack.c.l.b16 %v10111
      %v10924 = vunpack.c.h.b16 %v10111
      %v10925 = vunpack.c.l.b16 %v10112
      %v10926 = vunpack.c.h.b16 %v10112
      %v10927 = vunpack.c.l.b16 %v10113
      %v10928 = vunpack.c.l.b16 %v10114
      %v10929 = vunpack.c.h.b16 %v10114
      %v10930 = vunpack.c.l.b16 %v10115
      %v10931 = vunpack.c.h.b16 %v10115
      %v10932 = vunpack.c.l.b16 %v10116
      %v10933 = vunpack.c.l.b16 %v10117
      %v10934 = vunpack.c.h.b16 %v10117
      %v10935 = vunpack.c.l.b16 %v10118
      %v10936 = vunpack.c.h.b16 %v10118
      %v10937 = vunpack.c.l.b16 %v10119
      %v10938 = vunpack.c.l.b16 %v10120
      %v10939 = vunpack.c.h.b16 %v10120
      %v10940 = vunpack.c.l.b16 %v10121
      %v10941 = vunpack.c.h.b16 %v10121
      %v10942 = vunpack.c.l.b16 %v10122
      %v10943 = vunpack.c.l.b16 %v10123
      %v10944 = vunpack.c.h.b16 %v10123
      %v10945 = vunpack.c.l.b16 %v10124
      %v10946 = vunpack.c.h.b16 %v10124
      %v10947 = vunpack.c.l.b16 %v10125
      %v10948 = vunpack.c.l.b16 %v10126
      %v10949 = vunpack.c.h.b16 %v10126
      %v10950 = vunpack.c.l.b16 %v10127
      %v10951 = vunpack.c.h.b16 %v10127
      %v10952 = vunpack.c.l.b16 %v10128
      %v10953 = vunpack.c.l.b16 %v10129
      %v10954 = vunpack.c.h.b16 %v10129
      %v10955 = vunpack.c.l.b16 %v10130
      %v10956 = vunpack.c.h.b16 %v10130
      %v10957 = vunpack.c.l.b16 %v10131
      %v10958 = vunpack.c.l.b16 %v10132
      %v10959 = vunpack.c.h.b16 %v10132
      %v10960 = vunpack.c.l.b16 %v10133
      %v10961 = vunpack.c.h.b16 %v10133
      %v10962 = vunpack.c.l.b16 %v10134
      %v10963 = vunpack.c.l.b16 %v10135
      %v10964 = vunpack.c.h.b16 %v10135
      %v10965 = vunpack.c.l.b16 %v10136
      %v10966 = vunpack.c.h.b16 %v10136
      %v10967 = vunpack.c.l.b16 %v10137
      %v10968 = vunpack.c.l.b16 %v10138
      %v10969 = vunpack.c.h.b16 %v10138
      %v10970 = vunpack.c.l.b16 %v10139
      %v10971 = vunpack.c.h.b16 %v10139
      %v10972 = vunpack.c.l.b16 %v10140
      %v10973 = vunpack.c.l.b16 %v10141
      %v10974 = vunpack.c.h.b16 %v10141
      %v10975 = vunpack.c.l.b16 %v10142
      %v10976 = vunpack.c.h.b16 %v10142
      %v10977 = vunpack.c.l.b16 %v10143
      %v10978 = vunpack.c.l.b16 %v10144
      %v10979 = vunpack.c.h.b16 %v10144
      %v10980 = vunpack.c.l.b16 %v10145
      %v10981 = vunpack.c.h.b16 %v10145
      %v10982 = vunpack.c.l.b16 %v10146
      %v10983 = vpack.c.b16 %v10908, %v10903
      %v10984 = vpack.c.b16 %v10909, %v10904
      %v10985 = vpack.c.b16 %v10910, %v10905
      %v10986 = vpack.c.b16 %v10911, %v10906
      %v10987 = vpack.c.b16 %v10912, %v10907
      %v10988 = vpack.c.b16 %v10918, %v10913
      %v10989 = vpack.c.b16 %v10919, %v10914
      %v10990 = vpack.c.b16 %v10920, %v10915
      %v10991 = vpack.c.b16 %v10921, %v10916
      %v10992 = vpack.c.b16 %v10922, %v10917
      %v10993 = vpack.c.b16 %v10928, %v10923
      %v10994 = vpack.c.b16 %v10929, %v10924
      %v10995 = vpack.c.b16 %v10930, %v10925
      %v10996 = vpack.c.b16 %v10931, %v10926
      %v10997 = vpack.c.b16 %v10932, %v10927
      %v10998 = vpack.c.b16 %v10938, %v10933
      %v10999 = vpack.c.b16 %v10939, %v10934
      %v11000 = vpack.c.b16 %v10940, %v10935
      %v11001 = vpack.c.b16 %v10941, %v10936
      %v11002 = vpack.c.b16 %v10942, %v10937
      %v11003 = vpack.c.b16 %v10948, %v10943
      %v11004 = vpack.c.b16 %v10949, %v10944
      %v11005 = vpack.c.b16 %v10950, %v10945
      %v11006 = vpack.c.b16 %v10951, %v10946
      %v11007 = vpack.c.b16 %v10952, %v10947
      %v11008 = vpack.c.b16 %v10958, %v10953
      %v11009 = vpack.c.b16 %v10959, %v10954
      %v11010 = vpack.c.b16 %v10960, %v10955
      %v11011 = vpack.c.b16 %v10961, %v10956
      %v11012 = vpack.c.b16 %v10962, %v10957
      %v11013 = vpack.c.b16 %v10968, %v10963
      %v11014 = vpack.c.b16 %v10969, %v10964
      %v11015 = vpack.c.b16 %v10970, %v10965
      %v11016 = vpack.c.b16 %v10971, %v10966
      %v11017 = vpack.c.b16 %v10972, %v10967
      %v11018 = vpack.c.b16 %v10978, %v10973
      %v11019 = vpack.c.b16 %v10979, %v10974
      %v11020 = vpack.c.b16 %v10980, %v10975
      %v11021 = vpack.c.b16 %v10981, %v10976
      %v11022 = vpack.c.b16 %v10982, %v10977
      %v11056 = vsel %vm449, %v10987, 0
      %v11059 = vsel %vm449, %v10992, 0
      %v11062 = vsel %vm449, %v10997, 0
      %v11065 = vsel %vm449, %v11002, 0
      %v11068 = vsel %vm449, %v11007, 0
      %v11071 = vsel %vm449, %v11012, 0
      %v11074 = vsel %vm449, %v11017, 0
      %v11077 = vsel %vm449, %v11022, 0
      %11079 = vmatprep.subr.bf16.mxu0 0
      %11080 = vmatpush1.bf16.msra.mxu0 %v10070
      %11081 = vmatprep.subr.bf16.mxu0 0
      %11082 = vmatpush1.bf16.msra.mxu0 %v10069
      %11083 = vmatprep.subr.bf16.mxu0 0
      %11084 = vmatpush1.bf16.msra.mxu0 %v10068
      %11085 = vmatprep.subr.bf16.mxu0 0
      %11086 = vmatpush1.bf16.msra.mxu0 %v10067
      %11087 = vmatprep.subr.bf16.mxu0 0
      %11088 = vmatpush1.bf16.msra.mxu0 %v10066
      %11089 = vmatprep.subr.bf16.mxu0 0
      %11090 = vmatpush1.bf16.msra.mxu0 %v10065
      %11091 = vmatprep.subr.bf16.mxu0 0
      %11092 = vmatpush1.bf16.msra.mxu0 %v10064
      %11093 = vmatprep.subr.bf16.mxu0 0
      %11094 = vmatpush1.bf16.msra.mxu0 %v10063
      %11095 = vmatprep.subr.bf16.mxu0 0
      %11096 = vmatpush2.bf16.msra.mxu0 %v10078
      %11097 = vmatprep.subr.bf16.mxu0 0
      %11098 = vmatpush2.bf16.msra.mxu0 %v10077
      %11099 = vmatprep.subr.bf16.mxu0 0
      %11100 = vmatpush2.bf16.msra.mxu0 %v10076
      %11101 = vmatprep.subr.bf16.mxu0 0
      %11102 = vmatpush2.bf16.msra.mxu0 %v10075
      %11103 = vmatprep.subr.bf16.mxu0 0
      %11104 = vmatpush2.bf16.msra.mxu0 %v10074
      %11105 = vmatprep.subr.bf16.mxu0 0
      %11106 = vmatpush2.bf16.msra.mxu0 %v10073
      %11107 = vmatprep.subr.bf16.mxu0 0
      %11108 = vmatpush2.bf16.msra.mxu0 %v10072
      %11109 = vmatprep.subr.bf16.mxu0 0
      %11110 = vmatpush2.bf16.msra.mxu0 %v10071
      %11111 = vmatprep.mubr.bf16.mxu0 %v10984
      %11112 = vmatmul.mubr.bf16.gmra.mxu0 %v10983
      %v11113 = vpop.f32.mrf.mxu0
      %v11114 = vadd.f32 %v10793, %v11113
      %v11115 = vpop.f32.mrf.mxu0
      %v11116 = vpop.f32.mrf.mxu0
      %v11117 = vadd.f32 %v10796, %v11116
      %v11118 = vpop.f32.mrf.mxu0
      %11119 = vmatprep.mubr.bf16.mxu0 %v10989
      %11120 = vmatmul.mubr.bf16.gmra.mxu0 %v10988
      %v11121 = vpop.f32.mrf.mxu0
      %v11122 = vadd.f32 %v10801, %v11121
      %v11123 = vpop.f32.mrf.mxu0
      %v11124 = vpop.f32.mrf.mxu0
      %v11125 = vadd.f32 %v10804, %v11124
      %v11126 = vpop.f32.mrf.mxu0
      %11127 = vmatprep.mubr.bf16.mxu0 %v10994
      %11128 = vmatmul.mubr.bf16.gmra.mxu0 %v10993
      %v11129 = vpop.f32.mrf.mxu0
      %v11130 = vadd.f32 %v10809, %v11129
      %v11131 = vpop.f32.mrf.mxu0
      %v11132 = vpop.f32.mrf.mxu0
      %v11133 = vadd.f32 %v10812, %v11132
      %v11134 = vpop.f32.mrf.mxu0
      %11135 = vmatprep.mubr.bf16.mxu0 %v10999
      %11136 = vmatmul.mubr.bf16.gmra.mxu0 %v10998
      %v11137 = vpop.f32.mrf.mxu0
      %v11138 = vadd.f32 %v10817, %v11137
      %v11139 = vpop.f32.mrf.mxu0
      %v11140 = vpop.f32.mrf.mxu0
      %v11141 = vadd.f32 %v10820, %v11140
      %v11142 = vpop.f32.mrf.mxu0
      %11143 = vmatprep.mubr.bf16.mxu0 %v11004
      %11144 = vmatmul.mubr.bf16.gmra.mxu0 %v11003
      %v11145 = vpop.f32.mrf.mxu0
      %v11146 = vadd.f32 %v10825, %v11145
      %v11147 = vpop.f32.mrf.mxu0
      %v11148 = vpop.f32.mrf.mxu0
      %v11149 = vadd.f32 %v10828, %v11148
      %v11150 = vpop.f32.mrf.mxu0
      %11151 = vmatprep.mubr.bf16.mxu0 %v11009
      %11152 = vmatmul.mubr.bf16.gmra.mxu0 %v11008
      %v11153 = vpop.f32.mrf.mxu0
      %v11154 = vadd.f32 %v10833, %v11153
      %v11155 = vpop.f32.mrf.mxu0
      %v11156 = vpop.f32.mrf.mxu0
      %v11157 = vadd.f32 %v10836, %v11156
      %v11158 = vpop.f32.mrf.mxu0
      %11159 = vmatprep.mubr.bf16.mxu0 %v11014
      %11160 = vmatmul.mubr.bf16.gmra.mxu0 %v11013
      %v11161 = vpop.f32.mrf.mxu0
      %v11162 = vadd.f32 %v10841, %v11161
      %v11163 = vpop.f32.mrf.mxu0
      %v11164 = vpop.f32.mrf.mxu0
      %v11165 = vadd.f32 %v10844, %v11164
      %v11166 = vpop.f32.mrf.mxu0
      %11167 = vmatprep.mubr.bf16.mxu0 %v11019
      %11168 = vmatmul.mubr.bf16.gmra.mxu0 %v11018
      %v11169 = vpop.f32.mrf.mxu0
      %v11170 = vadd.f32 %v10849, %v11169
      %v11171 = vpop.f32.mrf.mxu0
      %v11172 = vpop.f32.mrf.mxu0
      %v11173 = vadd.f32 %v10852, %v11172
      %v11174 = vpop.f32.mrf.mxu0
      %11175 = vdwg.mxu0
      %11176 = vmatprep.subr.bf16.mxu0 0
      %11177 = vmatpush1.bf16.msra.mxu0 %v10086
      %11178 = vmatprep.subr.bf16.mxu0 0
      %11179 = vmatpush1.bf16.msra.mxu0 %v10085
      %11180 = vmatprep.subr.bf16.mxu0 0
      %11181 = vmatpush1.bf16.msra.mxu0 %v10084
      %11182 = vmatprep.subr.bf16.mxu0 0
      %11183 = vmatpush1.bf16.msra.mxu0 %v10083
      %11184 = vmatprep.subr.bf16.mxu0 0
      %11185 = vmatpush1.bf16.msra.mxu0 %v10082
      %11186 = vmatprep.subr.bf16.mxu0 0
      %11187 = vmatpush1.bf16.msra.mxu0 %v10081
      %11188 = vmatprep.subr.bf16.mxu0 0
      %11189 = vmatpush1.bf16.msra.mxu0 %v10080
      %11190 = vmatprep.subr.bf16.mxu0 0
      %11191 = vmatpush1.bf16.msra.mxu0 %v10079
      %11192 = vmatprep.subr.bf16.mxu0 0
      %11193 = vmatpush2.bf16.msra.mxu0 %v10094
      %11194 = vmatprep.subr.bf16.mxu0 0
      %11195 = vmatpush2.bf16.msra.mxu0 %v10093
      %11196 = vmatprep.subr.bf16.mxu0 0
      %11197 = vmatpush2.bf16.msra.mxu0 %v10092
      %11198 = vmatprep.subr.bf16.mxu0 0
      %11199 = vmatpush2.bf16.msra.mxu0 %v10091
      %11200 = vmatprep.subr.bf16.mxu0 0
      %11201 = vmatpush2.bf16.msra.mxu0 %v10090
      %11202 = vmatprep.subr.bf16.mxu0 0
      %11203 = vmatpush2.bf16.msra.mxu0 %v10089
      %11204 = vmatprep.subr.bf16.mxu0 0
      %11205 = vmatpush2.bf16.msra.mxu0 %v10088
      %11206 = vmatprep.subr.bf16.mxu0 0
      %11207 = vmatpush2.bf16.msra.mxu0 %v10087
      %11208 = vmatprep.mubr.bf16.mxu0 %v10986
      %11209 = vmatmul.mubr.bf16.gmra.mxu0 %v10985
      %v11210 = vpop.f32.mrf.mxu0
      %v11211 = vadd.f32 %v11114, %v11210
      %v11212 = vpop.f32.mrf.mxu0
      %v11213 = vpop.f32.mrf.mxu0
      %v11214 = vadd.f32 %v11117, %v11213
      %v11215 = vpop.f32.mrf.mxu0
      %11216 = vmatprep.mubr.bf16.mxu0 %v10991
      %11217 = vmatmul.mubr.bf16.gmra.mxu0 %v10990
      %v11218 = vpop.f32.mrf.mxu0
      %v11219 = vadd.f32 %v11122, %v11218
      %v11220 = vpop.f32.mrf.mxu0
      %v11221 = vpop.f32.mrf.mxu0
      %v11222 = vadd.f32 %v11125, %v11221
      %v11223 = vpop.f32.mrf.mxu0
      %11224 = vmatprep.mubr.bf16.mxu0 %v10996
      %11225 = vmatmul.mubr.bf16.gmra.mxu0 %v10995
      %v11226 = vpop.f32.mrf.mxu0
      %v11227 = vadd.f32 %v11130, %v11226
      %v11228 = vpop.f32.mrf.mxu0
      %v11229 = vpop.f32.mrf.mxu0
      %v11230 = vadd.f32 %v11133, %v11229
      %v11231 = vpop.f32.mrf.mxu0
      %11232 = vmatprep.mubr.bf16.mxu0 %v11001
      %11233 = vmatmul.mubr.bf16.gmra.mxu0 %v11000
      %v11234 = vpop.f32.mrf.mxu0
      %v11235 = vadd.f32 %v11138, %v11234
      %v11236 = vpop.f32.mrf.mxu0
      %v11237 = vpop.f32.mrf.mxu0
      %v11238 = vadd.f32 %v11141, %v11237
      %v11239 = vpop.f32.mrf.mxu0
      %11240 = vmatprep.mubr.bf16.mxu0 %v11006
      %11241 = vmatmul.mubr.bf16.gmra.mxu0 %v11005
      %v11242 = vpop.f32.mrf.mxu0
      %v11243 = vadd.f32 %v11146, %v11242
      %v11244 = vpop.f32.mrf.mxu0
      %v11245 = vpop.f32.mrf.mxu0
      %v11246 = vadd.f32 %v11149, %v11245
      %v11247 = vpop.f32.mrf.mxu0
      %11248 = vmatprep.mubr.bf16.mxu0 %v11011
      %11249 = vmatmul.mubr.bf16.gmra.mxu0 %v11010
      %v11250 = vpop.f32.mrf.mxu0
      %v11251 = vadd.f32 %v11154, %v11250
      %v11252 = vpop.f32.mrf.mxu0
      %v11253 = vpop.f32.mrf.mxu0
      %v11254 = vadd.f32 %v11157, %v11253
      %v11255 = vpop.f32.mrf.mxu0
      %11256 = vmatprep.mubr.bf16.mxu0 %v11016
      %11257 = vmatmul.mubr.bf16.gmra.mxu0 %v11015
      %v11258 = vpop.f32.mrf.mxu0
      %v11259 = vadd.f32 %v11162, %v11258
      %v11260 = vpop.f32.mrf.mxu0
      %v11261 = vpop.f32.mrf.mxu0
      %v11262 = vadd.f32 %v11165, %v11261
      %v11263 = vpop.f32.mrf.mxu0
      %11264 = vmatprep.mubr.bf16.mxu0 %v11021
      %11265 = vmatmul.mubr.bf16.gmra.mxu0 %v11020
      %v11266 = vpop.f32.mrf.mxu0
      %v11267 = vadd.f32 %v11170, %v11266
      %v11268 = vpop.f32.mrf.mxu0
      %v11269 = vpop.f32.mrf.mxu0
      %v11270 = vadd.f32 %v11173, %v11269
      %v11271 = vpop.f32.mrf.mxu0
      %11272 = vdwg.mxu0
      %11273 = vmatprep.subr.bf16.mxu0 0
      %11274 = vmatpush1.bf16.msra.mxu0 0
      %11275 = vmatprep.subr.bf16.mxu0 0
      %11276 = vmatpush1.bf16.msra.mxu0 0
      %11277 = vmatprep.subr.bf16.mxu0 0
      %11278 = vmatpush1.bf16.msra.mxu0 0
      %11279 = vmatprep.subr.bf16.mxu0 0
      %11280 = vmatpush1.bf16.msra.mxu0 0
      %11281 = vmatprep.subr.bf16.mxu0 0
      %11282 = vmatpush1.bf16.msra.mxu0 %v10098
      %11283 = vmatprep.subr.bf16.mxu0 0
      %11284 = vmatpush1.bf16.msra.mxu0 %v10097
      %11285 = vmatprep.subr.bf16.mxu0 0
      %11286 = vmatpush1.bf16.msra.mxu0 %v10096
      %11287 = vmatprep.subr.bf16.mxu0 0
      %11288 = vmatpush1.bf16.msra.mxu0 %v10095
      %11289 = vmatprep.subr.bf16.mxu0 0
      %11290 = vmatpush2.bf16.msra.mxu0 0
      %11291 = vmatprep.subr.bf16.mxu0 0
      %11292 = vmatpush2.bf16.msra.mxu0 0
      %11293 = vmatprep.subr.bf16.mxu0 0
      %11294 = vmatpush2.bf16.msra.mxu0 0
      %11295 = vmatprep.subr.bf16.mxu0 0
      %11296 = vmatpush2.bf16.msra.mxu0 0
      %11297 = vmatprep.subr.bf16.mxu0 0
      %11298 = vmatpush2.bf16.msra.mxu0 0
      %11299 = vmatprep.subr.bf16.mxu0 0
      %11300 = vmatpush2.bf16.msra.mxu0 0
      %11301 = vmatprep.subr.bf16.mxu0 0
      %11302 = vmatpush2.bf16.msra.mxu0 0
      %11303 = vmatprep.subr.bf16.mxu0 0
      %11304 = vmatpush2.bf16.msra.mxu0 0
      %11305 = vmatprep.mubr.bf16.mxu0 0
      %11306 = vmatmul.mubr.bf16.gmra.mxu0 %v11056
      %v11307 = vpop.f32.mrf.mxu0
      %v11308 = vadd.f32 %v11211, %v11307
      %v11309 = vpop.f32.mrf.mxu0
      %v11310 = vpop.f32.mrf.mxu0
      %v11311 = vadd.f32 %v11214, %v11310
      %v11312 = vpop.f32.mrf.mxu0
      %11313 = vmatprep.mubr.bf16.mxu0 0
      %11314 = vmatmul.mubr.bf16.gmra.mxu0 %v11059
      %v11315 = vpop.f32.mrf.mxu0
      %v11316 = vadd.f32 %v11219, %v11315
      %v11317 = vpop.f32.mrf.mxu0
      %v11318 = vpop.f32.mrf.mxu0
      %v11319 = vadd.f32 %v11222, %v11318
      %v11320 = vpop.f32.mrf.mxu0
      %11321 = vmatprep.mubr.bf16.mxu0 0
      %11322 = vmatmul.mubr.bf16.gmra.mxu0 %v11062
      %v11323 = vpop.f32.mrf.mxu0
      %v11324 = vadd.f32 %v11227, %v11323
      %v11325 = vpop.f32.mrf.mxu0
      %v11326 = vpop.f32.mrf.mxu0
      %v11327 = vadd.f32 %v11230, %v11326
      %v11328 = vpop.f32.mrf.mxu0
      %11329 = vmatprep.mubr.bf16.mxu0 0
      %11330 = vmatmul.mubr.bf16.gmra.mxu0 %v11065
      %v11331 = vpop.f32.mrf.mxu0
      %v11332 = vadd.f32 %v11235, %v11331
      %v11333 = vpop.f32.mrf.mxu0
      %v11334 = vpop.f32.mrf.mxu0
      %v11335 = vadd.f32 %v11238, %v11334
      %v11336 = vpop.f32.mrf.mxu0
      %11337 = vmatprep.mubr.bf16.mxu0 0
      %11338 = vmatmul.mubr.bf16.gmra.mxu0 %v11068
      %v11339 = vpop.f32.mrf.mxu0
      %v11340 = vadd.f32 %v11243, %v11339
      %v11341 = vpop.f32.mrf.mxu0
      %v11342 = vpop.f32.mrf.mxu0
      %v11343 = vadd.f32 %v11246, %v11342
      %v11344 = vpop.f32.mrf.mxu0
      %11345 = vmatprep.mubr.bf16.mxu0 0
      %11346 = vmatmul.mubr.bf16.gmra.mxu0 %v11071
      %v11347 = vpop.f32.mrf.mxu0
      %v11348 = vadd.f32 %v11251, %v11347
      %v11349 = vpop.f32.mrf.mxu0
      %v11350 = vpop.f32.mrf.mxu0
      %v11351 = vadd.f32 %v11254, %v11350
      %v11352 = vpop.f32.mrf.mxu0
      %11353 = vmatprep.mubr.bf16.mxu0 0
      %11354 = vmatmul.mubr.bf16.gmra.mxu0 %v11074
      %v11355 = vpop.f32.mrf.mxu0
      %v11356 = vadd.f32 %v11259, %v11355
      %v11357 = vpop.f32.mrf.mxu0
      %v11358 = vpop.f32.mrf.mxu0
      %v11359 = vadd.f32 %v11262, %v11358
      %v11360 = vpop.f32.mrf.mxu0
      %11361 = vmatprep.mubr.bf16.mxu0 0
      %11362 = vmatmul.mubr.bf16.gmra.mxu0 %v11077
      %v11363 = vpop.f32.mrf.mxu0
      %v11364 = vadd.f32 %v11267, %v11363
      %v11365 = vpop.f32.mrf.mxu0
      %v11366 = vpop.f32.mrf.mxu0
      %v11367 = vadd.f32 %v11270, %v11366
      %v11368 = vpop.f32.mrf.mxu0
      %11369 = vdwg.mxu0
      %s11370 = scalar_lea.vmem %s9, 640
      %v11371 = vld [vmem:[%s11370] sm:$0xff]
      %v11372 = vld [vmem:[%s11370 + $0x8] sm:$0xff]
      %v11373 = vld [vmem:[%s11370 + $0x10] sm:$0xf]
      %v11374 = vld [vmem:[%s11370 + $0x14] sm:$0xff]
      %v11375 = vld [vmem:[%s11370 + $0x1c] sm:$0xff]
      %v11376 = vld [vmem:[%s11370 + $0x24] sm:$0xf]
      %v11377 = vld [vmem:[%s11370 + $0x28] sm:$0xff]
      %v11378 = vld [vmem:[%s11370 + $0x30] sm:$0xff]
      %v11379 = vld [vmem:[%s11370 + $0x38] sm:$0xf]
      %v11380 = vld [vmem:[%s11370 + $0x3c] sm:$0xff]
      %v11381 = vld [vmem:[%s11370 + $0x44] sm:$0xff]
      %v11382 = vld [vmem:[%s11370 + $0x4c] sm:$0xf]
      %v11383 = vld [vmem:[%s11370 + $0x50] sm:$0xff]
      %v11384 = vld [vmem:[%s11370 + $0x58] sm:$0xff]
      %v11385 = vld [vmem:[%s11370 + $0x60] sm:$0xf]
      %v11386 = vld [vmem:[%s11370 + $0x64] sm:$0xff]
      %v11387 = vld [vmem:[%s11370 + $0x6c] sm:$0xff]
      %v11388 = vld [vmem:[%s11370 + $0x74] sm:$0xf]
      %v11389 = vld [vmem:[%s11370 + $0x78] sm:$0xff]
      %v11390 = vld [vmem:[%s11370 + $0x80] sm:$0xff]
      %v11391 = vld [vmem:[%s11370 + $0x88] sm:$0xf]
      %v11392 = vld [vmem:[%s11370 + $0x8c] sm:$0xff]
      %v11393 = vld [vmem:[%s11370 + $0x94] sm:$0xff]
      %v11394 = vld [vmem:[%s11370 + $0x9c] sm:$0xf]
      %v11395 = vld [vmem:[%s11370 + $0xa0] sm:$0xff]
      %v11396 = vld [vmem:[%s11370 + $0xa8] sm:$0xff]
      %v11397 = vld [vmem:[%s11370 + $0xb0] sm:$0xf]
      %v11398 = vld [vmem:[%s11370 + $0xb4] sm:$0xff]
      %v11399 = vld [vmem:[%s11370 + $0xbc] sm:$0xff]
      %v11400 = vld [vmem:[%s11370 + $0xc4] sm:$0xf]
      %v11401 = vld [vmem:[%s11370 + $0xc8] sm:$0xff]
      %v11402 = vld [vmem:[%s11370 + $0xd0] sm:$0xff]
      %v11403 = vld [vmem:[%s11370 + $0xd8] sm:$0xf]
      %v11404 = vld [vmem:[%s11370 + $0xdc] sm:$0xff]
      %v11405 = vld [vmem:[%s11370 + $0xe4] sm:$0xff]
      %v11406 = vld [vmem:[%s11370 + $0xec] sm:$0xf]
      %v11407 = vld [vmem:[%s11370 + $0xf0] sm:$0xff]
      %v11408 = vld [vmem:[%s11370 + $0xf8] sm:$0xff]
      %v11409 = vld [vmem:[%s11370 + $0x100] sm:$0xf]
      %v11410 = vld [vmem:[%s11370 + $0x104] sm:$0xff]
      %v11411 = vld [vmem:[%s11370 + $0x10c] sm:$0xff]
      %v11412 = vld [vmem:[%s11370 + $0x114] sm:$0xf]
      %v11413 = vld [vmem:[%s11370 + $0x118] sm:$0xff]
      %v11414 = vld [vmem:[%s11370 + $0x120] sm:$0xff]
      %v11415 = vld [vmem:[%s11370 + $0x128] sm:$0xf]
      %v11416 = vld [vmem:[%s11370 + $0x12c] sm:$0xff]
      %v11417 = vld [vmem:[%s11370 + $0x134] sm:$0xff]
      %v11418 = vld [vmem:[%s11370 + $0x13c] sm:$0xf]
      %v11467 = vunpack.c.l.b16 %v11371
      %v11468 = vunpack.c.h.b16 %v11371
      %v11469 = vunpack.c.l.b16 %v11372
      %v11470 = vunpack.c.h.b16 %v11372
      %v11471 = vunpack.c.l.b16 %v11373
      %v11472 = vunpack.c.l.b16 %v11374
      %v11473 = vunpack.c.h.b16 %v11374
      %v11474 = vunpack.c.l.b16 %v11375
      %v11475 = vunpack.c.h.b16 %v11375
      %v11476 = vunpack.c.l.b16 %v11376
      %v11477 = vunpack.c.l.b16 %v11377
      %v11478 = vunpack.c.h.b16 %v11377
      %v11479 = vunpack.c.l.b16 %v11378
      %v11480 = vunpack.c.h.b16 %v11378
      %v11481 = vunpack.c.l.b16 %v11379
      %v11482 = vunpack.c.l.b16 %v11380
      %v11483 = vunpack.c.h.b16 %v11380
      %v11484 = vunpack.c.l.b16 %v11381
      %v11485 = vunpack.c.h.b16 %v11381
      %v11486 = vunpack.c.l.b16 %v11382
      %v11487 = vunpack.c.l.b16 %v11383
      %v11488 = vunpack.c.h.b16 %v11383
      %v11489 = vunpack.c.l.b16 %v11384
      %v11490 = vunpack.c.h.b16 %v11384
      %v11491 = vunpack.c.l.b16 %v11385
      %v11492 = vunpack.c.l.b16 %v11386
      %v11493 = vunpack.c.h.b16 %v11386
      %v11494 = vunpack.c.l.b16 %v11387
      %v11495 = vunpack.c.h.b16 %v11387
      %v11496 = vunpack.c.l.b16 %v11388
      %v11497 = vunpack.c.l.b16 %v11389
      %v11498 = vunpack.c.h.b16 %v11389
      %v11499 = vunpack.c.l.b16 %v11390
      %v11500 = vunpack.c.h.b16 %v11390
      %v11501 = vunpack.c.l.b16 %v11391
      %v11502 = vunpack.c.l.b16 %v11392
      %v11503 = vunpack.c.h.b16 %v11392
      %v11504 = vunpack.c.l.b16 %v11393
      %v11505 = vunpack.c.h.b16 %v11393
      %v11506 = vunpack.c.l.b16 %v11394
      %v11507 = vunpack.c.l.b16 %v11395
      %v11508 = vunpack.c.h.b16 %v11395
      %v11509 = vunpack.c.l.b16 %v11396
      %v11510 = vunpack.c.h.b16 %v11396
      %v11511 = vunpack.c.l.b16 %v11397
      %v11512 = vunpack.c.l.b16 %v11398
      %v11513 = vunpack.c.h.b16 %v11398
      %v11514 = vunpack.c.l.b16 %v11399
      %v11515 = vunpack.c.h.b16 %v11399
      %v11516 = vunpack.c.l.b16 %v11400
      %v11517 = vunpack.c.l.b16 %v11401
      %v11518 = vunpack.c.h.b16 %v11401
      %v11519 = vunpack.c.l.b16 %v11402
      %v11520 = vunpack.c.h.b16 %v11402
      %v11521 = vunpack.c.l.b16 %v11403
      %v11522 = vunpack.c.l.b16 %v11404
      %v11523 = vunpack.c.h.b16 %v11404
      %v11524 = vunpack.c.l.b16 %v11405
      %v11525 = vunpack.c.h.b16 %v11405
      %v11526 = vunpack.c.l.b16 %v11406
      %v11527 = vunpack.c.l.b16 %v11407
      %v11528 = vunpack.c.h.b16 %v11407
      %v11529 = vunpack.c.l.b16 %v11408
      %v11530 = vunpack.c.h.b16 %v11408
      %v11531 = vunpack.c.l.b16 %v11409
      %v11532 = vunpack.c.l.b16 %v11410
      %v11533 = vunpack.c.h.b16 %v11410
      %v11534 = vunpack.c.l.b16 %v11411
      %v11535 = vunpack.c.h.b16 %v11411
      %v11536 = vunpack.c.l.b16 %v11412
      %v11537 = vunpack.c.l.b16 %v11413
      %v11538 = vunpack.c.h.b16 %v11413
      %v11539 = vunpack.c.l.b16 %v11414
      %v11540 = vunpack.c.h.b16 %v11414
      %v11541 = vunpack.c.l.b16 %v11415
      %v11542 = vunpack.c.l.b16 %v11416
      %v11543 = vunpack.c.h.b16 %v11416
      %v11544 = vunpack.c.l.b16 %v11417
      %v11545 = vunpack.c.h.b16 %v11417
      %v11546 = vunpack.c.l.b16 %v11418
      %v11547 = vpack.c.b16 %v11472, %v11467
      %v11548 = vpack.c.b16 %v11473, %v11468
      %v11549 = vpack.c.b16 %v11474, %v11469
      %v11550 = vpack.c.b16 %v11475, %v11470
      %v11551 = vpack.c.b16 %v11476, %v11471
      %v11552 = vpack.c.b16 %v11482, %v11477
      %v11553 = vpack.c.b16 %v11483, %v11478
      %v11554 = vpack.c.b16 %v11484, %v11479
      %v11555 = vpack.c.b16 %v11485, %v11480
      %v11556 = vpack.c.b16 %v11486, %v11481
      %v11557 = vpack.c.b16 %v11492, %v11487
      %v11558 = vpack.c.b16 %v11493, %v11488
      %v11559 = vpack.c.b16 %v11494, %v11489
      %v11560 = vpack.c.b16 %v11495, %v11490
      %v11561 = vpack.c.b16 %v11496, %v11491
      %v11562 = vpack.c.b16 %v11502, %v11497
      %v11563 = vpack.c.b16 %v11503, %v11498
      %v11564 = vpack.c.b16 %v11504, %v11499
      %v11565 = vpack.c.b16 %v11505, %v11500
      %v11566 = vpack.c.b16 %v11506, %v11501
      %v11567 = vpack.c.b16 %v11512, %v11507
      %v11568 = vpack.c.b16 %v11513, %v11508
      %v11569 = vpack.c.b16 %v11514, %v11509
      %v11570 = vpack.c.b16 %v11515, %v11510
      %v11571 = vpack.c.b16 %v11516, %v11511
      %v11572 = vpack.c.b16 %v11522, %v11517
      %v11573 = vpack.c.b16 %v11523, %v11518
      %v11574 = vpack.c.b16 %v11524, %v11519
      %v11575 = vpack.c.b16 %v11525, %v11520
      %v11576 = vpack.c.b16 %v11526, %v11521
      %v11577 = vpack.c.b16 %v11532, %v11527
      %v11578 = vpack.c.b16 %v11533, %v11528
      %v11579 = vpack.c.b16 %v11534, %v11529
      %v11580 = vpack.c.b16 %v11535, %v11530
      %v11581 = vpack.c.b16 %v11536, %v11531
      %v11582 = vpack.c.b16 %v11542, %v11537
      %v11583 = vpack.c.b16 %v11543, %v11538
      %v11584 = vpack.c.b16 %v11544, %v11539
      %v11585 = vpack.c.b16 %v11545, %v11540
      %v11586 = vpack.c.b16 %v11546, %v11541
      %11619 = vrot.lane.b32.xlu0 %v10063, 126
      %v11620 = vpop.permute.xlu0 %11619
      %11621 = vrot.lane.b32.xlu0 %v10064, 126
      %v11622 = vpop.permute.xlu0 %11621
      %11623 = vrot.lane.b32.xlu0 %v10065, 126
      %v11624 = vpop.permute.xlu0 %11623
      %11625 = vrot.lane.b32.xlu0 %v10066, 126
      %v11626 = vpop.permute.xlu0 %11625
      %11627 = vrot.lane.b32.xlu0 %v10067, 126
      %v11628 = vpop.permute.xlu0 %11627
      %11629 = vrot.lane.b32.xlu0 %v10068, 126
      %v11630 = vpop.permute.xlu0 %11629
      %11631 = vrot.lane.b32.xlu0 %v10069, 126
      %v11632 = vpop.permute.xlu0 %11631
      %11633 = vrot.lane.b32.xlu0 %v10070, 126
      %v11634 = vpop.permute.xlu0 %11633
      %11635 = vrot.lane.b32.xlu0 %v10071, 126
      %v11636 = vpop.permute.xlu0 %11635
      %11637 = vrot.lane.b32.xlu0 %v10072, 126
      %v11638 = vpop.permute.xlu0 %11637
      %11639 = vrot.lane.b32.xlu0 %v10073, 126
      %v11640 = vpop.permute.xlu0 %11639
      %11641 = vrot.lane.b32.xlu0 %v10074, 126
      %v11642 = vpop.permute.xlu0 %11641
      %11643 = vrot.lane.b32.xlu0 %v10075, 126
      %v11644 = vpop.permute.xlu0 %11643
      %11645 = vrot.lane.b32.xlu0 %v10076, 126
      %v11646 = vpop.permute.xlu0 %11645
      %11647 = vrot.lane.b32.xlu0 %v10077, 126
      %v11648 = vpop.permute.xlu0 %11647
      %11649 = vrot.lane.b32.xlu0 %v10078, 126
      %v11650 = vpop.permute.xlu0 %11649
      %11651 = vrot.lane.b32.xlu0 %v10079, 126
      %v11652 = vpop.permute.xlu0 %11651
      %11653 = vrot.lane.b32.xlu0 %v10080, 126
      %v11654 = vpop.permute.xlu0 %11653
      %11655 = vrot.lane.b32.xlu0 %v10081, 126
      %v11656 = vpop.permute.xlu0 %11655
      %11657 = vrot.lane.b32.xlu0 %v10082, 126
      %v11658 = vpop.permute.xlu0 %11657
      %11659 = vrot.lane.b32.xlu0 %v10083, 126
      %v11660 = vpop.permute.xlu0 %11659
      %11661 = vrot.lane.b32.xlu0 %v10084, 126
      %v11662 = vpop.permute.xlu0 %11661
      %11663 = vrot.lane.b32.xlu0 %v10085, 126
      %v11664 = vpop.permute.xlu0 %11663
      %11665 = vrot.lane.b32.xlu0 %v10086, 126
      %v11666 = vpop.permute.xlu0 %11665
      %11667 = vrot.lane.b32.xlu0 %v10087, 126
      %v11668 = vpop.permute.xlu0 %11667
      %11669 = vrot.lane.b32.xlu0 %v10088, 126
      %v11670 = vpop.permute.xlu0 %11669
      %11671 = vrot.lane.b32.xlu0 %v10089, 126
      %v11672 = vpop.permute.xlu0 %11671
      %11673 = vrot.lane.b32.xlu0 %v10090, 126
      %v11674 = vpop.permute.xlu0 %11673
      %11675 = vrot.lane.b32.xlu0 %v10091, 126
      %v11676 = vpop.permute.xlu0 %11675
      %11677 = vrot.lane.b32.xlu0 %v10092, 126
      %v11678 = vpop.permute.xlu0 %11677
      %11679 = vrot.lane.b32.xlu0 %v10093, 126
      %v11680 = vpop.permute.xlu0 %11679
      %11681 = vrot.lane.b32.xlu0 %v10094, 126
      %v11682 = vpop.permute.xlu0 %11681
      %11683 = vrot.lane.b32.xlu0 %v10095, 126
      %v11684 = vpop.permute.xlu0 %11683
      %11685 = vrot.lane.b32.xlu0 %v10096, 126
      %v11686 = vpop.permute.xlu0 %11685
      %11687 = vrot.lane.b32.xlu0 %v10097, 126
      %v11688 = vpop.permute.xlu0 %11687
      %11689 = vrot.lane.b32.xlu0 %v10098, 126
      %v11690 = vpop.permute.xlu0 %11689
      %v11728 = vsel %vm449, %v11551, 0
      %v11731 = vsel %vm449, %v11556, 0
      %v11734 = vsel %vm449, %v11561, 0
      %v11737 = vsel %vm449, %v11566, 0
      %v11740 = vsel %vm449, %v11571, 0
      %v11743 = vsel %vm449, %v11576, 0
      %v11746 = vsel %vm449, %v11581, 0
      %v11749 = vsel %vm449, %v11586, 0
      %11751 = vmatprep.subr.bf16.mxu0 0
      %11752 = vmatpush1.bf16.msra.mxu0 %v11634
      %11753 = vmatprep.subr.bf16.mxu0 0
      %11754 = vmatpush1.bf16.msra.mxu0 %v11632
      %11755 = vmatprep.subr.bf16.mxu0 0
      %11756 = vmatpush1.bf16.msra.mxu0 %v11630
      %11757 = vmatprep.subr.bf16.mxu0 0
      %11758 = vmatpush1.bf16.msra.mxu0 %v11628
      %11759 = vmatprep.subr.bf16.mxu0 0
      %11760 = vmatpush1.bf16.msra.mxu0 %v11626
      %11761 = vmatprep.subr.bf16.mxu0 0
      %11762 = vmatpush1.bf16.msra.mxu0 %v11624
      %11763 = vmatprep.subr.bf16.mxu0 0
      %11764 = vmatpush1.bf16.msra.mxu0 %v11622
      %11765 = vmatprep.subr.bf16.mxu0 0
      %11766 = vmatpush1.bf16.msra.mxu0 %v11620
      %11767 = vmatprep.subr.bf16.mxu0 0
      %11768 = vmatpush2.bf16.msra.mxu0 %v11650
      %11769 = vmatprep.subr.bf16.mxu0 0
      %11770 = vmatpush2.bf16.msra.mxu0 %v11648
      %11771 = vmatprep.subr.bf16.mxu0 0
      %11772 = vmatpush2.bf16.msra.mxu0 %v11646
      %11773 = vmatprep.subr.bf16.mxu0 0
      %11774 = vmatpush2.bf16.msra.mxu0 %v11644
      %11775 = vmatprep.subr.bf16.mxu0 0
      %11776 = vmatpush2.bf16.msra.mxu0 %v11642
      %11777 = vmatprep.subr.bf16.mxu0 0
      %11778 = vmatpush2.bf16.msra.mxu0 %v11640
      %11779 = vmatprep.subr.bf16.mxu0 0
      %11780 = vmatpush2.bf16.msra.mxu0 %v11638
      %11781 = vmatprep.subr.bf16.mxu0 0
      %11782 = vmatpush2.bf16.msra.mxu0 %v11636
      %11783 = vmatprep.mubr.bf16.mxu0 %v11548
      %11784 = vmatmul.mubr.bf16.gmra.mxu0 %v11547
      %v11785 = vpop.f32.mrf.mxu0
      %v11786 = vadd.f32 0.0, %v11785
      %v11787 = vpop.f32.mrf.mxu0
      %v11788 = vpop.f32.mrf.mxu0
      %v11789 = vadd.f32 0.0, %v11788
      %v11790 = vpop.f32.mrf.mxu0
      %11791 = vmatprep.mubr.bf16.mxu0 %v11553
      %11792 = vmatmul.mubr.bf16.gmra.mxu0 %v11552
      %v11793 = vpop.f32.mrf.mxu0
      %v11794 = vadd.f32 0.0, %v11793
      %v11795 = vpop.f32.mrf.mxu0
      %v11796 = vpop.f32.mrf.mxu0
      %v11797 = vadd.f32 0.0, %v11796
      %v11798 = vpop.f32.mrf.mxu0
      %11799 = vmatprep.mubr.bf16.mxu0 %v11558
      %11800 = vmatmul.mubr.bf16.gmra.mxu0 %v11557
      %v11801 = vpop.f32.mrf.mxu0
      %v11802 = vadd.f32 0.0, %v11801
      %v11803 = vpop.f32.mrf.mxu0
      %v11804 = vpop.f32.mrf.mxu0
      %v11805 = vadd.f32 0.0, %v11804
      %v11806 = vpop.f32.mrf.mxu0
      %11807 = vmatprep.mubr.bf16.mxu0 %v11563
      %11808 = vmatmul.mubr.bf16.gmra.mxu0 %v11562
      %v11809 = vpop.f32.mrf.mxu0
      %v11810 = vadd.f32 0.0, %v11809
      %v11811 = vpop.f32.mrf.mxu0
      %v11812 = vpop.f32.mrf.mxu0
      %v11813 = vadd.f32 0.0, %v11812
      %v11814 = vpop.f32.mrf.mxu0
      %11815 = vmatprep.mubr.bf16.mxu0 %v11568
      %11816 = vmatmul.mubr.bf16.gmra.mxu0 %v11567
      %v11817 = vpop.f32.mrf.mxu0
      %v11818 = vadd.f32 0.0, %v11817
      %v11819 = vpop.f32.mrf.mxu0
      %v11820 = vpop.f32.mrf.mxu0
      %v11821 = vadd.f32 0.0, %v11820
      %v11822 = vpop.f32.mrf.mxu0
      %11823 = vmatprep.mubr.bf16.mxu0 %v11573
      %11824 = vmatmul.mubr.bf16.gmra.mxu0 %v11572
      %v11825 = vpop.f32.mrf.mxu0
      %v11826 = vadd.f32 0.0, %v11825
      %v11827 = vpop.f32.mrf.mxu0
      %v11828 = vpop.f32.mrf.mxu0
      %v11829 = vadd.f32 0.0, %v11828
      %v11830 = vpop.f32.mrf.mxu0
      %11831 = vmatprep.mubr.bf16.mxu0 %v11578
      %11832 = vmatmul.mubr.bf16.gmra.mxu0 %v11577
      %v11833 = vpop.f32.mrf.mxu0
      %v11834 = vadd.f32 0.0, %v11833
      %v11835 = vpop.f32.mrf.mxu0
      %v11836 = vpop.f32.mrf.mxu0
      %v11837 = vadd.f32 0.0, %v11836
      %v11838 = vpop.f32.mrf.mxu0
      %11839 = vmatprep.mubr.bf16.mxu0 %v11583
      %11840 = vmatmul.mubr.bf16.gmra.mxu0 %v11582
      %v11841 = vpop.f32.mrf.mxu0
      %v11842 = vadd.f32 0.0, %v11841
      %v11843 = vpop.f32.mrf.mxu0
      %v11844 = vpop.f32.mrf.mxu0
      %v11845 = vadd.f32 0.0, %v11844
      %v11846 = vpop.f32.mrf.mxu0
      %11847 = vdwg.mxu0
      %11848 = vmatprep.subr.bf16.mxu0 0
      %11849 = vmatpush1.bf16.msra.mxu0 %v11666
      %11850 = vmatprep.subr.bf16.mxu0 0
      %11851 = vmatpush1.bf16.msra.mxu0 %v11664
      %11852 = vmatprep.subr.bf16.mxu0 0
      %11853 = vmatpush1.bf16.msra.mxu0 %v11662
      %11854 = vmatprep.subr.bf16.mxu0 0
      %11855 = vmatpush1.bf16.msra.mxu0 %v11660
      %11856 = vmatprep.subr.bf16.mxu0 0
      %11857 = vmatpush1.bf16.msra.mxu0 %v11658
      %11858 = vmatprep.subr.bf16.mxu0 0
      %11859 = vmatpush1.bf16.msra.mxu0 %v11656
      %11860 = vmatprep.subr.bf16.mxu0 0
      %11861 = vmatpush1.bf16.msra.mxu0 %v11654
      %11862 = vmatprep.subr.bf16.mxu0 0
      %11863 = vmatpush1.bf16.msra.mxu0 %v11652
      %11864 = vmatprep.subr.bf16.mxu0 0
      %11865 = vmatpush2.bf16.msra.mxu0 %v11682
      %11866 = vmatprep.subr.bf16.mxu0 0
      %11867 = vmatpush2.bf16.msra.mxu0 %v11680
      %11868 = vmatprep.subr.bf16.mxu0 0
      %11869 = vmatpush2.bf16.msra.mxu0 %v11678
      %11870 = vmatprep.subr.bf16.mxu0 0
      %11871 = vmatpush2.bf16.msra.mxu0 %v11676
      %11872 = vmatprep.subr.bf16.mxu0 0
      %11873 = vmatpush2.bf16.msra.mxu0 %v11674
      %11874 = vmatprep.subr.bf16.mxu0 0
      %11875 = vmatpush2.bf16.msra.mxu0 %v11672
      %11876 = vmatprep.subr.bf16.mxu0 0
      %11877 = vmatpush2.bf16.msra.mxu0 %v11670
      %11878 = vmatprep.subr.bf16.mxu0 0
      %11879 = vmatpush2.bf16.msra.mxu0 %v11668
      %11880 = vmatprep.mubr.bf16.mxu0 %v11550
      %11881 = vmatmul.mubr.bf16.gmra.mxu0 %v11549
      %v11882 = vpop.f32.mrf.mxu0
      %v11883 = vadd.f32 %v11786, %v11882
      %v11884 = vpop.f32.mrf.mxu0
      %v11885 = vpop.f32.mrf.mxu0
      %v11886 = vadd.f32 %v11789, %v11885
      %v11887 = vpop.f32.mrf.mxu0
      %11888 = vmatprep.mubr.bf16.mxu0 %v11555
      %11889 = vmatmul.mubr.bf16.gmra.mxu0 %v11554
      %v11890 = vpop.f32.mrf.mxu0
      %v11891 = vadd.f32 %v11794, %v11890
      %v11892 = vpop.f32.mrf.mxu0
      %v11893 = vpop.f32.mrf.mxu0
      %v11894 = vadd.f32 %v11797, %v11893
      %v11895 = vpop.f32.mrf.mxu0
      %11896 = vmatprep.mubr.bf16.mxu0 %v11560
      %11897 = vmatmul.mubr.bf16.gmra.mxu0 %v11559
      %v11898 = vpop.f32.mrf.mxu0
      %v11899 = vadd.f32 %v11802, %v11898
      %v11900 = vpop.f32.mrf.mxu0
      %v11901 = vpop.f32.mrf.mxu0
      %v11902 = vadd.f32 %v11805, %v11901
      %v11903 = vpop.f32.mrf.mxu0
      %11904 = vmatprep.mubr.bf16.mxu0 %v11565
      %11905 = vmatmul.mubr.bf16.gmra.mxu0 %v11564
      %v11906 = vpop.f32.mrf.mxu0
      %v11907 = vadd.f32 %v11810, %v11906
      %v11908 = vpop.f32.mrf.mxu0
      %v11909 = vpop.f32.mrf.mxu0
      %v11910 = vadd.f32 %v11813, %v11909
      %v11911 = vpop.f32.mrf.mxu0
      %11912 = vmatprep.mubr.bf16.mxu0 %v11570
      %11913 = vmatmul.mubr.bf16.gmra.mxu0 %v11569
      %v11914 = vpop.f32.mrf.mxu0
      %v11915 = vadd.f32 %v11818, %v11914
      %v11916 = vpop.f32.mrf.mxu0
      %v11917 = vpop.f32.mrf.mxu0
      %v11918 = vadd.f32 %v11821, %v11917
      %v11919 = vpop.f32.mrf.mxu0
      %11920 = vmatprep.mubr.bf16.mxu0 %v11575
      %11921 = vmatmul.mubr.bf16.gmra.mxu0 %v11574
      %v11922 = vpop.f32.mrf.mxu0
      %v11923 = vadd.f32 %v11826, %v11922
      %v11924 = vpop.f32.mrf.mxu0
      %v11925 = vpop.f32.mrf.mxu0
      %v11926 = vadd.f32 %v11829, %v11925
      %v11927 = vpop.f32.mrf.mxu0
      %11928 = vmatprep.mubr.bf16.mxu0 %v11580
      %11929 = vmatmul.mubr.bf16.gmra.mxu0 %v11579
      %v11930 = vpop.f32.mrf.mxu0
      %v11931 = vadd.f32 %v11834, %v11930
      %v11932 = vpop.f32.mrf.mxu0
      %v11933 = vpop.f32.mrf.mxu0
      %v11934 = vadd.f32 %v11837, %v11933
      %v11935 = vpop.f32.mrf.mxu0
      %11936 = vmatprep.mubr.bf16.mxu0 %v11585
      %11937 = vmatmul.mubr.bf16.gmra.mxu0 %v11584
      %v11938 = vpop.f32.mrf.mxu0
      %v11939 = vadd.f32 %v11842, %v11938
      %v11940 = vpop.f32.mrf.mxu0
      %v11941 = vpop.f32.mrf.mxu0
      %v11942 = vadd.f32 %v11845, %v11941
      %v11943 = vpop.f32.mrf.mxu0
      %11944 = vdwg.mxu0
      %11945 = vmatprep.subr.bf16.mxu0 0
      %11946 = vmatpush1.bf16.msra.mxu0 0
      %11947 = vmatprep.subr.bf16.mxu0 0
      %11948 = vmatpush1.bf16.msra.mxu0 0
      %11949 = vmatprep.subr.bf16.mxu0 0
      %11950 = vmatpush1.bf16.msra.mxu0 0
      %11951 = vmatprep.subr.bf16.mxu0 0
      %11952 = vmatpush1.bf16.msra.mxu0 0
      %11953 = vmatprep.subr.bf16.mxu0 0
      %11954 = vmatpush1.bf16.msra.mxu0 %v11690
      %11955 = vmatprep.subr.bf16.mxu0 0
      %11956 = vmatpush1.bf16.msra.mxu0 %v11688
      %11957 = vmatprep.subr.bf16.mxu0 0
      %11958 = vmatpush1.bf16.msra.mxu0 %v11686
      %11959 = vmatprep.subr.bf16.mxu0 0
      %11960 = vmatpush1.bf16.msra.mxu0 %v11684
      %11961 = vmatprep.subr.bf16.mxu0 0
      %11962 = vmatpush2.bf16.msra.mxu0 0
      %11963 = vmatprep.subr.bf16.mxu0 0
      %11964 = vmatpush2.bf16.msra.mxu0 0
      %11965 = vmatprep.subr.bf16.mxu0 0
      %11966 = vmatpush2.bf16.msra.mxu0 0
      %11967 = vmatprep.subr.bf16.mxu0 0
      %11968 = vmatpush2.bf16.msra.mxu0 0
      %11969 = vmatprep.subr.bf16.mxu0 0
      %11970 = vmatpush2.bf16.msra.mxu0 0
      %11971 = vmatprep.subr.bf16.mxu0 0
      %11972 = vmatpush2.bf16.msra.mxu0 0
      %11973 = vmatprep.subr.bf16.mxu0 0
      %11974 = vmatpush2.bf16.msra.mxu0 0
      %11975 = vmatprep.subr.bf16.mxu0 0
      %11976 = vmatpush2.bf16.msra.mxu0 0
      %11977 = vmatprep.mubr.bf16.mxu0 0
      %11978 = vmatmul.mubr.bf16.gmra.mxu0 %v11728
      %v11979 = vpop.f32.mrf.mxu0
      %v11980 = vadd.f32 %v11883, %v11979
      %v11981 = vpop.f32.mrf.mxu0
      %v11982 = vpop.f32.mrf.mxu0
      %v11983 = vadd.f32 %v11886, %v11982
      %v11984 = vpop.f32.mrf.mxu0
      %11985 = vmatprep.mubr.bf16.mxu0 0
      %11986 = vmatmul.mubr.bf16.gmra.mxu0 %v11731
      %v11987 = vpop.f32.mrf.mxu0
      %v11988 = vadd.f32 %v11891, %v11987
      %v11989 = vpop.f32.mrf.mxu0
      %v11990 = vpop.f32.mrf.mxu0
      %v11991 = vadd.f32 %v11894, %v11990
      %v11992 = vpop.f32.mrf.mxu0
      %11993 = vmatprep.mubr.bf16.mxu0 0
      %11994 = vmatmul.mubr.bf16.gmra.mxu0 %v11734
      %v11995 = vpop.f32.mrf.mxu0
      %v11996 = vadd.f32 %v11899, %v11995
      %v11997 = vpop.f32.mrf.mxu0
      %v11998 = vpop.f32.mrf.mxu0
      %v11999 = vadd.f32 %v11902, %v11998
      %v12000 = vpop.f32.mrf.mxu0
      %12001 = vmatprep.mubr.bf16.mxu0 0
      %12002 = vmatmul.mubr.bf16.gmra.mxu0 %v11737
      %v12003 = vpop.f32.mrf.mxu0
      %v12004 = vadd.f32 %v11907, %v12003
      %v12005 = vpop.f32.mrf.mxu0
      %v12006 = vpop.f32.mrf.mxu0
      %v12007 = vadd.f32 %v11910, %v12006
      %v12008 = vpop.f32.mrf.mxu0
      %12009 = vmatprep.mubr.bf16.mxu0 0
      %12010 = vmatmul.mubr.bf16.gmra.mxu0 %v11740
      %v12011 = vpop.f32.mrf.mxu0
      %v12012 = vadd.f32 %v11915, %v12011
      %v12013 = vpop.f32.mrf.mxu0
      %v12014 = vpop.f32.mrf.mxu0
      %v12015 = vadd.f32 %v11918, %v12014
      %v12016 = vpop.f32.mrf.mxu0
      %12017 = vmatprep.mubr.bf16.mxu0 0
      %12018 = vmatmul.mubr.bf16.gmra.mxu0 %v11743
      %v12019 = vpop.f32.mrf.mxu0
      %v12020 = vadd.f32 %v11923, %v12019
      %v12021 = vpop.f32.mrf.mxu0
      %v12022 = vpop.f32.mrf.mxu0
      %v12023 = vadd.f32 %v11926, %v12022
      %v12024 = vpop.f32.mrf.mxu0
      %12025 = vmatprep.mubr.bf16.mxu0 0
      %12026 = vmatmul.mubr.bf16.gmra.mxu0 %v11746
      %v12027 = vpop.f32.mrf.mxu0
      %v12028 = vadd.f32 %v11931, %v12027
      %v12029 = vpop.f32.mrf.mxu0
      %v12030 = vpop.f32.mrf.mxu0
      %v12031 = vadd.f32 %v11934, %v12030
      %v12032 = vpop.f32.mrf.mxu0
      %12033 = vmatprep.mubr.bf16.mxu0 0
      %12034 = vmatmul.mubr.bf16.gmra.mxu0 %v11749
      %v12035 = vpop.f32.mrf.mxu0
      %v12036 = vadd.f32 %v11939, %v12035
      %v12037 = vpop.f32.mrf.mxu0
      %v12038 = vpop.f32.mrf.mxu0
      %v12039 = vadd.f32 %v11942, %v12038
      %v12040 = vpop.f32.mrf.mxu0
      %12041 = vdwg.mxu0
      %v12042 = vadd.f32 %v11308, %v11980
      %v12043 = vadd.f32 %v11311, %v11983
      %v12044 = vadd.f32 %v11316, %v11988
      %v12045 = vadd.f32 %v11319, %v11991
      %v12046 = vadd.f32 %v11324, %v11996
      %v12047 = vadd.f32 %v11327, %v11999
      %v12048 = vadd.f32 %v11332, %v12004
      %v12049 = vadd.f32 %v11335, %v12007
      %v12050 = vadd.f32 %v11340, %v12012
      %v12051 = vadd.f32 %v11343, %v12015
      %v12052 = vadd.f32 %v11348, %v12020
      %v12053 = vadd.f32 %v11351, %v12023
      %v12054 = vadd.f32 %v11356, %v12028
      %v12055 = vadd.f32 %v11359, %v12031
      %v12056 = vadd.f32 %v11364, %v12036
      %v12057 = vadd.f32 %v11367, %v12039
      %s12058 = scalar_lea.vmem %s9, 960
      %v12059 = vld [vmem:[%s12058] sm:$0xff]
      %v12060 = vld [vmem:[%s12058 + $0x8] sm:$0xff]
      %v12061 = vld [vmem:[%s12058 + $0x10] sm:$0xf]
      %v12062 = vld [vmem:[%s12058 + $0x14] sm:$0xff]
      %v12063 = vld [vmem:[%s12058 + $0x1c] sm:$0xff]
      %v12064 = vld [vmem:[%s12058 + $0x24] sm:$0xf]
      %v12065 = vld [vmem:[%s12058 + $0x28] sm:$0xff]
      %v12066 = vld [vmem:[%s12058 + $0x30] sm:$0xff]
      %v12067 = vld [vmem:[%s12058 + $0x38] sm:$0xf]
      %v12068 = vld [vmem:[%s12058 + $0x3c] sm:$0xff]
      %v12069 = vld [vmem:[%s12058 + $0x44] sm:$0xff]
      %v12070 = vld [vmem:[%s12058 + $0x4c] sm:$0xf]
      %v12071 = vld [vmem:[%s12058 + $0x50] sm:$0xff]
      %v12072 = vld [vmem:[%s12058 + $0x58] sm:$0xff]
      %v12073 = vld [vmem:[%s12058 + $0x60] sm:$0xf]
      %v12074 = vld [vmem:[%s12058 + $0x64] sm:$0xff]
      %v12075 = vld [vmem:[%s12058 + $0x6c] sm:$0xff]
      %v12076 = vld [vmem:[%s12058 + $0x74] sm:$0xf]
      %v12077 = vld [vmem:[%s12058 + $0x78] sm:$0xff]
      %v12078 = vld [vmem:[%s12058 + $0x80] sm:$0xff]
      %v12079 = vld [vmem:[%s12058 + $0x88] sm:$0xf]
      %v12080 = vld [vmem:[%s12058 + $0x8c] sm:$0xff]
      %v12081 = vld [vmem:[%s12058 + $0x94] sm:$0xff]
      %v12082 = vld [vmem:[%s12058 + $0x9c] sm:$0xf]
      %v12083 = vld [vmem:[%s12058 + $0xa0] sm:$0xff]
      %v12084 = vld [vmem:[%s12058 + $0xa8] sm:$0xff]
      %v12085 = vld [vmem:[%s12058 + $0xb0] sm:$0xf]
      %v12086 = vld [vmem:[%s12058 + $0xb4] sm:$0xff]
      %v12087 = vld [vmem:[%s12058 + $0xbc] sm:$0xff]
      %v12088 = vld [vmem:[%s12058 + $0xc4] sm:$0xf]
      %v12089 = vld [vmem:[%s12058 + $0xc8] sm:$0xff]
      %v12090 = vld [vmem:[%s12058 + $0xd0] sm:$0xff]
      %v12091 = vld [vmem:[%s12058 + $0xd8] sm:$0xf]
      %v12092 = vld [vmem:[%s12058 + $0xdc] sm:$0xff]
      %v12093 = vld [vmem:[%s12058 + $0xe4] sm:$0xff]
      %v12094 = vld [vmem:[%s12058 + $0xec] sm:$0xf]
      %v12095 = vld [vmem:[%s12058 + $0xf0] sm:$0xff]
      %v12096 = vld [vmem:[%s12058 + $0xf8] sm:$0xff]
      %v12097 = vld [vmem:[%s12058 + $0x100] sm:$0xf]
      %v12098 = vld [vmem:[%s12058 + $0x104] sm:$0xff]
      %v12099 = vld [vmem:[%s12058 + $0x10c] sm:$0xff]
      %v12100 = vld [vmem:[%s12058 + $0x114] sm:$0xf]
      %v12101 = vld [vmem:[%s12058 + $0x118] sm:$0xff]
      %v12102 = vld [vmem:[%s12058 + $0x120] sm:$0xff]
      %v12103 = vld [vmem:[%s12058 + $0x128] sm:$0xf]
      %v12104 = vld [vmem:[%s12058 + $0x12c] sm:$0xff]
      %v12105 = vld [vmem:[%s12058 + $0x134] sm:$0xff]
      %v12106 = vld [vmem:[%s12058 + $0x13c] sm:$0xf]
      %v12155 = vunpack.c.l.b16 %v12059
      %v12156 = vunpack.c.h.b16 %v12059
      %v12157 = vunpack.c.l.b16 %v12060
      %v12158 = vunpack.c.h.b16 %v12060
      %v12159 = vunpack.c.l.b16 %v12061
      %v12160 = vunpack.c.l.b16 %v12062
      %v12161 = vunpack.c.h.b16 %v12062
      %v12162 = vunpack.c.l.b16 %v12063
      %v12163 = vunpack.c.h.b16 %v12063
      %v12164 = vunpack.c.l.b16 %v12064
      %v12165 = vunpack.c.l.b16 %v12065
      %v12166 = vunpack.c.h.b16 %v12065
      %v12167 = vunpack.c.l.b16 %v12066
      %v12168 = vunpack.c.h.b16 %v12066
      %v12169 = vunpack.c.l.b16 %v12067
      %v12170 = vunpack.c.l.b16 %v12068
      %v12171 = vunpack.c.h.b16 %v12068
      %v12172 = vunpack.c.l.b16 %v12069
      %v12173 = vunpack.c.h.b16 %v12069
      %v12174 = vunpack.c.l.b16 %v12070
      %v12175 = vunpack.c.l.b16 %v12071
      %v12176 = vunpack.c.h.b16 %v12071
      %v12177 = vunpack.c.l.b16 %v12072
      %v12178 = vunpack.c.h.b16 %v12072
      %v12179 = vunpack.c.l.b16 %v12073
      %v12180 = vunpack.c.l.b16 %v12074
      %v12181 = vunpack.c.h.b16 %v12074
      %v12182 = vunpack.c.l.b16 %v12075
      %v12183 = vunpack.c.h.b16 %v12075
      %v12184 = vunpack.c.l.b16 %v12076
      %v12185 = vunpack.c.l.b16 %v12077
      %v12186 = vunpack.c.h.b16 %v12077
      %v12187 = vunpack.c.l.b16 %v12078
      %v12188 = vunpack.c.h.b16 %v12078
      %v12189 = vunpack.c.l.b16 %v12079
      %v12190 = vunpack.c.l.b16 %v12080
      %v12191 = vunpack.c.h.b16 %v12080
      %v12192 = vunpack.c.l.b16 %v12081
      %v12193 = vunpack.c.h.b16 %v12081
      %v12194 = vunpack.c.l.b16 %v12082
      %v12195 = vunpack.c.l.b16 %v12083
      %v12196 = vunpack.c.h.b16 %v12083
      %v12197 = vunpack.c.l.b16 %v12084
      %v12198 = vunpack.c.h.b16 %v12084
      %v12199 = vunpack.c.l.b16 %v12085
      %v12200 = vunpack.c.l.b16 %v12086
      %v12201 = vunpack.c.h.b16 %v12086
      %v12202 = vunpack.c.l.b16 %v12087
      %v12203 = vunpack.c.h.b16 %v12087
      %v12204 = vunpack.c.l.b16 %v12088
      %v12205 = vunpack.c.l.b16 %v12089
      %v12206 = vunpack.c.h.b16 %v12089
      %v12207 = vunpack.c.l.b16 %v12090
      %v12208 = vunpack.c.h.b16 %v12090
      %v12209 = vunpack.c.l.b16 %v12091
      %v12210 = vunpack.c.l.b16 %v12092
      %v12211 = vunpack.c.h.b16 %v12092
      %v12212 = vunpack.c.l.b16 %v12093
      %v12213 = vunpack.c.h.b16 %v12093
      %v12214 = vunpack.c.l.b16 %v12094
      %v12215 = vunpack.c.l.b16 %v12095
      %v12216 = vunpack.c.h.b16 %v12095
      %v12217 = vunpack.c.l.b16 %v12096
      %v12218 = vunpack.c.h.b16 %v12096
      %v12219 = vunpack.c.l.b16 %v12097
      %v12220 = vunpack.c.l.b16 %v12098
      %v12221 = vunpack.c.h.b16 %v12098
      %v12222 = vunpack.c.l.b16 %v12099
      %v12223 = vunpack.c.h.b16 %v12099
      %v12224 = vunpack.c.l.b16 %v12100
      %v12225 = vunpack.c.l.b16 %v12101
      %v12226 = vunpack.c.h.b16 %v12101
      %v12227 = vunpack.c.l.b16 %v12102
      %v12228 = vunpack.c.h.b16 %v12102
      %v12229 = vunpack.c.l.b16 %v12103
      %v12230 = vunpack.c.l.b16 %v12104
      %v12231 = vunpack.c.h.b16 %v12104
      %v12232 = vunpack.c.l.b16 %v12105
      %v12233 = vunpack.c.h.b16 %v12105
      %v12234 = vunpack.c.l.b16 %v12106
      %v12235 = vpack.c.b16 %v12160, %v12155
      %v12236 = vpack.c.b16 %v12161, %v12156
      %v12237 = vpack.c.b16 %v12162, %v12157
      %v12238 = vpack.c.b16 %v12163, %v12158
      %v12239 = vpack.c.b16 %v12164, %v12159
      %v12240 = vpack.c.b16 %v12170, %v12165
      %v12241 = vpack.c.b16 %v12171, %v12166
      %v12242 = vpack.c.b16 %v12172, %v12167
      %v12243 = vpack.c.b16 %v12173, %v12168
      %v12244 = vpack.c.b16 %v12174, %v12169
      %v12245 = vpack.c.b16 %v12180, %v12175
      %v12246 = vpack.c.b16 %v12181, %v12176
      %v12247 = vpack.c.b16 %v12182, %v12177
      %v12248 = vpack.c.b16 %v12183, %v12178
      %v12249 = vpack.c.b16 %v12184, %v12179
      %v12250 = vpack.c.b16 %v12190, %v12185
      %v12251 = vpack.c.b16 %v12191, %v12186
      %v12252 = vpack.c.b16 %v12192, %v12187
      %v12253 = vpack.c.b16 %v12193, %v12188
      %v12254 = vpack.c.b16 %v12194, %v12189
      %v12255 = vpack.c.b16 %v12200, %v12195
      %v12256 = vpack.c.b16 %v12201, %v12196
      %v12257 = vpack.c.b16 %v12202, %v12197
      %v12258 = vpack.c.b16 %v12203, %v12198
      %v12259 = vpack.c.b16 %v12204, %v12199
      %v12260 = vpack.c.b16 %v12210, %v12205
      %v12261 = vpack.c.b16 %v12211, %v12206
      %v12262 = vpack.c.b16 %v12212, %v12207
      %v12263 = vpack.c.b16 %v12213, %v12208
      %v12264 = vpack.c.b16 %v12214, %v12209
      %v12265 = vpack.c.b16 %v12220, %v12215
      %v12266 = vpack.c.b16 %v12221, %v12216
      %v12267 = vpack.c.b16 %v12222, %v12217
      %v12268 = vpack.c.b16 %v12223, %v12218
      %v12269 = vpack.c.b16 %v12224, %v12219
      %v12270 = vpack.c.b16 %v12230, %v12225
      %v12271 = vpack.c.b16 %v12231, %v12226
      %v12272 = vpack.c.b16 %v12232, %v12227
      %v12273 = vpack.c.b16 %v12233, %v12228
      %v12274 = vpack.c.b16 %v12234, %v12229
      %12307 = vrot.lane.b32.xlu0 %v10063, 125
      %v12308 = vpop.permute.xlu0 %12307
      %12309 = vrot.lane.b32.xlu0 %v10064, 125
      %v12310 = vpop.permute.xlu0 %12309
      %12311 = vrot.lane.b32.xlu0 %v10065, 125
      %v12312 = vpop.permute.xlu0 %12311
      %12313 = vrot.lane.b32.xlu0 %v10066, 125
      %v12314 = vpop.permute.xlu0 %12313
      %12315 = vrot.lane.b32.xlu0 %v10067, 125
      %v12316 = vpop.permute.xlu0 %12315
      %12317 = vrot.lane.b32.xlu0 %v10068, 125
      %v12318 = vpop.permute.xlu0 %12317
      %12319 = vrot.lane.b32.xlu0 %v10069, 125
      %v12320 = vpop.permute.xlu0 %12319
      %12321 = vrot.lane.b32.xlu0 %v10070, 125
      %v12322 = vpop.permute.xlu0 %12321
      %12323 = vrot.lane.b32.xlu0 %v10071, 125
      %v12324 = vpop.permute.xlu0 %12323
      %12325 = vrot.lane.b32.xlu0 %v10072, 125
      %v12326 = vpop.permute.xlu0 %12325
      %12327 = vrot.lane.b32.xlu0 %v10073, 125
      %v12328 = vpop.permute.xlu0 %12327
      %12329 = vrot.lane.b32.xlu0 %v10074, 125
      %v12330 = vpop.permute.xlu0 %12329
      %12331 = vrot.lane.b32.xlu0 %v10075, 125
      %v12332 = vpop.permute.xlu0 %12331
      %12333 = vrot.lane.b32.xlu0 %v10076, 125
      %v12334 = vpop.permute.xlu0 %12333
      %12335 = vrot.lane.b32.xlu0 %v10077, 125
      %v12336 = vpop.permute.xlu0 %12335
      %12337 = vrot.lane.b32.xlu0 %v10078, 125
      %v12338 = vpop.permute.xlu0 %12337
      %12339 = vrot.lane.b32.xlu0 %v10079, 125
      %v12340 = vpop.permute.xlu0 %12339
      %12341 = vrot.lane.b32.xlu0 %v10080, 125
      %v12342 = vpop.permute.xlu0 %12341
      %12343 = vrot.lane.b32.xlu0 %v10081, 125
      %v12344 = vpop.permute.xlu0 %12343
      %12345 = vrot.lane.b32.xlu0 %v10082, 125
      %v12346 = vpop.permute.xlu0 %12345
      %12347 = vrot.lane.b32.xlu0 %v10083, 125
      %v12348 = vpop.permute.xlu0 %12347
      %12349 = vrot.lane.b32.xlu0 %v10084, 125
      %v12350 = vpop.permute.xlu0 %12349
      %12351 = vrot.lane.b32.xlu0 %v10085, 125
      %v12352 = vpop.permute.xlu0 %12351
      %12353 = vrot.lane.b32.xlu0 %v10086, 125
      %v12354 = vpop.permute.xlu0 %12353
      %12355 = vrot.lane.b32.xlu0 %v10087, 125
      %v12356 = vpop.permute.xlu0 %12355
      %12357 = vrot.lane.b32.xlu0 %v10088, 125
      %v12358 = vpop.permute.xlu0 %12357
      %12359 = vrot.lane.b32.xlu0 %v10089, 125
      %v12360 = vpop.permute.xlu0 %12359
      %12361 = vrot.lane.b32.xlu0 %v10090, 125
      %v12362 = vpop.permute.xlu0 %12361
      %12363 = vrot.lane.b32.xlu0 %v10091, 125
      %v12364 = vpop.permute.xlu0 %12363
      %12365 = vrot.lane.b32.xlu0 %v10092, 125
      %v12366 = vpop.permute.xlu0 %12365
      %12367 = vrot.lane.b32.xlu0 %v10093, 125
      %v12368 = vpop.permute.xlu0 %12367
      %12369 = vrot.lane.b32.xlu0 %v10094, 125
      %v12370 = vpop.permute.xlu0 %12369
      %12371 = vrot.lane.b32.xlu0 %v10095, 125
      %v12372 = vpop.permute.xlu0 %12371
      %12373 = vrot.lane.b32.xlu0 %v10096, 125
      %v12374 = vpop.permute.xlu0 %12373
      %12375 = vrot.lane.b32.xlu0 %v10097, 125
      %v12376 = vpop.permute.xlu0 %12375
      %12377 = vrot.lane.b32.xlu0 %v10098, 125
      %v12378 = vpop.permute.xlu0 %12377
      %v12416 = vsel %vm449, %v12239, 0
      %v12419 = vsel %vm449, %v12244, 0
      %v12422 = vsel %vm449, %v12249, 0
      %v12425 = vsel %vm449, %v12254, 0
      %v12428 = vsel %vm449, %v12259, 0
      %v12431 = vsel %vm449, %v12264, 0
      %v12434 = vsel %vm449, %v12269, 0
      %v12437 = vsel %vm449, %v12274, 0
      %12439 = vmatprep.subr.bf16.mxu0 0
      %12440 = vmatpush1.bf16.msra.mxu0 %v12322
      %12441 = vmatprep.subr.bf16.mxu0 0
      %12442 = vmatpush1.bf16.msra.mxu0 %v12320
      %12443 = vmatprep.subr.bf16.mxu0 0
      %12444 = vmatpush1.bf16.msra.mxu0 %v12318
      %12445 = vmatprep.subr.bf16.mxu0 0
      %12446 = vmatpush1.bf16.msra.mxu0 %v12316
      %12447 = vmatprep.subr.bf16.mxu0 0
      %12448 = vmatpush1.bf16.msra.mxu0 %v12314
      %12449 = vmatprep.subr.bf16.mxu0 0
      %12450 = vmatpush1.bf16.msra.mxu0 %v12312
      %12451 = vmatprep.subr.bf16.mxu0 0
      %12452 = vmatpush1.bf16.msra.mxu0 %v12310
      %12453 = vmatprep.subr.bf16.mxu0 0
      %12454 = vmatpush1.bf16.msra.mxu0 %v12308
      %12455 = vmatprep.subr.bf16.mxu0 0
      %12456 = vmatpush2.bf16.msra.mxu0 %v12338
      %12457 = vmatprep.subr.bf16.mxu0 0
      %12458 = vmatpush2.bf16.msra.mxu0 %v12336
      %12459 = vmatprep.subr.bf16.mxu0 0
      %12460 = vmatpush2.bf16.msra.mxu0 %v12334
      %12461 = vmatprep.subr.bf16.mxu0 0
      %12462 = vmatpush2.bf16.msra.mxu0 %v12332
      %12463 = vmatprep.subr.bf16.mxu0 0
      %12464 = vmatpush2.bf16.msra.mxu0 %v12330
      %12465 = vmatprep.subr.bf16.mxu0 0
      %12466 = vmatpush2.bf16.msra.mxu0 %v12328
      %12467 = vmatprep.subr.bf16.mxu0 0
      %12468 = vmatpush2.bf16.msra.mxu0 %v12326
      %12469 = vmatprep.subr.bf16.mxu0 0
      %12470 = vmatpush2.bf16.msra.mxu0 %v12324
      %12471 = vmatprep.mubr.bf16.mxu0 %v12236
      %12472 = vmatmul.mubr.bf16.gmra.mxu0 %v12235
      %v12473 = vpop.f32.mrf.mxu0
      %v12474 = vadd.f32 0.0, %v12473
      %v12475 = vpop.f32.mrf.mxu0
      %v12476 = vpop.f32.mrf.mxu0
      %v12477 = vadd.f32 0.0, %v12476
      %v12478 = vpop.f32.mrf.mxu0
      %12479 = vmatprep.mubr.bf16.mxu0 %v12241
      %12480 = vmatmul.mubr.bf16.gmra.mxu0 %v12240
      %v12481 = vpop.f32.mrf.mxu0
      %v12482 = vadd.f32 0.0, %v12481
      %v12483 = vpop.f32.mrf.mxu0
      %v12484 = vpop.f32.mrf.mxu0
      %v12485 = vadd.f32 0.0, %v12484
      %v12486 = vpop.f32.mrf.mxu0
      %12487 = vmatprep.mubr.bf16.mxu0 %v12246
      %12488 = vmatmul.mubr.bf16.gmra.mxu0 %v12245
      %v12489 = vpop.f32.mrf.mxu0
      %v12490 = vadd.f32 0.0, %v12489
      %v12491 = vpop.f32.mrf.mxu0
      %v12492 = vpop.f32.mrf.mxu0
      %v12493 = vadd.f32 0.0, %v12492
      %v12494 = vpop.f32.mrf.mxu0
      %12495 = vmatprep.mubr.bf16.mxu0 %v12251
      %12496 = vmatmul.mubr.bf16.gmra.mxu0 %v12250
      %v12497 = vpop.f32.mrf.mxu0
      %v12498 = vadd.f32 0.0, %v12497
      %v12499 = vpop.f32.mrf.mxu0
      %v12500 = vpop.f32.mrf.mxu0
      %v12501 = vadd.f32 0.0, %v12500
      %v12502 = vpop.f32.mrf.mxu0
      %12503 = vmatprep.mubr.bf16.mxu0 %v12256
      %12504 = vmatmul.mubr.bf16.gmra.mxu0 %v12255
      %v12505 = vpop.f32.mrf.mxu0
      %v12506 = vadd.f32 0.0, %v12505
      %v12507 = vpop.f32.mrf.mxu0
      %v12508 = vpop.f32.mrf.mxu0
      %v12509 = vadd.f32 0.0, %v12508
      %v12510 = vpop.f32.mrf.mxu0
      %12511 = vmatprep.mubr.bf16.mxu0 %v12261
      %12512 = vmatmul.mubr.bf16.gmra.mxu0 %v12260
      %v12513 = vpop.f32.mrf.mxu0
      %v12514 = vadd.f32 0.0, %v12513
      %v12515 = vpop.f32.mrf.mxu0
      %v12516 = vpop.f32.mrf.mxu0
      %v12517 = vadd.f32 0.0, %v12516
      %v12518 = vpop.f32.mrf.mxu0
      %12519 = vmatprep.mubr.bf16.mxu0 %v12266
      %12520 = vmatmul.mubr.bf16.gmra.mxu0 %v12265
      %v12521 = vpop.f32.mrf.mxu0
      %v12522 = vadd.f32 0.0, %v12521
      %v12523 = vpop.f32.mrf.mxu0
      %v12524 = vpop.f32.mrf.mxu0
      %v12525 = vadd.f32 0.0, %v12524
      %v12526 = vpop.f32.mrf.mxu0
      %12527 = vmatprep.mubr.bf16.mxu0 %v12271
      %12528 = vmatmul.mubr.bf16.gmra.mxu0 %v12270
      %v12529 = vpop.f32.mrf.mxu0
      %v12530 = vadd.f32 0.0, %v12529
      %v12531 = vpop.f32.mrf.mxu0
      %v12532 = vpop.f32.mrf.mxu0
      %v12533 = vadd.f32 0.0, %v12532
      %v12534 = vpop.f32.mrf.mxu0
      %12535 = vdwg.mxu0
      %12536 = vmatprep.subr.bf16.mxu0 0
      %12537 = vmatpush1.bf16.msra.mxu0 %v12354
      %12538 = vmatprep.subr.bf16.mxu0 0
      %12539 = vmatpush1.bf16.msra.mxu0 %v12352
      %12540 = vmatprep.subr.bf16.mxu0 0
      %12541 = vmatpush1.bf16.msra.mxu0 %v12350
      %12542 = vmatprep.subr.bf16.mxu0 0
      %12543 = vmatpush1.bf16.msra.mxu0 %v12348
      %12544 = vmatprep.subr.bf16.mxu0 0
      %12545 = vmatpush1.bf16.msra.mxu0 %v12346
      %12546 = vmatprep.subr.bf16.mxu0 0
      %12547 = vmatpush1.bf16.msra.mxu0 %v12344
      %12548 = vmatprep.subr.bf16.mxu0 0
      %12549 = vmatpush1.bf16.msra.mxu0 %v12342
      %12550 = vmatprep.subr.bf16.mxu0 0
      %12551 = vmatpush1.bf16.msra.mxu0 %v12340
      %12552 = vmatprep.subr.bf16.mxu0 0
      %12553 = vmatpush2.bf16.msra.mxu0 %v12370
      %12554 = vmatprep.subr.bf16.mxu0 0
      %12555 = vmatpush2.bf16.msra.mxu0 %v12368
      %12556 = vmatprep.subr.bf16.mxu0 0
      %12557 = vmatpush2.bf16.msra.mxu0 %v12366
      %12558 = vmatprep.subr.bf16.mxu0 0
      %12559 = vmatpush2.bf16.msra.mxu0 %v12364
      %12560 = vmatprep.subr.bf16.mxu0 0
      %12561 = vmatpush2.bf16.msra.mxu0 %v12362
      %12562 = vmatprep.subr.bf16.mxu0 0
      %12563 = vmatpush2.bf16.msra.mxu0 %v12360
      %12564 = vmatprep.subr.bf16.mxu0 0
      %12565 = vmatpush2.bf16.msra.mxu0 %v12358
      %12566 = vmatprep.subr.bf16.mxu0 0
      %12567 = vmatpush2.bf16.msra.mxu0 %v12356
      %12568 = vmatprep.mubr.bf16.mxu0 %v12238
      %12569 = vmatmul.mubr.bf16.gmra.mxu0 %v12237
      %v12570 = vpop.f32.mrf.mxu0
      %v12571 = vadd.f32 %v12474, %v12570
      %v12572 = vpop.f32.mrf.mxu0
      %v12573 = vpop.f32.mrf.mxu0
      %v12574 = vadd.f32 %v12477, %v12573
      %v12575 = vpop.f32.mrf.mxu0
      %12576 = vmatprep.mubr.bf16.mxu0 %v12243
      %12577 = vmatmul.mubr.bf16.gmra.mxu0 %v12242
      %v12578 = vpop.f32.mrf.mxu0
      %v12579 = vadd.f32 %v12482, %v12578
      %v12580 = vpop.f32.mrf.mxu0
      %v12581 = vpop.f32.mrf.mxu0
      %v12582 = vadd.f32 %v12485, %v12581
      %v12583 = vpop.f32.mrf.mxu0
      %12584 = vmatprep.mubr.bf16.mxu0 %v12248
      %12585 = vmatmul.mubr.bf16.gmra.mxu0 %v12247
      %v12586 = vpop.f32.mrf.mxu0
      %v12587 = vadd.f32 %v12490, %v12586
      %v12588 = vpop.f32.mrf.mxu0
      %v12589 = vpop.f32.mrf.mxu0
      %v12590 = vadd.f32 %v12493, %v12589
      %v12591 = vpop.f32.mrf.mxu0
      %12592 = vmatprep.mubr.bf16.mxu0 %v12253
      %12593 = vmatmul.mubr.bf16.gmra.mxu0 %v12252
      %v12594 = vpop.f32.mrf.mxu0
      %v12595 = vadd.f32 %v12498, %v12594
      %v12596 = vpop.f32.mrf.mxu0
      %v12597 = vpop.f32.mrf.mxu0
      %v12598 = vadd.f32 %v12501, %v12597
      %v12599 = vpop.f32.mrf.mxu0
      %12600 = vmatprep.mubr.bf16.mxu0 %v12258
      %12601 = vmatmul.mubr.bf16.gmra.mxu0 %v12257
      %v12602 = vpop.f32.mrf.mxu0
      %v12603 = vadd.f32 %v12506, %v12602
      %v12604 = vpop.f32.mrf.mxu0
      %v12605 = vpop.f32.mrf.mxu0
      %v12606 = vadd.f32 %v12509, %v12605
      %v12607 = vpop.f32.mrf.mxu0
      %12608 = vmatprep.mubr.bf16.mxu0 %v12263
      %12609 = vmatmul.mubr.bf16.gmra.mxu0 %v12262
      %v12610 = vpop.f32.mrf.mxu0
      %v12611 = vadd.f32 %v12514, %v12610
      %v12612 = vpop.f32.mrf.mxu0
      %v12613 = vpop.f32.mrf.mxu0
      %v12614 = vadd.f32 %v12517, %v12613
      %v12615 = vpop.f32.mrf.mxu0
      %12616 = vmatprep.mubr.bf16.mxu0 %v12268
      %12617 = vmatmul.mubr.bf16.gmra.mxu0 %v12267
      %v12618 = vpop.f32.mrf.mxu0
      %v12619 = vadd.f32 %v12522, %v12618
      %v12620 = vpop.f32.mrf.mxu0
      %v12621 = vpop.f32.mrf.mxu0
      %v12622 = vadd.f32 %v12525, %v12621
      %v12623 = vpop.f32.mrf.mxu0
      %12624 = vmatprep.mubr.bf16.mxu0 %v12273
      %12625 = vmatmul.mubr.bf16.gmra.mxu0 %v12272
      %v12626 = vpop.f32.mrf.mxu0
      %v12627 = vadd.f32 %v12530, %v12626
      %v12628 = vpop.f32.mrf.mxu0
      %v12629 = vpop.f32.mrf.mxu0
      %v12630 = vadd.f32 %v12533, %v12629
      %v12631 = vpop.f32.mrf.mxu0
      %12632 = vdwg.mxu0
      %12633 = vmatprep.subr.bf16.mxu0 0
      %12634 = vmatpush1.bf16.msra.mxu0 0
      %12635 = vmatprep.subr.bf16.mxu0 0
      %12636 = vmatpush1.bf16.msra.mxu0 0
      %12637 = vmatprep.subr.bf16.mxu0 0
      %12638 = vmatpush1.bf16.msra.mxu0 0
      %12639 = vmatprep.subr.bf16.mxu0 0
      %12640 = vmatpush1.bf16.msra.mxu0 0
      %12641 = vmatprep.subr.bf16.mxu0 0
      %12642 = vmatpush1.bf16.msra.mxu0 %v12378
      %12643 = vmatprep.subr.bf16.mxu0 0
      %12644 = vmatpush1.bf16.msra.mxu0 %v12376
      %12645 = vmatprep.subr.bf16.mxu0 0
      %12646 = vmatpush1.bf16.msra.mxu0 %v12374
      %12647 = vmatprep.subr.bf16.mxu0 0
      %12648 = vmatpush1.bf16.msra.mxu0 %v12372
      %12649 = vmatprep.subr.bf16.mxu0 0
      %12650 = vmatpush2.bf16.msra.mxu0 0
      %12651 = vmatprep.subr.bf16.mxu0 0
      %12652 = vmatpush2.bf16.msra.mxu0 0
      %12653 = vmatprep.subr.bf16.mxu0 0
      %12654 = vmatpush2.bf16.msra.mxu0 0
      %12655 = vmatprep.subr.bf16.mxu0 0
      %12656 = vmatpush2.bf16.msra.mxu0 0
      %12657 = vmatprep.subr.bf16.mxu0 0
      %12658 = vmatpush2.bf16.msra.mxu0 0
      %12659 = vmatprep.subr.bf16.mxu0 0
      %12660 = vmatpush2.bf16.msra.mxu0 0
      %12661 = vmatprep.subr.bf16.mxu0 0
      %12662 = vmatpush2.bf16.msra.mxu0 0
      %12663 = vmatprep.subr.bf16.mxu0 0
      %12664 = vmatpush2.bf16.msra.mxu0 0
      %12665 = vmatprep.mubr.bf16.mxu0 0
      %12666 = vmatmul.mubr.bf16.gmra.mxu0 %v12416
      %v12667 = vpop.f32.mrf.mxu0
      %v12668 = vadd.f32 %v12571, %v12667
      %v12669 = vpop.f32.mrf.mxu0
      %v12670 = vpop.f32.mrf.mxu0
      %v12671 = vadd.f32 %v12574, %v12670
      %v12672 = vpop.f32.mrf.mxu0
      %12673 = vmatprep.mubr.bf16.mxu0 0
      %12674 = vmatmul.mubr.bf16.gmra.mxu0 %v12419
      %v12675 = vpop.f32.mrf.mxu0
      %v12676 = vadd.f32 %v12579, %v12675
      %v12677 = vpop.f32.mrf.mxu0
      %v12678 = vpop.f32.mrf.mxu0
      %v12679 = vadd.f32 %v12582, %v12678
      %v12680 = vpop.f32.mrf.mxu0
      %12681 = vmatprep.mubr.bf16.mxu0 0
      %12682 = vmatmul.mubr.bf16.gmra.mxu0 %v12422
      %v12683 = vpop.f32.mrf.mxu0
      %v12684 = vadd.f32 %v12587, %v12683
      %v12685 = vpop.f32.mrf.mxu0
      %v12686 = vpop.f32.mrf.mxu0
      %v12687 = vadd.f32 %v12590, %v12686
      %v12688 = vpop.f32.mrf.mxu0
      %12689 = vmatprep.mubr.bf16.mxu0 0
      %12690 = vmatmul.mubr.bf16.gmra.mxu0 %v12425
      %v12691 = vpop.f32.mrf.mxu0
      %v12692 = vadd.f32 %v12595, %v12691
      %v12693 = vpop.f32.mrf.mxu0
      %v12694 = vpop.f32.mrf.mxu0
      %v12695 = vadd.f32 %v12598, %v12694
      %v12696 = vpop.f32.mrf.mxu0
      %12697 = vmatprep.mubr.bf16.mxu0 0
      %12698 = vmatmul.mubr.bf16.gmra.mxu0 %v12428
      %v12699 = vpop.f32.mrf.mxu0
      %v12700 = vadd.f32 %v12603, %v12699
      %v12701 = vpop.f32.mrf.mxu0
      %v12702 = vpop.f32.mrf.mxu0
      %v12703 = vadd.f32 %v12606, %v12702
      %v12704 = vpop.f32.mrf.mxu0
      %12705 = vmatprep.mubr.bf16.mxu0 0
      %12706 = vmatmul.mubr.bf16.gmra.mxu0 %v12431
      %v12707 = vpop.f32.mrf.mxu0
      %v12708 = vadd.f32 %v12611, %v12707
      %v12709 = vpop.f32.mrf.mxu0
      %v12710 = vpop.f32.mrf.mxu0
      %v12711 = vadd.f32 %v12614, %v12710
      %v12712 = vpop.f32.mrf.mxu0
      %12713 = vmatprep.mubr.bf16.mxu0 0
      %12714 = vmatmul.mubr.bf16.gmra.mxu0 %v12434
      %v12715 = vpop.f32.mrf.mxu0
      %v12716 = vadd.f32 %v12619, %v12715
      %v12717 = vpop.f32.mrf.mxu0
      %v12718 = vpop.f32.mrf.mxu0
      %v12719 = vadd.f32 %v12622, %v12718
      %v12720 = vpop.f32.mrf.mxu0
      %12721 = vmatprep.mubr.bf16.mxu0 0
      %12722 = vmatmul.mubr.bf16.gmra.mxu0 %v12437
      %v12723 = vpop.f32.mrf.mxu0
      %v12724 = vadd.f32 %v12627, %v12723
      %v12725 = vpop.f32.mrf.mxu0
      %v12726 = vpop.f32.mrf.mxu0
      %v12727 = vadd.f32 %v12630, %v12726
      %v12728 = vpop.f32.mrf.mxu0
      %12729 = vdwg.mxu0
      %v12730 = vadd.f32 %v12042, %v12668
      %v12731 = vadd.f32 %v12043, %v12671
      %v12732 = vadd.f32 %v12044, %v12676
      %v12733 = vadd.f32 %v12045, %v12679
      %v12734 = vadd.f32 %v12046, %v12684
      %v12735 = vadd.f32 %v12047, %v12687
      %v12736 = vadd.f32 %v12048, %v12692
      %v12737 = vadd.f32 %v12049, %v12695
      %v12738 = vadd.f32 %v12050, %v12700
      %v12739 = vadd.f32 %v12051, %v12703
      %v12740 = vadd.f32 %v12052, %v12708
      %v12741 = vadd.f32 %v12053, %v12711
      %v12742 = vadd.f32 %v12054, %v12716
      %v12743 = vadd.f32 %v12055, %v12719
      %v12744 = vadd.f32 %v12056, %v12724
      %v12745 = vadd.f32 %v12057, %v12727
      %v12746 = vld [vmem:[%s10] sm:$0xff]
      %v12747 = vld [vmem:[%s10 + $0x8] sm:$0xff]
      %v12748 = vld [vmem:[%s10 + $0x10] sm:$0xff]
      %v12749 = vld [vmem:[%s10 + $0x18] sm:$0xff]
      %v12750 = vld [vmem:[%s10 + $0x20] sm:$0xff]
      %v12751 = vld [vmem:[%s10 + $0x28] sm:$0xff]
      %v12752 = vld [vmem:[%s10 + $0x30] sm:$0xff]
      %v12753 = vld [vmem:[%s10 + $0x38] sm:$0xff]
      %v12754 = vld [vmem:[%s10 + $0x40] sm:$0xff]
      %v12755 = vld [vmem:[%s10 + $0x48] sm:$0xff]
      %v12756 = vld [vmem:[%s10 + $0x50] sm:$0xff]
      %v12757 = vld [vmem:[%s10 + $0x58] sm:$0xff]
      %v12758 = vld [vmem:[%s10 + $0x60] sm:$0xff]
      %v12759 = vld [vmem:[%s10 + $0x68] sm:$0xff]
      %v12760 = vld [vmem:[%s10 + $0x70] sm:$0xff]
      %v12761 = vld [vmem:[%s10 + $0x78] sm:$0xff]
      %v12762 = vadd.f32 %v12730, %v12746
      %v12763 = vadd.f32 %v12731, %v12747
      %v12764 = vadd.f32 %v12732, %v12748
      %v12765 = vadd.f32 %v12733, %v12749
      %v12766 = vadd.f32 %v12734, %v12750
      %v12767 = vadd.f32 %v12735, %v12751
      %v12768 = vadd.f32 %v12736, %v12752
      %v12769 = vadd.f32 %v12737, %v12753
      %v12770 = vadd.f32 %v12738, %v12754
      %v12771 = vadd.f32 %v12739, %v12755
      %v12772 = vadd.f32 %v12740, %v12756
      %v12773 = vadd.f32 %v12741, %v12757
      %v12774 = vadd.f32 %v12742, %v12758
      %v12775 = vadd.f32 %v12743, %v12759
      %v12776 = vadd.f32 %v12744, %v12760
      %v12777 = vadd.f32 %v12745, %v12761
      %v12778 = vmax.f32 %v12762, 0.0
      %v12779 = vmax.f32 %v12763, 0.0
      %v12780 = vmax.f32 %v12764, 0.0
      %v12781 = vmax.f32 %v12765, 0.0
      %v12782 = vmax.f32 %v12766, 0.0
      %v12783 = vmax.f32 %v12767, 0.0
      %v12784 = vmax.f32 %v12768, 0.0
      %v12785 = vmax.f32 %v12769, 0.0
      %v12786 = vmax.f32 %v12770, 0.0
      %v12787 = vmax.f32 %v12771, 0.0
      %v12788 = vmax.f32 %v12772, 0.0
      %v12789 = vmax.f32 %v12773, 0.0
      %v12790 = vmax.f32 %v12774, 0.0
      %v12791 = vmax.f32 %v12775, 0.0
      %v12792 = vmax.f32 %v12776, 0.0
      %v12793 = vmax.f32 %v12777, 0.0
      %v12794 = vpack.c.bf16 %v12779, %v12778
      %v12795 = vpack.c.bf16 %v12781, %v12780
      %v12796 = vpack.c.bf16 %v12783, %v12782
      %v12797 = vpack.c.bf16 %v12785, %v12784
      %v12798 = vpack.c.bf16 %v12787, %v12786
      %v12799 = vpack.c.bf16 %v12789, %v12788
      %v12800 = vpack.c.bf16 %v12791, %v12790
      %v12801 = vpack.c.bf16 %v12793, %v12792
      %v12802 = vld [vmem:[%s11] sm:$0x3]
      %v12803 = vld [vmem:[%s12] sm:$0xf]
      %12804 = vmatprep.subr.bf16.mxu0 0
      %12805 = vmatpush1.bf16.msra.mxu0 %v12801
      %12806 = vmatprep.subr.bf16.mxu0 0
      %12807 = vmatpush1.bf16.msra.mxu0 %v12800
      %12808 = vmatprep.subr.bf16.mxu0 0
      %12809 = vmatpush1.bf16.msra.mxu0 %v12799
      %12810 = vmatprep.subr.bf16.mxu0 0
      %12811 = vmatpush1.bf16.msra.mxu0 %v12798
      %12812 = vmatprep.subr.bf16.mxu0 0
      %12813 = vmatpush1.bf16.msra.mxu0 %v12797
      %12814 = vmatprep.subr.bf16.mxu0 0
      %12815 = vmatpush1.bf16.msra.mxu0 %v12796
      %12816 = vmatprep.subr.bf16.mxu0 0
      %12817 = vmatpush1.bf16.msra.mxu0 %v12795
      %12818 = vmatprep.subr.bf16.mxu0 0
      %12819 = vmatpush1.bf16.msra.mxu0 %v12794
      %12820 = vmatprep.subr.bf16.mxu0 0
      %12821 = vmatpush2.bf16.msra.mxu0 0
      %12822 = vmatprep.subr.bf16.mxu0 0
      %12823 = vmatpush2.bf16.msra.mxu0 0
      %12824 = vmatprep.subr.bf16.mxu0 0
      %12825 = vmatpush2.bf16.msra.mxu0 0
      %12826 = vmatprep.subr.bf16.mxu0 0
      %12827 = vmatpush2.bf16.msra.mxu0 0
      %12828 = vmatprep.subr.bf16.mxu0 0
      %12829 = vmatpush2.bf16.msra.mxu0 0
      %12830 = vmatprep.subr.bf16.mxu0 0
      %12831 = vmatpush2.bf16.msra.mxu0 0
      %12832 = vmatprep.subr.bf16.mxu0 0
      %12833 = vmatpush2.bf16.msra.mxu0 0
      %12834 = vmatprep.subr.bf16.mxu0 0
      %12835 = vmatpush2.bf16.msra.mxu0 0
      %12836 = vmatprep.mubr.bf16.mxu0 0
      %12837 = vmatmul.mubr.bf16.gmra.mxu0 %v12802
      %v12838 = vpop.f32.mrf.mxu0
      %v12839 = vadd.f32 %v12803, %v12838
      %v12840 = vpop.f32.mrf.mxu0
      %v12841 = vpop.f32.mrf.mxu0
      %v12842 = vpop.f32.mrf.mxu0
      %12843 = vdwg.mxu0
      %vm12844 = vcmask 3072
      %12845 = vst.msk [vmem:[%s438] sm:$0xf] %vm12844, %v12839
      %p12846 = scmp.lt.s32.totalorder %s24, 1
      %s12847 = scalar_select %p12846, %s24, 1
      %s12848 = smul.addr %s12847, 4
      %s12849 = scalar_lea.vmem %s13, %s12848
      // Predicated region
      $region73: #{dqn_forward.1} parent=71 // pred_check
        %p12850 = pneg %p320
      $region74: #{dqn_forward.1} parent=71 // pred_check_branch
        %12852 = sbr.rel (%p12850) target = $region76
      $region75: #{dqn_forward.1} parent=71 // pred_region
        _
      $region76: #{dqn_forward.1} parent=71 // pred_fallthru
        _
    $region72: #{dqn_forward.1} parent=5 // pred_fallthru
      _
    %p12853 = scmp.le.s32.totalorder 2, %s19
    // Predicated region
    $region77: #{dqn_forward.1} parent=5 // pred_check
      %p12854 = pneg %p12853
    $region78: #{dqn_forward.1} parent=5 // pred_check_branch
      %12856 = sbr.rel (%p12854) target = $region80
    $region79: #{dqn_forward.1} parent=5 // pred_region
      %s12857 = ssub.s32 %s19, 2
      // Predicated region
      $region81: #{dqn_forward.1} parent=79 // pred_check
        %p12858 = pneg %p326
      $region82: #{dqn_forward.1} parent=79 // pred_check_branch
        %12860 = sbr.rel (%p12858) target = $region84
      $region83: #{dqn_forward.1} parent=79 // pred_region
        %p12861 = scmp.lt.s32.totalorder %s25, 1
        %s12862 = scalar_select %p12861, %s25, 1
        %s12863 = smul.addr %s12862, 4
        %s12864 = scalar_lea.vmem %s13, %s12863
      $region84: #{dqn_forward.1} parent=79 // pred_fallthru
        _
    $region80: #{dqn_forward.1} parent=5 // pred_fallthru
      _
  $region6: #{dqn_forward.1} parent=0 // loop_footer
    %s23 = sadd.s32 1, %s19
  $region7: #{dqn_forward.1} parent=0 // loop_footer_branch
    %18 = sbr.rel target = $region3
  $region8: #{dqn_forward.1} parent=0 // loop_exit
    _

</llo_original>
